<compile_context>
chip_gen: v5e
topology: v5e:2x2
jax: 0.10.0
libtpu: 0.0.40
codegen_flags: <defaults>
</compile_context>

<pallas_src>
import jax
import jax.numpy as jnp
import numpy as np
from jax import lax
from jax.experimental import pallas as pl
from jax.experimental.pallas import tpu as pltpu

C_PIC, H_PIC, W_PIC = 512, 28, 28
POOL = 4
HP, WP = H_PIC // POOL, W_PIC // POOL       # 7, 7
FEAT = C_PIC * HP * WP                      # 25088 = 196 * 128 (lane-dense)


def _build_pool_matrix():
    # pmat[(4i+di)*28 + (4j+dj), i*7+j] = 1/16  -> 4x4 average pool as a matmul
    pmat = np.zeros((H_PIC * W_PIC, HP * WP), dtype=np.float32)
    for i in range(HP):
        for j in range(WP):
            for di in range(POOL):
                for dj in range(POOL):
                    pmat[(POOL * i + di) * W_PIC + (POOL * j + dj), i * WP + j] = 1.0 / (POOL * POOL)
    return pmat


_POOL_MAT_NP = _build_pool_matrix()   # built once at import, constant-folded under jit


# ---------------------------------------------------------------------------
# Kernel 1: 4x4 average pooling as a matmul against a fixed pooling matrix.
#           (tile, 784) @ (784, 49) per grid step; pure HBM streaming.
# ---------------------------------------------------------------------------
def _avgpool_kernel(x_ref, p_ref, o_ref):
    o_ref[...] = jnp.dot(x_ref[...], p_ref[...], preferred_element_type=jnp.float32)


def _avg_pool_4x4(pic_feat, pmat):
    """(B, 512, 28, 28) f32 -> (B, 512*7*7) f32, matching torch .view(B, -1) order."""
    B = pic_feat.shape[0]
    rows = B * C_PIC
    x2d = pic_feat.reshape(rows, H_PIC * W_PIC)

    # tile=512: rows = B*512 is always divisible, per-step overhead amortized,
    # and the grid stays >= 2 steps for B >= 2 (keeps both v7x TCs busy).
    tile = 512
    assert rows % tile == 0

    cost = pl.CostEstimate(
        flops=2 * rows * (H_PIC * W_PIC) * (HP * WP),
        transcendentals=0,
        bytes_accessed=4 * (rows * H_PIC * W_PIC
                            + H_PIC * W_PIC * HP * WP
                            + rows * HP * WP),
    )

    pooled = pl.pallas_call(
        _avgpool_kernel,
        out_shape=jax.ShapeDtypeStruct((rows, HP * WP), jnp.float32),
        grid=(rows // tile,),
        in_specs=[
            pl.BlockSpec((tile, H_PIC * W_PIC), lambda i: (i, 0)),
            pl.BlockSpec((H_PIC * W_PIC, HP * WP), lambda i: (0, 0)),
        ],
        out_specs=pl.BlockSpec((tile, HP * WP), lambda i: (i, 0)),
        compiler_params=pltpu.CompilerParams(dimension_semantics=("parallel",)),
        cost_estimate=cost,
    )(x2d, pmat)

    # (B*C, 49) -> (B, C*49): matches torch .view(B, -1) on (B, C, 7, 7)
    return pooled.reshape(B, FEAT)


# ---------------------------------------------------------------------------
# Kernel 2: fused fc1 -> concat -> fc2, single step (whole K fits in VMEM).
#   pic_emb = pic_flat @ W1^T + b1      (W1 streamed in native (hidden, F) layout)
#   out     = pic_emb @ w2a + text_bias (text_bias = text @ w2b + b2, precomputed)
# ---------------------------------------------------------------------------
def _head_kernel(pic_ref, w1_ref, w2a_ref, b1_ref, tb_ref, o_ref):
    # NT contraction: (B, F) . (hidden, F) over the lane dims -> (B, hidden).
    pic_emb = lax.dot_general(
        pic_ref[...], w1_ref[...],
        dimension_numbers=(((1,), (1,)), ((), ())),
        preferred_element_type=jnp.float32,
    ) + b1_ref[...]
    o_ref[...] = (
        jnp.dot(pic_emb, w2a_ref[...], preferred_element_type=jnp.float32)
        + tb_ref[...]
    ).astype(o_ref.dtype)


def _mm_head(pic_flat, text_emb, w1, b1, w2, b2):
    B, F = pic_flat.shape
    hidden = w1.shape[0]
    out_class = w2.shape[0]
    assert F == FEAT

    # Tiny prep ops; constant-shaped, fused/folded by XLA under jit.
    w2a = w2[:, :hidden].T                     # (hidden, out_class) -- pic_emb part
    w2b = w2[:, hidden:].T                     # (hidden, out_class) -- text part
    b1_2d = b1.reshape(1, hidden)
    # Fold the whole text branch + b2 into one (B, out_class) additive term.
    text_bias = text_emb @ w2b + b2.reshape(1, out_class)

    cost = pl.CostEstimate(
        flops=2 * B * F * hidden + 2 * B * hidden * out_class,
        transcendentals=0,
        bytes_accessed=4 * (B * F + hidden * F + hidden * out_class
                            + hidden + 2 * B * out_class),
    )

    # No grid: every operand (pic_flat ~200 KB, W1 ~3.2 MB, rest tiny) sits in
    # VMEM for a single kernel invocation -- no reduction scratch, no pl.when,
    # no per-step overhead.  Fits default scoped VMEM on v5e/v6e/v7x.
    return pl.pallas_call(
        _head_kernel,
        out_shape=jax.ShapeDtypeStruct((B, out_class), jnp.float32),
        cost_estimate=cost,
    )(pic_flat, w1, w2a, b1_2d, text_bias)


@jax.jit
def multimodal_concat_forward(pic_feat, text_pooler, w1, b1, w2, b2):
    pmat = jnp.asarray(_POOL_MAT_NP)        # compile-time constant
    pic_flat = _avg_pool_4x4(pic_feat, pmat)
    return _mm_head(pic_flat, text_pooler, w1, b1, w2, b2)


# ---------------------------------------------------------------------------
# Pure-JAX reference for correctness check
# ---------------------------------------------------------------------------
def reference(pic_feat, text_pooler, w1, b1, w2, b2):
    B = pic_feat.shape[0]
    pooled = pic_feat.reshape(B, C_PIC, HP, POOL, WP, POOL).mean(axis=(3, 5))
    pic_flat = pooled.reshape(B, -1)
    pic_emb = pic_flat @ w1.T + b1
    x = jnp.concatenate([pic_emb, text_pooler], axis=1)
    return x @ w2.T + b2


if __name__ == "__main__":
    B = 2
    hidden = 32          # fc1 output size; BERT pooler assumed to match (fc2 in = hidden*2)
    out_class = 4

    key = jax.random.PRNGKey(0)
    k_pic, k_txt, k_w1, k_b1, k_w2, k_b2 = jax.random.split(key, 6)

    # Stand-ins for the external sub-model outputs.
    pic_feat = 0.1 * jax.random.normal(k_pic, (B, C_PIC, H_PIC, W_PIC), dtype=jnp.float32)
    text_pooler = jax.random.normal(k_txt, (B, hidden), dtype=jnp.float32)

    # Deterministic parameters (shapes from nn.Linear in __init__).
    w1 = 0.01 * jax.random.normal(k_w1, (hidden, FEAT), dtype=jnp.float32)
    b1 = 0.01 * jax.random.normal(k_b1, (hidden,), dtype=jnp.float32)
    w2 = 0.1 * jax.random.normal(k_w2, (out_class, hidden * 2), dtype=jnp.float32)
    b2 = 0.1 * jax.random.normal(k_b2, (out_class,), dtype=jnp.float32)

    out = multimodal_concat_forward(pic_feat, text_pooler, w1, b1, w2, b2)
    out = jax.block_until_ready(out)

    ref = reference(pic_feat, text_pooler, w1, b1, w2, b2)
    assert out.shape == (B, out_class)
    np.testing.assert_allclose(np.asarray(out), np.asarray(ref), rtol=1e-3, atol=1e-3)

    print("KERNEL_OK")
</pallas_src>

<mosaic_0001>
module attributes {stable_mosaic.version = 11 : i64} {
  func.func @_avgpool_kernel(%arg0: i32, %arg1: memref<512x784xf32, #tpu.memory_space<vmem>>, %arg2: memref<784x49xf32, #tpu.memory_space<vmem>>, %arg3: memref<512x49xf32, #tpu.memory_space<vmem>>) attributes {dimension_semantics = [#tpu.dimension_semantics<parallel>], iteration_bounds = array<i64: 2>, scalar_prefetch = 0 : i64, scratch_operands = 0 : i64, tpu.core_type = #tpu.core_type<tc>, window_params = [{transform_indices = @transform_0, window_bounds = array<i64: 512, 784>}, {pipeline_mode = #tpu.pipeline_mode<synchronous>, transform_indices = @transform_1, window_bounds = array<i64: 784, 49>}, {transform_indices = @transform_2, window_bounds = array<i64: 512, 49>}]} {
    %c0 = arith.constant 0 : index
    %c0_0 = arith.constant 0 : index
    %0 = vector.load %arg1[%c0, %c0_0] : memref<512x784xf32, #tpu.memory_space<vmem>>, vector<512x784xf32>
    %c0_1 = arith.constant 0 : index
    %c0_2 = arith.constant 0 : index
    %1 = vector.load %arg2[%c0_1, %c0_2] : memref<784x49xf32, #tpu.memory_space<vmem>>, vector<784x49xf32>
    %cst = arith.constant dense<0.000000e+00> : vector<512x49xf32>
    %2 = tpu.matmul %0, %1, %cst {dimension_numbers = #tpu.dot_dimension_numbers<[1], [0], [0], [1], [0, 0, 1, 1], [], []>} : vector<512x784xf32>, vector<784x49xf32>, vector<512x49xf32> -> vector<512x49xf32>
    %c0_3 = arith.constant 0 : index
    %c0_4 = arith.constant 0 : index
    %3 = vector.load %arg3[%c0_3, %c0_4] : memref<512x49xf32, #tpu.memory_space<vmem>>, vector<512x49xf32>
    tpu.vector_store %arg3[%c0_3, %c0_4], %2 {strides = array<i32>} : memref<512x49xf32, #tpu.memory_space<vmem>>, vector<512x49xf32>,
    return
  }
  func.func @transform_0(%arg0: i32) -> (i32, i32) {
    %c0_i32 = arith.constant 0 : i32
    %c0_i32_0 = arith.constant 0 : i32
    return %arg0, %c0_i32 : i32, i32
  }
  func.func @transform_1(%arg0: i32) -> (i32, i32) {
    %c0_i32 = arith.constant 0 : i32
    %c0_i32_0 = arith.constant 0 : i32
    %c0_i32_1 = arith.constant 0 : i32
    return %c0_i32, %c0_i32_0 : i32, i32
  }
  func.func @transform_2(%arg0: i32) -> (i32, i32) {
    %c0_i32 = arith.constant 0 : i32
    %c0_i32_0 = arith.constant 0 : i32
    return %arg0, %c0_i32 : i32, i32
  }
}

module attributes {stable_mosaic.version = 11 : i64} {
  func.func @_head_kernel(%arg0: memref<2x25088xf32, #tpu.memory_space<vmem>>, %arg1: memref<32x25088xf32, #tpu.memory_space<vmem>>, %arg2: memref<32x4xf32, #tpu.memory_space<vmem>>, %arg3: memref<1x32xf32, #tpu.memory_space<vmem>>, %arg4: memref<2x4xf32, #tpu.memory_space<vmem>>, %arg5: memref<2x4xf32, #tpu.memory_space<vmem>>) attributes {dimension_semantics = [], scalar_prefetch = 0 : i64, scratch_operands = 0 : i64, tpu.core_type = #tpu.core_type<tc>} {
    %c0 = arith.constant 0 : index
    %c0_0 = arith.constant 0 : index
    %0 = vector.load %arg0[%c0, %c0_0] : memref<2x25088xf32, #tpu.memory_space<vmem>>, vector<2x25088xf32>
    %c0_1 = arith.constant 0 : index
    %c0_2 = arith.constant 0 : index
    %1 = vector.load %arg1[%c0_1, %c0_2] : memref<32x25088xf32, #tpu.memory_space<vmem>>, vector<32x25088xf32>
    %cst = arith.constant dense<0.000000e+00> : vector<2x32xf32>
    %2 = tpu.matmul %0, %1, %cst {dimension_numbers = #tpu.dot_dimension_numbers<[1], [1], [0], [0], [0, 0, 1, 0], [], []>} : vector<2x25088xf32>, vector<32x25088xf32>, vector<2x32xf32> -> vector<2x32xf32>
    %c0_3 = arith.constant 0 : index
    %c0_4 = arith.constant 0 : index
    %3 = vector.load %arg3[%c0_3, %c0_4] : memref<1x32xf32, #tpu.memory_space<vmem>>, vector<1x32xf32>
    %4 = vector.broadcast %3 : vector<1x32xf32> to vector<2x32xf32>
    %5 = arith.addf %2, %4 : vector<2x32xf32>
    %c0_5 = arith.constant 0 : index
    %c0_6 = arith.constant 0 : index
    %6 = vector.load %arg2[%c0_5, %c0_6] : memref<32x4xf32, #tpu.memory_space<vmem>>, vector<32x4xf32>
    %cst_7 = arith.constant dense<0.000000e+00> : vector<2x4xf32>
    %7 = tpu.matmul %5, %6, %cst_7 {dimension_numbers = #tpu.dot_dimension_numbers<[1], [0], [0], [1], [0, 0, 1, 1], [], []>} : vector<2x32xf32>, vector<32x4xf32>, vector<2x4xf32> -> vector<2x4xf32>
    %c0_8 = arith.constant 0 : index
    %c0_9 = arith.constant 0 : index
    %8 = vector.load %arg4[%c0_8, %c0_9] : memref<2x4xf32, #tpu.memory_space<vmem>>, vector<2x4xf32>
    %9 = arith.addf %7, %8 : vector<2x4xf32>
    %c0_10 = arith.constant 0 : index
    %c0_11 = arith.constant 0 : index
    %10 = vector.load %arg5[%c0_10, %c0_11] : memref<2x4xf32, #tpu.memory_space<vmem>>, vector<2x4xf32>
    tpu.vector_store %arg5[%c0_10, %c0_11], %9 {strides = array<i32>} : memref<2x4xf32, #tpu.memory_space<vmem>>, vector<2x4xf32>,
    return
  }
}

</mosaic_0001>

<llo_original>
// kernel: multimodal_concat_forward.2
$region0: #{multimodal_concat_forward.2}
  #allocation0 [shape = 'u32[]', space=smem, size = 0x4, offset = 0x4, fixed_abs, tag = 'smem constant byte address 0x4 - core index']
  #allocation1 [shape = 'u32[72,128]{1,0:T(1,128)}', space=vmem, size = 0x9000, scoped, tag = 'internal scratch']
  %s0 = inlined_call_operand.vmem [shape: f32[1024,784], index: 0, kind: input, shape index: {}]
  %s1 = inlined_call_operand.vmem [shape: f32[784,49], index: 1, kind: input, shape index: {}]
  %s2 = inlined_call_operand.vmem [shape: f32[1024,49], index: 2, kind: output, shape index: {}]
  %s3 = sld [smem:[#allocation0]]
  $region41: #{multimodal_concat_forward.2} parent=0
    _
  %s5 = ssub.s32 1, %s3
  %s6 = scalar_select 0, %s5, %s3
  loop: start=0, step=1, limit=4
  $region2: #{multimodal_concat_forward.2} parent=0 // loop_pre_header
    _
  $region3: #{multimodal_concat_forward.2} parent=0 // loop_header
    %s8 = sphi 0, %s12
    %p9 = scmp.ge.s32.totalorder %s8, 4
    %s18 = sphi 0, %s20
    %s21 = sphi 0, %s18
    %s22 = sphi 0, %s21
    %s38 = sphi 0, %s22
    %s42 = sphi 0, %s42
    %s44 = sphi 0, %s42
    %s45 = sphi 0, %s44
    %s59 = sphi 0, %s45
    %s65 = sphi 0, %s67
    %s68 = sphi 0, %s65
    %s69 = sphi 0, %s68
    %s85 = sphi 0, %s69
  $region4: #{multimodal_concat_forward.2} parent=0 // loop_header_branch
    %11 = sbr.rel (%p9) target = $region8
  $region5: #{multimodal_concat_forward.2} parent=0 // loop_body
    %s13 = ssub.s32 %s8, 1
    %s14 = ssub.s32 %s8, 2
    %s15 = sadd.s32 %s8, 1
    %s16 = ssub.s32 %s8, %s15
    %p17 = scmp.eq.s32.totalorder %s16, 0
    %s19 = sadd.s32 %s18, 1
    %s20 = scalar_select %p17, %s18, %s19
    %p23 = pneg %p17
    %p24 = scmp.eq.s32.totalorder %s8, 1
    %p25 = por %p23, %p24
    %p26 = scmp.ne.s32.totalorder %s18, %s21
    %p27 = scmp.eq.s32.totalorder %s8, 0
    %p28 = por %p26, %p27
    %p29 = scmp.ne.s32.totalorder %s18, %s21
    %p30 = scmp.eq.s32.totalorder %s13, 1
    %p31 = por %p29, %p30
    %p32 = scmp.ne.s32.totalorder %s21, %s22
    %p33 = scmp.eq.s32.totalorder %s13, 0
    %p34 = por %p32, %p33
    %p35 = scmp.ne.s32.totalorder %s21, %s22
    %p36 = scmp.eq.s32.totalorder %s14, 1
    %p37 = por %p35, %p36
    %p39 = scmp.ne.s32.totalorder %s22, %s38
    %p40 = scmp.eq.s32.totalorder %s14, 0
    %p41 = por %p39, %p40
    %s43 = sadd.s32 %s42, 1
    %p46 = scmp.eq.s32.totalorder %s8, 1
    %p47 = scmp.ne.s32.totalorder %s42, %s44
    %p48 = scmp.eq.s32.totalorder %s8, 0
    %p49 = por %p47, %p48
    %p50 = scmp.ne.s32.totalorder %s42, %s44
    %p51 = scmp.eq.s32.totalorder %s13, 1
    %p52 = por %p50, %p51
    %p53 = scmp.ne.s32.totalorder %s44, %s45
    %p54 = scmp.eq.s32.totalorder %s13, 0
    %p55 = por %p53, %p54
    %p56 = scmp.ne.s32.totalorder %s44, %s45
    %p57 = scmp.eq.s32.totalorder %s14, 1
    %p58 = por %p56, %p57
    %p60 = scmp.ne.s32.totalorder %s45, %s59
    %p61 = scmp.eq.s32.totalorder %s14, 0
    %p62 = por %p60, %p61
    %s63 = ssub.s32 %s8, %s15
    %p64 = scmp.eq.s32.totalorder %s63, 0
    %s66 = sadd.s32 %s65, 1
    %s67 = scalar_select %p64, %s65, %s66
    %p70 = pneg %p64
    %p71 = scmp.eq.s32.totalorder %s8, 1
    %p72 = por %p70, %p71
    %p73 = scmp.ne.s32.totalorder %s65, %s68
    %p74 = scmp.eq.s32.totalorder %s8, 0
    %p75 = por %p73, %p74
    %p76 = scmp.ne.s32.totalorder %s65, %s68
    %p77 = scmp.eq.s32.totalorder %s13, 1
    %p78 = por %p76, %p77
    %p79 = scmp.ne.s32.totalorder %s68, %s69
    %p80 = scmp.eq.s32.totalorder %s13, 0
    %p81 = por %p79, %p80
    %p82 = scmp.ne.s32.totalorder %s68, %s69
    %p83 = scmp.eq.s32.totalorder %s14, 1
    %p84 = por %p82, %p83
    %p86 = scmp.ne.s32.totalorder %s69, %s85
    %p87 = scmp.eq.s32.totalorder %s14, 0
    %p88 = por %p86, %p87
    %p89 = scmp.le.s32.totalorder 1, %s8
    %p90 = scmp.lt.s32.totalorder %s8, 3
    %p91 = pnand %p89, %p90
    %p92 = pneg %p91
    // Predicated region
    $region9: #{multimodal_concat_forward.2} parent=5 // pred_check
      _
    $region10: #{multimodal_concat_forward.2} parent=5 // pred_check_branch
      %94 = sbr.rel (%p91) target = $region12
    $region11: #{multimodal_concat_forward.2} parent=5 // pred_region
      %s95 = ssub.s32 %s8, 1
      // Predicated region
      $region13: #{multimodal_concat_forward.2} parent=11 // pred_check
        %p96 = pneg %p55
      $region14: #{multimodal_concat_forward.2} parent=11 // pred_check_branch
        %98 = sbr.rel (%p96) target = $region16
      $region15: #{multimodal_concat_forward.2} parent=11 // pred_region
        _
      $region16: #{multimodal_concat_forward.2} parent=11 // pred_fallthru
        _
    $region12: #{multimodal_concat_forward.2} parent=5 // pred_fallthru
      _
    %p99 = scmp.lt.s32.totalorder %s8, 2
    // Predicated region
    $region17: #{multimodal_concat_forward.2} parent=5 // pred_check
      %p100 = pneg %p99
    $region18: #{multimodal_concat_forward.2} parent=5 // pred_check_branch
      %102 = sbr.rel (%p100) target = $region20
    $region19: #{multimodal_concat_forward.2} parent=5 // pred_region
      // Predicated region
      $region21: #{multimodal_concat_forward.2} parent=19 // pred_check
        %p103 = pneg %p28
      $region22: #{multimodal_concat_forward.2} parent=19 // pred_check_branch
        %105 = sbr.rel (%p103) target = $region24
      $region23: #{multimodal_concat_forward.2} parent=19 // pred_region
        %s106 = smul.u32 64, %s8
        %p107 = scmp.lt.s32.totalorder %s106, 127
        %s108 = scalar_select %p107, %s106, 127
        %s109 = smul.addr %s108, 7
        %s110 = smul.addr %s109, 8
        %s111 = scalar_lea.vmem %s0, %s110
        %s112 = smul.u32 64, %s8
      $region24: #{multimodal_concat_forward.2} parent=19 // pred_fallthru
        _
    $region20: #{multimodal_concat_forward.2} parent=5 // pred_fallthru
      _
    %p113 = scmp.le.s32.totalorder 1, %s8
    %p114 = scmp.lt.s32.totalorder %s8, 3
    %p115 = pnand %p113, %p114
    %p116 = pneg %p115
    // Predicated region
    $region25: #{multimodal_concat_forward.2} parent=5 // pred_check
      _
    $region26: #{multimodal_concat_forward.2} parent=5 // pred_check_branch
      %118 = sbr.rel (%p115) target = $region28
    $region27: #{multimodal_concat_forward.2} parent=5 // pred_region
      %s119 = ssub.s32 %s8, 1
      %s120 = smul.u32 64, %s13
      %p121 = scmp.lt.s32.totalorder %s120, 127
      %s122 = scalar_select %p121, %s120, 127
      %s123 = smul.addr %s122, 7
      %s124 = smul.addr %s123, 8
      %s125 = scalar_lea.vmem %s0, %s124
      %p126 = pneg %p34
      %p127 = pneg %p31
      %p128 = pneg %p55
      %p129 = pneg %p52
      %p130 = pneg %p81
      %p131 = pneg %p78
      %s132 = smul.u32 64, %s13
      %p133 = scmp.lt.s32.totalorder %s132, 127
      %s134 = scalar_select %p133, %s132, 127
      %s135 = smul.addr %s134, 8
      %s136 = scalar_lea.vmem %s2, %s135
      %s137 = smul.u32 64, %s13
      %p138 = scmp.lt.s32.totalorder %s137, 127
      %s139 = scalar_select %p138, %s137, 127
      %s140 = smul.addr %s139, 7
      %s141 = smul.addr %s140, 8
      %s142 = scalar_lea.vmem %s0, %s141
      %s143 = smul.u32 64, %s13
      %s144 = smul.u32 64, %s13
      %p145 = scmp.lt.s32.totalorder %s144, 127
      %s146 = scalar_select %p145, %s144, 127
      %s147 = smul.addr %s146, 8
      %s148 = scalar_lea.vmem %s2, %s147
      %s149 = smul.u32 64, %s13
      %v150 = vld [vmem:[%s142] sm:$0xff]
      %v151 = vld [vmem:[%s142 + $0x8] sm:$0xff]
      %v152 = vld [vmem:[%s142 + $0x10] sm:$0xff]
      %v153 = vld [vmem:[%s142 + $0x18] sm:$0xff]
      %v154 = vld [vmem:[%s142 + $0x20] sm:$0xff]
      %v155 = vld [vmem:[%s142 + $0x28] sm:$0xff]
      %v156 = vld [vmem:[%s142 + $0x30] sm:$0xff]
      %v157 = vld [vmem:[%s142 + $0x38] sm:$0xff]
      %v158 = vld [vmem:[%s142 + $0x40] sm:$0xff]
      %v159 = vld [vmem:[%s142 + $0x48] sm:$0xff]
      %v160 = vld [vmem:[%s142 + $0x50] sm:$0xff]
      %v161 = vld [vmem:[%s142 + $0x58] sm:$0xff]
      %v162 = vld [vmem:[%s142 + $0x60] sm:$0xff]
      %v163 = vld [vmem:[%s142 + $0x68] sm:$0xff]
      %v164 = vld [vmem:[%s142 + $0x70] sm:$0xff]
      %v165 = vld [vmem:[%s142 + $0x78] sm:$0xff]
      %v166 = vld [vmem:[%s142 + $0x80] sm:$0xff]
      %v167 = vld [vmem:[%s142 + $0x88] sm:$0xff]
      %v168 = vld [vmem:[%s142 + $0x90] sm:$0xff]
      %v169 = vld [vmem:[%s142 + $0x98] sm:$0xff]
      %v170 = vld [vmem:[%s142 + $0xa0] sm:$0xff]
      %v171 = vld [vmem:[%s142 + $0xa8] sm:$0xff]
      %v172 = vld [vmem:[%s142 + $0xb0] sm:$0xff]
      %v173 = vld [vmem:[%s142 + $0xb8] sm:$0xff]
      %v174 = vld [vmem:[%s142 + $0xc0] sm:$0xff]
      %v175 = vld [vmem:[%s142 + $0xc8] sm:$0xff]
      %v176 = vld [vmem:[%s142 + $0xd0] sm:$0xff]
      %v177 = vld [vmem:[%s142 + $0xd8] sm:$0xff]
      %v178 = vld [vmem:[%s142 + $0xe0] sm:$0xff]
      %v179 = vld [vmem:[%s142 + $0xe8] sm:$0xff]
      %v180 = vld [vmem:[%s142 + $0xf0] sm:$0xff]
      %v181 = vld [vmem:[%s142 + $0xf8] sm:$0xff]
      %v182 = vld [vmem:[%s142 + $0x100] sm:$0xff]
      %v183 = vld [vmem:[%s142 + $0x108] sm:$0xff]
      %v184 = vld [vmem:[%s142 + $0x110] sm:$0xff]
      %v185 = vld [vmem:[%s142 + $0x118] sm:$0xff]
      %v186 = vld [vmem:[%s142 + $0x120] sm:$0xff]
      %v187 = vld [vmem:[%s142 + $0x128] sm:$0xff]
      %v188 = vld [vmem:[%s142 + $0x130] sm:$0xff]
      %v189 = vld [vmem:[%s142 + $0x138] sm:$0xff]
      %v190 = vld [vmem:[%s142 + $0x140] sm:$0xff]
      %v191 = vld [vmem:[%s142 + $0x148] sm:$0xff]
      %v192 = vld [vmem:[%s142 + $0x150] sm:$0xff]
      %v193 = vld [vmem:[%s142 + $0x158] sm:$0xff]
      %v194 = vld [vmem:[%s142 + $0x160] sm:$0xff]
      %v195 = vld [vmem:[%s142 + $0x168] sm:$0xff]
      %v196 = vld [vmem:[%s142 + $0x170] sm:$0xff]
      %v197 = vld [vmem:[%s142 + $0x178] sm:$0xff]
      %v198 = vld [vmem:[%s142 + $0x180] sm:$0xff]
      %v199 = vld [vmem:[%s142 + $0x188] sm:$0xff]
      %v200 = vld [vmem:[%s142 + $0x190] sm:$0xff]
      %v201 = vld [vmem:[%s142 + $0x198] sm:$0xff]
      %v202 = vld [vmem:[%s142 + $0x1a0] sm:$0xff]
      %v203 = vld [vmem:[%s142 + $0x1a8] sm:$0xff]
      %v204 = vld [vmem:[%s142 + $0x1b0] sm:$0xff]
      %v205 = vld [vmem:[%s142 + $0x1b8] sm:$0xff]
      %v206 = vld [vmem:[%s142 + $0x1c0] sm:$0xff]
      %v207 = vld [vmem:[%s142 + $0x1c8] sm:$0xff]
      %v208 = vld [vmem:[%s142 + $0x1d0] sm:$0xff]
      %v209 = vld [vmem:[%s142 + $0x1d8] sm:$0xff]
      %v210 = vld [vmem:[%s142 + $0x1e0] sm:$0xff]
      %v211 = vld [vmem:[%s142 + $0x1e8] sm:$0xff]
      %v212 = vld [vmem:[%s142 + $0x1f0] sm:$0xff]
      %v213 = vld [vmem:[%s142 + $0x1f8] sm:$0xff]
      %v214 = vld [vmem:[%s142 + $0x200] sm:$0xff]
      %v215 = vld [vmem:[%s142 + $0x208] sm:$0xff]
      %v216 = vld [vmem:[%s142 + $0x210] sm:$0xff]
      %v217 = vld [vmem:[%s142 + $0x218] sm:$0xff]
      %v218 = vld [vmem:[%s142 + $0x220] sm:$0xff]
      %v219 = vld [vmem:[%s142 + $0x228] sm:$0xff]
      %v220 = vld [vmem:[%s142 + $0x230] sm:$0xff]
      %v221 = vld [vmem:[%s142 + $0x238] sm:$0xff]
      %v222 = vld [vmem:[%s142 + $0x240] sm:$0xff]
      %v223 = vld [vmem:[%s142 + $0x248] sm:$0xff]
      %v224 = vld [vmem:[%s142 + $0x250] sm:$0xff]
      %v225 = vld [vmem:[%s142 + $0x258] sm:$0xff]
      %v226 = vld [vmem:[%s142 + $0x260] sm:$0xff]
      %v227 = vld [vmem:[%s142 + $0x268] sm:$0xff]
      %v228 = vld [vmem:[%s142 + $0x270] sm:$0xff]
      %v229 = vld [vmem:[%s142 + $0x278] sm:$0xff]
      %v230 = vld [vmem:[%s142 + $0x280] sm:$0xff]
      %v231 = vld [vmem:[%s142 + $0x288] sm:$0xff]
      %v232 = vld [vmem:[%s142 + $0x290] sm:$0xff]
      %v233 = vld [vmem:[%s142 + $0x298] sm:$0xff]
      %v234 = vld [vmem:[%s142 + $0x2a0] sm:$0xff]
      %v235 = vld [vmem:[%s142 + $0x2a8] sm:$0xff]
      %v236 = vld [vmem:[%s142 + $0x2b0] sm:$0xff]
      %v237 = vld [vmem:[%s142 + $0x2b8] sm:$0xff]
      %v238 = vld [vmem:[%s142 + $0x2c0] sm:$0xff]
      %v239 = vld [vmem:[%s142 + $0x2c8] sm:$0xff]
      %v240 = vld [vmem:[%s142 + $0x2d0] sm:$0xff]
      %v241 = vld [vmem:[%s142 + $0x2d8] sm:$0xff]
      %v242 = vld [vmem:[%s142 + $0x2e0] sm:$0xff]
      %v243 = vld [vmem:[%s142 + $0x2e8] sm:$0xff]
      %v244 = vld [vmem:[%s142 + $0x2f0] sm:$0xff]
      %v245 = vld [vmem:[%s142 + $0x2f8] sm:$0xff]
      %v246 = vld [vmem:[%s142 + $0x300] sm:$0xff]
      %v247 = vld [vmem:[%s142 + $0x308] sm:$0xff]
      %v248 = vld [vmem:[%s142 + $0x310] sm:$0xff]
      %v249 = vld [vmem:[%s142 + $0x318] sm:$0xff]
      %v250 = vld [vmem:[%s142 + $0x320] sm:$0xff]
      %v251 = vld [vmem:[%s142 + $0x328] sm:$0xff]
      %v252 = vld [vmem:[%s142 + $0x330] sm:$0xff]
      %v253 = vld [vmem:[%s142 + $0x338] sm:$0xff]
      %v254 = vld [vmem:[%s142 + $0x340] sm:$0xff]
      %v255 = vld [vmem:[%s142 + $0x348] sm:$0xff]
      %v256 = vld [vmem:[%s142 + $0x350] sm:$0xff]
      %v257 = vld [vmem:[%s142 + $0x358] sm:$0xff]
      %v258 = vld [vmem:[%s142 + $0x360] sm:$0xff]
      %v259 = vld [vmem:[%s142 + $0x368] sm:$0xff]
      %v260 = vld [vmem:[%s142 + $0x370] sm:$0xff]
      %v261 = vld [vmem:[%s142 + $0x378] sm:$0xff]
      %v262 = vld [vmem:[%s142 + $0x380] sm:$0xff]
      %v263 = vld [vmem:[%s142 + $0x388] sm:$0xff]
      %v264 = vld [vmem:[%s142 + $0x390] sm:$0xff]
      %v265 = vld [vmem:[%s142 + $0x398] sm:$0xff]
      %v266 = vld [vmem:[%s142 + $0x3a0] sm:$0xff]
      %v267 = vld [vmem:[%s142 + $0x3a8] sm:$0xff]
      %v268 = vld [vmem:[%s142 + $0x3b0] sm:$0xff]
      %v269 = vld [vmem:[%s142 + $0x3b8] sm:$0xff]
      %v270 = vld [vmem:[%s142 + $0x3c0] sm:$0xff]
      %v271 = vld [vmem:[%s142 + $0x3c8] sm:$0xff]
      %v272 = vld [vmem:[%s142 + $0x3d0] sm:$0xff]
      %v273 = vld [vmem:[%s142 + $0x3d8] sm:$0xff]
      %v274 = vld [vmem:[%s142 + $0x3e0] sm:$0xff]
      %v275 = vld [vmem:[%s142 + $0x3e8] sm:$0xff]
      %v276 = vld [vmem:[%s142 + $0x3f0] sm:$0xff]
      %v277 = vld [vmem:[%s142 + $0x3f8] sm:$0xff]
      %v278 = vld [vmem:[%s142 + $0x400] sm:$0xff]
      %v279 = vld [vmem:[%s142 + $0x408] sm:$0xff]
      %v280 = vld [vmem:[%s142 + $0x410] sm:$0xff]
      %v281 = vld [vmem:[%s142 + $0x418] sm:$0xff]
      %v282 = vld [vmem:[%s142 + $0x420] sm:$0xff]
      %v283 = vld [vmem:[%s142 + $0x428] sm:$0xff]
      %v284 = vld [vmem:[%s142 + $0x430] sm:$0xff]
      %v285 = vld [vmem:[%s142 + $0x438] sm:$0xff]
      %v286 = vld [vmem:[%s142 + $0x440] sm:$0xff]
      %v287 = vld [vmem:[%s142 + $0x448] sm:$0xff]
      %v288 = vld [vmem:[%s142 + $0x450] sm:$0xff]
      %v289 = vld [vmem:[%s142 + $0x458] sm:$0xff]
      %v290 = vld [vmem:[%s142 + $0x460] sm:$0xff]
      %v291 = vld [vmem:[%s142 + $0x468] sm:$0xff]
      %v292 = vld [vmem:[%s142 + $0x470] sm:$0xff]
      %v293 = vld [vmem:[%s142 + $0x478] sm:$0xff]
      %v294 = vld [vmem:[%s142 + $0x480] sm:$0xff]
      %v295 = vld [vmem:[%s142 + $0x488] sm:$0xff]
      %v296 = vld [vmem:[%s142 + $0x490] sm:$0xff]
      %v297 = vld [vmem:[%s142 + $0x498] sm:$0xff]
      %v298 = vld [vmem:[%s142 + $0x4a0] sm:$0xff]
      %v299 = vld [vmem:[%s142 + $0x4a8] sm:$0xff]
      %v300 = vld [vmem:[%s142 + $0x4b0] sm:$0xff]
      %v301 = vld [vmem:[%s142 + $0x4b8] sm:$0xff]
      %v302 = vld [vmem:[%s142 + $0x4c0] sm:$0xff]
      %v303 = vld [vmem:[%s142 + $0x4c8] sm:$0xff]
      %v304 = vld [vmem:[%s142 + $0x4d0] sm:$0xff]
      %v305 = vld [vmem:[%s142 + $0x4d8] sm:$0xff]
      %v306 = vld [vmem:[%s142 + $0x4e0] sm:$0xff]
      %v307 = vld [vmem:[%s142 + $0x4e8] sm:$0xff]
      %v308 = vld [vmem:[%s142 + $0x4f0] sm:$0xff]
      %v309 = vld [vmem:[%s142 + $0x4f8] sm:$0xff]
      %v310 = vld [vmem:[%s142 + $0x500] sm:$0xff]
      %v311 = vld [vmem:[%s142 + $0x508] sm:$0xff]
      %v312 = vld [vmem:[%s142 + $0x510] sm:$0xff]
      %v313 = vld [vmem:[%s142 + $0x518] sm:$0xff]
      %v314 = vld [vmem:[%s142 + $0x520] sm:$0xff]
      %v315 = vld [vmem:[%s142 + $0x528] sm:$0xff]
      %v316 = vld [vmem:[%s142 + $0x530] sm:$0xff]
      %v317 = vld [vmem:[%s142 + $0x538] sm:$0xff]
      %v318 = vld [vmem:[%s142 + $0x540] sm:$0xff]
      %v319 = vld [vmem:[%s142 + $0x548] sm:$0xff]
      %v320 = vld [vmem:[%s142 + $0x550] sm:$0xff]
      %v321 = vld [vmem:[%s142 + $0x558] sm:$0xff]
      %v322 = vld [vmem:[%s142 + $0x560] sm:$0xff]
      %v323 = vld [vmem:[%s142 + $0x568] sm:$0xff]
      %v324 = vld [vmem:[%s142 + $0x570] sm:$0xff]
      %v325 = vld [vmem:[%s142 + $0x578] sm:$0xff]
      %v326 = vld [vmem:[%s142 + $0x580] sm:$0xff]
      %v327 = vld [vmem:[%s142 + $0x588] sm:$0xff]
      %v328 = vld [vmem:[%s142 + $0x590] sm:$0xff]
      %v329 = vld [vmem:[%s142 + $0x598] sm:$0xff]
      %v330 = vld [vmem:[%s142 + $0x5a0] sm:$0xff]
      %v331 = vld [vmem:[%s142 + $0x5a8] sm:$0xff]
      %v332 = vld [vmem:[%s142 + $0x5b0] sm:$0xff]
      %v333 = vld [vmem:[%s142 + $0x5b8] sm:$0xff]
      %v334 = vld [vmem:[%s142 + $0x5c0] sm:$0xff]
      %v335 = vld [vmem:[%s142 + $0x5c8] sm:$0xff]
      %v336 = vld [vmem:[%s142 + $0x5d0] sm:$0xff]
      %v337 = vld [vmem:[%s142 + $0x5d8] sm:$0xff]
      %v338 = vld [vmem:[%s142 + $0x5e0] sm:$0xff]
      %v339 = vld [vmem:[%s142 + $0x5e8] sm:$0xff]
      %v340 = vld [vmem:[%s142 + $0x5f0] sm:$0xff]
      %v341 = vld [vmem:[%s142 + $0x5f8] sm:$0xff]
      %v342 = vld [vmem:[%s142 + $0x600] sm:$0xff]
      %v343 = vld [vmem:[%s142 + $0x608] sm:$0xff]
      %v344 = vld [vmem:[%s142 + $0x610] sm:$0xff]
      %v345 = vld [vmem:[%s142 + $0x618] sm:$0xff]
      %v346 = vld [vmem:[%s142 + $0x620] sm:$0xff]
      %v347 = vld [vmem:[%s142 + $0x628] sm:$0xff]
      %v348 = vld [vmem:[%s142 + $0x630] sm:$0xff]
      %v349 = vld [vmem:[%s142 + $0x638] sm:$0xff]
      %v350 = vld [vmem:[%s142 + $0x640] sm:$0xff]
      %v351 = vld [vmem:[%s142 + $0x648] sm:$0xff]
      %v352 = vld [vmem:[%s142 + $0x650] sm:$0xff]
      %v353 = vld [vmem:[%s142 + $0x658] sm:$0xff]
      %v354 = vld [vmem:[%s142 + $0x660] sm:$0xff]
      %v355 = vld [vmem:[%s142 + $0x668] sm:$0xff]
      %v356 = vld [vmem:[%s142 + $0x670] sm:$0xff]
      %v357 = vld [vmem:[%s142 + $0x678] sm:$0xff]
      %v358 = vld [vmem:[%s142 + $0x680] sm:$0xff]
      %v359 = vld [vmem:[%s142 + $0x688] sm:$0xff]
      %v360 = vld [vmem:[%s142 + $0x690] sm:$0xff]
      %v361 = vld [vmem:[%s142 + $0x698] sm:$0xff]
      %v362 = vld [vmem:[%s142 + $0x6a0] sm:$0xff]
      %v363 = vld [vmem:[%s142 + $0x6a8] sm:$0xff]
      %v364 = vld [vmem:[%s142 + $0x6b0] sm:$0xff]
      %v365 = vld [vmem:[%s142 + $0x6b8] sm:$0xff]
      %v366 = vld [vmem:[%s142 + $0x6c0] sm:$0xff]
      %v367 = vld [vmem:[%s142 + $0x6c8] sm:$0xff]
      %v368 = vld [vmem:[%s142 + $0x6d0] sm:$0xff]
      %v369 = vld [vmem:[%s142 + $0x6d8] sm:$0xff]
      %v370 = vld [vmem:[%s142 + $0x6e0] sm:$0xff]
      %v371 = vld [vmem:[%s142 + $0x6e8] sm:$0xff]
      %v372 = vld [vmem:[%s142 + $0x6f0] sm:$0xff]
      %v373 = vld [vmem:[%s142 + $0x6f8] sm:$0xff]
      %v374 = vld [vmem:[%s142 + $0x700] sm:$0xff]
      %v375 = vld [vmem:[%s142 + $0x708] sm:$0xff]
      %v376 = vld [vmem:[%s142 + $0x710] sm:$0xff]
      %v377 = vld [vmem:[%s142 + $0x718] sm:$0xff]
      %v378 = vld [vmem:[%s142 + $0x720] sm:$0xff]
      %v379 = vld [vmem:[%s142 + $0x728] sm:$0xff]
      %v380 = vld [vmem:[%s142 + $0x730] sm:$0xff]
      %v381 = vld [vmem:[%s142 + $0x738] sm:$0xff]
      %v382 = vld [vmem:[%s142 + $0x740] sm:$0xff]
      %v383 = vld [vmem:[%s142 + $0x748] sm:$0xff]
      %v384 = vld [vmem:[%s142 + $0x750] sm:$0xff]
      %v385 = vld [vmem:[%s142 + $0x758] sm:$0xff]
      %v386 = vld [vmem:[%s142 + $0x760] sm:$0xff]
      %v387 = vld [vmem:[%s142 + $0x768] sm:$0xff]
      %v388 = vld [vmem:[%s142 + $0x770] sm:$0xff]
      %v389 = vld [vmem:[%s142 + $0x778] sm:$0xff]
      %v390 = vld [vmem:[%s142 + $0x780] sm:$0xff]
      %v391 = vld [vmem:[%s142 + $0x788] sm:$0xff]
      %v392 = vld [vmem:[%s142 + $0x790] sm:$0xff]
      %v393 = vld [vmem:[%s142 + $0x798] sm:$0xff]
      %v394 = vld [vmem:[%s142 + $0x7a0] sm:$0xff]
      %v395 = vld [vmem:[%s142 + $0x7a8] sm:$0xff]
      %v396 = vld [vmem:[%s142 + $0x7b0] sm:$0xff]
      %v397 = vld [vmem:[%s142 + $0x7b8] sm:$0xff]
      %v398 = vld [vmem:[%s142 + $0x7c0] sm:$0xff]
      %v399 = vld [vmem:[%s142 + $0x7c8] sm:$0xff]
      %v400 = vld [vmem:[%s142 + $0x7d0] sm:$0xff]
      %v401 = vld [vmem:[%s142 + $0x7d8] sm:$0xff]
      %v402 = vld [vmem:[%s142 + $0x7e0] sm:$0xff]
      %v403 = vld [vmem:[%s142 + $0x7e8] sm:$0xff]
      %v404 = vld [vmem:[%s142 + $0x7f0] sm:$0xff]
      %v405 = vld [vmem:[%s142 + $0x7f8] sm:$0xff]
      %v406 = vld [vmem:[%s142 + $0x800] sm:$0xff]
      %v407 = vld [vmem:[%s142 + $0x808] sm:$0xff]
      %v408 = vld [vmem:[%s142 + $0x810] sm:$0xff]
      %v409 = vld [vmem:[%s142 + $0x818] sm:$0xff]
      %v410 = vld [vmem:[%s142 + $0x820] sm:$0xff]
      %v411 = vld [vmem:[%s142 + $0x828] sm:$0xff]
      %v412 = vld [vmem:[%s142 + $0x830] sm:$0xff]
      %v413 = vld [vmem:[%s142 + $0x838] sm:$0xff]
      %v414 = vld [vmem:[%s142 + $0x840] sm:$0xff]
      %v415 = vld [vmem:[%s142 + $0x848] sm:$0xff]
      %v416 = vld [vmem:[%s142 + $0x850] sm:$0xff]
      %v417 = vld [vmem:[%s142 + $0x858] sm:$0xff]
      %v418 = vld [vmem:[%s142 + $0x860] sm:$0xff]
      %v419 = vld [vmem:[%s142 + $0x868] sm:$0xff]
      %v420 = vld [vmem:[%s142 + $0x870] sm:$0xff]
      %v421 = vld [vmem:[%s142 + $0x878] sm:$0xff]
      %v422 = vld [vmem:[%s142 + $0x880] sm:$0xff]
      %v423 = vld [vmem:[%s142 + $0x888] sm:$0xff]
      %v424 = vld [vmem:[%s142 + $0x890] sm:$0xff]
      %v425 = vld [vmem:[%s142 + $0x898] sm:$0xff]
      %v426 = vld [vmem:[%s142 + $0x8a0] sm:$0xff]
      %v427 = vld [vmem:[%s142 + $0x8a8] sm:$0xff]
      %v428 = vld [vmem:[%s142 + $0x8b0] sm:$0xff]
      %v429 = vld [vmem:[%s142 + $0x8b8] sm:$0xff]
      %v430 = vld [vmem:[%s142 + $0x8c0] sm:$0xff]
      %v431 = vld [vmem:[%s142 + $0x8c8] sm:$0xff]
      %v432 = vld [vmem:[%s142 + $0x8d0] sm:$0xff]
      %v433 = vld [vmem:[%s142 + $0x8d8] sm:$0xff]
      %v434 = vld [vmem:[%s142 + $0x8e0] sm:$0xff]
      %v435 = vld [vmem:[%s142 + $0x8e8] sm:$0xff]
      %v436 = vld [vmem:[%s142 + $0x8f0] sm:$0xff]
      %v437 = vld [vmem:[%s142 + $0x8f8] sm:$0xff]
      %v438 = vld [vmem:[%s142 + $0x900] sm:$0xff]
      %v439 = vld [vmem:[%s142 + $0x908] sm:$0xff]
      %v440 = vld [vmem:[%s142 + $0x910] sm:$0xff]
      %v441 = vld [vmem:[%s142 + $0x918] sm:$0xff]
      %v442 = vld [vmem:[%s142 + $0x920] sm:$0xff]
      %v443 = vld [vmem:[%s142 + $0x928] sm:$0xff]
      %v444 = vld [vmem:[%s142 + $0x930] sm:$0xff]
      %v445 = vld [vmem:[%s142 + $0x938] sm:$0xff]
      %v446 = vld [vmem:[%s142 + $0x940] sm:$0xff]
      %v447 = vld [vmem:[%s142 + $0x948] sm:$0xff]
      %v448 = vld [vmem:[%s142 + $0x950] sm:$0xff]
      %v449 = vld [vmem:[%s142 + $0x958] sm:$0xff]
      %v450 = vld [vmem:[%s142 + $0x960] sm:$0xff]
      %v451 = vld [vmem:[%s142 + $0x968] sm:$0xff]
      %v452 = vld [vmem:[%s142 + $0x970] sm:$0xff]
      %v453 = vld [vmem:[%s142 + $0x978] sm:$0xff]
      %v454 = vld [vmem:[%s142 + $0x980] sm:$0xff]
      %v455 = vld [vmem:[%s142 + $0x988] sm:$0xff]
      %v456 = vld [vmem:[%s142 + $0x990] sm:$0xff]
      %v457 = vld [vmem:[%s142 + $0x998] sm:$0xff]
      %v458 = vld [vmem:[%s142 + $0x9a0] sm:$0xff]
      %v459 = vld [vmem:[%s142 + $0x9a8] sm:$0xff]
      %v460 = vld [vmem:[%s142 + $0x9b0] sm:$0xff]
      %v461 = vld [vmem:[%s142 + $0x9b8] sm:$0xff]
      %v462 = vld [vmem:[%s142 + $0x9c0] sm:$0xff]
      %v463 = vld [vmem:[%s142 + $0x9c8] sm:$0xff]
      %v464 = vld [vmem:[%s142 + $0x9d0] sm:$0xff]
      %v465 = vld [vmem:[%s142 + $0x9d8] sm:$0xff]
      %v466 = vld [vmem:[%s142 + $0x9e0] sm:$0xff]
      %v467 = vld [vmem:[%s142 + $0x9e8] sm:$0xff]
      %v468 = vld [vmem:[%s142 + $0x9f0] sm:$0xff]
      %v469 = vld [vmem:[%s142 + $0x9f8] sm:$0xff]
      %v470 = vld [vmem:[%s142 + $0xa00] sm:$0xff]
      %v471 = vld [vmem:[%s142 + $0xa08] sm:$0xff]
      %v472 = vld [vmem:[%s142 + $0xa10] sm:$0xff]
      %v473 = vld [vmem:[%s142 + $0xa18] sm:$0xff]
      %v474 = vld [vmem:[%s142 + $0xa20] sm:$0xff]
      %v475 = vld [vmem:[%s142 + $0xa28] sm:$0xff]
      %v476 = vld [vmem:[%s142 + $0xa30] sm:$0xff]
      %v477 = vld [vmem:[%s142 + $0xa38] sm:$0xff]
      %v478 = vld [vmem:[%s142 + $0xa40] sm:$0xff]
      %v479 = vld [vmem:[%s142 + $0xa48] sm:$0xff]
      %v480 = vld [vmem:[%s142 + $0xa50] sm:$0xff]
      %v481 = vld [vmem:[%s142 + $0xa58] sm:$0xff]
      %v482 = vld [vmem:[%s142 + $0xa60] sm:$0xff]
      %v483 = vld [vmem:[%s142 + $0xa68] sm:$0xff]
      %v484 = vld [vmem:[%s142 + $0xa70] sm:$0xff]
      %v485 = vld [vmem:[%s142 + $0xa78] sm:$0xff]
      %v486 = vld [vmem:[%s142 + $0xa80] sm:$0xff]
      %v487 = vld [vmem:[%s142 + $0xa88] sm:$0xff]
      %v488 = vld [vmem:[%s142 + $0xa90] sm:$0xff]
      %v489 = vld [vmem:[%s142 + $0xa98] sm:$0xff]
      %v490 = vld [vmem:[%s142 + $0xaa0] sm:$0xff]
      %v491 = vld [vmem:[%s142 + $0xaa8] sm:$0xff]
      %v492 = vld [vmem:[%s142 + $0xab0] sm:$0xff]
      %v493 = vld [vmem:[%s142 + $0xab8] sm:$0xff]
      %v494 = vld [vmem:[%s142 + $0xac0] sm:$0xff]
      %v495 = vld [vmem:[%s142 + $0xac8] sm:$0xff]
      %v496 = vld [vmem:[%s142 + $0xad0] sm:$0xff]
      %v497 = vld [vmem:[%s142 + $0xad8] sm:$0xff]
      %v498 = vld [vmem:[%s142 + $0xae0] sm:$0xff]
      %v499 = vld [vmem:[%s142 + $0xae8] sm:$0xff]
      %v500 = vld [vmem:[%s142 + $0xaf0] sm:$0xff]
      %v501 = vld [vmem:[%s142 + $0xaf8] sm:$0xff]
      %v502 = vld [vmem:[%s142 + $0xb00] sm:$0xff]
      %v503 = vld [vmem:[%s142 + $0xb08] sm:$0xff]
      %v504 = vld [vmem:[%s142 + $0xb10] sm:$0xff]
      %v505 = vld [vmem:[%s142 + $0xb18] sm:$0xff]
      %v506 = vld [vmem:[%s142 + $0xb20] sm:$0xff]
      %v507 = vld [vmem:[%s142 + $0xb28] sm:$0xff]
      %v508 = vld [vmem:[%s142 + $0xb30] sm:$0xff]
      %v509 = vld [vmem:[%s142 + $0xb38] sm:$0xff]
      %v510 = vld [vmem:[%s142 + $0xb40] sm:$0xff]
      %v511 = vld [vmem:[%s142 + $0xb48] sm:$0xff]
      %v512 = vld [vmem:[%s142 + $0xb50] sm:$0xff]
      %v513 = vld [vmem:[%s142 + $0xb58] sm:$0xff]
      %v514 = vld [vmem:[%s142 + $0xb60] sm:$0xff]
      %v515 = vld [vmem:[%s142 + $0xb68] sm:$0xff]
      %v516 = vld [vmem:[%s142 + $0xb70] sm:$0xff]
      %v517 = vld [vmem:[%s142 + $0xb78] sm:$0xff]
      %v518 = vld [vmem:[%s142 + $0xb80] sm:$0xff]
      %v519 = vld [vmem:[%s142 + $0xb88] sm:$0xff]
      %v520 = vld [vmem:[%s142 + $0xb90] sm:$0xff]
      %v521 = vld [vmem:[%s142 + $0xb98] sm:$0xff]
      %v522 = vld [vmem:[%s142 + $0xba0] sm:$0xff]
      %v523 = vld [vmem:[%s142 + $0xba8] sm:$0xff]
      %v524 = vld [vmem:[%s142 + $0xbb0] sm:$0xff]
      %v525 = vld [vmem:[%s142 + $0xbb8] sm:$0xff]
      %v526 = vld [vmem:[%s142 + $0xbc0] sm:$0xff]
      %v527 = vld [vmem:[%s142 + $0xbc8] sm:$0xff]
      %v528 = vld [vmem:[%s142 + $0xbd0] sm:$0xff]
      %v529 = vld [vmem:[%s142 + $0xbd8] sm:$0xff]
      %v530 = vld [vmem:[%s142 + $0xbe0] sm:$0xff]
      %v531 = vld [vmem:[%s142 + $0xbe8] sm:$0xff]
      %v532 = vld [vmem:[%s142 + $0xbf0] sm:$0xff]
      %v533 = vld [vmem:[%s142 + $0xbf8] sm:$0xff]
      %v534 = vld [vmem:[%s142 + $0xc00] sm:$0xff]
      %v535 = vld [vmem:[%s142 + $0xc08] sm:$0xff]
      %v536 = vld [vmem:[%s142 + $0xc10] sm:$0xff]
      %v537 = vld [vmem:[%s142 + $0xc18] sm:$0xff]
      %v538 = vld [vmem:[%s142 + $0xc20] sm:$0xff]
      %v539 = vld [vmem:[%s142 + $0xc28] sm:$0xff]
      %v540 = vld [vmem:[%s142 + $0xc30] sm:$0xff]
      %v541 = vld [vmem:[%s142 + $0xc38] sm:$0xff]
      %v542 = vld [vmem:[%s142 + $0xc40] sm:$0xff]
      %v543 = vld [vmem:[%s142 + $0xc48] sm:$0xff]
      %v544 = vld [vmem:[%s142 + $0xc50] sm:$0xff]
      %v545 = vld [vmem:[%s142 + $0xc58] sm:$0xff]
      %v546 = vld [vmem:[%s142 + $0xc60] sm:$0xff]
      %v547 = vld [vmem:[%s142 + $0xc68] sm:$0xff]
      %v548 = vld [vmem:[%s142 + $0xc70] sm:$0xff]
      %v549 = vld [vmem:[%s142 + $0xc78] sm:$0xff]
      %v550 = vld [vmem:[%s142 + $0xc80] sm:$0xff]
      %v551 = vld [vmem:[%s142 + $0xc88] sm:$0xff]
      %v552 = vld [vmem:[%s142 + $0xc90] sm:$0xff]
      %v553 = vld [vmem:[%s142 + $0xc98] sm:$0xff]
      %v554 = vld [vmem:[%s142 + $0xca0] sm:$0xff]
      %v555 = vld [vmem:[%s142 + $0xca8] sm:$0xff]
      %v556 = vld [vmem:[%s142 + $0xcb0] sm:$0xff]
      %v557 = vld [vmem:[%s142 + $0xcb8] sm:$0xff]
      %v558 = vld [vmem:[%s142 + $0xcc0] sm:$0xff]
      %v559 = vld [vmem:[%s142 + $0xcc8] sm:$0xff]
      %v560 = vld [vmem:[%s142 + $0xcd0] sm:$0xff]
      %v561 = vld [vmem:[%s142 + $0xcd8] sm:$0xff]
      %v562 = vld [vmem:[%s142 + $0xce0] sm:$0xff]
      %v563 = vld [vmem:[%s142 + $0xce8] sm:$0xff]
      %v564 = vld [vmem:[%s142 + $0xcf0] sm:$0xff]
      %v565 = vld [vmem:[%s142 + $0xcf8] sm:$0xff]
      %v566 = vld [vmem:[%s142 + $0xd00] sm:$0xff]
      %v567 = vld [vmem:[%s142 + $0xd08] sm:$0xff]
      %v568 = vld [vmem:[%s142 + $0xd10] sm:$0xff]
      %v569 = vld [vmem:[%s142 + $0xd18] sm:$0xff]
      %v570 = vld [vmem:[%s142 + $0xd20] sm:$0xff]
      %v571 = vld [vmem:[%s142 + $0xd28] sm:$0xff]
      %v572 = vld [vmem:[%s142 + $0xd30] sm:$0xff]
      %v573 = vld [vmem:[%s142 + $0xd38] sm:$0xff]
      %v574 = vld [vmem:[%s142 + $0xd40] sm:$0xff]
      %v575 = vld [vmem:[%s142 + $0xd48] sm:$0xff]
      %v576 = vld [vmem:[%s142 + $0xd50] sm:$0xff]
      %v577 = vld [vmem:[%s142 + $0xd58] sm:$0xff]
      %v578 = vld [vmem:[%s142 + $0xd60] sm:$0xff]
      %v579 = vld [vmem:[%s142 + $0xd68] sm:$0xff]
      %v580 = vld [vmem:[%s142 + $0xd70] sm:$0xff]
      %v581 = vld [vmem:[%s142 + $0xd78] sm:$0xff]
      %v582 = vld [vmem:[%s142 + $0xd80] sm:$0xff]
      %v583 = vld [vmem:[%s142 + $0xd88] sm:$0xff]
      %v584 = vld [vmem:[%s142 + $0xd90] sm:$0xff]
      %v585 = vld [vmem:[%s142 + $0xd98] sm:$0xff]
      %v586 = vld [vmem:[%s142 + $0xda0] sm:$0xff]
      %v587 = vld [vmem:[%s142 + $0xda8] sm:$0xff]
      %v588 = vld [vmem:[%s142 + $0xdb0] sm:$0xff]
      %v589 = vld [vmem:[%s142 + $0xdb8] sm:$0xff]
      %v590 = vld [vmem:[%s142 + $0xdc0] sm:$0xff]
      %v591 = vld [vmem:[%s142 + $0xdc8] sm:$0xff]
      %v592 = vld [vmem:[%s142 + $0xdd0] sm:$0xff]
      %v593 = vld [vmem:[%s142 + $0xdd8] sm:$0xff]
      %v594 = vld [vmem:[%s142 + $0xde0] sm:$0xff]
      %v595 = vld [vmem:[%s142 + $0xde8] sm:$0xff]
      %v596 = vld [vmem:[%s142 + $0xdf0] sm:$0xff]
      %v597 = vld [vmem:[%s142 + $0xdf8] sm:$0xff]
      %v598 = vld [vmem:[%s1] sm:$0xff]
      %v599 = vld [vmem:[%s1 + $0x8] sm:$0xff]
      %v600 = vld [vmem:[%s1 + $0x10] sm:$0xff]
      %v601 = vld [vmem:[%s1 + $0x18] sm:$0xff]
      %v602 = vld [vmem:[%s1 + $0x20] sm:$0xff]
      %v603 = vld [vmem:[%s1 + $0x28] sm:$0xff]
      %v604 = vld [vmem:[%s1 + $0x30] sm:$0xff]
      %v605 = vld [vmem:[%s1 + $0x38] sm:$0xff]
      %v606 = vld [vmem:[%s1 + $0x40] sm:$0xff]
      %v607 = vld [vmem:[%s1 + $0x48] sm:$0xff]
      %v608 = vld [vmem:[%s1 + $0x50] sm:$0xff]
      %v609 = vld [vmem:[%s1 + $0x58] sm:$0xff]
      %v610 = vld [vmem:[%s1 + $0x60] sm:$0xff]
      %v611 = vld [vmem:[%s1 + $0x68] sm:$0xff]
      %v612 = vld [vmem:[%s1 + $0x70] sm:$0xff]
      %v613 = vld [vmem:[%s1 + $0x78] sm:$0xff]
      %v614 = vld [vmem:[%s1 + $0x80] sm:$0xff]
      %v615 = vld [vmem:[%s1 + $0x88] sm:$0xff]
      %v616 = vld [vmem:[%s1 + $0x90] sm:$0xff]
      %v617 = vld [vmem:[%s1 + $0x98] sm:$0xff]
      %v618 = vld [vmem:[%s1 + $0xa0] sm:$0xff]
      %v619 = vld [vmem:[%s1 + $0xa8] sm:$0xff]
      %v620 = vld [vmem:[%s1 + $0xb0] sm:$0xff]
      %v621 = vld [vmem:[%s1 + $0xb8] sm:$0xff]
      %v622 = vld [vmem:[%s1 + $0xc0] sm:$0xff]
      %v623 = vld [vmem:[%s1 + $0xc8] sm:$0xff]
      %v624 = vld [vmem:[%s1 + $0xd0] sm:$0xff]
      %v625 = vld [vmem:[%s1 + $0xd8] sm:$0xff]
      %v626 = vld [vmem:[%s1 + $0xe0] sm:$0xff]
      %v627 = vld [vmem:[%s1 + $0xe8] sm:$0xff]
      %v628 = vld [vmem:[%s1 + $0xf0] sm:$0xff]
      %v629 = vld [vmem:[%s1 + $0xf8] sm:$0xff]
      %v630 = vld [vmem:[%s1 + $0x100] sm:$0xff]
      %v631 = vld [vmem:[%s1 + $0x108] sm:$0xff]
      %v632 = vld [vmem:[%s1 + $0x110] sm:$0xff]
      %v633 = vld [vmem:[%s1 + $0x118] sm:$0xff]
      %v634 = vld [vmem:[%s1 + $0x120] sm:$0xff]
      %v635 = vld [vmem:[%s1 + $0x128] sm:$0xff]
      %v636 = vld [vmem:[%s1 + $0x130] sm:$0xff]
      %v637 = vld [vmem:[%s1 + $0x138] sm:$0xff]
      %v638 = vld [vmem:[%s1 + $0x140] sm:$0xff]
      %v639 = vld [vmem:[%s1 + $0x148] sm:$0xff]
      %v640 = vld [vmem:[%s1 + $0x150] sm:$0xff]
      %v641 = vld [vmem:[%s1 + $0x158] sm:$0xff]
      %v642 = vld [vmem:[%s1 + $0x160] sm:$0xff]
      %v643 = vld [vmem:[%s1 + $0x168] sm:$0xff]
      %v644 = vld [vmem:[%s1 + $0x170] sm:$0xff]
      %v645 = vld [vmem:[%s1 + $0x178] sm:$0xff]
      %v646 = vld [vmem:[%s1 + $0x180] sm:$0xff]
      %v647 = vld [vmem:[%s1 + $0x188] sm:$0xff]
      %v648 = vld [vmem:[%s1 + $0x190] sm:$0xff]
      %v649 = vld [vmem:[%s1 + $0x198] sm:$0xff]
      %v650 = vld [vmem:[%s1 + $0x1a0] sm:$0xff]
      %v651 = vld [vmem:[%s1 + $0x1a8] sm:$0xff]
      %v652 = vld [vmem:[%s1 + $0x1b0] sm:$0xff]
      %v653 = vld [vmem:[%s1 + $0x1b8] sm:$0xff]
      %v654 = vld [vmem:[%s1 + $0x1c0] sm:$0xff]
      %v655 = vld [vmem:[%s1 + $0x1c8] sm:$0xff]
      %v656 = vld [vmem:[%s1 + $0x1d0] sm:$0xff]
      %v657 = vld [vmem:[%s1 + $0x1d8] sm:$0xff]
      %v658 = vld [vmem:[%s1 + $0x1e0] sm:$0xff]
      %v659 = vld [vmem:[%s1 + $0x1e8] sm:$0xff]
      %v660 = vld [vmem:[%s1 + $0x1f0] sm:$0xff]
      %v661 = vld [vmem:[%s1 + $0x1f8] sm:$0xff]
      %v662 = vld [vmem:[%s1 + $0x200] sm:$0xff]
      %v663 = vld [vmem:[%s1 + $0x208] sm:$0xff]
      %v664 = vld [vmem:[%s1 + $0x210] sm:$0xff]
      %v665 = vld [vmem:[%s1 + $0x218] sm:$0xff]
      %v666 = vld [vmem:[%s1 + $0x220] sm:$0xff]
      %v667 = vld [vmem:[%s1 + $0x228] sm:$0xff]
      %v668 = vld [vmem:[%s1 + $0x230] sm:$0xff]
      %v669 = vld [vmem:[%s1 + $0x238] sm:$0xff]
      %v670 = vld [vmem:[%s1 + $0x240] sm:$0xff]
      %v671 = vld [vmem:[%s1 + $0x248] sm:$0xff]
      %v672 = vld [vmem:[%s1 + $0x250] sm:$0xff]
      %v673 = vld [vmem:[%s1 + $0x258] sm:$0xff]
      %v674 = vld [vmem:[%s1 + $0x260] sm:$0xff]
      %v675 = vld [vmem:[%s1 + $0x268] sm:$0xff]
      %v676 = vld [vmem:[%s1 + $0x270] sm:$0xff]
      %v677 = vld [vmem:[%s1 + $0x278] sm:$0xff]
      %v678 = vld [vmem:[%s1 + $0x280] sm:$0xff]
      %v679 = vld [vmem:[%s1 + $0x288] sm:$0xff]
      %v680 = vld [vmem:[%s1 + $0x290] sm:$0xff]
      %v681 = vld [vmem:[%s1 + $0x298] sm:$0xff]
      %v682 = vld [vmem:[%s1 + $0x2a0] sm:$0xff]
      %v683 = vld [vmem:[%s1 + $0x2a8] sm:$0xff]
      %v684 = vld [vmem:[%s1 + $0x2b0] sm:$0xff]
      %v685 = vld [vmem:[%s1 + $0x2b8] sm:$0xff]
      %v686 = vld [vmem:[%s1 + $0x2c0] sm:$0xff]
      %v687 = vld [vmem:[%s1 + $0x2c8] sm:$0xff]
      %v688 = vld [vmem:[%s1 + $0x2d0] sm:$0xff]
      %v689 = vld [vmem:[%s1 + $0x2d8] sm:$0xff]
      %v690 = vld [vmem:[%s1 + $0x2e0] sm:$0xff]
      %v691 = vld [vmem:[%s1 + $0x2e8] sm:$0xff]
      %v692 = vld [vmem:[%s1 + $0x2f0] sm:$0xff]
      %v693 = vld [vmem:[%s1 + $0x2f8] sm:$0xff]
      %v694 = vld [vmem:[%s1 + $0x300] sm:$0xff]
      %v695 = vld [vmem:[%s1 + $0x308] sm:$0xff]
      %vm696 = vcmask 130048
      %v698 = vsel %vm696, %v156, 0
      %v701 = vsel %vm696, %v163, 0
      %v704 = vsel %vm696, %v170, 0
      %v707 = vsel %vm696, %v177, 0
      %v710 = vsel %vm696, %v184, 0
      %v713 = vsel %vm696, %v191, 0
      %v716 = vsel %vm696, %v198, 0
      %v719 = vsel %vm696, %v205, 0
      %v722 = vsel %vm696, %v212, 0
      %v725 = vsel %vm696, %v219, 0
      %v728 = vsel %vm696, %v226, 0
      %v731 = vsel %vm696, %v233, 0
      %v734 = vsel %vm696, %v240, 0
      %v737 = vsel %vm696, %v247, 0
      %v740 = vsel %vm696, %v254, 0
      %v743 = vsel %vm696, %v261, 0
      %v746 = vsel %vm696, %v268, 0
      %v749 = vsel %vm696, %v275, 0
      %v752 = vsel %vm696, %v282, 0
      %v755 = vsel %vm696, %v289, 0
      %v758 = vsel %vm696, %v296, 0
      %v761 = vsel %vm696, %v303, 0
      %v764 = vsel %vm696, %v310, 0
      %v767 = vsel %vm696, %v317, 0
      %v770 = vsel %vm696, %v324, 0
      %v773 = vsel %vm696, %v331, 0
      %v776 = vsel %vm696, %v338, 0
      %v779 = vsel %vm696, %v345, 0
      %v782 = vsel %vm696, %v352, 0
      %v785 = vsel %vm696, %v359, 0
      %v788 = vsel %vm696, %v366, 0
      %v791 = vsel %vm696, %v373, 0
      %v794 = vsel %vm696, %v380, 0
      %v797 = vsel %vm696, %v387, 0
      %v800 = vsel %vm696, %v394, 0
      %v803 = vsel %vm696, %v401, 0
      %v806 = vsel %vm696, %v408, 0
      %v809 = vsel %vm696, %v415, 0
      %v812 = vsel %vm696, %v422, 0
      %v815 = vsel %vm696, %v429, 0
      %v818 = vsel %vm696, %v436, 0
      %v821 = vsel %vm696, %v443, 0
      %v824 = vsel %vm696, %v450, 0
      %v827 = vsel %vm696, %v457, 0
      %v830 = vsel %vm696, %v464, 0
      %v833 = vsel %vm696, %v471, 0
      %v836 = vsel %vm696, %v478, 0
      %v839 = vsel %vm696, %v485, 0
      %v842 = vsel %vm696, %v492, 0
      %v845 = vsel %vm696, %v499, 0
      %v848 = vsel %vm696, %v506, 0
      %v851 = vsel %vm696, %v513, 0
      %v854 = vsel %vm696, %v520, 0
      %v857 = vsel %vm696, %v527, 0
      %v860 = vsel %vm696, %v534, 0
      %v863 = vsel %vm696, %v541, 0
      %v866 = vsel %vm696, %v548, 0
      %v869 = vsel %vm696, %v555, 0
      %v872 = vsel %vm696, %v562, 0
      %v875 = vsel %vm696, %v569, 0
      %v878 = vsel %vm696, %v576, 0
      %v881 = vsel %vm696, %v583, 0
      %v884 = vsel %vm696, %v590, 0
      %v887 = vsel %vm696, %v597, 0
      %889 = vmatpush.msra.mxu0 %v613
      %890 = vmatpush.msra.mxu0 %v612
      %891 = vmatpush.msra.mxu0 %v611
      %892 = vmatpush.msra.mxu0 %v610
      %893 = vmatpush.msra.mxu0 %v609
      %894 = vmatpush.msra.mxu0 %v608
      %895 = vmatpush.msra.mxu0 %v607
      %896 = vmatpush.msra.mxu0 %v606
      %897 = vmatpush.msra.mxu0 %v605
      %898 = vmatpush.msra.mxu0 %v604
      %899 = vmatpush.msra.mxu0 %v603
      %900 = vmatpush.msra.mxu0 %v602
      %901 = vmatpush.msra.mxu0 %v601
      %902 = vmatpush.msra.mxu0 %v600
      %903 = vmatpush.msra.mxu0 %v599
      %904 = vmatpush.msra.mxu0 %v598
      %905 = vmatmul.f32.gmra.mxu0 %v150
      %v906 = vpop.f32.mrf.mxu0
      %v907 = vadd.f32 0.0, %v906
      %908 = vmatmul.f32.gmra.mxu0 %v157
      %v909 = vpop.f32.mrf.mxu0
      %v910 = vadd.f32 0.0, %v909
      %911 = vmatmul.f32.gmra.mxu0 %v164
      %v912 = vpop.f32.mrf.mxu0
      %v913 = vadd.f32 0.0, %v912
      %914 = vmatmul.f32.gmra.mxu0 %v171
      %v915 = vpop.f32.mrf.mxu0
      %v916 = vadd.f32 0.0, %v915
      %917 = vmatmul.f32.gmra.mxu0 %v178
      %v918 = vpop.f32.mrf.mxu0
      %v919 = vadd.f32 0.0, %v918
      %920 = vmatmul.f32.gmra.mxu0 %v185
      %v921 = vpop.f32.mrf.mxu0
      %v922 = vadd.f32 0.0, %v921
      %923 = vmatmul.f32.gmra.mxu0 %v192
      %v924 = vpop.f32.mrf.mxu0
      %v925 = vadd.f32 0.0, %v924
      %926 = vmatmul.f32.gmra.mxu0 %v199
      %v927 = vpop.f32.mrf.mxu0
      %v928 = vadd.f32 0.0, %v927
      %929 = vmatmul.f32.gmra.mxu0 %v206
      %v930 = vpop.f32.mrf.mxu0
      %v931 = vadd.f32 0.0, %v930
      %932 = vmatmul.f32.gmra.mxu0 %v213
      %v933 = vpop.f32.mrf.mxu0
      %v934 = vadd.f32 0.0, %v933
      %935 = vmatmul.f32.gmra.mxu0 %v220
      %v936 = vpop.f32.mrf.mxu0
      %v937 = vadd.f32 0.0, %v936
      %938 = vmatmul.f32.gmra.mxu0 %v227
      %v939 = vpop.f32.mrf.mxu0
      %v940 = vadd.f32 0.0, %v939
      %941 = vmatmul.f32.gmra.mxu0 %v234
      %v942 = vpop.f32.mrf.mxu0
      %v943 = vadd.f32 0.0, %v942
      %944 = vmatmul.f32.gmra.mxu0 %v241
      %v945 = vpop.f32.mrf.mxu0
      %v946 = vadd.f32 0.0, %v945
      %947 = vmatmul.f32.gmra.mxu0 %v248
      %v948 = vpop.f32.mrf.mxu0
      %v949 = vadd.f32 0.0, %v948
      %950 = vmatmul.f32.gmra.mxu0 %v255
      %v951 = vpop.f32.mrf.mxu0
      %v952 = vadd.f32 0.0, %v951
      %953 = vmatmul.f32.gmra.mxu0 %v262
      %v954 = vpop.f32.mrf.mxu0
      %v955 = vadd.f32 0.0, %v954
      %956 = vmatmul.f32.gmra.mxu0 %v269
      %v957 = vpop.f32.mrf.mxu0
      %v958 = vadd.f32 0.0, %v957
      %959 = vmatmul.f32.gmra.mxu0 %v276
      %v960 = vpop.f32.mrf.mxu0
      %v961 = vadd.f32 0.0, %v960
      %962 = vmatmul.f32.gmra.mxu0 %v283
      %v963 = vpop.f32.mrf.mxu0
      %v964 = vadd.f32 0.0, %v963
      %965 = vmatmul.f32.gmra.mxu0 %v290
      %v966 = vpop.f32.mrf.mxu0
      %v967 = vadd.f32 0.0, %v966
      %968 = vmatmul.f32.gmra.mxu0 %v297
      %v969 = vpop.f32.mrf.mxu0
      %v970 = vadd.f32 0.0, %v969
      %971 = vmatmul.f32.gmra.mxu0 %v304
      %v972 = vpop.f32.mrf.mxu0
      %v973 = vadd.f32 0.0, %v972
      %974 = vmatmul.f32.gmra.mxu0 %v311
      %v975 = vpop.f32.mrf.mxu0
      %v976 = vadd.f32 0.0, %v975
      %977 = vmatmul.f32.gmra.mxu0 %v318
      %v978 = vpop.f32.mrf.mxu0
      %v979 = vadd.f32 0.0, %v978
      %980 = vmatmul.f32.gmra.mxu0 %v325
      %v981 = vpop.f32.mrf.mxu0
      %v982 = vadd.f32 0.0, %v981
      %983 = vmatmul.f32.gmra.mxu0 %v332
      %v984 = vpop.f32.mrf.mxu0
      %v985 = vadd.f32 0.0, %v984
      %986 = vmatmul.f32.gmra.mxu0 %v339
      %v987 = vpop.f32.mrf.mxu0
      %v988 = vadd.f32 0.0, %v987
      %989 = vmatmul.f32.gmra.mxu0 %v346
      %v990 = vpop.f32.mrf.mxu0
      %v991 = vadd.f32 0.0, %v990
      %992 = vmatmul.f32.gmra.mxu0 %v353
      %v993 = vpop.f32.mrf.mxu0
      %v994 = vadd.f32 0.0, %v993
      %995 = vmatmul.f32.gmra.mxu0 %v360
      %v996 = vpop.f32.mrf.mxu0
      %v997 = vadd.f32 0.0, %v996
      %998 = vmatmul.f32.gmra.mxu0 %v367
      %v999 = vpop.f32.mrf.mxu0
      %v1000 = vadd.f32 0.0, %v999
      %1001 = vmatmul.f32.gmra.mxu0 %v374
      %v1002 = vpop.f32.mrf.mxu0
      %v1003 = vadd.f32 0.0, %v1002
      %1004 = vmatmul.f32.gmra.mxu0 %v381
      %v1005 = vpop.f32.mrf.mxu0
      %v1006 = vadd.f32 0.0, %v1005
      %1007 = vmatmul.f32.gmra.mxu0 %v388
      %v1008 = vpop.f32.mrf.mxu0
      %v1009 = vadd.f32 0.0, %v1008
      %1010 = vmatmul.f32.gmra.mxu0 %v395
      %v1011 = vpop.f32.mrf.mxu0
      %v1012 = vadd.f32 0.0, %v1011
      %1013 = vmatmul.f32.gmra.mxu0 %v402
      %v1014 = vpop.f32.mrf.mxu0
      %v1015 = vadd.f32 0.0, %v1014
      %1016 = vmatmul.f32.gmra.mxu0 %v409
      %v1017 = vpop.f32.mrf.mxu0
      %v1018 = vadd.f32 0.0, %v1017
      %1019 = vmatmul.f32.gmra.mxu0 %v416
      %v1020 = vpop.f32.mrf.mxu0
      %v1021 = vadd.f32 0.0, %v1020
      %1022 = vmatmul.f32.gmra.mxu0 %v423
      %v1023 = vpop.f32.mrf.mxu0
      %v1024 = vadd.f32 0.0, %v1023
      %1025 = vmatmul.f32.gmra.mxu0 %v430
      %v1026 = vpop.f32.mrf.mxu0
      %v1027 = vadd.f32 0.0, %v1026
      %1028 = vmatmul.f32.gmra.mxu0 %v437
      %v1029 = vpop.f32.mrf.mxu0
      %v1030 = vadd.f32 0.0, %v1029
      %1031 = vmatmul.f32.gmra.mxu0 %v444
      %v1032 = vpop.f32.mrf.mxu0
      %v1033 = vadd.f32 0.0, %v1032
      %1034 = vmatmul.f32.gmra.mxu0 %v451
      %v1035 = vpop.f32.mrf.mxu0
      %v1036 = vadd.f32 0.0, %v1035
      %1037 = vmatmul.f32.gmra.mxu0 %v458
      %v1038 = vpop.f32.mrf.mxu0
      %v1039 = vadd.f32 0.0, %v1038
      %1040 = vmatmul.f32.gmra.mxu0 %v465
      %v1041 = vpop.f32.mrf.mxu0
      %v1042 = vadd.f32 0.0, %v1041
      %1043 = vmatmul.f32.gmra.mxu0 %v472
      %v1044 = vpop.f32.mrf.mxu0
      %v1045 = vadd.f32 0.0, %v1044
      %1046 = vmatmul.f32.gmra.mxu0 %v479
      %v1047 = vpop.f32.mrf.mxu0
      %v1048 = vadd.f32 0.0, %v1047
      %1049 = vmatmul.f32.gmra.mxu0 %v486
      %v1050 = vpop.f32.mrf.mxu0
      %v1051 = vadd.f32 0.0, %v1050
      %1052 = vmatmul.f32.gmra.mxu0 %v493
      %v1053 = vpop.f32.mrf.mxu0
      %v1054 = vadd.f32 0.0, %v1053
      %1055 = vmatmul.f32.gmra.mxu0 %v500
      %v1056 = vpop.f32.mrf.mxu0
      %v1057 = vadd.f32 0.0, %v1056
      %1058 = vmatmul.f32.gmra.mxu0 %v507
      %v1059 = vpop.f32.mrf.mxu0
      %v1060 = vadd.f32 0.0, %v1059
      %1061 = vmatmul.f32.gmra.mxu0 %v514
      %v1062 = vpop.f32.mrf.mxu0
      %v1063 = vadd.f32 0.0, %v1062
      %1064 = vmatmul.f32.gmra.mxu0 %v521
      %v1065 = vpop.f32.mrf.mxu0
      %v1066 = vadd.f32 0.0, %v1065
      %1067 = vmatmul.f32.gmra.mxu0 %v528
      %v1068 = vpop.f32.mrf.mxu0
      %v1069 = vadd.f32 0.0, %v1068
      %1070 = vmatmul.f32.gmra.mxu0 %v535
      %v1071 = vpop.f32.mrf.mxu0
      %v1072 = vadd.f32 0.0, %v1071
      %1073 = vmatmul.f32.gmra.mxu0 %v542
      %v1074 = vpop.f32.mrf.mxu0
      %v1075 = vadd.f32 0.0, %v1074
      %1076 = vmatmul.f32.gmra.mxu0 %v549
      %v1077 = vpop.f32.mrf.mxu0
      %v1078 = vadd.f32 0.0, %v1077
      %1079 = vmatmul.f32.gmra.mxu0 %v556
      %v1080 = vpop.f32.mrf.mxu0
      %v1081 = vadd.f32 0.0, %v1080
      %1082 = vmatmul.f32.gmra.mxu0 %v563
      %v1083 = vpop.f32.mrf.mxu0
      %v1084 = vadd.f32 0.0, %v1083
      %1085 = vmatmul.f32.gmra.mxu0 %v570
      %v1086 = vpop.f32.mrf.mxu0
      %v1087 = vadd.f32 0.0, %v1086
      %1088 = vmatmul.f32.gmra.mxu0 %v577
      %v1089 = vpop.f32.mrf.mxu0
      %v1090 = vadd.f32 0.0, %v1089
      %1091 = vmatmul.f32.gmra.mxu0 %v584
      %v1092 = vpop.f32.mrf.mxu0
      %v1093 = vadd.f32 0.0, %v1092
      %1094 = vmatmul.f32.gmra.mxu0 %v591
      %v1095 = vpop.f32.mrf.mxu0
      %v1096 = vadd.f32 0.0, %v1095
      %1097 = vdwg.mxu0
      %1098 = vmatpush.msra.mxu0 %v629
      %1099 = vmatpush.msra.mxu0 %v628
      %1100 = vmatpush.msra.mxu0 %v627
      %1101 = vmatpush.msra.mxu0 %v626
      %1102 = vmatpush.msra.mxu0 %v625
      %1103 = vmatpush.msra.mxu0 %v624
      %1104 = vmatpush.msra.mxu0 %v623
      %1105 = vmatpush.msra.mxu0 %v622
      %1106 = vmatpush.msra.mxu0 %v621
      %1107 = vmatpush.msra.mxu0 %v620
      %1108 = vmatpush.msra.mxu0 %v619
      %1109 = vmatpush.msra.mxu0 %v618
      %1110 = vmatpush.msra.mxu0 %v617
      %1111 = vmatpush.msra.mxu0 %v616
      %1112 = vmatpush.msra.mxu0 %v615
      %1113 = vmatpush.msra.mxu0 %v614
      %1114 = vmatmul.f32.gmra.mxu0 %v151
      %v1115 = vpop.f32.mrf.mxu0
      %v1116 = vadd.f32 %v907, %v1115
      %1117 = vmatmul.f32.gmra.mxu0 %v158
      %v1118 = vpop.f32.mrf.mxu0
      %v1119 = vadd.f32 %v910, %v1118
      %1120 = vmatmul.f32.gmra.mxu0 %v165
      %v1121 = vpop.f32.mrf.mxu0
      %v1122 = vadd.f32 %v913, %v1121
      %1123 = vmatmul.f32.gmra.mxu0 %v172
      %v1124 = vpop.f32.mrf.mxu0
      %v1125 = vadd.f32 %v916, %v1124
      %1126 = vmatmul.f32.gmra.mxu0 %v179
      %v1127 = vpop.f32.mrf.mxu0
      %v1128 = vadd.f32 %v919, %v1127
      %1129 = vmatmul.f32.gmra.mxu0 %v186
      %v1130 = vpop.f32.mrf.mxu0
      %v1131 = vadd.f32 %v922, %v1130
      %1132 = vmatmul.f32.gmra.mxu0 %v193
      %v1133 = vpop.f32.mrf.mxu0
      %v1134 = vadd.f32 %v925, %v1133
      %1135 = vmatmul.f32.gmra.mxu0 %v200
      %v1136 = vpop.f32.mrf.mxu0
      %v1137 = vadd.f32 %v928, %v1136
      %1138 = vmatmul.f32.gmra.mxu0 %v207
      %v1139 = vpop.f32.mrf.mxu0
      %v1140 = vadd.f32 %v931, %v1139
      %1141 = vmatmul.f32.gmra.mxu0 %v214
      %v1142 = vpop.f32.mrf.mxu0
      %v1143 = vadd.f32 %v934, %v1142
      %1144 = vmatmul.f32.gmra.mxu0 %v221
      %v1145 = vpop.f32.mrf.mxu0
      %v1146 = vadd.f32 %v937, %v1145
      %1147 = vmatmul.f32.gmra.mxu0 %v228
      %v1148 = vpop.f32.mrf.mxu0
      %v1149 = vadd.f32 %v940, %v1148
      %1150 = vmatmul.f32.gmra.mxu0 %v235
      %v1151 = vpop.f32.mrf.mxu0
      %v1152 = vadd.f32 %v943, %v1151
      %1153 = vmatmul.f32.gmra.mxu0 %v242
      %v1154 = vpop.f32.mrf.mxu0
      %v1155 = vadd.f32 %v946, %v1154
      %1156 = vmatmul.f32.gmra.mxu0 %v249
      %v1157 = vpop.f32.mrf.mxu0
      %v1158 = vadd.f32 %v949, %v1157
      %1159 = vmatmul.f32.gmra.mxu0 %v256
      %v1160 = vpop.f32.mrf.mxu0
      %v1161 = vadd.f32 %v952, %v1160
      %1162 = vmatmul.f32.gmra.mxu0 %v263
      %v1163 = vpop.f32.mrf.mxu0
      %v1164 = vadd.f32 %v955, %v1163
      %1165 = vmatmul.f32.gmra.mxu0 %v270
      %v1166 = vpop.f32.mrf.mxu0
      %v1167 = vadd.f32 %v958, %v1166
      %1168 = vmatmul.f32.gmra.mxu0 %v277
      %v1169 = vpop.f32.mrf.mxu0
      %v1170 = vadd.f32 %v961, %v1169
      %1171 = vmatmul.f32.gmra.mxu0 %v284
      %v1172 = vpop.f32.mrf.mxu0
      %v1173 = vadd.f32 %v964, %v1172
      %1174 = vmatmul.f32.gmra.mxu0 %v291
      %v1175 = vpop.f32.mrf.mxu0
      %v1176 = vadd.f32 %v967, %v1175
      %1177 = vmatmul.f32.gmra.mxu0 %v298
      %v1178 = vpop.f32.mrf.mxu0
      %v1179 = vadd.f32 %v970, %v1178
      %1180 = vmatmul.f32.gmra.mxu0 %v305
      %v1181 = vpop.f32.mrf.mxu0
      %v1182 = vadd.f32 %v973, %v1181
      %1183 = vmatmul.f32.gmra.mxu0 %v312
      %v1184 = vpop.f32.mrf.mxu0
      %v1185 = vadd.f32 %v976, %v1184
      %1186 = vmatmul.f32.gmra.mxu0 %v319
      %v1187 = vpop.f32.mrf.mxu0
      %v1188 = vadd.f32 %v979, %v1187
      %1189 = vmatmul.f32.gmra.mxu0 %v326
      %v1190 = vpop.f32.mrf.mxu0
      %v1191 = vadd.f32 %v982, %v1190
      %1192 = vmatmul.f32.gmra.mxu0 %v333
      %v1193 = vpop.f32.mrf.mxu0
      %v1194 = vadd.f32 %v985, %v1193
      %1195 = vmatmul.f32.gmra.mxu0 %v340
      %v1196 = vpop.f32.mrf.mxu0
      %v1197 = vadd.f32 %v988, %v1196
      %1198 = vmatmul.f32.gmra.mxu0 %v347
      %v1199 = vpop.f32.mrf.mxu0
      %v1200 = vadd.f32 %v991, %v1199
      %1201 = vmatmul.f32.gmra.mxu0 %v354
      %v1202 = vpop.f32.mrf.mxu0
      %v1203 = vadd.f32 %v994, %v1202
      %1204 = vmatmul.f32.gmra.mxu0 %v361
      %v1205 = vpop.f32.mrf.mxu0
      %v1206 = vadd.f32 %v997, %v1205
      %1207 = vmatmul.f32.gmra.mxu0 %v368
      %v1208 = vpop.f32.mrf.mxu0
      %v1209 = vadd.f32 %v1000, %v1208
      %1210 = vmatmul.f32.gmra.mxu0 %v375
      %v1211 = vpop.f32.mrf.mxu0
      %v1212 = vadd.f32 %v1003, %v1211
      %1213 = vmatmul.f32.gmra.mxu0 %v382
      %v1214 = vpop.f32.mrf.mxu0
      %v1215 = vadd.f32 %v1006, %v1214
      %1216 = vmatmul.f32.gmra.mxu0 %v389
      %v1217 = vpop.f32.mrf.mxu0
      %v1218 = vadd.f32 %v1009, %v1217
      %1219 = vmatmul.f32.gmra.mxu0 %v396
      %v1220 = vpop.f32.mrf.mxu0
      %v1221 = vadd.f32 %v1012, %v1220
      %1222 = vmatmul.f32.gmra.mxu0 %v403
      %v1223 = vpop.f32.mrf.mxu0
      %v1224 = vadd.f32 %v1015, %v1223
      %1225 = vmatmul.f32.gmra.mxu0 %v410
      %v1226 = vpop.f32.mrf.mxu0
      %v1227 = vadd.f32 %v1018, %v1226
      %1228 = vmatmul.f32.gmra.mxu0 %v417
      %v1229 = vpop.f32.mrf.mxu0
      %v1230 = vadd.f32 %v1021, %v1229
      %1231 = vmatmul.f32.gmra.mxu0 %v424
      %v1232 = vpop.f32.mrf.mxu0
      %v1233 = vadd.f32 %v1024, %v1232
      %1234 = vmatmul.f32.gmra.mxu0 %v431
      %v1235 = vpop.f32.mrf.mxu0
      %v1236 = vadd.f32 %v1027, %v1235
      %1237 = vmatmul.f32.gmra.mxu0 %v438
      %v1238 = vpop.f32.mrf.mxu0
      %v1239 = vadd.f32 %v1030, %v1238
      %1240 = vmatmul.f32.gmra.mxu0 %v445
      %v1241 = vpop.f32.mrf.mxu0
      %v1242 = vadd.f32 %v1033, %v1241
      %1243 = vmatmul.f32.gmra.mxu0 %v452
      %v1244 = vpop.f32.mrf.mxu0
      %v1245 = vadd.f32 %v1036, %v1244
      %1246 = vmatmul.f32.gmra.mxu0 %v459
      %v1247 = vpop.f32.mrf.mxu0
      %v1248 = vadd.f32 %v1039, %v1247
      %1249 = vmatmul.f32.gmra.mxu0 %v466
      %v1250 = vpop.f32.mrf.mxu0
      %v1251 = vadd.f32 %v1042, %v1250
      %1252 = vmatmul.f32.gmra.mxu0 %v473
      %v1253 = vpop.f32.mrf.mxu0
      %v1254 = vadd.f32 %v1045, %v1253
      %1255 = vmatmul.f32.gmra.mxu0 %v480
      %v1256 = vpop.f32.mrf.mxu0
      %v1257 = vadd.f32 %v1048, %v1256
      %1258 = vmatmul.f32.gmra.mxu0 %v487
      %v1259 = vpop.f32.mrf.mxu0
      %v1260 = vadd.f32 %v1051, %v1259
      %1261 = vmatmul.f32.gmra.mxu0 %v494
      %v1262 = vpop.f32.mrf.mxu0
      %v1263 = vadd.f32 %v1054, %v1262
      %1264 = vmatmul.f32.gmra.mxu0 %v501
      %v1265 = vpop.f32.mrf.mxu0
      %v1266 = vadd.f32 %v1057, %v1265
      %1267 = vmatmul.f32.gmra.mxu0 %v508
      %v1268 = vpop.f32.mrf.mxu0
      %v1269 = vadd.f32 %v1060, %v1268
      %1270 = vmatmul.f32.gmra.mxu0 %v515
      %v1271 = vpop.f32.mrf.mxu0
      %v1272 = vadd.f32 %v1063, %v1271
      %1273 = vmatmul.f32.gmra.mxu0 %v522
      %v1274 = vpop.f32.mrf.mxu0
      %v1275 = vadd.f32 %v1066, %v1274
      %1276 = vmatmul.f32.gmra.mxu0 %v529
      %v1277 = vpop.f32.mrf.mxu0
      %v1278 = vadd.f32 %v1069, %v1277
      %1279 = vmatmul.f32.gmra.mxu0 %v536
      %v1280 = vpop.f32.mrf.mxu0
      %v1281 = vadd.f32 %v1072, %v1280
      %1282 = vmatmul.f32.gmra.mxu0 %v543
      %v1283 = vpop.f32.mrf.mxu0
      %v1284 = vadd.f32 %v1075, %v1283
      %1285 = vmatmul.f32.gmra.mxu0 %v550
      %v1286 = vpop.f32.mrf.mxu0
      %v1287 = vadd.f32 %v1078, %v1286
      %1288 = vmatmul.f32.gmra.mxu0 %v557
      %v1289 = vpop.f32.mrf.mxu0
      %v1290 = vadd.f32 %v1081, %v1289
      %1291 = vmatmul.f32.gmra.mxu0 %v564
      %v1292 = vpop.f32.mrf.mxu0
      %v1293 = vadd.f32 %v1084, %v1292
      %1294 = vmatmul.f32.gmra.mxu0 %v571
      %v1295 = vpop.f32.mrf.mxu0
      %v1296 = vadd.f32 %v1087, %v1295
      %1297 = vmatmul.f32.gmra.mxu0 %v578
      %v1298 = vpop.f32.mrf.mxu0
      %v1299 = vadd.f32 %v1090, %v1298
      %1300 = vmatmul.f32.gmra.mxu0 %v585
      %v1301 = vpop.f32.mrf.mxu0
      %v1302 = vadd.f32 %v1093, %v1301
      %1303 = vmatmul.f32.gmra.mxu0 %v592
      %v1304 = vpop.f32.mrf.mxu0
      %v1305 = vadd.f32 %v1096, %v1304
      %1306 = vdwg.mxu0
      %1307 = vmatpush.msra.mxu0 %v645
      %1308 = vmatpush.msra.mxu0 %v644
      %1309 = vmatpush.msra.mxu0 %v643
      %1310 = vmatpush.msra.mxu0 %v642
      %1311 = vmatpush.msra.mxu0 %v641
      %1312 = vmatpush.msra.mxu0 %v640
      %1313 = vmatpush.msra.mxu0 %v639
      %1314 = vmatpush.msra.mxu0 %v638
      %1315 = vmatpush.msra.mxu0 %v637
      %1316 = vmatpush.msra.mxu0 %v636
      %1317 = vmatpush.msra.mxu0 %v635
      %1318 = vmatpush.msra.mxu0 %v634
      %1319 = vmatpush.msra.mxu0 %v633
      %1320 = vmatpush.msra.mxu0 %v632
      %1321 = vmatpush.msra.mxu0 %v631
      %1322 = vmatpush.msra.mxu0 %v630
      %1323 = vmatmul.f32.gmra.mxu0 %v152
      %v1324 = vpop.f32.mrf.mxu0
      %v1325 = vadd.f32 %v1116, %v1324
      %1326 = vmatmul.f32.gmra.mxu0 %v159
      %v1327 = vpop.f32.mrf.mxu0
      %v1328 = vadd.f32 %v1119, %v1327
      %1329 = vmatmul.f32.gmra.mxu0 %v166
      %v1330 = vpop.f32.mrf.mxu0
      %v1331 = vadd.f32 %v1122, %v1330
      %1332 = vmatmul.f32.gmra.mxu0 %v173
      %v1333 = vpop.f32.mrf.mxu0
      %v1334 = vadd.f32 %v1125, %v1333
      %1335 = vmatmul.f32.gmra.mxu0 %v180
      %v1336 = vpop.f32.mrf.mxu0
      %v1337 = vadd.f32 %v1128, %v1336
      %1338 = vmatmul.f32.gmra.mxu0 %v187
      %v1339 = vpop.f32.mrf.mxu0
      %v1340 = vadd.f32 %v1131, %v1339
      %1341 = vmatmul.f32.gmra.mxu0 %v194
      %v1342 = vpop.f32.mrf.mxu0
      %v1343 = vadd.f32 %v1134, %v1342
      %1344 = vmatmul.f32.gmra.mxu0 %v201
      %v1345 = vpop.f32.mrf.mxu0
      %v1346 = vadd.f32 %v1137, %v1345
      %1347 = vmatmul.f32.gmra.mxu0 %v208
      %v1348 = vpop.f32.mrf.mxu0
      %v1349 = vadd.f32 %v1140, %v1348
      %1350 = vmatmul.f32.gmra.mxu0 %v215
      %v1351 = vpop.f32.mrf.mxu0
      %v1352 = vadd.f32 %v1143, %v1351
      %1353 = vmatmul.f32.gmra.mxu0 %v222
      %v1354 = vpop.f32.mrf.mxu0
      %v1355 = vadd.f32 %v1146, %v1354
      %1356 = vmatmul.f32.gmra.mxu0 %v229
      %v1357 = vpop.f32.mrf.mxu0
      %v1358 = vadd.f32 %v1149, %v1357
      %1359 = vmatmul.f32.gmra.mxu0 %v236
      %v1360 = vpop.f32.mrf.mxu0
      %v1361 = vadd.f32 %v1152, %v1360
      %1362 = vmatmul.f32.gmra.mxu0 %v243
      %v1363 = vpop.f32.mrf.mxu0
      %v1364 = vadd.f32 %v1155, %v1363
      %1365 = vmatmul.f32.gmra.mxu0 %v250
      %v1366 = vpop.f32.mrf.mxu0
      %v1367 = vadd.f32 %v1158, %v1366
      %1368 = vmatmul.f32.gmra.mxu0 %v257
      %v1369 = vpop.f32.mrf.mxu0
      %v1370 = vadd.f32 %v1161, %v1369
      %1371 = vmatmul.f32.gmra.mxu0 %v264
      %v1372 = vpop.f32.mrf.mxu0
      %v1373 = vadd.f32 %v1164, %v1372
      %1374 = vmatmul.f32.gmra.mxu0 %v271
      %v1375 = vpop.f32.mrf.mxu0
      %v1376 = vadd.f32 %v1167, %v1375
      %1377 = vmatmul.f32.gmra.mxu0 %v278
      %v1378 = vpop.f32.mrf.mxu0
      %v1379 = vadd.f32 %v1170, %v1378
      %1380 = vmatmul.f32.gmra.mxu0 %v285
      %v1381 = vpop.f32.mrf.mxu0
      %v1382 = vadd.f32 %v1173, %v1381
      %1383 = vmatmul.f32.gmra.mxu0 %v292
      %v1384 = vpop.f32.mrf.mxu0
      %v1385 = vadd.f32 %v1176, %v1384
      %1386 = vmatmul.f32.gmra.mxu0 %v299
      %v1387 = vpop.f32.mrf.mxu0
      %v1388 = vadd.f32 %v1179, %v1387
      %1389 = vmatmul.f32.gmra.mxu0 %v306
      %v1390 = vpop.f32.mrf.mxu0
      %v1391 = vadd.f32 %v1182, %v1390
      %1392 = vmatmul.f32.gmra.mxu0 %v313
      %v1393 = vpop.f32.mrf.mxu0
      %v1394 = vadd.f32 %v1185, %v1393
      %1395 = vmatmul.f32.gmra.mxu0 %v320
      %v1396 = vpop.f32.mrf.mxu0
      %v1397 = vadd.f32 %v1188, %v1396
      %1398 = vmatmul.f32.gmra.mxu0 %v327
      %v1399 = vpop.f32.mrf.mxu0
      %v1400 = vadd.f32 %v1191, %v1399
      %1401 = vmatmul.f32.gmra.mxu0 %v334
      %v1402 = vpop.f32.mrf.mxu0
      %v1403 = vadd.f32 %v1194, %v1402
      %1404 = vmatmul.f32.gmra.mxu0 %v341
      %v1405 = vpop.f32.mrf.mxu0
      %v1406 = vadd.f32 %v1197, %v1405
      %1407 = vmatmul.f32.gmra.mxu0 %v348
      %v1408 = vpop.f32.mrf.mxu0
      %v1409 = vadd.f32 %v1200, %v1408
      %1410 = vmatmul.f32.gmra.mxu0 %v355
      %v1411 = vpop.f32.mrf.mxu0
      %v1412 = vadd.f32 %v1203, %v1411
      %1413 = vmatmul.f32.gmra.mxu0 %v362
      %v1414 = vpop.f32.mrf.mxu0
      %v1415 = vadd.f32 %v1206, %v1414
      %1416 = vmatmul.f32.gmra.mxu0 %v369
      %v1417 = vpop.f32.mrf.mxu0
      %v1418 = vadd.f32 %v1209, %v1417
      %1419 = vmatmul.f32.gmra.mxu0 %v376
      %v1420 = vpop.f32.mrf.mxu0
      %v1421 = vadd.f32 %v1212, %v1420
      %1422 = vmatmul.f32.gmra.mxu0 %v383
      %v1423 = vpop.f32.mrf.mxu0
      %v1424 = vadd.f32 %v1215, %v1423
      %1425 = vmatmul.f32.gmra.mxu0 %v390
      %v1426 = vpop.f32.mrf.mxu0
      %v1427 = vadd.f32 %v1218, %v1426
      %1428 = vmatmul.f32.gmra.mxu0 %v397
      %v1429 = vpop.f32.mrf.mxu0
      %v1430 = vadd.f32 %v1221, %v1429
      %1431 = vmatmul.f32.gmra.mxu0 %v404
      %v1432 = vpop.f32.mrf.mxu0
      %v1433 = vadd.f32 %v1224, %v1432
      %1434 = vmatmul.f32.gmra.mxu0 %v411
      %v1435 = vpop.f32.mrf.mxu0
      %v1436 = vadd.f32 %v1227, %v1435
      %1437 = vmatmul.f32.gmra.mxu0 %v418
      %v1438 = vpop.f32.mrf.mxu0
      %v1439 = vadd.f32 %v1230, %v1438
      %1440 = vmatmul.f32.gmra.mxu0 %v425
      %v1441 = vpop.f32.mrf.mxu0
      %v1442 = vadd.f32 %v1233, %v1441
      %1443 = vmatmul.f32.gmra.mxu0 %v432
      %v1444 = vpop.f32.mrf.mxu0
      %v1445 = vadd.f32 %v1236, %v1444
      %1446 = vmatmul.f32.gmra.mxu0 %v439
      %v1447 = vpop.f32.mrf.mxu0
      %v1448 = vadd.f32 %v1239, %v1447
      %1449 = vmatmul.f32.gmra.mxu0 %v446
      %v1450 = vpop.f32.mrf.mxu0
      %v1451 = vadd.f32 %v1242, %v1450
      %1452 = vmatmul.f32.gmra.mxu0 %v453
      %v1453 = vpop.f32.mrf.mxu0
      %v1454 = vadd.f32 %v1245, %v1453
      %1455 = vmatmul.f32.gmra.mxu0 %v460
      %v1456 = vpop.f32.mrf.mxu0
      %v1457 = vadd.f32 %v1248, %v1456
      %1458 = vmatmul.f32.gmra.mxu0 %v467
      %v1459 = vpop.f32.mrf.mxu0
      %v1460 = vadd.f32 %v1251, %v1459
      %1461 = vmatmul.f32.gmra.mxu0 %v474
      %v1462 = vpop.f32.mrf.mxu0
      %v1463 = vadd.f32 %v1254, %v1462
      %1464 = vmatmul.f32.gmra.mxu0 %v481
      %v1465 = vpop.f32.mrf.mxu0
      %v1466 = vadd.f32 %v1257, %v1465
      %1467 = vmatmul.f32.gmra.mxu0 %v488
      %v1468 = vpop.f32.mrf.mxu0
      %v1469 = vadd.f32 %v1260, %v1468
      %1470 = vmatmul.f32.gmra.mxu0 %v495
      %v1471 = vpop.f32.mrf.mxu0
      %v1472 = vadd.f32 %v1263, %v1471
      %1473 = vmatmul.f32.gmra.mxu0 %v502
      %v1474 = vpop.f32.mrf.mxu0
      %v1475 = vadd.f32 %v1266, %v1474
      %1476 = vmatmul.f32.gmra.mxu0 %v509
      %v1477 = vpop.f32.mrf.mxu0
      %v1478 = vadd.f32 %v1269, %v1477
      %1479 = vmatmul.f32.gmra.mxu0 %v516
      %v1480 = vpop.f32.mrf.mxu0
      %v1481 = vadd.f32 %v1272, %v1480
      %1482 = vmatmul.f32.gmra.mxu0 %v523
      %v1483 = vpop.f32.mrf.mxu0
      %v1484 = vadd.f32 %v1275, %v1483
      %1485 = vmatmul.f32.gmra.mxu0 %v530
      %v1486 = vpop.f32.mrf.mxu0
      %v1487 = vadd.f32 %v1278, %v1486
      %1488 = vmatmul.f32.gmra.mxu0 %v537
      %v1489 = vpop.f32.mrf.mxu0
      %v1490 = vadd.f32 %v1281, %v1489
      %1491 = vmatmul.f32.gmra.mxu0 %v544
      %v1492 = vpop.f32.mrf.mxu0
      %v1493 = vadd.f32 %v1284, %v1492
      %1494 = vmatmul.f32.gmra.mxu0 %v551
      %v1495 = vpop.f32.mrf.mxu0
      %v1496 = vadd.f32 %v1287, %v1495
      %1497 = vmatmul.f32.gmra.mxu0 %v558
      %v1498 = vpop.f32.mrf.mxu0
      %v1499 = vadd.f32 %v1290, %v1498
      %1500 = vmatmul.f32.gmra.mxu0 %v565
      %v1501 = vpop.f32.mrf.mxu0
      %v1502 = vadd.f32 %v1293, %v1501
      %1503 = vmatmul.f32.gmra.mxu0 %v572
      %v1504 = vpop.f32.mrf.mxu0
      %v1505 = vadd.f32 %v1296, %v1504
      %1506 = vmatmul.f32.gmra.mxu0 %v579
      %v1507 = vpop.f32.mrf.mxu0
      %v1508 = vadd.f32 %v1299, %v1507
      %1509 = vmatmul.f32.gmra.mxu0 %v586
      %v1510 = vpop.f32.mrf.mxu0
      %v1511 = vadd.f32 %v1302, %v1510
      %1512 = vmatmul.f32.gmra.mxu0 %v593
      %v1513 = vpop.f32.mrf.mxu0
      %v1514 = vadd.f32 %v1305, %v1513
      %1515 = vdwg.mxu0
      %1516 = vmatpush.msra.mxu0 %v661
      %1517 = vmatpush.msra.mxu0 %v660
      %1518 = vmatpush.msra.mxu0 %v659
      %1519 = vmatpush.msra.mxu0 %v658
      %1520 = vmatpush.msra.mxu0 %v657
      %1521 = vmatpush.msra.mxu0 %v656
      %1522 = vmatpush.msra.mxu0 %v655
      %1523 = vmatpush.msra.mxu0 %v654
      %1524 = vmatpush.msra.mxu0 %v653
      %1525 = vmatpush.msra.mxu0 %v652
      %1526 = vmatpush.msra.mxu0 %v651
      %1527 = vmatpush.msra.mxu0 %v650
      %1528 = vmatpush.msra.mxu0 %v649
      %1529 = vmatpush.msra.mxu0 %v648
      %1530 = vmatpush.msra.mxu0 %v647
      %1531 = vmatpush.msra.mxu0 %v646
      %1532 = vmatmul.f32.gmra.mxu0 %v153
      %v1533 = vpop.f32.mrf.mxu0
      %v1534 = vadd.f32 %v1325, %v1533
      %1535 = vmatmul.f32.gmra.mxu0 %v160
      %v1536 = vpop.f32.mrf.mxu0
      %v1537 = vadd.f32 %v1328, %v1536
      %1538 = vmatmul.f32.gmra.mxu0 %v167
      %v1539 = vpop.f32.mrf.mxu0
      %v1540 = vadd.f32 %v1331, %v1539
      %1541 = vmatmul.f32.gmra.mxu0 %v174
      %v1542 = vpop.f32.mrf.mxu0
      %v1543 = vadd.f32 %v1334, %v1542
      %1544 = vmatmul.f32.gmra.mxu0 %v181
      %v1545 = vpop.f32.mrf.mxu0
      %v1546 = vadd.f32 %v1337, %v1545
      %1547 = vmatmul.f32.gmra.mxu0 %v188
      %v1548 = vpop.f32.mrf.mxu0
      %v1549 = vadd.f32 %v1340, %v1548
      %1550 = vmatmul.f32.gmra.mxu0 %v195
      %v1551 = vpop.f32.mrf.mxu0
      %v1552 = vadd.f32 %v1343, %v1551
      %1553 = vmatmul.f32.gmra.mxu0 %v202
      %v1554 = vpop.f32.mrf.mxu0
      %v1555 = vadd.f32 %v1346, %v1554
      %1556 = vmatmul.f32.gmra.mxu0 %v209
      %v1557 = vpop.f32.mrf.mxu0
      %v1558 = vadd.f32 %v1349, %v1557
      %1559 = vmatmul.f32.gmra.mxu0 %v216
      %v1560 = vpop.f32.mrf.mxu0
      %v1561 = vadd.f32 %v1352, %v1560
      %1562 = vmatmul.f32.gmra.mxu0 %v223
      %v1563 = vpop.f32.mrf.mxu0
      %v1564 = vadd.f32 %v1355, %v1563
      %1565 = vmatmul.f32.gmra.mxu0 %v230
      %v1566 = vpop.f32.mrf.mxu0
      %v1567 = vadd.f32 %v1358, %v1566
      %1568 = vmatmul.f32.gmra.mxu0 %v237
      %v1569 = vpop.f32.mrf.mxu0
      %v1570 = vadd.f32 %v1361, %v1569
      %1571 = vmatmul.f32.gmra.mxu0 %v244
      %v1572 = vpop.f32.mrf.mxu0
      %v1573 = vadd.f32 %v1364, %v1572
      %1574 = vmatmul.f32.gmra.mxu0 %v251
      %v1575 = vpop.f32.mrf.mxu0
      %v1576 = vadd.f32 %v1367, %v1575
      %1577 = vmatmul.f32.gmra.mxu0 %v258
      %v1578 = vpop.f32.mrf.mxu0
      %v1579 = vadd.f32 %v1370, %v1578
      %1580 = vmatmul.f32.gmra.mxu0 %v265
      %v1581 = vpop.f32.mrf.mxu0
      %v1582 = vadd.f32 %v1373, %v1581
      %1583 = vmatmul.f32.gmra.mxu0 %v272
      %v1584 = vpop.f32.mrf.mxu0
      %v1585 = vadd.f32 %v1376, %v1584
      %1586 = vmatmul.f32.gmra.mxu0 %v279
      %v1587 = vpop.f32.mrf.mxu0
      %v1588 = vadd.f32 %v1379, %v1587
      %1589 = vmatmul.f32.gmra.mxu0 %v286
      %v1590 = vpop.f32.mrf.mxu0
      %v1591 = vadd.f32 %v1382, %v1590
      %1592 = vmatmul.f32.gmra.mxu0 %v293
      %v1593 = vpop.f32.mrf.mxu0
      %v1594 = vadd.f32 %v1385, %v1593
      %1595 = vmatmul.f32.gmra.mxu0 %v300
      %v1596 = vpop.f32.mrf.mxu0
      %v1597 = vadd.f32 %v1388, %v1596
      %1598 = vmatmul.f32.gmra.mxu0 %v307
      %v1599 = vpop.f32.mrf.mxu0
      %v1600 = vadd.f32 %v1391, %v1599
      %1601 = vmatmul.f32.gmra.mxu0 %v314
      %v1602 = vpop.f32.mrf.mxu0
      %v1603 = vadd.f32 %v1394, %v1602
      %1604 = vmatmul.f32.gmra.mxu0 %v321
      %v1605 = vpop.f32.mrf.mxu0
      %v1606 = vadd.f32 %v1397, %v1605
      %1607 = vmatmul.f32.gmra.mxu0 %v328
      %v1608 = vpop.f32.mrf.mxu0
      %v1609 = vadd.f32 %v1400, %v1608
      %1610 = vmatmul.f32.gmra.mxu0 %v335
      %v1611 = vpop.f32.mrf.mxu0
      %v1612 = vadd.f32 %v1403, %v1611
      %1613 = vmatmul.f32.gmra.mxu0 %v342
      %v1614 = vpop.f32.mrf.mxu0
      %v1615 = vadd.f32 %v1406, %v1614
      %1616 = vmatmul.f32.gmra.mxu0 %v349
      %v1617 = vpop.f32.mrf.mxu0
      %v1618 = vadd.f32 %v1409, %v1617
      %1619 = vmatmul.f32.gmra.mxu0 %v356
      %v1620 = vpop.f32.mrf.mxu0
      %v1621 = vadd.f32 %v1412, %v1620
      %1622 = vmatmul.f32.gmra.mxu0 %v363
      %v1623 = vpop.f32.mrf.mxu0
      %v1624 = vadd.f32 %v1415, %v1623
      %1625 = vmatmul.f32.gmra.mxu0 %v370
      %v1626 = vpop.f32.mrf.mxu0
      %v1627 = vadd.f32 %v1418, %v1626
      %1628 = vmatmul.f32.gmra.mxu0 %v377
      %v1629 = vpop.f32.mrf.mxu0
      %v1630 = vadd.f32 %v1421, %v1629
      %1631 = vmatmul.f32.gmra.mxu0 %v384
      %v1632 = vpop.f32.mrf.mxu0
      %v1633 = vadd.f32 %v1424, %v1632
      %1634 = vmatmul.f32.gmra.mxu0 %v391
      %v1635 = vpop.f32.mrf.mxu0
      %v1636 = vadd.f32 %v1427, %v1635
      %1637 = vmatmul.f32.gmra.mxu0 %v398
      %v1638 = vpop.f32.mrf.mxu0
      %v1639 = vadd.f32 %v1430, %v1638
      %1640 = vmatmul.f32.gmra.mxu0 %v405
      %v1641 = vpop.f32.mrf.mxu0
      %v1642 = vadd.f32 %v1433, %v1641
      %1643 = vmatmul.f32.gmra.mxu0 %v412
      %v1644 = vpop.f32.mrf.mxu0
      %v1645 = vadd.f32 %v1436, %v1644
      %1646 = vmatmul.f32.gmra.mxu0 %v419
      %v1647 = vpop.f32.mrf.mxu0
      %v1648 = vadd.f32 %v1439, %v1647
      %1649 = vmatmul.f32.gmra.mxu0 %v426
      %v1650 = vpop.f32.mrf.mxu0
      %v1651 = vadd.f32 %v1442, %v1650
      %1652 = vmatmul.f32.gmra.mxu0 %v433
      %v1653 = vpop.f32.mrf.mxu0
      %v1654 = vadd.f32 %v1445, %v1653
      %1655 = vmatmul.f32.gmra.mxu0 %v440
      %v1656 = vpop.f32.mrf.mxu0
      %v1657 = vadd.f32 %v1448, %v1656
      %1658 = vmatmul.f32.gmra.mxu0 %v447
      %v1659 = vpop.f32.mrf.mxu0
      %v1660 = vadd.f32 %v1451, %v1659
      %1661 = vmatmul.f32.gmra.mxu0 %v454
      %v1662 = vpop.f32.mrf.mxu0
      %v1663 = vadd.f32 %v1454, %v1662
      %1664 = vmatmul.f32.gmra.mxu0 %v461
      %v1665 = vpop.f32.mrf.mxu0
      %v1666 = vadd.f32 %v1457, %v1665
      %1667 = vmatmul.f32.gmra.mxu0 %v468
      %v1668 = vpop.f32.mrf.mxu0
      %v1669 = vadd.f32 %v1460, %v1668
      %1670 = vmatmul.f32.gmra.mxu0 %v475
      %v1671 = vpop.f32.mrf.mxu0
      %v1672 = vadd.f32 %v1463, %v1671
      %1673 = vmatmul.f32.gmra.mxu0 %v482
      %v1674 = vpop.f32.mrf.mxu0
      %v1675 = vadd.f32 %v1466, %v1674
      %1676 = vmatmul.f32.gmra.mxu0 %v489
      %v1677 = vpop.f32.mrf.mxu0
      %v1678 = vadd.f32 %v1469, %v1677
      %1679 = vmatmul.f32.gmra.mxu0 %v496
      %v1680 = vpop.f32.mrf.mxu0
      %v1681 = vadd.f32 %v1472, %v1680
      %1682 = vmatmul.f32.gmra.mxu0 %v503
      %v1683 = vpop.f32.mrf.mxu0
      %v1684 = vadd.f32 %v1475, %v1683
      %1685 = vmatmul.f32.gmra.mxu0 %v510
      %v1686 = vpop.f32.mrf.mxu0
      %v1687 = vadd.f32 %v1478, %v1686
      %1688 = vmatmul.f32.gmra.mxu0 %v517
      %v1689 = vpop.f32.mrf.mxu0
      %v1690 = vadd.f32 %v1481, %v1689
      %1691 = vmatmul.f32.gmra.mxu0 %v524
      %v1692 = vpop.f32.mrf.mxu0
      %v1693 = vadd.f32 %v1484, %v1692
      %1694 = vmatmul.f32.gmra.mxu0 %v531
      %v1695 = vpop.f32.mrf.mxu0
      %v1696 = vadd.f32 %v1487, %v1695
      %1697 = vmatmul.f32.gmra.mxu0 %v538
      %v1698 = vpop.f32.mrf.mxu0
      %v1699 = vadd.f32 %v1490, %v1698
      %1700 = vmatmul.f32.gmra.mxu0 %v545
      %v1701 = vpop.f32.mrf.mxu0
      %v1702 = vadd.f32 %v1493, %v1701
      %1703 = vmatmul.f32.gmra.mxu0 %v552
      %v1704 = vpop.f32.mrf.mxu0
      %v1705 = vadd.f32 %v1496, %v1704
      %1706 = vmatmul.f32.gmra.mxu0 %v559
      %v1707 = vpop.f32.mrf.mxu0
      %v1708 = vadd.f32 %v1499, %v1707
      %1709 = vmatmul.f32.gmra.mxu0 %v566
      %v1710 = vpop.f32.mrf.mxu0
      %v1711 = vadd.f32 %v1502, %v1710
      %1712 = vmatmul.f32.gmra.mxu0 %v573
      %v1713 = vpop.f32.mrf.mxu0
      %v1714 = vadd.f32 %v1505, %v1713
      %1715 = vmatmul.f32.gmra.mxu0 %v580
      %v1716 = vpop.f32.mrf.mxu0
      %v1717 = vadd.f32 %v1508, %v1716
      %1718 = vmatmul.f32.gmra.mxu0 %v587
      %v1719 = vpop.f32.mrf.mxu0
      %v1720 = vadd.f32 %v1511, %v1719
      %1721 = vmatmul.f32.gmra.mxu0 %v594
      %v1722 = vpop.f32.mrf.mxu0
      %v1723 = vadd.f32 %v1514, %v1722
      %1724 = vdwg.mxu0
      %1725 = vmatpush.msra.mxu0 %v677
      %1726 = vmatpush.msra.mxu0 %v676
      %1727 = vmatpush.msra.mxu0 %v675
      %1728 = vmatpush.msra.mxu0 %v674
      %1729 = vmatpush.msra.mxu0 %v673
      %1730 = vmatpush.msra.mxu0 %v672
      %1731 = vmatpush.msra.mxu0 %v671
      %1732 = vmatpush.msra.mxu0 %v670
      %1733 = vmatpush.msra.mxu0 %v669
      %1734 = vmatpush.msra.mxu0 %v668
      %1735 = vmatpush.msra.mxu0 %v667
      %1736 = vmatpush.msra.mxu0 %v666
      %1737 = vmatpush.msra.mxu0 %v665
      %1738 = vmatpush.msra.mxu0 %v664
      %1739 = vmatpush.msra.mxu0 %v663
      %1740 = vmatpush.msra.mxu0 %v662
      %1741 = vmatmul.f32.gmra.mxu0 %v154
      %v1742 = vpop.f32.mrf.mxu0
      %v1743 = vadd.f32 %v1534, %v1742
      %1744 = vmatmul.f32.gmra.mxu0 %v161
      %v1745 = vpop.f32.mrf.mxu0
      %v1746 = vadd.f32 %v1537, %v1745
      %1747 = vmatmul.f32.gmra.mxu0 %v168
      %v1748 = vpop.f32.mrf.mxu0
      %v1749 = vadd.f32 %v1540, %v1748
      %1750 = vmatmul.f32.gmra.mxu0 %v175
      %v1751 = vpop.f32.mrf.mxu0
      %v1752 = vadd.f32 %v1543, %v1751
      %1753 = vmatmul.f32.gmra.mxu0 %v182
      %v1754 = vpop.f32.mrf.mxu0
      %v1755 = vadd.f32 %v1546, %v1754
      %1756 = vmatmul.f32.gmra.mxu0 %v189
      %v1757 = vpop.f32.mrf.mxu0
      %v1758 = vadd.f32 %v1549, %v1757
      %1759 = vmatmul.f32.gmra.mxu0 %v196
      %v1760 = vpop.f32.mrf.mxu0
      %v1761 = vadd.f32 %v1552, %v1760
      %1762 = vmatmul.f32.gmra.mxu0 %v203
      %v1763 = vpop.f32.mrf.mxu0
      %v1764 = vadd.f32 %v1555, %v1763
      %1765 = vmatmul.f32.gmra.mxu0 %v210
      %v1766 = vpop.f32.mrf.mxu0
      %v1767 = vadd.f32 %v1558, %v1766
      %1768 = vmatmul.f32.gmra.mxu0 %v217
      %v1769 = vpop.f32.mrf.mxu0
      %v1770 = vadd.f32 %v1561, %v1769
      %1771 = vmatmul.f32.gmra.mxu0 %v224
      %v1772 = vpop.f32.mrf.mxu0
      %v1773 = vadd.f32 %v1564, %v1772
      %1774 = vmatmul.f32.gmra.mxu0 %v231
      %v1775 = vpop.f32.mrf.mxu0
      %v1776 = vadd.f32 %v1567, %v1775
      %1777 = vmatmul.f32.gmra.mxu0 %v238
      %v1778 = vpop.f32.mrf.mxu0
      %v1779 = vadd.f32 %v1570, %v1778
      %1780 = vmatmul.f32.gmra.mxu0 %v245
      %v1781 = vpop.f32.mrf.mxu0
      %v1782 = vadd.f32 %v1573, %v1781
      %1783 = vmatmul.f32.gmra.mxu0 %v252
      %v1784 = vpop.f32.mrf.mxu0
      %v1785 = vadd.f32 %v1576, %v1784
      %1786 = vmatmul.f32.gmra.mxu0 %v259
      %v1787 = vpop.f32.mrf.mxu0
      %v1788 = vadd.f32 %v1579, %v1787
      %1789 = vmatmul.f32.gmra.mxu0 %v266
      %v1790 = vpop.f32.mrf.mxu0
      %v1791 = vadd.f32 %v1582, %v1790
      %1792 = vmatmul.f32.gmra.mxu0 %v273
      %v1793 = vpop.f32.mrf.mxu0
      %v1794 = vadd.f32 %v1585, %v1793
      %1795 = vmatmul.f32.gmra.mxu0 %v280
      %v1796 = vpop.f32.mrf.mxu0
      %v1797 = vadd.f32 %v1588, %v1796
      %1798 = vmatmul.f32.gmra.mxu0 %v287
      %v1799 = vpop.f32.mrf.mxu0
      %v1800 = vadd.f32 %v1591, %v1799
      %1801 = vmatmul.f32.gmra.mxu0 %v294
      %v1802 = vpop.f32.mrf.mxu0
      %v1803 = vadd.f32 %v1594, %v1802
      %1804 = vmatmul.f32.gmra.mxu0 %v301
      %v1805 = vpop.f32.mrf.mxu0
      %v1806 = vadd.f32 %v1597, %v1805
      %1807 = vmatmul.f32.gmra.mxu0 %v308
      %v1808 = vpop.f32.mrf.mxu0
      %v1809 = vadd.f32 %v1600, %v1808
      %1810 = vmatmul.f32.gmra.mxu0 %v315
      %v1811 = vpop.f32.mrf.mxu0
      %v1812 = vadd.f32 %v1603, %v1811
      %1813 = vmatmul.f32.gmra.mxu0 %v322
      %v1814 = vpop.f32.mrf.mxu0
      %v1815 = vadd.f32 %v1606, %v1814
      %1816 = vmatmul.f32.gmra.mxu0 %v329
      %v1817 = vpop.f32.mrf.mxu0
      %v1818 = vadd.f32 %v1609, %v1817
      %1819 = vmatmul.f32.gmra.mxu0 %v336
      %v1820 = vpop.f32.mrf.mxu0
      %v1821 = vadd.f32 %v1612, %v1820
      %1822 = vmatmul.f32.gmra.mxu0 %v343
      %v1823 = vpop.f32.mrf.mxu0
      %v1824 = vadd.f32 %v1615, %v1823
      %1825 = vmatmul.f32.gmra.mxu0 %v350
      %v1826 = vpop.f32.mrf.mxu0
      %v1827 = vadd.f32 %v1618, %v1826
      %1828 = vmatmul.f32.gmra.mxu0 %v357
      %v1829 = vpop.f32.mrf.mxu0
      %v1830 = vadd.f32 %v1621, %v1829
      %1831 = vmatmul.f32.gmra.mxu0 %v364
      %v1832 = vpop.f32.mrf.mxu0
      %v1833 = vadd.f32 %v1624, %v1832
      %1834 = vmatmul.f32.gmra.mxu0 %v371
      %v1835 = vpop.f32.mrf.mxu0
      %v1836 = vadd.f32 %v1627, %v1835
      %1837 = vmatmul.f32.gmra.mxu0 %v378
      %v1838 = vpop.f32.mrf.mxu0
      %v1839 = vadd.f32 %v1630, %v1838
      %1840 = vmatmul.f32.gmra.mxu0 %v385
      %v1841 = vpop.f32.mrf.mxu0
      %v1842 = vadd.f32 %v1633, %v1841
      %1843 = vmatmul.f32.gmra.mxu0 %v392
      %v1844 = vpop.f32.mrf.mxu0
      %v1845 = vadd.f32 %v1636, %v1844
      %1846 = vmatmul.f32.gmra.mxu0 %v399
      %v1847 = vpop.f32.mrf.mxu0
      %v1848 = vadd.f32 %v1639, %v1847
      %1849 = vmatmul.f32.gmra.mxu0 %v406
      %v1850 = vpop.f32.mrf.mxu0
      %v1851 = vadd.f32 %v1642, %v1850
      %1852 = vmatmul.f32.gmra.mxu0 %v413
      %v1853 = vpop.f32.mrf.mxu0
      %v1854 = vadd.f32 %v1645, %v1853
      %1855 = vmatmul.f32.gmra.mxu0 %v420
      %v1856 = vpop.f32.mrf.mxu0
      %v1857 = vadd.f32 %v1648, %v1856
      %1858 = vmatmul.f32.gmra.mxu0 %v427
      %v1859 = vpop.f32.mrf.mxu0
      %v1860 = vadd.f32 %v1651, %v1859
      %1861 = vmatmul.f32.gmra.mxu0 %v434
      %v1862 = vpop.f32.mrf.mxu0
      %v1863 = vadd.f32 %v1654, %v1862
      %1864 = vmatmul.f32.gmra.mxu0 %v441
      %v1865 = vpop.f32.mrf.mxu0
      %v1866 = vadd.f32 %v1657, %v1865
      %1867 = vmatmul.f32.gmra.mxu0 %v448
      %v1868 = vpop.f32.mrf.mxu0
      %v1869 = vadd.f32 %v1660, %v1868
      %1870 = vmatmul.f32.gmra.mxu0 %v455
      %v1871 = vpop.f32.mrf.mxu0
      %v1872 = vadd.f32 %v1663, %v1871
      %1873 = vmatmul.f32.gmra.mxu0 %v462
      %v1874 = vpop.f32.mrf.mxu0
      %v1875 = vadd.f32 %v1666, %v1874
      %1876 = vmatmul.f32.gmra.mxu0 %v469
      %v1877 = vpop.f32.mrf.mxu0
      %v1878 = vadd.f32 %v1669, %v1877
      %1879 = vmatmul.f32.gmra.mxu0 %v476
      %v1880 = vpop.f32.mrf.mxu0
      %v1881 = vadd.f32 %v1672, %v1880
      %1882 = vmatmul.f32.gmra.mxu0 %v483
      %v1883 = vpop.f32.mrf.mxu0
      %v1884 = vadd.f32 %v1675, %v1883
      %1885 = vmatmul.f32.gmra.mxu0 %v490
      %v1886 = vpop.f32.mrf.mxu0
      %v1887 = vadd.f32 %v1678, %v1886
      %1888 = vmatmul.f32.gmra.mxu0 %v497
      %v1889 = vpop.f32.mrf.mxu0
      %v1890 = vadd.f32 %v1681, %v1889
      %1891 = vmatmul.f32.gmra.mxu0 %v504
      %v1892 = vpop.f32.mrf.mxu0
      %v1893 = vadd.f32 %v1684, %v1892
      %1894 = vmatmul.f32.gmra.mxu0 %v511
      %v1895 = vpop.f32.mrf.mxu0
      %v1896 = vadd.f32 %v1687, %v1895
      %1897 = vmatmul.f32.gmra.mxu0 %v518
      %v1898 = vpop.f32.mrf.mxu0
      %v1899 = vadd.f32 %v1690, %v1898
      %1900 = vmatmul.f32.gmra.mxu0 %v525
      %v1901 = vpop.f32.mrf.mxu0
      %v1902 = vadd.f32 %v1693, %v1901
      %1903 = vmatmul.f32.gmra.mxu0 %v532
      %v1904 = vpop.f32.mrf.mxu0
      %v1905 = vadd.f32 %v1696, %v1904
      %1906 = vmatmul.f32.gmra.mxu0 %v539
      %v1907 = vpop.f32.mrf.mxu0
      %v1908 = vadd.f32 %v1699, %v1907
      %1909 = vmatmul.f32.gmra.mxu0 %v546
      %v1910 = vpop.f32.mrf.mxu0
      %v1911 = vadd.f32 %v1702, %v1910
      %1912 = vmatmul.f32.gmra.mxu0 %v553
      %v1913 = vpop.f32.mrf.mxu0
      %v1914 = vadd.f32 %v1705, %v1913
      %1915 = vmatmul.f32.gmra.mxu0 %v560
      %v1916 = vpop.f32.mrf.mxu0
      %v1917 = vadd.f32 %v1708, %v1916
      %1918 = vmatmul.f32.gmra.mxu0 %v567
      %v1919 = vpop.f32.mrf.mxu0
      %v1920 = vadd.f32 %v1711, %v1919
      %1921 = vmatmul.f32.gmra.mxu0 %v574
      %v1922 = vpop.f32.mrf.mxu0
      %v1923 = vadd.f32 %v1714, %v1922
      %1924 = vmatmul.f32.gmra.mxu0 %v581
      %v1925 = vpop.f32.mrf.mxu0
      %v1926 = vadd.f32 %v1717, %v1925
      %1927 = vmatmul.f32.gmra.mxu0 %v588
      %v1928 = vpop.f32.mrf.mxu0
      %v1929 = vadd.f32 %v1720, %v1928
      %1930 = vmatmul.f32.gmra.mxu0 %v595
      %v1931 = vpop.f32.mrf.mxu0
      %v1932 = vadd.f32 %v1723, %v1931
      %1933 = vdwg.mxu0
      %1934 = vmatpush.msra.mxu0 %v693
      %1935 = vmatpush.msra.mxu0 %v692
      %1936 = vmatpush.msra.mxu0 %v691
      %1937 = vmatpush.msra.mxu0 %v690
      %1938 = vmatpush.msra.mxu0 %v689
      %1939 = vmatpush.msra.mxu0 %v688
      %1940 = vmatpush.msra.mxu0 %v687
      %1941 = vmatpush.msra.mxu0 %v686
      %1942 = vmatpush.msra.mxu0 %v685
      %1943 = vmatpush.msra.mxu0 %v684
      %1944 = vmatpush.msra.mxu0 %v683
      %1945 = vmatpush.msra.mxu0 %v682
      %1946 = vmatpush.msra.mxu0 %v681
      %1947 = vmatpush.msra.mxu0 %v680
      %1948 = vmatpush.msra.mxu0 %v679
      %1949 = vmatpush.msra.mxu0 %v678
      %1950 = vmatmul.f32.gmra.mxu0 %v155
      %v1951 = vpop.f32.mrf.mxu0
      %v1952 = vadd.f32 %v1743, %v1951
      %1953 = vmatmul.f32.gmra.mxu0 %v162
      %v1954 = vpop.f32.mrf.mxu0
      %v1955 = vadd.f32 %v1746, %v1954
      %1956 = vmatmul.f32.gmra.mxu0 %v169
      %v1957 = vpop.f32.mrf.mxu0
      %v1958 = vadd.f32 %v1749, %v1957
      %1959 = vmatmul.f32.gmra.mxu0 %v176
      %v1960 = vpop.f32.mrf.mxu0
      %v1961 = vadd.f32 %v1752, %v1960
      %1962 = vmatmul.f32.gmra.mxu0 %v183
      %v1963 = vpop.f32.mrf.mxu0
      %v1964 = vadd.f32 %v1755, %v1963
      %1965 = vmatmul.f32.gmra.mxu0 %v190
      %v1966 = vpop.f32.mrf.mxu0
      %v1967 = vadd.f32 %v1758, %v1966
      %1968 = vmatmul.f32.gmra.mxu0 %v197
      %v1969 = vpop.f32.mrf.mxu0
      %v1970 = vadd.f32 %v1761, %v1969
      %1971 = vmatmul.f32.gmra.mxu0 %v204
      %v1972 = vpop.f32.mrf.mxu0
      %v1973 = vadd.f32 %v1764, %v1972
      %1974 = vmatmul.f32.gmra.mxu0 %v211
      %v1975 = vpop.f32.mrf.mxu0
      %v1976 = vadd.f32 %v1767, %v1975
      %1977 = vmatmul.f32.gmra.mxu0 %v218
      %v1978 = vpop.f32.mrf.mxu0
      %v1979 = vadd.f32 %v1770, %v1978
      %1980 = vmatmul.f32.gmra.mxu0 %v225
      %v1981 = vpop.f32.mrf.mxu0
      %v1982 = vadd.f32 %v1773, %v1981
      %1983 = vmatmul.f32.gmra.mxu0 %v232
      %v1984 = vpop.f32.mrf.mxu0
      %v1985 = vadd.f32 %v1776, %v1984
      %1986 = vmatmul.f32.gmra.mxu0 %v239
      %v1987 = vpop.f32.mrf.mxu0
      %v1988 = vadd.f32 %v1779, %v1987
      %1989 = vmatmul.f32.gmra.mxu0 %v246
      %v1990 = vpop.f32.mrf.mxu0
      %v1991 = vadd.f32 %v1782, %v1990
      %1992 = vmatmul.f32.gmra.mxu0 %v253
      %v1993 = vpop.f32.mrf.mxu0
      %v1994 = vadd.f32 %v1785, %v1993
      %1995 = vmatmul.f32.gmra.mxu0 %v260
      %v1996 = vpop.f32.mrf.mxu0
      %v1997 = vadd.f32 %v1788, %v1996
      %1998 = vmatmul.f32.gmra.mxu0 %v267
      %v1999 = vpop.f32.mrf.mxu0
      %v2000 = vadd.f32 %v1791, %v1999
      %2001 = vmatmul.f32.gmra.mxu0 %v274
      %v2002 = vpop.f32.mrf.mxu0
      %v2003 = vadd.f32 %v1794, %v2002
      %2004 = vmatmul.f32.gmra.mxu0 %v281
      %v2005 = vpop.f32.mrf.mxu0
      %v2006 = vadd.f32 %v1797, %v2005
      %2007 = vmatmul.f32.gmra.mxu0 %v288
      %v2008 = vpop.f32.mrf.mxu0
      %v2009 = vadd.f32 %v1800, %v2008
      %2010 = vmatmul.f32.gmra.mxu0 %v295
      %v2011 = vpop.f32.mrf.mxu0
      %v2012 = vadd.f32 %v1803, %v2011
      %2013 = vmatmul.f32.gmra.mxu0 %v302
      %v2014 = vpop.f32.mrf.mxu0
      %v2015 = vadd.f32 %v1806, %v2014
      %2016 = vmatmul.f32.gmra.mxu0 %v309
      %v2017 = vpop.f32.mrf.mxu0
      %v2018 = vadd.f32 %v1809, %v2017
      %2019 = vmatmul.f32.gmra.mxu0 %v316
      %v2020 = vpop.f32.mrf.mxu0
      %v2021 = vadd.f32 %v1812, %v2020
      %2022 = vmatmul.f32.gmra.mxu0 %v323
      %v2023 = vpop.f32.mrf.mxu0
      %v2024 = vadd.f32 %v1815, %v2023
      %2025 = vmatmul.f32.gmra.mxu0 %v330
      %v2026 = vpop.f32.mrf.mxu0
      %v2027 = vadd.f32 %v1818, %v2026
      %2028 = vmatmul.f32.gmra.mxu0 %v337
      %v2029 = vpop.f32.mrf.mxu0
      %v2030 = vadd.f32 %v1821, %v2029
      %2031 = vmatmul.f32.gmra.mxu0 %v344
      %v2032 = vpop.f32.mrf.mxu0
      %v2033 = vadd.f32 %v1824, %v2032
      %2034 = vmatmul.f32.gmra.mxu0 %v351
      %v2035 = vpop.f32.mrf.mxu0
      %v2036 = vadd.f32 %v1827, %v2035
      %2037 = vmatmul.f32.gmra.mxu0 %v358
      %v2038 = vpop.f32.mrf.mxu0
      %v2039 = vadd.f32 %v1830, %v2038
      %2040 = vmatmul.f32.gmra.mxu0 %v365
      %v2041 = vpop.f32.mrf.mxu0
      %v2042 = vadd.f32 %v1833, %v2041
      %2043 = vmatmul.f32.gmra.mxu0 %v372
      %v2044 = vpop.f32.mrf.mxu0
      %v2045 = vadd.f32 %v1836, %v2044
      %2046 = vmatmul.f32.gmra.mxu0 %v379
      %v2047 = vpop.f32.mrf.mxu0
      %v2048 = vadd.f32 %v1839, %v2047
      %2049 = vmatmul.f32.gmra.mxu0 %v386
      %v2050 = vpop.f32.mrf.mxu0
      %v2051 = vadd.f32 %v1842, %v2050
      %2052 = vmatmul.f32.gmra.mxu0 %v393
      %v2053 = vpop.f32.mrf.mxu0
      %v2054 = vadd.f32 %v1845, %v2053
      %2055 = vmatmul.f32.gmra.mxu0 %v400
      %v2056 = vpop.f32.mrf.mxu0
      %v2057 = vadd.f32 %v1848, %v2056
      %2058 = vmatmul.f32.gmra.mxu0 %v407
      %v2059 = vpop.f32.mrf.mxu0
      %v2060 = vadd.f32 %v1851, %v2059
      %2061 = vmatmul.f32.gmra.mxu0 %v414
      %v2062 = vpop.f32.mrf.mxu0
      %v2063 = vadd.f32 %v1854, %v2062
      %2064 = vmatmul.f32.gmra.mxu0 %v421
      %v2065 = vpop.f32.mrf.mxu0
      %v2066 = vadd.f32 %v1857, %v2065
      %2067 = vmatmul.f32.gmra.mxu0 %v428
      %v2068 = vpop.f32.mrf.mxu0
      %v2069 = vadd.f32 %v1860, %v2068
      %2070 = vmatmul.f32.gmra.mxu0 %v435
      %v2071 = vpop.f32.mrf.mxu0
      %v2072 = vadd.f32 %v1863, %v2071
      %2073 = vmatmul.f32.gmra.mxu0 %v442
      %v2074 = vpop.f32.mrf.mxu0
      %v2075 = vadd.f32 %v1866, %v2074
      %2076 = vmatmul.f32.gmra.mxu0 %v449
      %v2077 = vpop.f32.mrf.mxu0
      %v2078 = vadd.f32 %v1869, %v2077
      %2079 = vmatmul.f32.gmra.mxu0 %v456
      %v2080 = vpop.f32.mrf.mxu0
      %v2081 = vadd.f32 %v1872, %v2080
      %2082 = vmatmul.f32.gmra.mxu0 %v463
      %v2083 = vpop.f32.mrf.mxu0
      %v2084 = vadd.f32 %v1875, %v2083
      %2085 = vmatmul.f32.gmra.mxu0 %v470
      %v2086 = vpop.f32.mrf.mxu0
      %v2087 = vadd.f32 %v1878, %v2086
      %2088 = vmatmul.f32.gmra.mxu0 %v477
      %v2089 = vpop.f32.mrf.mxu0
      %v2090 = vadd.f32 %v1881, %v2089
      %2091 = vmatmul.f32.gmra.mxu0 %v484
      %v2092 = vpop.f32.mrf.mxu0
      %v2093 = vadd.f32 %v1884, %v2092
      %2094 = vmatmul.f32.gmra.mxu0 %v491
      %v2095 = vpop.f32.mrf.mxu0
      %v2096 = vadd.f32 %v1887, %v2095
      %2097 = vmatmul.f32.gmra.mxu0 %v498
      %v2098 = vpop.f32.mrf.mxu0
      %v2099 = vadd.f32 %v1890, %v2098
      %2100 = vmatmul.f32.gmra.mxu0 %v505
      %v2101 = vpop.f32.mrf.mxu0
      %v2102 = vadd.f32 %v1893, %v2101
      %2103 = vmatmul.f32.gmra.mxu0 %v512
      %v2104 = vpop.f32.mrf.mxu0
      %v2105 = vadd.f32 %v1896, %v2104
      %2106 = vmatmul.f32.gmra.mxu0 %v519
      %v2107 = vpop.f32.mrf.mxu0
      %v2108 = vadd.f32 %v1899, %v2107
      %2109 = vmatmul.f32.gmra.mxu0 %v526
      %v2110 = vpop.f32.mrf.mxu0
      %v2111 = vadd.f32 %v1902, %v2110
      %2112 = vmatmul.f32.gmra.mxu0 %v533
      %v2113 = vpop.f32.mrf.mxu0
      %v2114 = vadd.f32 %v1905, %v2113
      %2115 = vmatmul.f32.gmra.mxu0 %v540
      %v2116 = vpop.f32.mrf.mxu0
      %v2117 = vadd.f32 %v1908, %v2116
      %2118 = vmatmul.f32.gmra.mxu0 %v547
      %v2119 = vpop.f32.mrf.mxu0
      %v2120 = vadd.f32 %v1911, %v2119
      %2121 = vmatmul.f32.gmra.mxu0 %v554
      %v2122 = vpop.f32.mrf.mxu0
      %v2123 = vadd.f32 %v1914, %v2122
      %2124 = vmatmul.f32.gmra.mxu0 %v561
      %v2125 = vpop.f32.mrf.mxu0
      %v2126 = vadd.f32 %v1917, %v2125
      %2127 = vmatmul.f32.gmra.mxu0 %v568
      %v2128 = vpop.f32.mrf.mxu0
      %v2129 = vadd.f32 %v1920, %v2128
      %2130 = vmatmul.f32.gmra.mxu0 %v575
      %v2131 = vpop.f32.mrf.mxu0
      %v2132 = vadd.f32 %v1923, %v2131
      %2133 = vmatmul.f32.gmra.mxu0 %v582
      %v2134 = vpop.f32.mrf.mxu0
      %v2135 = vadd.f32 %v1926, %v2134
      %2136 = vmatmul.f32.gmra.mxu0 %v589
      %v2137 = vpop.f32.mrf.mxu0
      %v2138 = vadd.f32 %v1929, %v2137
      %2139 = vmatmul.f32.gmra.mxu0 %v596
      %v2140 = vpop.f32.mrf.mxu0
      %v2141 = vadd.f32 %v1932, %v2140
      %2142 = vdwg.mxu0
      %2143 = vmatpush.msra.mxu0 0.0
      %2144 = vmatpush.msra.mxu0 0.0
      %2145 = vmatpush.msra.mxu0 0.0
      %2146 = vmatpush.msra.mxu0 0.0
      %2147 = vmatpush.msra.mxu0 0.0
      %2148 = vmatpush.msra.mxu0 0.0
      %2149 = vmatpush.msra.mxu0 0.0
      %2150 = vmatpush.msra.mxu0 0.0
      %2151 = vmatpush.msra.mxu0 0.0
      %2152 = vmatpush.msra.mxu0 0.0
      %2153 = vmatpush.msra.mxu0 0.0
      %2154 = vmatpush.msra.mxu0 0.0
      %2155 = vmatpush.msra.mxu0 0.0
      %2156 = vmatpush.msra.mxu0 0.0
      %2157 = vmatpush.msra.mxu0 %v695
      %2158 = vmatpush.msra.mxu0 %v694
      %2159 = vmatmul.f32.gmra.mxu0 %v698
      %v2160 = vpop.f32.mrf.mxu0
      %v2161 = vadd.f32 %v1952, %v2160
      %2162 = vmatmul.f32.gmra.mxu0 %v701
      %v2163 = vpop.f32.mrf.mxu0
      %v2164 = vadd.f32 %v1955, %v2163
      %2165 = vmatmul.f32.gmra.mxu0 %v704
      %v2166 = vpop.f32.mrf.mxu0
      %v2167 = vadd.f32 %v1958, %v2166
      %2168 = vmatmul.f32.gmra.mxu0 %v707
      %v2169 = vpop.f32.mrf.mxu0
      %v2170 = vadd.f32 %v1961, %v2169
      %2171 = vmatmul.f32.gmra.mxu0 %v710
      %v2172 = vpop.f32.mrf.mxu0
      %v2173 = vadd.f32 %v1964, %v2172
      %2174 = vmatmul.f32.gmra.mxu0 %v713
      %v2175 = vpop.f32.mrf.mxu0
      %v2176 = vadd.f32 %v1967, %v2175
      %2177 = vmatmul.f32.gmra.mxu0 %v716
      %v2178 = vpop.f32.mrf.mxu0
      %v2179 = vadd.f32 %v1970, %v2178
      %2180 = vmatmul.f32.gmra.mxu0 %v719
      %v2181 = vpop.f32.mrf.mxu0
      %v2182 = vadd.f32 %v1973, %v2181
      %2183 = vmatmul.f32.gmra.mxu0 %v722
      %v2184 = vpop.f32.mrf.mxu0
      %v2185 = vadd.f32 %v1976, %v2184
      %2186 = vmatmul.f32.gmra.mxu0 %v725
      %v2187 = vpop.f32.mrf.mxu0
      %v2188 = vadd.f32 %v1979, %v2187
      %2189 = vmatmul.f32.gmra.mxu0 %v728
      %v2190 = vpop.f32.mrf.mxu0
      %v2191 = vadd.f32 %v1982, %v2190
      %2192 = vmatmul.f32.gmra.mxu0 %v731
      %v2193 = vpop.f32.mrf.mxu0
      %v2194 = vadd.f32 %v1985, %v2193
      %2195 = vmatmul.f32.gmra.mxu0 %v734
      %v2196 = vpop.f32.mrf.mxu0
      %v2197 = vadd.f32 %v1988, %v2196
      %2198 = vmatmul.f32.gmra.mxu0 %v737
      %v2199 = vpop.f32.mrf.mxu0
      %v2200 = vadd.f32 %v1991, %v2199
      %2201 = vmatmul.f32.gmra.mxu0 %v740
      %v2202 = vpop.f32.mrf.mxu0
      %v2203 = vadd.f32 %v1994, %v2202
      %2204 = vmatmul.f32.gmra.mxu0 %v743
      %v2205 = vpop.f32.mrf.mxu0
      %v2206 = vadd.f32 %v1997, %v2205
      %2207 = vmatmul.f32.gmra.mxu0 %v746
      %v2208 = vpop.f32.mrf.mxu0
      %v2209 = vadd.f32 %v2000, %v2208
      %2210 = vmatmul.f32.gmra.mxu0 %v749
      %v2211 = vpop.f32.mrf.mxu0
      %v2212 = vadd.f32 %v2003, %v2211
      %2213 = vmatmul.f32.gmra.mxu0 %v752
      %v2214 = vpop.f32.mrf.mxu0
      %v2215 = vadd.f32 %v2006, %v2214
      %2216 = vmatmul.f32.gmra.mxu0 %v755
      %v2217 = vpop.f32.mrf.mxu0
      %v2218 = vadd.f32 %v2009, %v2217
      %2219 = vmatmul.f32.gmra.mxu0 %v758
      %v2220 = vpop.f32.mrf.mxu0
      %v2221 = vadd.f32 %v2012, %v2220
      %2222 = vmatmul.f32.gmra.mxu0 %v761
      %v2223 = vpop.f32.mrf.mxu0
      %v2224 = vadd.f32 %v2015, %v2223
      %2225 = vmatmul.f32.gmra.mxu0 %v764
      %v2226 = vpop.f32.mrf.mxu0
      %v2227 = vadd.f32 %v2018, %v2226
      %2228 = vmatmul.f32.gmra.mxu0 %v767
      %v2229 = vpop.f32.mrf.mxu0
      %v2230 = vadd.f32 %v2021, %v2229
      %2231 = vmatmul.f32.gmra.mxu0 %v770
      %v2232 = vpop.f32.mrf.mxu0
      %v2233 = vadd.f32 %v2024, %v2232
      %2234 = vmatmul.f32.gmra.mxu0 %v773
      %v2235 = vpop.f32.mrf.mxu0
      %v2236 = vadd.f32 %v2027, %v2235
      %2237 = vmatmul.f32.gmra.mxu0 %v776
      %v2238 = vpop.f32.mrf.mxu0
      %v2239 = vadd.f32 %v2030, %v2238
      %2240 = vmatmul.f32.gmra.mxu0 %v779
      %v2241 = vpop.f32.mrf.mxu0
      %v2242 = vadd.f32 %v2033, %v2241
      %2243 = vmatmul.f32.gmra.mxu0 %v782
      %v2244 = vpop.f32.mrf.mxu0
      %v2245 = vadd.f32 %v2036, %v2244
      %2246 = vmatmul.f32.gmra.mxu0 %v785
      %v2247 = vpop.f32.mrf.mxu0
      %v2248 = vadd.f32 %v2039, %v2247
      %2249 = vmatmul.f32.gmra.mxu0 %v788
      %v2250 = vpop.f32.mrf.mxu0
      %v2251 = vadd.f32 %v2042, %v2250
      %2252 = vmatmul.f32.gmra.mxu0 %v791
      %v2253 = vpop.f32.mrf.mxu0
      %v2254 = vadd.f32 %v2045, %v2253
      %2255 = vmatmul.f32.gmra.mxu0 %v794
      %v2256 = vpop.f32.mrf.mxu0
      %v2257 = vadd.f32 %v2048, %v2256
      %2258 = vmatmul.f32.gmra.mxu0 %v797
      %v2259 = vpop.f32.mrf.mxu0
      %v2260 = vadd.f32 %v2051, %v2259
      %2261 = vmatmul.f32.gmra.mxu0 %v800
      %v2262 = vpop.f32.mrf.mxu0
      %v2263 = vadd.f32 %v2054, %v2262
      %2264 = vmatmul.f32.gmra.mxu0 %v803
      %v2265 = vpop.f32.mrf.mxu0
      %v2266 = vadd.f32 %v2057, %v2265
      %2267 = vmatmul.f32.gmra.mxu0 %v806
      %v2268 = vpop.f32.mrf.mxu0
      %v2269 = vadd.f32 %v2060, %v2268
      %2270 = vmatmul.f32.gmra.mxu0 %v809
      %v2271 = vpop.f32.mrf.mxu0
      %v2272 = vadd.f32 %v2063, %v2271
      %2273 = vmatmul.f32.gmra.mxu0 %v812
      %v2274 = vpop.f32.mrf.mxu0
      %v2275 = vadd.f32 %v2066, %v2274
      %2276 = vmatmul.f32.gmra.mxu0 %v815
      %v2277 = vpop.f32.mrf.mxu0
      %v2278 = vadd.f32 %v2069, %v2277
      %2279 = vmatmul.f32.gmra.mxu0 %v818
      %v2280 = vpop.f32.mrf.mxu0
      %v2281 = vadd.f32 %v2072, %v2280
      %2282 = vmatmul.f32.gmra.mxu0 %v821
      %v2283 = vpop.f32.mrf.mxu0
      %v2284 = vadd.f32 %v2075, %v2283
      %2285 = vmatmul.f32.gmra.mxu0 %v824
      %v2286 = vpop.f32.mrf.mxu0
      %v2287 = vadd.f32 %v2078, %v2286
      %2288 = vmatmul.f32.gmra.mxu0 %v827
      %v2289 = vpop.f32.mrf.mxu0
      %v2290 = vadd.f32 %v2081, %v2289
      %2291 = vmatmul.f32.gmra.mxu0 %v830
      %v2292 = vpop.f32.mrf.mxu0
      %v2293 = vadd.f32 %v2084, %v2292
      %2294 = vmatmul.f32.gmra.mxu0 %v833
      %v2295 = vpop.f32.mrf.mxu0
      %v2296 = vadd.f32 %v2087, %v2295
      %2297 = vmatmul.f32.gmra.mxu0 %v836
      %v2298 = vpop.f32.mrf.mxu0
      %v2299 = vadd.f32 %v2090, %v2298
      %2300 = vmatmul.f32.gmra.mxu0 %v839
      %v2301 = vpop.f32.mrf.mxu0
      %v2302 = vadd.f32 %v2093, %v2301
      %2303 = vmatmul.f32.gmra.mxu0 %v842
      %v2304 = vpop.f32.mrf.mxu0
      %v2305 = vadd.f32 %v2096, %v2304
      %2306 = vmatmul.f32.gmra.mxu0 %v845
      %v2307 = vpop.f32.mrf.mxu0
      %v2308 = vadd.f32 %v2099, %v2307
      %2309 = vmatmul.f32.gmra.mxu0 %v848
      %v2310 = vpop.f32.mrf.mxu0
      %v2311 = vadd.f32 %v2102, %v2310
      %2312 = vmatmul.f32.gmra.mxu0 %v851
      %v2313 = vpop.f32.mrf.mxu0
      %v2314 = vadd.f32 %v2105, %v2313
      %2315 = vmatmul.f32.gmra.mxu0 %v854
      %v2316 = vpop.f32.mrf.mxu0
      %v2317 = vadd.f32 %v2108, %v2316
      %2318 = vmatmul.f32.gmra.mxu0 %v857
      %v2319 = vpop.f32.mrf.mxu0
      %v2320 = vadd.f32 %v2111, %v2319
      %2321 = vmatmul.f32.gmra.mxu0 %v860
      %v2322 = vpop.f32.mrf.mxu0
      %v2323 = vadd.f32 %v2114, %v2322
      %2324 = vmatmul.f32.gmra.mxu0 %v863
      %v2325 = vpop.f32.mrf.mxu0
      %v2326 = vadd.f32 %v2117, %v2325
      %2327 = vmatmul.f32.gmra.mxu0 %v866
      %v2328 = vpop.f32.mrf.mxu0
      %v2329 = vadd.f32 %v2120, %v2328
      %2330 = vmatmul.f32.gmra.mxu0 %v869
      %v2331 = vpop.f32.mrf.mxu0
      %v2332 = vadd.f32 %v2123, %v2331
      %2333 = vmatmul.f32.gmra.mxu0 %v872
      %v2334 = vpop.f32.mrf.mxu0
      %v2335 = vadd.f32 %v2126, %v2334
      %2336 = vmatmul.f32.gmra.mxu0 %v875
      %v2337 = vpop.f32.mrf.mxu0
      %v2338 = vadd.f32 %v2129, %v2337
      %2339 = vmatmul.f32.gmra.mxu0 %v878
      %v2340 = vpop.f32.mrf.mxu0
      %v2341 = vadd.f32 %v2132, %v2340
      %2342 = vmatmul.f32.gmra.mxu0 %v881
      %v2343 = vpop.f32.mrf.mxu0
      %v2344 = vadd.f32 %v2135, %v2343
      %2345 = vmatmul.f32.gmra.mxu0 %v884
      %v2346 = vpop.f32.mrf.mxu0
      %v2347 = vadd.f32 %v2138, %v2346
      %2348 = vmatmul.f32.gmra.mxu0 %v887
      %v2349 = vpop.f32.mrf.mxu0
      %v2350 = vadd.f32 %v2141, %v2349
      %2351 = vdwg.mxu0
      %vm2352 = vcmask 400384
      %2353 = vst.msk [vmem:[%s148] sm:$0xff] %vm2352, %v2161
      %2354 = vst.msk [vmem:[%s148 + $0x8] sm:$0xff] %vm2352, %v2164
      %2355 = vst.msk [vmem:[%s148 + $0x10] sm:$0xff] %vm2352, %v2167
      %2356 = vst.msk [vmem:[%s148 + $0x18] sm:$0xff] %vm2352, %v2170
      %2357 = vst.msk [vmem:[%s148 + $0x20] sm:$0xff] %vm2352, %v2173
      %2358 = vst.msk [vmem:[%s148 + $0x28] sm:$0xff] %vm2352, %v2176
      %2359 = vst.msk [vmem:[%s148 + $0x30] sm:$0xff] %vm2352, %v2179
      %2360 = vst.msk [vmem:[%s148 + $0x38] sm:$0xff] %vm2352, %v2182
      %2361 = vst.msk [vmem:[%s148 + $0x40] sm:$0xff] %vm2352, %v2185
      %2362 = vst.msk [vmem:[%s148 + $0x48] sm:$0xff] %vm2352, %v2188
      %2363 = vst.msk [vmem:[%s148 + $0x50] sm:$0xff] %vm2352, %v2191
      %2364 = vst.msk [vmem:[%s148 + $0x58] sm:$0xff] %vm2352, %v2194
      %2365 = vst.msk [vmem:[%s148 + $0x60] sm:$0xff] %vm2352, %v2197
      %2366 = vst.msk [vmem:[%s148 + $0x68] sm:$0xff] %vm2352, %v2200
      %2367 = vst.msk [vmem:[%s148 + $0x70] sm:$0xff] %vm2352, %v2203
      %2368 = vst.msk [vmem:[%s148 + $0x78] sm:$0xff] %vm2352, %v2206
      %2369 = vst.msk [vmem:[%s148 + $0x80] sm:$0xff] %vm2352, %v2209
      %2370 = vst.msk [vmem:[%s148 + $0x88] sm:$0xff] %vm2352, %v2212
      %2371 = vst.msk [vmem:[%s148 + $0x90] sm:$0xff] %vm2352, %v2215
      %2372 = vst.msk [vmem:[%s148 + $0x98] sm:$0xff] %vm2352, %v2218
      %2373 = vst.msk [vmem:[%s148 + $0xa0] sm:$0xff] %vm2352, %v2221
      %2374 = vst.msk [vmem:[%s148 + $0xa8] sm:$0xff] %vm2352, %v2224
      %2375 = vst.msk [vmem:[%s148 + $0xb0] sm:$0xff] %vm2352, %v2227
      %2376 = vst.msk [vmem:[%s148 + $0xb8] sm:$0xff] %vm2352, %v2230
      %2377 = vst.msk [vmem:[%s148 + $0xc0] sm:$0xff] %vm2352, %v2233
      %2378 = vst.msk [vmem:[%s148 + $0xc8] sm:$0xff] %vm2352, %v2236
      %2379 = vst.msk [vmem:[%s148 + $0xd0] sm:$0xff] %vm2352, %v2239
      %2380 = vst.msk [vmem:[%s148 + $0xd8] sm:$0xff] %vm2352, %v2242
      %2381 = vst.msk [vmem:[%s148 + $0xe0] sm:$0xff] %vm2352, %v2245
      %2382 = vst.msk [vmem:[%s148 + $0xe8] sm:$0xff] %vm2352, %v2248
      %2383 = vst.msk [vmem:[%s148 + $0xf0] sm:$0xff] %vm2352, %v2251
      %2384 = vst.msk [vmem:[%s148 + $0xf8] sm:$0xff] %vm2352, %v2254
      %2385 = vst.msk [vmem:[%s148 + $0x100] sm:$0xff] %vm2352, %v2257
      %2386 = vst.msk [vmem:[%s148 + $0x108] sm:$0xff] %vm2352, %v2260
      %2387 = vst.msk [vmem:[%s148 + $0x110] sm:$0xff] %vm2352, %v2263
      %2388 = vst.msk [vmem:[%s148 + $0x118] sm:$0xff] %vm2352, %v2266
      %2389 = vst.msk [vmem:[%s148 + $0x120] sm:$0xff] %vm2352, %v2269
      %2390 = vst.msk [vmem:[%s148 + $0x128] sm:$0xff] %vm2352, %v2272
      %2391 = vst.msk [vmem:[%s148 + $0x130] sm:$0xff] %vm2352, %v2275
      %2392 = vst.msk [vmem:[%s148 + $0x138] sm:$0xff] %vm2352, %v2278
      %2393 = vst.msk [vmem:[%s148 + $0x140] sm:$0xff] %vm2352, %v2281
      %2394 = vst.msk [vmem:[%s148 + $0x148] sm:$0xff] %vm2352, %v2284
      %2395 = vst.msk [vmem:[%s148 + $0x150] sm:$0xff] %vm2352, %v2287
      %2396 = vst.msk [vmem:[%s148 + $0x158] sm:$0xff] %vm2352, %v2290
      %2397 = vst.msk [vmem:[%s148 + $0x160] sm:$0xff] %vm2352, %v2293
      %2398 = vst.msk [vmem:[%s148 + $0x168] sm:$0xff] %vm2352, %v2296
      %2399 = vst.msk [vmem:[%s148 + $0x170] sm:$0xff] %vm2352, %v2299
      %2400 = vst.msk [vmem:[%s148 + $0x178] sm:$0xff] %vm2352, %v2302
      %2401 = vst.msk [vmem:[%s148 + $0x180] sm:$0xff] %vm2352, %v2305
      %2402 = vst.msk [vmem:[%s148 + $0x188] sm:$0xff] %vm2352, %v2308
      %2403 = vst.msk [vmem:[%s148 + $0x190] sm:$0xff] %vm2352, %v2311
      %2404 = vst.msk [vmem:[%s148 + $0x198] sm:$0xff] %vm2352, %v2314
      %2405 = vst.msk [vmem:[%s148 + $0x1a0] sm:$0xff] %vm2352, %v2317
      %2406 = vst.msk [vmem:[%s148 + $0x1a8] sm:$0xff] %vm2352, %v2320
      %2407 = vst.msk [vmem:[%s148 + $0x1b0] sm:$0xff] %vm2352, %v2323
      %2408 = vst.msk [vmem:[%s148 + $0x1b8] sm:$0xff] %vm2352, %v2326
      %2409 = vst.msk [vmem:[%s148 + $0x1c0] sm:$0xff] %vm2352, %v2329
      %2410 = vst.msk [vmem:[%s148 + $0x1c8] sm:$0xff] %vm2352, %v2332
      %2411 = vst.msk [vmem:[%s148 + $0x1d0] sm:$0xff] %vm2352, %v2335
      %2412 = vst.msk [vmem:[%s148 + $0x1d8] sm:$0xff] %vm2352, %v2338
      %2413 = vst.msk [vmem:[%s148 + $0x1e0] sm:$0xff] %vm2352, %v2341
      %2414 = vst.msk [vmem:[%s148 + $0x1e8] sm:$0xff] %vm2352, %v2344
      %2415 = vst.msk [vmem:[%s148 + $0x1f0] sm:$0xff] %vm2352, %v2347
      %2416 = vst.msk [vmem:[%s148 + $0x1f8] sm:$0xff] %vm2352, %v2350
      %s2417 = smul.u32 64, %s13
      %p2418 = scmp.lt.s32.totalorder %s2417, 127
      %s2419 = scalar_select %p2418, %s2417, 127
      %s2420 = smul.addr %s2419, 8
      %s2421 = scalar_lea.vmem %s2, %s2420
      // Predicated region
      $region29: #{multimodal_concat_forward.2} parent=27 // pred_check
        %p2422 = pneg %p78
      $region30: #{multimodal_concat_forward.2} parent=27 // pred_check_branch
        %2424 = sbr.rel (%p2422) target = $region32
      $region31: #{multimodal_concat_forward.2} parent=27 // pred_region
        %s2425 = smul.u32 64, %s13
      $region32: #{multimodal_concat_forward.2} parent=27 // pred_fallthru
        _
    $region28: #{multimodal_concat_forward.2} parent=5 // pred_fallthru
      _
    %p2426 = scmp.le.s32.totalorder 2, %s8
    // Predicated region
    $region33: #{multimodal_concat_forward.2} parent=5 // pred_check
      %p2427 = pneg %p2426
    $region34: #{multimodal_concat_forward.2} parent=5 // pred_check_branch
      %2429 = sbr.rel (%p2427) target = $region36
    $region35: #{multimodal_concat_forward.2} parent=5 // pred_region
      %s2430 = ssub.s32 %s8, 2
      // Predicated region
      $region37: #{multimodal_concat_forward.2} parent=35 // pred_check
        %p2431 = pneg %p84
      $region38: #{multimodal_concat_forward.2} parent=35 // pred_check_branch
        %2433 = sbr.rel (%p2431) target = $region40
      $region39: #{multimodal_concat_forward.2} parent=35 // pred_region
        %s2434 = smul.u32 64, %s14
        %p2435 = scmp.lt.s32.totalorder %s2434, 127
        %s2436 = scalar_select %p2435, %s2434, 127
        %s2437 = smul.addr %s2436, 8
        %s2438 = scalar_lea.vmem %s2, %s2437
      $region40: #{multimodal_concat_forward.2} parent=35 // pred_fallthru
        _
    $region36: #{multimodal_concat_forward.2} parent=5 // pred_fallthru
      _
  $region6: #{multimodal_concat_forward.2} parent=0 // loop_footer
    %s12 = sadd.s32 1, %s8
  $region7: #{multimodal_concat_forward.2} parent=0 // loop_footer_branch
    %7 = sbr.rel target = $region3
  $region8: #{multimodal_concat_forward.2} parent=0 // loop_exit
    _

// kernel: multimodal_concat_forward.3
$region0: #{multimodal_concat_forward.3}
  #allocation0 [shape = 'u32[]', space=smem, size = 0x4, offset = 0x4, fixed_abs, tag = 'smem constant byte address 0x4 - core index']
  #allocation1 [shape = 'u32[72,128]{1,0:T(1,128)}', space=vmem, size = 0x9000, scoped, tag = 'internal scratch']
  %s0 = inlined_call_operand.vmem [shape: f32[2,25088], index: 0, kind: input, shape index: {}]
  %s1 = inlined_call_operand.vmem [shape: f32[32,25088], index: 1, kind: input, shape index: {}]
  %s2 = inlined_call_operand.vmem [shape: f32[32,4], index: 2, kind: input, shape index: {}]
  %s3 = inlined_call_operand.vmem [shape: f32[1,32], index: 3, kind: input, shape index: {}]
  %s4 = inlined_call_operand.vmem [shape: f32[2,4], index: 4, kind: input, shape index: {}]
  %s5 = inlined_call_operand.hbm [shape: f32[2,4], index: 5, kind: output, shape index: {}]
  %s6 = sld [smem:[#allocation0]]
  $region30: #{multimodal_concat_forward.3} parent=0
    _
  %s8 = ssub.s32 1, %s6
  %s9 = scalar_select 0, %s8, %s6
  $region1: #{multimodal_concat_forward.3} parent=0
    #allocation2 [shape = 'u8[1024]{0}', space=vmem, size = 0x400, scoped, tag = 'output window, operand 0, single buffered']
    #allocation3 [shape = 's32[1]{0}', space=sflag, size = 0x4, scoped, tag = 'scoped memory for multimodal_concat_forward.3']
    %10 = vsyncpa [#allocation3], 0
    // Predicated region
    $region2: #{multimodal_concat_forward.3} parent=1 // pred_check
      _
    $region3: #{multimodal_concat_forward.3} parent=1 // pred_check_branch
      %12 = sbr.rel (0) target = $region5
    $region4: #{multimodal_concat_forward.3} parent=1 // pred_region
      _
    $region5: #{multimodal_concat_forward.3} parent=1 // pred_fallthru
      _
    // Predicated region
    $region6: #{multimodal_concat_forward.3} parent=1 // pred_check
      _
    $region7: #{multimodal_concat_forward.3} parent=1 // pred_check_branch
      %14 = sbr.rel (0) target = $region9
    $region8: #{multimodal_concat_forward.3} parent=1 // pred_region
      _
    $region9: #{multimodal_concat_forward.3} parent=1 // pred_fallthru
      _
    // Predicated region
    $region10: #{multimodal_concat_forward.3} parent=1 // pred_check
      _
    $region11: #{multimodal_concat_forward.3} parent=1 // pred_check_branch
      %16 = sbr.rel (0) target = $region13
    $region12: #{multimodal_concat_forward.3} parent=1 // pred_region
      _
    $region13: #{multimodal_concat_forward.3} parent=1 // pred_fallthru
      _
    // Predicated region
    $region14: #{multimodal_concat_forward.3} parent=1 // pred_check
      _
    $region15: #{multimodal_concat_forward.3} parent=1 // pred_check_branch
      %18 = sbr.rel (0) target = $region17
    $region16: #{multimodal_concat_forward.3} parent=1 // pred_region
      _
    $region17: #{multimodal_concat_forward.3} parent=1 // pred_fallthru
      _
    // Predicated region
    $region18: #{multimodal_concat_forward.3} parent=1 // pred_check
      _
    $region19: #{multimodal_concat_forward.3} parent=1 // pred_check_branch
      %20 = sbr.rel (0) target = $region21
    $region20: #{multimodal_concat_forward.3} parent=1 // pred_region
      _
    $region21: #{multimodal_concat_forward.3} parent=1 // pred_fallthru
      _
    %v21 = vld [vmem:[%s0] sm:$0xff]
    %v22 = vld [vmem:[%s0 + $0x8] sm:$0xff]
    %v23 = vld [vmem:[%s0 + $0x10] sm:$0xff]
    %v24 = vld [vmem:[%s0 + $0x18] sm:$0xff]
    %v25 = vld [vmem:[%s0 + $0x20] sm:$0xff]
    %v26 = vld [vmem:[%s0 + $0x28] sm:$0xff]
    %v27 = vld [vmem:[%s0 + $0x30] sm:$0xff]
    %v28 = vld [vmem:[%s0 + $0x38] sm:$0xff]
    %v29 = vld [vmem:[%s0 + $0x40] sm:$0xff]
    %v30 = vld [vmem:[%s0 + $0x48] sm:$0xff]
    %v31 = vld [vmem:[%s0 + $0x50] sm:$0xff]
    %v32 = vld [vmem:[%s0 + $0x58] sm:$0xff]
    %v33 = vld [vmem:[%s0 + $0x60] sm:$0xff]
    %v34 = vld [vmem:[%s0 + $0x68] sm:$0xff]
    %v35 = vld [vmem:[%s0 + $0x70] sm:$0xff]
    %v36 = vld [vmem:[%s0 + $0x78] sm:$0xff]
    %v37 = vld [vmem:[%s0 + $0x80] sm:$0xff]
    %v38 = vld [vmem:[%s0 + $0x88] sm:$0xff]
    %v39 = vld [vmem:[%s0 + $0x90] sm:$0xff]
    %v40 = vld [vmem:[%s0 + $0x98] sm:$0xff]
    %v41 = vld [vmem:[%s0 + $0xa0] sm:$0xff]
    %v42 = vld [vmem:[%s0 + $0xa8] sm:$0xff]
    %v43 = vld [vmem:[%s0 + $0xb0] sm:$0xff]
    %v44 = vld [vmem:[%s0 + $0xb8] sm:$0xff]
    %v45 = vld [vmem:[%s0 + $0xc0] sm:$0xff]
    %v46 = vld [vmem:[%s0 + $0xc8] sm:$0xff]
    %v47 = vld [vmem:[%s0 + $0xd0] sm:$0xff]
    %v48 = vld [vmem:[%s0 + $0xd8] sm:$0xff]
    %v49 = vld [vmem:[%s0 + $0xe0] sm:$0xff]
    %v50 = vld [vmem:[%s0 + $0xe8] sm:$0xff]
    %v51 = vld [vmem:[%s0 + $0xf0] sm:$0xff]
    %v52 = vld [vmem:[%s0 + $0xf8] sm:$0xff]
    %v53 = vld [vmem:[%s0 + $0x100] sm:$0xff]
    %v54 = vld [vmem:[%s0 + $0x108] sm:$0xff]
    %v55 = vld [vmem:[%s0 + $0x110] sm:$0xff]
    %v56 = vld [vmem:[%s0 + $0x118] sm:$0xff]
    %v57 = vld [vmem:[%s0 + $0x120] sm:$0xff]
    %v58 = vld [vmem:[%s0 + $0x128] sm:$0xff]
    %v59 = vld [vmem:[%s0 + $0x130] sm:$0xff]
    %v60 = vld [vmem:[%s0 + $0x138] sm:$0xff]
    %v61 = vld [vmem:[%s0 + $0x140] sm:$0xff]
    %v62 = vld [vmem:[%s0 + $0x148] sm:$0xff]
    %v63 = vld [vmem:[%s0 + $0x150] sm:$0xff]
    %v64 = vld [vmem:[%s0 + $0x158] sm:$0xff]
    %v65 = vld [vmem:[%s0 + $0x160] sm:$0xff]
    %v66 = vld [vmem:[%s0 + $0x168] sm:$0xff]
    %v67 = vld [vmem:[%s0 + $0x170] sm:$0xff]
    %v68 = vld [vmem:[%s0 + $0x178] sm:$0xff]
    %v69 = vld [vmem:[%s0 + $0x180] sm:$0xff]
    %v70 = vld [vmem:[%s1] sm:$0xff]
    %v71 = vld [vmem:[%s1 + $0x8] sm:$0xff]
    %v72 = vld [vmem:[%s1 + $0x10] sm:$0xff]
    %v73 = vld [vmem:[%s1 + $0x18] sm:$0xff]
    %v74 = vld [vmem:[%s1 + $0x20] sm:$0xff]
    %v75 = vld [vmem:[%s1 + $0x28] sm:$0xff]
    %v76 = vld [vmem:[%s1 + $0x30] sm:$0xff]
    %v77 = vld [vmem:[%s1 + $0x38] sm:$0xff]
    %v78 = vld [vmem:[%s1 + $0x40] sm:$0xff]
    %v79 = vld [vmem:[%s1 + $0x48] sm:$0xff]
    %v80 = vld [vmem:[%s1 + $0x50] sm:$0xff]
    %v81 = vld [vmem:[%s1 + $0x58] sm:$0xff]
    %v82 = vld [vmem:[%s1 + $0x60] sm:$0xff]
    %v83 = vld [vmem:[%s1 + $0x68] sm:$0xff]
    %v84 = vld [vmem:[%s1 + $0x70] sm:$0xff]
    %v85 = vld [vmem:[%s1 + $0x78] sm:$0xff]
    %v86 = vld [vmem:[%s1 + $0x80] sm:$0xff]
    %v87 = vld [vmem:[%s1 + $0x88] sm:$0xff]
    %v88 = vld [vmem:[%s1 + $0x90] sm:$0xff]
    %v89 = vld [vmem:[%s1 + $0x98] sm:$0xff]
    %v90 = vld [vmem:[%s1 + $0xa0] sm:$0xff]
    %v91 = vld [vmem:[%s1 + $0xa8] sm:$0xff]
    %v92 = vld [vmem:[%s1 + $0xb0] sm:$0xff]
    %v93 = vld [vmem:[%s1 + $0xb8] sm:$0xff]
    %v94 = vld [vmem:[%s1 + $0xc0] sm:$0xff]
    %v95 = vld [vmem:[%s1 + $0xc8] sm:$0xff]
    %v96 = vld [vmem:[%s1 + $0xd0] sm:$0xff]
    %v97 = vld [vmem:[%s1 + $0xd8] sm:$0xff]
    %v98 = vld [vmem:[%s1 + $0xe0] sm:$0xff]
    %v99 = vld [vmem:[%s1 + $0xe8] sm:$0xff]
    %v100 = vld [vmem:[%s1 + $0xf0] sm:$0xff]
    %v101 = vld [vmem:[%s1 + $0xf8] sm:$0xff]
    %v102 = vld [vmem:[%s1 + $0x100] sm:$0xff]
    %v103 = vld [vmem:[%s1 + $0x108] sm:$0xff]
    %v104 = vld [vmem:[%s1 + $0x110] sm:$0xff]
    %v105 = vld [vmem:[%s1 + $0x118] sm:$0xff]
    %v106 = vld [vmem:[%s1 + $0x120] sm:$0xff]
    %v107 = vld [vmem:[%s1 + $0x128] sm:$0xff]
    %v108 = vld [vmem:[%s1 + $0x130] sm:$0xff]
    %v109 = vld [vmem:[%s1 + $0x138] sm:$0xff]
    %v110 = vld [vmem:[%s1 + $0x140] sm:$0xff]
    %v111 = vld [vmem:[%s1 + $0x148] sm:$0xff]
    %v112 = vld [vmem:[%s1 + $0x150] sm:$0xff]
    %v113 = vld [vmem:[%s1 + $0x158] sm:$0xff]
    %v114 = vld [vmem:[%s1 + $0x160] sm:$0xff]
    %v115 = vld [vmem:[%s1 + $0x168] sm:$0xff]
    %v116 = vld [vmem:[%s1 + $0x170] sm:$0xff]
    %v117 = vld [vmem:[%s1 + $0x178] sm:$0xff]
    %v118 = vld [vmem:[%s1 + $0x180] sm:$0xff]
    %v119 = vld [vmem:[%s1 + $0x188] sm:$0xff]
    %v120 = vld [vmem:[%s1 + $0x190] sm:$0xff]
    %v121 = vld [vmem:[%s1 + $0x198] sm:$0xff]
    %v122 = vld [vmem:[%s1 + $0x1a0] sm:$0xff]
    %v123 = vld [vmem:[%s1 + $0x1a8] sm:$0xff]
    %v124 = vld [vmem:[%s1 + $0x1b0] sm:$0xff]
    %v125 = vld [vmem:[%s1 + $0x1b8] sm:$0xff]
    %v126 = vld [vmem:[%s1 + $0x1c0] sm:$0xff]
    %v127 = vld [vmem:[%s1 + $0x1c8] sm:$0xff]
    %v128 = vld [vmem:[%s1 + $0x1d0] sm:$0xff]
    %v129 = vld [vmem:[%s1 + $0x1d8] sm:$0xff]
    %v130 = vld [vmem:[%s1 + $0x1e0] sm:$0xff]
    %v131 = vld [vmem:[%s1 + $0x1e8] sm:$0xff]
    %v132 = vld [vmem:[%s1 + $0x1f0] sm:$0xff]
    %v133 = vld [vmem:[%s1 + $0x1f8] sm:$0xff]
    %v134 = vld [vmem:[%s1 + $0x200] sm:$0xff]
    %v135 = vld [vmem:[%s1 + $0x208] sm:$0xff]
    %v136 = vld [vmem:[%s1 + $0x210] sm:$0xff]
    %v137 = vld [vmem:[%s1 + $0x218] sm:$0xff]
    %v138 = vld [vmem:[%s1 + $0x220] sm:$0xff]
    %v139 = vld [vmem:[%s1 + $0x228] sm:$0xff]
    %v140 = vld [vmem:[%s1 + $0x230] sm:$0xff]
    %v141 = vld [vmem:[%s1 + $0x238] sm:$0xff]
    %v142 = vld [vmem:[%s1 + $0x240] sm:$0xff]
    %v143 = vld [vmem:[%s1 + $0x248] sm:$0xff]
    %v144 = vld [vmem:[%s1 + $0x250] sm:$0xff]
    %v145 = vld [vmem:[%s1 + $0x258] sm:$0xff]
    %v146 = vld [vmem:[%s1 + $0x260] sm:$0xff]
    %v147 = vld [vmem:[%s1 + $0x268] sm:$0xff]
    %v148 = vld [vmem:[%s1 + $0x270] sm:$0xff]
    %v149 = vld [vmem:[%s1 + $0x278] sm:$0xff]
    %v150 = vld [vmem:[%s1 + $0x280] sm:$0xff]
    %v151 = vld [vmem:[%s1 + $0x288] sm:$0xff]
    %v152 = vld [vmem:[%s1 + $0x290] sm:$0xff]
    %v153 = vld [vmem:[%s1 + $0x298] sm:$0xff]
    %v154 = vld [vmem:[%s1 + $0x2a0] sm:$0xff]
    %v155 = vld [vmem:[%s1 + $0x2a8] sm:$0xff]
    %v156 = vld [vmem:[%s1 + $0x2b0] sm:$0xff]
    %v157 = vld [vmem:[%s1 + $0x2b8] sm:$0xff]
    %v158 = vld [vmem:[%s1 + $0x2c0] sm:$0xff]
    %v159 = vld [vmem:[%s1 + $0x2c8] sm:$0xff]
    %v160 = vld [vmem:[%s1 + $0x2d0] sm:$0xff]
    %v161 = vld [vmem:[%s1 + $0x2d8] sm:$0xff]
    %v162 = vld [vmem:[%s1 + $0x2e0] sm:$0xff]
    %v163 = vld [vmem:[%s1 + $0x2e8] sm:$0xff]
    %v164 = vld [vmem:[%s1 + $0x2f0] sm:$0xff]
    %v165 = vld [vmem:[%s1 + $0x2f8] sm:$0xff]
    %v166 = vld [vmem:[%s1 + $0x300] sm:$0xff]
    %v167 = vld [vmem:[%s1 + $0x308] sm:$0xff]
    %v168 = vld [vmem:[%s1 + $0x310] sm:$0xff]
    %v169 = vld [vmem:[%s1 + $0x318] sm:$0xff]
    %v170 = vld [vmem:[%s1 + $0x320] sm:$0xff]
    %v171 = vld [vmem:[%s1 + $0x328] sm:$0xff]
    %v172 = vld [vmem:[%s1 + $0x330] sm:$0xff]
    %v173 = vld [vmem:[%s1 + $0x338] sm:$0xff]
    %v174 = vld [vmem:[%s1 + $0x340] sm:$0xff]
    %v175 = vld [vmem:[%s1 + $0x348] sm:$0xff]
    %v176 = vld [vmem:[%s1 + $0x350] sm:$0xff]
    %v177 = vld [vmem:[%s1 + $0x358] sm:$0xff]
    %v178 = vld [vmem:[%s1 + $0x360] sm:$0xff]
    %v179 = vld [vmem:[%s1 + $0x368] sm:$0xff]
    %v180 = vld [vmem:[%s1 + $0x370] sm:$0xff]
    %v181 = vld [vmem:[%s1 + $0x378] sm:$0xff]
    %v182 = vld [vmem:[%s1 + $0x380] sm:$0xff]
    %v183 = vld [vmem:[%s1 + $0x388] sm:$0xff]
    %v184 = vld [vmem:[%s1 + $0x390] sm:$0xff]
    %v185 = vld [vmem:[%s1 + $0x398] sm:$0xff]
    %v186 = vld [vmem:[%s1 + $0x3a0] sm:$0xff]
    %v187 = vld [vmem:[%s1 + $0x3a8] sm:$0xff]
    %v188 = vld [vmem:[%s1 + $0x3b0] sm:$0xff]
    %v189 = vld [vmem:[%s1 + $0x3b8] sm:$0xff]
    %v190 = vld [vmem:[%s1 + $0x3c0] sm:$0xff]
    %v191 = vld [vmem:[%s1 + $0x3c8] sm:$0xff]
    %v192 = vld [vmem:[%s1 + $0x3d0] sm:$0xff]
    %v193 = vld [vmem:[%s1 + $0x3d8] sm:$0xff]
    %v194 = vld [vmem:[%s1 + $0x3e0] sm:$0xff]
    %v195 = vld [vmem:[%s1 + $0x3e8] sm:$0xff]
    %v196 = vld [vmem:[%s1 + $0x3f0] sm:$0xff]
    %v197 = vld [vmem:[%s1 + $0x3f8] sm:$0xff]
    %v198 = vld [vmem:[%s1 + $0x400] sm:$0xff]
    %v199 = vld [vmem:[%s1 + $0x408] sm:$0xff]
    %v200 = vld [vmem:[%s1 + $0x410] sm:$0xff]
    %v201 = vld [vmem:[%s1 + $0x418] sm:$0xff]
    %v202 = vld [vmem:[%s1 + $0x420] sm:$0xff]
    %v203 = vld [vmem:[%s1 + $0x428] sm:$0xff]
    %v204 = vld [vmem:[%s1 + $0x430] sm:$0xff]
    %v205 = vld [vmem:[%s1 + $0x438] sm:$0xff]
    %v206 = vld [vmem:[%s1 + $0x440] sm:$0xff]
    %v207 = vld [vmem:[%s1 + $0x448] sm:$0xff]
    %v208 = vld [vmem:[%s1 + $0x450] sm:$0xff]
    %v209 = vld [vmem:[%s1 + $0x458] sm:$0xff]
    %v210 = vld [vmem:[%s1 + $0x460] sm:$0xff]
    %v211 = vld [vmem:[%s1 + $0x468] sm:$0xff]
    %v212 = vld [vmem:[%s1 + $0x470] sm:$0xff]
    %v213 = vld [vmem:[%s1 + $0x478] sm:$0xff]
    %v214 = vld [vmem:[%s1 + $0x480] sm:$0xff]
    %v215 = vld [vmem:[%s1 + $0x488] sm:$0xff]
    %v216 = vld [vmem:[%s1 + $0x490] sm:$0xff]
    %v217 = vld [vmem:[%s1 + $0x498] sm:$0xff]
    %v218 = vld [vmem:[%s1 + $0x4a0] sm:$0xff]
    %v219 = vld [vmem:[%s1 + $0x4a8] sm:$0xff]
    %v220 = vld [vmem:[%s1 + $0x4b0] sm:$0xff]
    %v221 = vld [vmem:[%s1 + $0x4b8] sm:$0xff]
    %v222 = vld [vmem:[%s1 + $0x4c0] sm:$0xff]
    %v223 = vld [vmem:[%s1 + $0x4c8] sm:$0xff]
    %v224 = vld [vmem:[%s1 + $0x4d0] sm:$0xff]
    %v225 = vld [vmem:[%s1 + $0x4d8] sm:$0xff]
    %v226 = vld [vmem:[%s1 + $0x4e0] sm:$0xff]
    %v227 = vld [vmem:[%s1 + $0x4e8] sm:$0xff]
    %v228 = vld [vmem:[%s1 + $0x4f0] sm:$0xff]
    %v229 = vld [vmem:[%s1 + $0x4f8] sm:$0xff]
    %v230 = vld [vmem:[%s1 + $0x500] sm:$0xff]
    %v231 = vld [vmem:[%s1 + $0x508] sm:$0xff]
    %v232 = vld [vmem:[%s1 + $0x510] sm:$0xff]
    %v233 = vld [vmem:[%s1 + $0x518] sm:$0xff]
    %v234 = vld [vmem:[%s1 + $0x520] sm:$0xff]
    %v235 = vld [vmem:[%s1 + $0x528] sm:$0xff]
    %v236 = vld [vmem:[%s1 + $0x530] sm:$0xff]
    %v237 = vld [vmem:[%s1 + $0x538] sm:$0xff]
    %v238 = vld [vmem:[%s1 + $0x540] sm:$0xff]
    %v239 = vld [vmem:[%s1 + $0x548] sm:$0xff]
    %v240 = vld [vmem:[%s1 + $0x550] sm:$0xff]
    %v241 = vld [vmem:[%s1 + $0x558] sm:$0xff]
    %v242 = vld [vmem:[%s1 + $0x560] sm:$0xff]
    %v243 = vld [vmem:[%s1 + $0x568] sm:$0xff]
    %v244 = vld [vmem:[%s1 + $0x570] sm:$0xff]
    %v245 = vld [vmem:[%s1 + $0x578] sm:$0xff]
    %v246 = vld [vmem:[%s1 + $0x580] sm:$0xff]
    %v247 = vld [vmem:[%s1 + $0x588] sm:$0xff]
    %v248 = vld [vmem:[%s1 + $0x590] sm:$0xff]
    %v249 = vld [vmem:[%s1 + $0x598] sm:$0xff]
    %v250 = vld [vmem:[%s1 + $0x5a0] sm:$0xff]
    %v251 = vld [vmem:[%s1 + $0x5a8] sm:$0xff]
    %v252 = vld [vmem:[%s1 + $0x5b0] sm:$0xff]
    %v253 = vld [vmem:[%s1 + $0x5b8] sm:$0xff]
    %v254 = vld [vmem:[%s1 + $0x5c0] sm:$0xff]
    %v255 = vld [vmem:[%s1 + $0x5c8] sm:$0xff]
    %v256 = vld [vmem:[%s1 + $0x5d0] sm:$0xff]
    %v257 = vld [vmem:[%s1 + $0x5d8] sm:$0xff]
    %v258 = vld [vmem:[%s1 + $0x5e0] sm:$0xff]
    %v259 = vld [vmem:[%s1 + $0x5e8] sm:$0xff]
    %v260 = vld [vmem:[%s1 + $0x5f0] sm:$0xff]
    %v261 = vld [vmem:[%s1 + $0x5f8] sm:$0xff]
    %v262 = vld [vmem:[%s1 + $0x600] sm:$0xff]
    %v263 = vld [vmem:[%s1 + $0x608] sm:$0xff]
    %v264 = vld [vmem:[%s1 + $0x610] sm:$0xff]
    %v265 = vld [vmem:[%s1 + $0x618] sm:$0xff]
    %v266 = vld [vmem:[%s1 + $0x620] sm:$0xff]
    %v267 = vld [vmem:[%s1 + $0x628] sm:$0xff]
    %v268 = vld [vmem:[%s1 + $0x630] sm:$0xff]
    %v269 = vld [vmem:[%s1 + $0x638] sm:$0xff]
    %v270 = vld [vmem:[%s1 + $0x640] sm:$0xff]
    %v271 = vld [vmem:[%s1 + $0x648] sm:$0xff]
    %v272 = vld [vmem:[%s1 + $0x650] sm:$0xff]
    %v273 = vld [vmem:[%s1 + $0x658] sm:$0xff]
    %v274 = vld [vmem:[%s1 + $0x660] sm:$0xff]
    %v275 = vld [vmem:[%s1 + $0x668] sm:$0xff]
    %v276 = vld [vmem:[%s1 + $0x670] sm:$0xff]
    %v277 = vld [vmem:[%s1 + $0x678] sm:$0xff]
    %v278 = vld [vmem:[%s1 + $0x680] sm:$0xff]
    %v279 = vld [vmem:[%s1 + $0x688] sm:$0xff]
    %v280 = vld [vmem:[%s1 + $0x690] sm:$0xff]
    %v281 = vld [vmem:[%s1 + $0x698] sm:$0xff]
    %v282 = vld [vmem:[%s1 + $0x6a0] sm:$0xff]
    %v283 = vld [vmem:[%s1 + $0x6a8] sm:$0xff]
    %v284 = vld [vmem:[%s1 + $0x6b0] sm:$0xff]
    %v285 = vld [vmem:[%s1 + $0x6b8] sm:$0xff]
    %v286 = vld [vmem:[%s1 + $0x6c0] sm:$0xff]
    %v287 = vld [vmem:[%s1 + $0x6c8] sm:$0xff]
    %v288 = vld [vmem:[%s1 + $0x6d0] sm:$0xff]
    %v289 = vld [vmem:[%s1 + $0x6d8] sm:$0xff]
    %v290 = vld [vmem:[%s1 + $0x6e0] sm:$0xff]
    %v291 = vld [vmem:[%s1 + $0x6e8] sm:$0xff]
    %v292 = vld [vmem:[%s1 + $0x6f0] sm:$0xff]
    %v293 = vld [vmem:[%s1 + $0x6f8] sm:$0xff]
    %v294 = vld [vmem:[%s1 + $0x700] sm:$0xff]
    %v295 = vld [vmem:[%s1 + $0x708] sm:$0xff]
    %v296 = vld [vmem:[%s1 + $0x710] sm:$0xff]
    %v297 = vld [vmem:[%s1 + $0x718] sm:$0xff]
    %v298 = vld [vmem:[%s1 + $0x720] sm:$0xff]
    %v299 = vld [vmem:[%s1 + $0x728] sm:$0xff]
    %v300 = vld [vmem:[%s1 + $0x730] sm:$0xff]
    %v301 = vld [vmem:[%s1 + $0x738] sm:$0xff]
    %v302 = vld [vmem:[%s1 + $0x740] sm:$0xff]
    %v303 = vld [vmem:[%s1 + $0x748] sm:$0xff]
    %v304 = vld [vmem:[%s1 + $0x750] sm:$0xff]
    %v305 = vld [vmem:[%s1 + $0x758] sm:$0xff]
    %v306 = vld [vmem:[%s1 + $0x760] sm:$0xff]
    %v307 = vld [vmem:[%s1 + $0x768] sm:$0xff]
    %v308 = vld [vmem:[%s1 + $0x770] sm:$0xff]
    %v309 = vld [vmem:[%s1 + $0x778] sm:$0xff]
    %v310 = vld [vmem:[%s1 + $0x780] sm:$0xff]
    %v311 = vld [vmem:[%s1 + $0x788] sm:$0xff]
    %v312 = vld [vmem:[%s1 + $0x790] sm:$0xff]
    %v313 = vld [vmem:[%s1 + $0x798] sm:$0xff]
    %v314 = vld [vmem:[%s1 + $0x7a0] sm:$0xff]
    %v315 = vld [vmem:[%s1 + $0x7a8] sm:$0xff]
    %v316 = vld [vmem:[%s1 + $0x7b0] sm:$0xff]
    %v317 = vld [vmem:[%s1 + $0x7b8] sm:$0xff]
    %v318 = vld [vmem:[%s1 + $0x7c0] sm:$0xff]
    %v319 = vld [vmem:[%s1 + $0x7c8] sm:$0xff]
    %v320 = vld [vmem:[%s1 + $0x7d0] sm:$0xff]
    %v321 = vld [vmem:[%s1 + $0x7d8] sm:$0xff]
    %v322 = vld [vmem:[%s1 + $0x7e0] sm:$0xff]
    %v323 = vld [vmem:[%s1 + $0x7e8] sm:$0xff]
    %v324 = vld [vmem:[%s1 + $0x7f0] sm:$0xff]
    %v325 = vld [vmem:[%s1 + $0x7f8] sm:$0xff]
    %v326 = vld [vmem:[%s1 + $0x800] sm:$0xff]
    %v327 = vld [vmem:[%s1 + $0x808] sm:$0xff]
    %v328 = vld [vmem:[%s1 + $0x810] sm:$0xff]
    %v329 = vld [vmem:[%s1 + $0x818] sm:$0xff]
    %v330 = vld [vmem:[%s1 + $0x820] sm:$0xff]
    %v331 = vld [vmem:[%s1 + $0x828] sm:$0xff]
    %v332 = vld [vmem:[%s1 + $0x830] sm:$0xff]
    %v333 = vld [vmem:[%s1 + $0x838] sm:$0xff]
    %v334 = vld [vmem:[%s1 + $0x840] sm:$0xff]
    %v335 = vld [vmem:[%s1 + $0x848] sm:$0xff]
    %v336 = vld [vmem:[%s1 + $0x850] sm:$0xff]
    %v337 = vld [vmem:[%s1 + $0x858] sm:$0xff]
    %v338 = vld [vmem:[%s1 + $0x860] sm:$0xff]
    %v339 = vld [vmem:[%s1 + $0x868] sm:$0xff]
    %v340 = vld [vmem:[%s1 + $0x870] sm:$0xff]
    %v341 = vld [vmem:[%s1 + $0x878] sm:$0xff]
    %v342 = vld [vmem:[%s1 + $0x880] sm:$0xff]
    %v343 = vld [vmem:[%s1 + $0x888] sm:$0xff]
    %v344 = vld [vmem:[%s1 + $0x890] sm:$0xff]
    %v345 = vld [vmem:[%s1 + $0x898] sm:$0xff]
    %v346 = vld [vmem:[%s1 + $0x8a0] sm:$0xff]
    %v347 = vld [vmem:[%s1 + $0x8a8] sm:$0xff]
    %v348 = vld [vmem:[%s1 + $0x8b0] sm:$0xff]
    %v349 = vld [vmem:[%s1 + $0x8b8] sm:$0xff]
    %v350 = vld [vmem:[%s1 + $0x8c0] sm:$0xff]
    %v351 = vld [vmem:[%s1 + $0x8c8] sm:$0xff]
    %v352 = vld [vmem:[%s1 + $0x8d0] sm:$0xff]
    %v353 = vld [vmem:[%s1 + $0x8d8] sm:$0xff]
    %v354 = vld [vmem:[%s1 + $0x8e0] sm:$0xff]
    %v355 = vld [vmem:[%s1 + $0x8e8] sm:$0xff]
    %v356 = vld [vmem:[%s1 + $0x8f0] sm:$0xff]
    %v357 = vld [vmem:[%s1 + $0x8f8] sm:$0xff]
    %v358 = vld [vmem:[%s1 + $0x900] sm:$0xff]
    %v359 = vld [vmem:[%s1 + $0x908] sm:$0xff]
    %v360 = vld [vmem:[%s1 + $0x910] sm:$0xff]
    %v361 = vld [vmem:[%s1 + $0x918] sm:$0xff]
    %v362 = vld [vmem:[%s1 + $0x920] sm:$0xff]
    %v363 = vld [vmem:[%s1 + $0x928] sm:$0xff]
    %v364 = vld [vmem:[%s1 + $0x930] sm:$0xff]
    %v365 = vld [vmem:[%s1 + $0x938] sm:$0xff]
    %v366 = vld [vmem:[%s1 + $0x940] sm:$0xff]
    %v367 = vld [vmem:[%s1 + $0x948] sm:$0xff]
    %v368 = vld [vmem:[%s1 + $0x950] sm:$0xff]
    %v369 = vld [vmem:[%s1 + $0x958] sm:$0xff]
    %v370 = vld [vmem:[%s1 + $0x960] sm:$0xff]
    %v371 = vld [vmem:[%s1 + $0x968] sm:$0xff]
    %v372 = vld [vmem:[%s1 + $0x970] sm:$0xff]
    %v373 = vld [vmem:[%s1 + $0x978] sm:$0xff]
    %v374 = vld [vmem:[%s1 + $0x980] sm:$0xff]
    %v375 = vld [vmem:[%s1 + $0x988] sm:$0xff]
    %v376 = vld [vmem:[%s1 + $0x990] sm:$0xff]
    %v377 = vld [vmem:[%s1 + $0x998] sm:$0xff]
    %v378 = vld [vmem:[%s1 + $0x9a0] sm:$0xff]
    %v379 = vld [vmem:[%s1 + $0x9a8] sm:$0xff]
    %v380 = vld [vmem:[%s1 + $0x9b0] sm:$0xff]
    %v381 = vld [vmem:[%s1 + $0x9b8] sm:$0xff]
    %v382 = vld [vmem:[%s1 + $0x9c0] sm:$0xff]
    %v383 = vld [vmem:[%s1 + $0x9c8] sm:$0xff]
    %v384 = vld [vmem:[%s1 + $0x9d0] sm:$0xff]
    %v385 = vld [vmem:[%s1 + $0x9d8] sm:$0xff]
    %v386 = vld [vmem:[%s1 + $0x9e0] sm:$0xff]
    %v387 = vld [vmem:[%s1 + $0x9e8] sm:$0xff]
    %v388 = vld [vmem:[%s1 + $0x9f0] sm:$0xff]
    %v389 = vld [vmem:[%s1 + $0x9f8] sm:$0xff]
    %v390 = vld [vmem:[%s1 + $0xa00] sm:$0xff]
    %v391 = vld [vmem:[%s1 + $0xa08] sm:$0xff]
    %v392 = vld [vmem:[%s1 + $0xa10] sm:$0xff]
    %v393 = vld [vmem:[%s1 + $0xa18] sm:$0xff]
    %v394 = vld [vmem:[%s1 + $0xa20] sm:$0xff]
    %v395 = vld [vmem:[%s1 + $0xa28] sm:$0xff]
    %v396 = vld [vmem:[%s1 + $0xa30] sm:$0xff]
    %v397 = vld [vmem:[%s1 + $0xa38] sm:$0xff]
    %v398 = vld [vmem:[%s1 + $0xa40] sm:$0xff]
    %v399 = vld [vmem:[%s1 + $0xa48] sm:$0xff]
    %v400 = vld [vmem:[%s1 + $0xa50] sm:$0xff]
    %v401 = vld [vmem:[%s1 + $0xa58] sm:$0xff]
    %v402 = vld [vmem:[%s1 + $0xa60] sm:$0xff]
    %v403 = vld [vmem:[%s1 + $0xa68] sm:$0xff]
    %v404 = vld [vmem:[%s1 + $0xa70] sm:$0xff]
    %v405 = vld [vmem:[%s1 + $0xa78] sm:$0xff]
    %v406 = vld [vmem:[%s1 + $0xa80] sm:$0xff]
    %v407 = vld [vmem:[%s1 + $0xa88] sm:$0xff]
    %v408 = vld [vmem:[%s1 + $0xa90] sm:$0xff]
    %v409 = vld [vmem:[%s1 + $0xa98] sm:$0xff]
    %v410 = vld [vmem:[%s1 + $0xaa0] sm:$0xff]
    %v411 = vld [vmem:[%s1 + $0xaa8] sm:$0xff]
    %v412 = vld [vmem:[%s1 + $0xab0] sm:$0xff]
    %v413 = vld [vmem:[%s1 + $0xab8] sm:$0xff]
    %v414 = vld [vmem:[%s1 + $0xac0] sm:$0xff]
    %v415 = vld [vmem:[%s1 + $0xac8] sm:$0xff]
    %v416 = vld [vmem:[%s1 + $0xad0] sm:$0xff]
    %v417 = vld [vmem:[%s1 + $0xad8] sm:$0xff]
    %v418 = vld [vmem:[%s1 + $0xae0] sm:$0xff]
    %v419 = vld [vmem:[%s1 + $0xae8] sm:$0xff]
    %v420 = vld [vmem:[%s1 + $0xaf0] sm:$0xff]
    %v421 = vld [vmem:[%s1 + $0xaf8] sm:$0xff]
    %v422 = vld [vmem:[%s1 + $0xb00] sm:$0xff]
    %v423 = vld [vmem:[%s1 + $0xb08] sm:$0xff]
    %v424 = vld [vmem:[%s1 + $0xb10] sm:$0xff]
    %v425 = vld [vmem:[%s1 + $0xb18] sm:$0xff]
    %v426 = vld [vmem:[%s1 + $0xb20] sm:$0xff]
    %v427 = vld [vmem:[%s1 + $0xb28] sm:$0xff]
    %v428 = vld [vmem:[%s1 + $0xb30] sm:$0xff]
    %v429 = vld [vmem:[%s1 + $0xb38] sm:$0xff]
    %v430 = vld [vmem:[%s1 + $0xb40] sm:$0xff]
    %v431 = vld [vmem:[%s1 + $0xb48] sm:$0xff]
    %v432 = vld [vmem:[%s1 + $0xb50] sm:$0xff]
    %v433 = vld [vmem:[%s1 + $0xb58] sm:$0xff]
    %v434 = vld [vmem:[%s1 + $0xb60] sm:$0xff]
    %v435 = vld [vmem:[%s1 + $0xb68] sm:$0xff]
    %v436 = vld [vmem:[%s1 + $0xb70] sm:$0xff]
    %v437 = vld [vmem:[%s1 + $0xb78] sm:$0xff]
    %v438 = vld [vmem:[%s1 + $0xb80] sm:$0xff]
    %v439 = vld [vmem:[%s1 + $0xb88] sm:$0xff]
    %v440 = vld [vmem:[%s1 + $0xb90] sm:$0xff]
    %v441 = vld [vmem:[%s1 + $0xb98] sm:$0xff]
    %v442 = vld [vmem:[%s1 + $0xba0] sm:$0xff]
    %v443 = vld [vmem:[%s1 + $0xba8] sm:$0xff]
    %v444 = vld [vmem:[%s1 + $0xbb0] sm:$0xff]
    %v445 = vld [vmem:[%s1 + $0xbb8] sm:$0xff]
    %v446 = vld [vmem:[%s1 + $0xbc0] sm:$0xff]
    %v447 = vld [vmem:[%s1 + $0xbc8] sm:$0xff]
    %v448 = vld [vmem:[%s1 + $0xbd0] sm:$0xff]
    %v449 = vld [vmem:[%s1 + $0xbd8] sm:$0xff]
    %v450 = vld [vmem:[%s1 + $0xbe0] sm:$0xff]
    %v451 = vld [vmem:[%s1 + $0xbe8] sm:$0xff]
    %v452 = vld [vmem:[%s1 + $0xbf0] sm:$0xff]
    %v453 = vld [vmem:[%s1 + $0xbf8] sm:$0xff]
    %v454 = vld [vmem:[%s1 + $0xc00] sm:$0xff]
    %v455 = vld [vmem:[%s1 + $0xc08] sm:$0xff]
    %v456 = vld [vmem:[%s1 + $0xc10] sm:$0xff]
    %v457 = vld [vmem:[%s1 + $0xc18] sm:$0xff]
    %v458 = vld [vmem:[%s1 + $0xc20] sm:$0xff]
    %v459 = vld [vmem:[%s1 + $0xc28] sm:$0xff]
    %v460 = vld [vmem:[%s1 + $0xc30] sm:$0xff]
    %v461 = vld [vmem:[%s1 + $0xc38] sm:$0xff]
    %v462 = vld [vmem:[%s1 + $0xc40] sm:$0xff]
    %v463 = vld [vmem:[%s1 + $0xc48] sm:$0xff]
    %v464 = vld [vmem:[%s1 + $0xc50] sm:$0xff]
    %v465 = vld [vmem:[%s1 + $0xc58] sm:$0xff]
    %v466 = vld [vmem:[%s1 + $0xc60] sm:$0xff]
    %v467 = vld [vmem:[%s1 + $0xc68] sm:$0xff]
    %v468 = vld [vmem:[%s1 + $0xc70] sm:$0xff]
    %v469 = vld [vmem:[%s1 + $0xc78] sm:$0xff]
    %v470 = vld [vmem:[%s1 + $0xc80] sm:$0xff]
    %v471 = vld [vmem:[%s1 + $0xc88] sm:$0xff]
    %v472 = vld [vmem:[%s1 + $0xc90] sm:$0xff]
    %v473 = vld [vmem:[%s1 + $0xc98] sm:$0xff]
    %v474 = vld [vmem:[%s1 + $0xca0] sm:$0xff]
    %v475 = vld [vmem:[%s1 + $0xca8] sm:$0xff]
    %v476 = vld [vmem:[%s1 + $0xcb0] sm:$0xff]
    %v477 = vld [vmem:[%s1 + $0xcb8] sm:$0xff]
    %v478 = vld [vmem:[%s1 + $0xcc0] sm:$0xff]
    %v479 = vld [vmem:[%s1 + $0xcc8] sm:$0xff]
    %v480 = vld [vmem:[%s1 + $0xcd0] sm:$0xff]
    %v481 = vld [vmem:[%s1 + $0xcd8] sm:$0xff]
    %v482 = vld [vmem:[%s1 + $0xce0] sm:$0xff]
    %v483 = vld [vmem:[%s1 + $0xce8] sm:$0xff]
    %v484 = vld [vmem:[%s1 + $0xcf0] sm:$0xff]
    %v485 = vld [vmem:[%s1 + $0xcf8] sm:$0xff]
    %v486 = vld [vmem:[%s1 + $0xd00] sm:$0xff]
    %v487 = vld [vmem:[%s1 + $0xd08] sm:$0xff]
    %v488 = vld [vmem:[%s1 + $0xd10] sm:$0xff]
    %v489 = vld [vmem:[%s1 + $0xd18] sm:$0xff]
    %v490 = vld [vmem:[%s1 + $0xd20] sm:$0xff]
    %v491 = vld [vmem:[%s1 + $0xd28] sm:$0xff]
    %v492 = vld [vmem:[%s1 + $0xd30] sm:$0xff]
    %v493 = vld [vmem:[%s1 + $0xd38] sm:$0xff]
    %v494 = vld [vmem:[%s1 + $0xd40] sm:$0xff]
    %v495 = vld [vmem:[%s1 + $0xd48] sm:$0xff]
    %v496 = vld [vmem:[%s1 + $0xd50] sm:$0xff]
    %v497 = vld [vmem:[%s1 + $0xd58] sm:$0xff]
    %v498 = vld [vmem:[%s1 + $0xd60] sm:$0xff]
    %v499 = vld [vmem:[%s1 + $0xd68] sm:$0xff]
    %v500 = vld [vmem:[%s1 + $0xd70] sm:$0xff]
    %v501 = vld [vmem:[%s1 + $0xd78] sm:$0xff]
    %v502 = vld [vmem:[%s1 + $0xd80] sm:$0xff]
    %v503 = vld [vmem:[%s1 + $0xd88] sm:$0xff]
    %v504 = vld [vmem:[%s1 + $0xd90] sm:$0xff]
    %v505 = vld [vmem:[%s1 + $0xd98] sm:$0xff]
    %v506 = vld [vmem:[%s1 + $0xda0] sm:$0xff]
    %v507 = vld [vmem:[%s1 + $0xda8] sm:$0xff]
    %v508 = vld [vmem:[%s1 + $0xdb0] sm:$0xff]
    %v509 = vld [vmem:[%s1 + $0xdb8] sm:$0xff]
    %v510 = vld [vmem:[%s1 + $0xdc0] sm:$0xff]
    %v511 = vld [vmem:[%s1 + $0xdc8] sm:$0xff]
    %v512 = vld [vmem:[%s1 + $0xdd0] sm:$0xff]
    %v513 = vld [vmem:[%s1 + $0xdd8] sm:$0xff]
    %v514 = vld [vmem:[%s1 + $0xde0] sm:$0xff]
    %v515 = vld [vmem:[%s1 + $0xde8] sm:$0xff]
    %v516 = vld [vmem:[%s1 + $0xdf0] sm:$0xff]
    %v517 = vld [vmem:[%s1 + $0xdf8] sm:$0xff]
    %v518 = vld [vmem:[%s1 + $0xe00] sm:$0xff]
    %v519 = vld [vmem:[%s1 + $0xe08] sm:$0xff]
    %v520 = vld [vmem:[%s1 + $0xe10] sm:$0xff]
    %v521 = vld [vmem:[%s1 + $0xe18] sm:$0xff]
    %v522 = vld [vmem:[%s1 + $0xe20] sm:$0xff]
    %v523 = vld [vmem:[%s1 + $0xe28] sm:$0xff]
    %v524 = vld [vmem:[%s1 + $0xe30] sm:$0xff]
    %v525 = vld [vmem:[%s1 + $0xe38] sm:$0xff]
    %v526 = vld [vmem:[%s1 + $0xe40] sm:$0xff]
    %v527 = vld [vmem:[%s1 + $0xe48] sm:$0xff]
    %v528 = vld [vmem:[%s1 + $0xe50] sm:$0xff]
    %v529 = vld [vmem:[%s1 + $0xe58] sm:$0xff]
    %v530 = vld [vmem:[%s1 + $0xe60] sm:$0xff]
    %v531 = vld [vmem:[%s1 + $0xe68] sm:$0xff]
    %v532 = vld [vmem:[%s1 + $0xe70] sm:$0xff]
    %v533 = vld [vmem:[%s1 + $0xe78] sm:$0xff]
    %v534 = vld [vmem:[%s1 + $0xe80] sm:$0xff]
    %v535 = vld [vmem:[%s1 + $0xe88] sm:$0xff]
    %v536 = vld [vmem:[%s1 + $0xe90] sm:$0xff]
    %v537 = vld [vmem:[%s1 + $0xe98] sm:$0xff]
    %v538 = vld [vmem:[%s1 + $0xea0] sm:$0xff]
    %v539 = vld [vmem:[%s1 + $0xea8] sm:$0xff]
    %v540 = vld [vmem:[%s1 + $0xeb0] sm:$0xff]
    %v541 = vld [vmem:[%s1 + $0xeb8] sm:$0xff]
    %v542 = vld [vmem:[%s1 + $0xec0] sm:$0xff]
    %v543 = vld [vmem:[%s1 + $0xec8] sm:$0xff]
    %v544 = vld [vmem:[%s1 + $0xed0] sm:$0xff]
    %v545 = vld [vmem:[%s1 + $0xed8] sm:$0xff]
    %v546 = vld [vmem:[%s1 + $0xee0] sm:$0xff]
    %v547 = vld [vmem:[%s1 + $0xee8] sm:$0xff]
    %v548 = vld [vmem:[%s1 + $0xef0] sm:$0xff]
    %v549 = vld [vmem:[%s1 + $0xef8] sm:$0xff]
    %v550 = vld [vmem:[%s1 + $0xf00] sm:$0xff]
    %v551 = vld [vmem:[%s1 + $0xf08] sm:$0xff]
    %v552 = vld [vmem:[%s1 + $0xf10] sm:$0xff]
    %v553 = vld [vmem:[%s1 + $0xf18] sm:$0xff]
    %v554 = vld [vmem:[%s1 + $0xf20] sm:$0xff]
    %v555 = vld [vmem:[%s1 + $0xf28] sm:$0xff]
    %v556 = vld [vmem:[%s1 + $0xf30] sm:$0xff]
    %v557 = vld [vmem:[%s1 + $0xf38] sm:$0xff]
    %v558 = vld [vmem:[%s1 + $0xf40] sm:$0xff]
    %v559 = vld [vmem:[%s1 + $0xf48] sm:$0xff]
    %v560 = vld [vmem:[%s1 + $0xf50] sm:$0xff]
    %v561 = vld [vmem:[%s1 + $0xf58] sm:$0xff]
    %v562 = vld [vmem:[%s1 + $0xf60] sm:$0xff]
    %v563 = vld [vmem:[%s1 + $0xf68] sm:$0xff]
    %v564 = vld [vmem:[%s1 + $0xf70] sm:$0xff]
    %v565 = vld [vmem:[%s1 + $0xf78] sm:$0xff]
    %v566 = vld [vmem:[%s1 + $0xf80] sm:$0xff]
    %v567 = vld [vmem:[%s1 + $0xf88] sm:$0xff]
    %v568 = vld [vmem:[%s1 + $0xf90] sm:$0xff]
    %v569 = vld [vmem:[%s1 + $0xf98] sm:$0xff]
    %v570 = vld [vmem:[%s1 + $0xfa0] sm:$0xff]
    %v571 = vld [vmem:[%s1 + $0xfa8] sm:$0xff]
    %v572 = vld [vmem:[%s1 + $0xfb0] sm:$0xff]
    %v573 = vld [vmem:[%s1 + $0xfb8] sm:$0xff]
    %v574 = vld [vmem:[%s1 + $0xfc0] sm:$0xff]
    %v575 = vld [vmem:[%s1 + $0xfc8] sm:$0xff]
    %v576 = vld [vmem:[%s1 + $0xfd0] sm:$0xff]
    %v577 = vld [vmem:[%s1 + $0xfd8] sm:$0xff]
    %v578 = vld [vmem:[%s1 + $0xfe0] sm:$0xff]
    %v579 = vld [vmem:[%s1 + $0xfe8] sm:$0xff]
    %v580 = vld [vmem:[%s1 + $0xff0] sm:$0xff]
    %v581 = vld [vmem:[%s1 + $0xff8] sm:$0xff]
    %v582 = vld [vmem:[%s1 + $0x1000] sm:$0xff]
    %v583 = vld [vmem:[%s1 + $0x1008] sm:$0xff]
    %v584 = vld [vmem:[%s1 + $0x1010] sm:$0xff]
    %v585 = vld [vmem:[%s1 + $0x1018] sm:$0xff]
    %v586 = vld [vmem:[%s1 + $0x1020] sm:$0xff]
    %v587 = vld [vmem:[%s1 + $0x1028] sm:$0xff]
    %v588 = vld [vmem:[%s1 + $0x1030] sm:$0xff]
    %v589 = vld [vmem:[%s1 + $0x1038] sm:$0xff]
    %v590 = vld [vmem:[%s1 + $0x1040] sm:$0xff]
    %v591 = vld [vmem:[%s1 + $0x1048] sm:$0xff]
    %v592 = vld [vmem:[%s1 + $0x1050] sm:$0xff]
    %v593 = vld [vmem:[%s1 + $0x1058] sm:$0xff]
    %v594 = vld [vmem:[%s1 + $0x1060] sm:$0xff]
    %v595 = vld [vmem:[%s1 + $0x1068] sm:$0xff]
    %v596 = vld [vmem:[%s1 + $0x1070] sm:$0xff]
    %v597 = vld [vmem:[%s1 + $0x1078] sm:$0xff]
    %v598 = vld [vmem:[%s1 + $0x1080] sm:$0xff]
    %v599 = vld [vmem:[%s1 + $0x1088] sm:$0xff]
    %v600 = vld [vmem:[%s1 + $0x1090] sm:$0xff]
    %v601 = vld [vmem:[%s1 + $0x1098] sm:$0xff]
    %v602 = vld [vmem:[%s1 + $0x10a0] sm:$0xff]
    %v603 = vld [vmem:[%s1 + $0x10a8] sm:$0xff]
    %v604 = vld [vmem:[%s1 + $0x10b0] sm:$0xff]
    %v605 = vld [vmem:[%s1 + $0x10b8] sm:$0xff]
    %v606 = vld [vmem:[%s1 + $0x10c0] sm:$0xff]
    %v607 = vld [vmem:[%s1 + $0x10c8] sm:$0xff]
    %v608 = vld [vmem:[%s1 + $0x10d0] sm:$0xff]
    %v609 = vld [vmem:[%s1 + $0x10d8] sm:$0xff]
    %v610 = vld [vmem:[%s1 + $0x10e0] sm:$0xff]
    %v611 = vld [vmem:[%s1 + $0x10e8] sm:$0xff]
    %v612 = vld [vmem:[%s1 + $0x10f0] sm:$0xff]
    %v613 = vld [vmem:[%s1 + $0x10f8] sm:$0xff]
    %v614 = vld [vmem:[%s1 + $0x1100] sm:$0xff]
    %v615 = vld [vmem:[%s1 + $0x1108] sm:$0xff]
    %v616 = vld [vmem:[%s1 + $0x1110] sm:$0xff]
    %v617 = vld [vmem:[%s1 + $0x1118] sm:$0xff]
    %v618 = vld [vmem:[%s1 + $0x1120] sm:$0xff]
    %v619 = vld [vmem:[%s1 + $0x1128] sm:$0xff]
    %v620 = vld [vmem:[%s1 + $0x1130] sm:$0xff]
    %v621 = vld [vmem:[%s1 + $0x1138] sm:$0xff]
    %v622 = vld [vmem:[%s1 + $0x1140] sm:$0xff]
    %v623 = vld [vmem:[%s1 + $0x1148] sm:$0xff]
    %v624 = vld [vmem:[%s1 + $0x1150] sm:$0xff]
    %v625 = vld [vmem:[%s1 + $0x1158] sm:$0xff]
    %v626 = vld [vmem:[%s1 + $0x1160] sm:$0xff]
    %v627 = vld [vmem:[%s1 + $0x1168] sm:$0xff]
    %v628 = vld [vmem:[%s1 + $0x1170] sm:$0xff]
    %v629 = vld [vmem:[%s1 + $0x1178] sm:$0xff]
    %v630 = vld [vmem:[%s1 + $0x1180] sm:$0xff]
    %v631 = vld [vmem:[%s1 + $0x1188] sm:$0xff]
    %v632 = vld [vmem:[%s1 + $0x1190] sm:$0xff]
    %v633 = vld [vmem:[%s1 + $0x1198] sm:$0xff]
    %v634 = vld [vmem:[%s1 + $0x11a0] sm:$0xff]
    %v635 = vld [vmem:[%s1 + $0x11a8] sm:$0xff]
    %v636 = vld [vmem:[%s1 + $0x11b0] sm:$0xff]
    %v637 = vld [vmem:[%s1 + $0x11b8] sm:$0xff]
    %v638 = vld [vmem:[%s1 + $0x11c0] sm:$0xff]
    %v639 = vld [vmem:[%s1 + $0x11c8] sm:$0xff]
    %v640 = vld [vmem:[%s1 + $0x11d0] sm:$0xff]
    %v641 = vld [vmem:[%s1 + $0x11d8] sm:$0xff]
    %v642 = vld [vmem:[%s1 + $0x11e0] sm:$0xff]
    %v643 = vld [vmem:[%s1 + $0x11e8] sm:$0xff]
    %v644 = vld [vmem:[%s1 + $0x11f0] sm:$0xff]
    %v645 = vld [vmem:[%s1 + $0x11f8] sm:$0xff]
    %v646 = vld [vmem:[%s1 + $0x1200] sm:$0xff]
    %v647 = vld [vmem:[%s1 + $0x1208] sm:$0xff]
    %v648 = vld [vmem:[%s1 + $0x1210] sm:$0xff]
    %v649 = vld [vmem:[%s1 + $0x1218] sm:$0xff]
    %v650 = vld [vmem:[%s1 + $0x1220] sm:$0xff]
    %v651 = vld [vmem:[%s1 + $0x1228] sm:$0xff]
    %v652 = vld [vmem:[%s1 + $0x1230] sm:$0xff]
    %v653 = vld [vmem:[%s1 + $0x1238] sm:$0xff]
    %v654 = vld [vmem:[%s1 + $0x1240] sm:$0xff]
    %v655 = vld [vmem:[%s1 + $0x1248] sm:$0xff]
    %v656 = vld [vmem:[%s1 + $0x1250] sm:$0xff]
    %v657 = vld [vmem:[%s1 + $0x1258] sm:$0xff]
    %v658 = vld [vmem:[%s1 + $0x1260] sm:$0xff]
    %v659 = vld [vmem:[%s1 + $0x1268] sm:$0xff]
    %v660 = vld [vmem:[%s1 + $0x1270] sm:$0xff]
    %v661 = vld [vmem:[%s1 + $0x1278] sm:$0xff]
    %v662 = vld [vmem:[%s1 + $0x1280] sm:$0xff]
    %v663 = vld [vmem:[%s1 + $0x1288] sm:$0xff]
    %v664 = vld [vmem:[%s1 + $0x1290] sm:$0xff]
    %v665 = vld [vmem:[%s1 + $0x1298] sm:$0xff]
    %v666 = vld [vmem:[%s1 + $0x12a0] sm:$0xff]
    %v667 = vld [vmem:[%s1 + $0x12a8] sm:$0xff]
    %v668 = vld [vmem:[%s1 + $0x12b0] sm:$0xff]
    %v669 = vld [vmem:[%s1 + $0x12b8] sm:$0xff]
    %v670 = vld [vmem:[%s1 + $0x12c0] sm:$0xff]
    %v671 = vld [vmem:[%s1 + $0x12c8] sm:$0xff]
    %v672 = vld [vmem:[%s1 + $0x12d0] sm:$0xff]
    %v673 = vld [vmem:[%s1 + $0x12d8] sm:$0xff]
    %v674 = vld [vmem:[%s1 + $0x12e0] sm:$0xff]
    %v675 = vld [vmem:[%s1 + $0x12e8] sm:$0xff]
    %v676 = vld [vmem:[%s1 + $0x12f0] sm:$0xff]
    %v677 = vld [vmem:[%s1 + $0x12f8] sm:$0xff]
    %v678 = vld [vmem:[%s1 + $0x1300] sm:$0xff]
    %v679 = vld [vmem:[%s1 + $0x1308] sm:$0xff]
    %v680 = vld [vmem:[%s1 + $0x1310] sm:$0xff]
    %v681 = vld [vmem:[%s1 + $0x1318] sm:$0xff]
    %v682 = vld [vmem:[%s1 + $0x1320] sm:$0xff]
    %v683 = vld [vmem:[%s1 + $0x1328] sm:$0xff]
    %v684 = vld [vmem:[%s1 + $0x1330] sm:$0xff]
    %v685 = vld [vmem:[%s1 + $0x1338] sm:$0xff]
    %v686 = vld [vmem:[%s1 + $0x1340] sm:$0xff]
    %v687 = vld [vmem:[%s1 + $0x1348] sm:$0xff]
    %v688 = vld [vmem:[%s1 + $0x1350] sm:$0xff]
    %v689 = vld [vmem:[%s1 + $0x1358] sm:$0xff]
    %v690 = vld [vmem:[%s1 + $0x1360] sm:$0xff]
    %v691 = vld [vmem:[%s1 + $0x1368] sm:$0xff]
    %v692 = vld [vmem:[%s1 + $0x1370] sm:$0xff]
    %v693 = vld [vmem:[%s1 + $0x1378] sm:$0xff]
    %v694 = vld [vmem:[%s1 + $0x1380] sm:$0xff]
    %v695 = vld [vmem:[%s1 + $0x1388] sm:$0xff]
    %v696 = vld [vmem:[%s1 + $0x1390] sm:$0xff]
    %v697 = vld [vmem:[%s1 + $0x1398] sm:$0xff]
    %v698 = vld [vmem:[%s1 + $0x13a0] sm:$0xff]
    %v699 = vld [vmem:[%s1 + $0x13a8] sm:$0xff]
    %v700 = vld [vmem:[%s1 + $0x13b0] sm:$0xff]
    %v701 = vld [vmem:[%s1 + $0x13b8] sm:$0xff]
    %v702 = vld [vmem:[%s1 + $0x13c0] sm:$0xff]
    %v703 = vld [vmem:[%s1 + $0x13c8] sm:$0xff]
    %v704 = vld [vmem:[%s1 + $0x13d0] sm:$0xff]
    %v705 = vld [vmem:[%s1 + $0x13d8] sm:$0xff]
    %v706 = vld [vmem:[%s1 + $0x13e0] sm:$0xff]
    %v707 = vld [vmem:[%s1 + $0x13e8] sm:$0xff]
    %v708 = vld [vmem:[%s1 + $0x13f0] sm:$0xff]
    %v709 = vld [vmem:[%s1 + $0x13f8] sm:$0xff]
    %v710 = vld [vmem:[%s1 + $0x1400] sm:$0xff]
    %v711 = vld [vmem:[%s1 + $0x1408] sm:$0xff]
    %v712 = vld [vmem:[%s1 + $0x1410] sm:$0xff]
    %v713 = vld [vmem:[%s1 + $0x1418] sm:$0xff]
    %v714 = vld [vmem:[%s1 + $0x1420] sm:$0xff]
    %v715 = vld [vmem:[%s1 + $0x1428] sm:$0xff]
    %v716 = vld [vmem:[%s1 + $0x1430] sm:$0xff]
    %v717 = vld [vmem:[%s1 + $0x1438] sm:$0xff]
    %v718 = vld [vmem:[%s1 + $0x1440] sm:$0xff]
    %v719 = vld [vmem:[%s1 + $0x1448] sm:$0xff]
    %v720 = vld [vmem:[%s1 + $0x1450] sm:$0xff]
    %v721 = vld [vmem:[%s1 + $0x1458] sm:$0xff]
    %v722 = vld [vmem:[%s1 + $0x1460] sm:$0xff]
    %v723 = vld [vmem:[%s1 + $0x1468] sm:$0xff]
    %v724 = vld [vmem:[%s1 + $0x1470] sm:$0xff]
    %v725 = vld [vmem:[%s1 + $0x1478] sm:$0xff]
    %v726 = vld [vmem:[%s1 + $0x1480] sm:$0xff]
    %v727 = vld [vmem:[%s1 + $0x1488] sm:$0xff]
    %v728 = vld [vmem:[%s1 + $0x1490] sm:$0xff]
    %v729 = vld [vmem:[%s1 + $0x1498] sm:$0xff]
    %v730 = vld [vmem:[%s1 + $0x14a0] sm:$0xff]
    %v731 = vld [vmem:[%s1 + $0x14a8] sm:$0xff]
    %v732 = vld [vmem:[%s1 + $0x14b0] sm:$0xff]
    %v733 = vld [vmem:[%s1 + $0x14b8] sm:$0xff]
    %v734 = vld [vmem:[%s1 + $0x14c0] sm:$0xff]
    %v735 = vld [vmem:[%s1 + $0x14c8] sm:$0xff]
    %v736 = vld [vmem:[%s1 + $0x14d0] sm:$0xff]
    %v737 = vld [vmem:[%s1 + $0x14d8] sm:$0xff]
    %v738 = vld [vmem:[%s1 + $0x14e0] sm:$0xff]
    %v739 = vld [vmem:[%s1 + $0x14e8] sm:$0xff]
    %v740 = vld [vmem:[%s1 + $0x14f0] sm:$0xff]
    %v741 = vld [vmem:[%s1 + $0x14f8] sm:$0xff]
    %v742 = vld [vmem:[%s1 + $0x1500] sm:$0xff]
    %v743 = vld [vmem:[%s1 + $0x1508] sm:$0xff]
    %v744 = vld [vmem:[%s1 + $0x1510] sm:$0xff]
    %v745 = vld [vmem:[%s1 + $0x1518] sm:$0xff]
    %v746 = vld [vmem:[%s1 + $0x1520] sm:$0xff]
    %v747 = vld [vmem:[%s1 + $0x1528] sm:$0xff]
    %v748 = vld [vmem:[%s1 + $0x1530] sm:$0xff]
    %v749 = vld [vmem:[%s1 + $0x1538] sm:$0xff]
    %v750 = vld [vmem:[%s1 + $0x1540] sm:$0xff]
    %v751 = vld [vmem:[%s1 + $0x1548] sm:$0xff]
    %v752 = vld [vmem:[%s1 + $0x1550] sm:$0xff]
    %v753 = vld [vmem:[%s1 + $0x1558] sm:$0xff]
    %v754 = vld [vmem:[%s1 + $0x1560] sm:$0xff]
    %v755 = vld [vmem:[%s1 + $0x1568] sm:$0xff]
    %v756 = vld [vmem:[%s1 + $0x1570] sm:$0xff]
    %v757 = vld [vmem:[%s1 + $0x1578] sm:$0xff]
    %v758 = vld [vmem:[%s1 + $0x1580] sm:$0xff]
    %v759 = vld [vmem:[%s1 + $0x1588] sm:$0xff]
    %v760 = vld [vmem:[%s1 + $0x1590] sm:$0xff]
    %v761 = vld [vmem:[%s1 + $0x1598] sm:$0xff]
    %v762 = vld [vmem:[%s1 + $0x15a0] sm:$0xff]
    %v763 = vld [vmem:[%s1 + $0x15a8] sm:$0xff]
    %v764 = vld [vmem:[%s1 + $0x15b0] sm:$0xff]
    %v765 = vld [vmem:[%s1 + $0x15b8] sm:$0xff]
    %v766 = vld [vmem:[%s1 + $0x15c0] sm:$0xff]
    %v767 = vld [vmem:[%s1 + $0x15c8] sm:$0xff]
    %v768 = vld [vmem:[%s1 + $0x15d0] sm:$0xff]
    %v769 = vld [vmem:[%s1 + $0x15d8] sm:$0xff]
    %v770 = vld [vmem:[%s1 + $0x15e0] sm:$0xff]
    %v771 = vld [vmem:[%s1 + $0x15e8] sm:$0xff]
    %v772 = vld [vmem:[%s1 + $0x15f0] sm:$0xff]
    %v773 = vld [vmem:[%s1 + $0x15f8] sm:$0xff]
    %v774 = vld [vmem:[%s1 + $0x1600] sm:$0xff]
    %v775 = vld [vmem:[%s1 + $0x1608] sm:$0xff]
    %v776 = vld [vmem:[%s1 + $0x1610] sm:$0xff]
    %v777 = vld [vmem:[%s1 + $0x1618] sm:$0xff]
    %v778 = vld [vmem:[%s1 + $0x1620] sm:$0xff]
    %v779 = vld [vmem:[%s1 + $0x1628] sm:$0xff]
    %v780 = vld [vmem:[%s1 + $0x1630] sm:$0xff]
    %v781 = vld [vmem:[%s1 + $0x1638] sm:$0xff]
    %v782 = vld [vmem:[%s1 + $0x1640] sm:$0xff]
    %v783 = vld [vmem:[%s1 + $0x1648] sm:$0xff]
    %v784 = vld [vmem:[%s1 + $0x1650] sm:$0xff]
    %v785 = vld [vmem:[%s1 + $0x1658] sm:$0xff]
    %v786 = vld [vmem:[%s1 + $0x1660] sm:$0xff]
    %v787 = vld [vmem:[%s1 + $0x1668] sm:$0xff]
    %v788 = vld [vmem:[%s1 + $0x1670] sm:$0xff]
    %v789 = vld [vmem:[%s1 + $0x1678] sm:$0xff]
    %v790 = vld [vmem:[%s1 + $0x1680] sm:$0xff]
    %v791 = vld [vmem:[%s1 + $0x1688] sm:$0xff]
    %v792 = vld [vmem:[%s1 + $0x1690] sm:$0xff]
    %v793 = vld [vmem:[%s1 + $0x1698] sm:$0xff]
    %v794 = vld [vmem:[%s1 + $0x16a0] sm:$0xff]
    %v795 = vld [vmem:[%s1 + $0x16a8] sm:$0xff]
    %v796 = vld [vmem:[%s1 + $0x16b0] sm:$0xff]
    %v797 = vld [vmem:[%s1 + $0x16b8] sm:$0xff]
    %v798 = vld [vmem:[%s1 + $0x16c0] sm:$0xff]
    %v799 = vld [vmem:[%s1 + $0x16c8] sm:$0xff]
    %v800 = vld [vmem:[%s1 + $0x16d0] sm:$0xff]
    %v801 = vld [vmem:[%s1 + $0x16d8] sm:$0xff]
    %v802 = vld [vmem:[%s1 + $0x16e0] sm:$0xff]
    %v803 = vld [vmem:[%s1 + $0x16e8] sm:$0xff]
    %v804 = vld [vmem:[%s1 + $0x16f0] sm:$0xff]
    %v805 = vld [vmem:[%s1 + $0x16f8] sm:$0xff]
    %v806 = vld [vmem:[%s1 + $0x1700] sm:$0xff]
    %v807 = vld [vmem:[%s1 + $0x1708] sm:$0xff]
    %v808 = vld [vmem:[%s1 + $0x1710] sm:$0xff]
    %v809 = vld [vmem:[%s1 + $0x1718] sm:$0xff]
    %v810 = vld [vmem:[%s1 + $0x1720] sm:$0xff]
    %v811 = vld [vmem:[%s1 + $0x1728] sm:$0xff]
    %v812 = vld [vmem:[%s1 + $0x1730] sm:$0xff]
    %v813 = vld [vmem:[%s1 + $0x1738] sm:$0xff]
    %v814 = vld [vmem:[%s1 + $0x1740] sm:$0xff]
    %v815 = vld [vmem:[%s1 + $0x1748] sm:$0xff]
    %v816 = vld [vmem:[%s1 + $0x1750] sm:$0xff]
    %v817 = vld [vmem:[%s1 + $0x1758] sm:$0xff]
    %v818 = vld [vmem:[%s1 + $0x1760] sm:$0xff]
    %v819 = vld [vmem:[%s1 + $0x1768] sm:$0xff]
    %v820 = vld [vmem:[%s1 + $0x1770] sm:$0xff]
    %v821 = vld [vmem:[%s1 + $0x1778] sm:$0xff]
    %v822 = vld [vmem:[%s1 + $0x1780] sm:$0xff]
    %v823 = vld [vmem:[%s1 + $0x1788] sm:$0xff]
    %v824 = vld [vmem:[%s1 + $0x1790] sm:$0xff]
    %v825 = vld [vmem:[%s1 + $0x1798] sm:$0xff]
    %v826 = vld [vmem:[%s1 + $0x17a0] sm:$0xff]
    %v827 = vld [vmem:[%s1 + $0x17a8] sm:$0xff]
    %v828 = vld [vmem:[%s1 + $0x17b0] sm:$0xff]
    %v829 = vld [vmem:[%s1 + $0x17b8] sm:$0xff]
    %v830 = vld [vmem:[%s1 + $0x17c0] sm:$0xff]
    %v831 = vld [vmem:[%s1 + $0x17c8] sm:$0xff]
    %v832 = vld [vmem:[%s1 + $0x17d0] sm:$0xff]
    %v833 = vld [vmem:[%s1 + $0x17d8] sm:$0xff]
    %v834 = vld [vmem:[%s1 + $0x17e0] sm:$0xff]
    %v835 = vld [vmem:[%s1 + $0x17e8] sm:$0xff]
    %v836 = vld [vmem:[%s1 + $0x17f0] sm:$0xff]
    %v837 = vld [vmem:[%s1 + $0x17f8] sm:$0xff]
    %v838 = vld [vmem:[%s1 + $0x1800] sm:$0xff]
    %v839 = vld [vmem:[%s1 + $0x1808] sm:$0xff]
    %v840 = vld [vmem:[%s1 + $0x1810] sm:$0xff]
    %v841 = vld [vmem:[%s1 + $0x1818] sm:$0xff]
    %v842 = vld [vmem:[%s1 + $0x1820] sm:$0xff]
    %v843 = vld [vmem:[%s1 + $0x1828] sm:$0xff]
    %v844 = vld [vmem:[%s1 + $0x1830] sm:$0xff]
    %v845 = vld [vmem:[%s1 + $0x1838] sm:$0xff]
    %v846 = vld [vmem:[%s1 + $0x1840] sm:$0xff]
    %v847 = vld [vmem:[%s1 + $0x1848] sm:$0xff]
    %v848 = vld [vmem:[%s1 + $0x1850] sm:$0xff]
    %v849 = vld [vmem:[%s1 + $0x1858] sm:$0xff]
    %v850 = vld [vmem:[%s1 + $0x1860] sm:$0xff]
    %v851 = vld [vmem:[%s1 + $0x1868] sm:$0xff]
    %v852 = vld [vmem:[%s1 + $0x1870] sm:$0xff]
    %v853 = vld [vmem:[%s1 + $0x1878] sm:$0xff]
    %v854 = vld [vmem:[%s3] sm:$0x1]
    %v856 = vperm.slane %v854, 0
    %907 = vst [vmem:[#allocation1] ss:$4 sm:$0xff] %v21
    %s908 = scalar_lea.vmem [#allocation1], 32
    %909 = vst [vmem:[%s908] ss:$4 sm:$0xff] %v22
    %v910 = vld.sshfl [vmem:[#allocation1] sm:$0xff pattern:$0x73625140]
    %v911 = vld.sshfl [vmem:[#allocation1 + $0x8] sm:$0xff pattern:$0x73625140]
    %v912 = vld.sshfl [vmem:[#allocation1 + $0x10] sm:$0xff pattern:$0x73625140]
    %v913 = vld.sshfl [vmem:[#allocation1 + $0x18] sm:$0xff pattern:$0x73625140]
    %v914 = vld.sshfl [vmem:[#allocation1 + $0x20] sm:$0xff pattern:$0x73625140]
    %v915 = vld.sshfl [vmem:[#allocation1 + $0x28] sm:$0xff pattern:$0x73625140]
    %v916 = vld.sshfl [vmem:[#allocation1 + $0x30] sm:$0xff pattern:$0x73625140]
    %v917 = vld.sshfl [vmem:[#allocation1 + $0x38] sm:$0xff pattern:$0x73625140]
    %918 = vst [vmem:[#allocation1] ss:$4 sm:$0xff] %v23
    %919 = vst [vmem:[%s908] ss:$4 sm:$0xff] %v24
    %v920 = vld.sshfl [vmem:[#allocation1] sm:$0xff pattern:$0x73625140]
    %v921 = vld.sshfl [vmem:[#allocation1 + $0x8] sm:$0xff pattern:$0x73625140]
    %v922 = vld.sshfl [vmem:[#allocation1 + $0x10] sm:$0xff pattern:$0x73625140]
    %v923 = vld.sshfl [vmem:[#allocation1 + $0x18] sm:$0xff pattern:$0x73625140]
    %v924 = vld.sshfl [vmem:[#allocation1 + $0x20] sm:$0xff pattern:$0x73625140]
    %v925 = vld.sshfl [vmem:[#allocation1 + $0x28] sm:$0xff pattern:$0x73625140]
    %v926 = vld.sshfl [vmem:[#allocation1 + $0x30] sm:$0xff pattern:$0x73625140]
    %v927 = vld.sshfl [vmem:[#allocation1 + $0x38] sm:$0xff pattern:$0x73625140]
    %928 = vst [vmem:[#allocation1] ss:$4 sm:$0xff] %v25
    %929 = vst [vmem:[%s908] ss:$4 sm:$0xff] %v26
    %v930 = vld.sshfl [vmem:[#allocation1] sm:$0xff pattern:$0x73625140]
    %v931 = vld.sshfl [vmem:[#allocation1 + $0x8] sm:$0xff pattern:$0x73625140]
    %v932 = vld.sshfl [vmem:[#allocation1 + $0x10] sm:$0xff pattern:$0x73625140]
    %v933 = vld.sshfl [vmem:[#allocation1 + $0x18] sm:$0xff pattern:$0x73625140]
    %v934 = vld.sshfl [vmem:[#allocation1 + $0x20] sm:$0xff pattern:$0x73625140]
    %v935 = vld.sshfl [vmem:[#allocation1 + $0x28] sm:$0xff pattern:$0x73625140]
    %v936 = vld.sshfl [vmem:[#allocation1 + $0x30] sm:$0xff pattern:$0x73625140]
    %v937 = vld.sshfl [vmem:[#allocation1 + $0x38] sm:$0xff pattern:$0x73625140]
    %938 = vst [vmem:[#allocation1] ss:$4 sm:$0xff] %v27
    %939 = vst [vmem:[%s908] ss:$4 sm:$0xff] %v28
    %v940 = vld.sshfl [vmem:[#allocation1] sm:$0xff pattern:$0x73625140]
    %v941 = vld.sshfl [vmem:[#allocation1 + $0x8] sm:$0xff pattern:$0x73625140]
    %v942 = vld.sshfl [vmem:[#allocation1 + $0x10] sm:$0xff pattern:$0x73625140]
    %v943 = vld.sshfl [vmem:[#allocation1 + $0x18] sm:$0xff pattern:$0x73625140]
    %v944 = vld.sshfl [vmem:[#allocation1 + $0x20] sm:$0xff pattern:$0x73625140]
    %v945 = vld.sshfl [vmem:[#allocation1 + $0x28] sm:$0xff pattern:$0x73625140]
    %v946 = vld.sshfl [vmem:[#allocation1 + $0x30] sm:$0xff pattern:$0x73625140]
    %v947 = vld.sshfl [vmem:[#allocation1 + $0x38] sm:$0xff pattern:$0x73625140]
    %948 = vst [vmem:[#allocation1] ss:$4 sm:$0xff] %v29
    %949 = vst [vmem:[%s908] ss:$4 sm:$0xff] %v30
    %v950 = vld.sshfl [vmem:[#allocation1] sm:$0xff pattern:$0x73625140]
    %v951 = vld.sshfl [vmem:[#allocation1 + $0x8] sm:$0xff pattern:$0x73625140]
    %v952 = vld.sshfl [vmem:[#allocation1 + $0x10] sm:$0xff pattern:$0x73625140]
    %v953 = vld.sshfl [vmem:[#allocation1 + $0x18] sm:$0xff pattern:$0x73625140]
    %v954 = vld.sshfl [vmem:[#allocation1 + $0x20] sm:$0xff pattern:$0x73625140]
    %v955 = vld.sshfl [vmem:[#allocation1 + $0x28] sm:$0xff pattern:$0x73625140]
    %v956 = vld.sshfl [vmem:[#allocation1 + $0x30] sm:$0xff pattern:$0x73625140]
    %v957 = vld.sshfl [vmem:[#allocation1 + $0x38] sm:$0xff pattern:$0x73625140]
    %958 = vst [vmem:[#allocation1] ss:$4 sm:$0xff] %v31
    %959 = vst [vmem:[%s908] ss:$4 sm:$0xff] %v32
    %v960 = vld.sshfl [vmem:[#allocation1] sm:$0xff pattern:$0x73625140]
    %v961 = vld.sshfl [vmem:[#allocation1 + $0x8] sm:$0xff pattern:$0x73625140]
    %v962 = vld.sshfl [vmem:[#allocation1 + $0x10] sm:$0xff pattern:$0x73625140]
    %v963 = vld.sshfl [vmem:[#allocation1 + $0x18] sm:$0xff pattern:$0x73625140]
    %v964 = vld.sshfl [vmem:[#allocation1 + $0x20] sm:$0xff pattern:$0x73625140]
    %v965 = vld.sshfl [vmem:[#allocation1 + $0x28] sm:$0xff pattern:$0x73625140]
    %v966 = vld.sshfl [vmem:[#allocation1 + $0x30] sm:$0xff pattern:$0x73625140]
    %v967 = vld.sshfl [vmem:[#allocation1 + $0x38] sm:$0xff pattern:$0x73625140]
    %968 = vst [vmem:[#allocation1] ss:$4 sm:$0xff] %v33
    %969 = vst [vmem:[%s908] ss:$4 sm:$0xff] %v34
    %v970 = vld.sshfl [vmem:[#allocation1] sm:$0xff pattern:$0x73625140]
    %v971 = vld.sshfl [vmem:[#allocation1 + $0x8] sm:$0xff pattern:$0x73625140]
    %v972 = vld.sshfl [vmem:[#allocation1 + $0x10] sm:$0xff pattern:$0x73625140]
    %v973 = vld.sshfl [vmem:[#allocation1 + $0x18] sm:$0xff pattern:$0x73625140]
    %v974 = vld.sshfl [vmem:[#allocation1 + $0x20] sm:$0xff pattern:$0x73625140]
    %v975 = vld.sshfl [vmem:[#allocation1 + $0x28] sm:$0xff pattern:$0x73625140]
    %v976 = vld.sshfl [vmem:[#allocation1 + $0x30] sm:$0xff pattern:$0x73625140]
    %v977 = vld.sshfl [vmem:[#allocation1 + $0x38] sm:$0xff pattern:$0x73625140]
    %978 = vst [vmem:[#allocation1] ss:$4 sm:$0xff] %v35
    %979 = vst [vmem:[%s908] ss:$4 sm:$0xff] %v36
    %v980 = vld.sshfl [vmem:[#allocation1] sm:$0xff pattern:$0x73625140]
    %v981 = vld.sshfl [vmem:[#allocation1 + $0x8] sm:$0xff pattern:$0x73625140]
    %v982 = vld.sshfl [vmem:[#allocation1 + $0x10] sm:$0xff pattern:$0x73625140]
    %v983 = vld.sshfl [vmem:[#allocation1 + $0x18] sm:$0xff pattern:$0x73625140]
    %v984 = vld.sshfl [vmem:[#allocation1 + $0x20] sm:$0xff pattern:$0x73625140]
    %v985 = vld.sshfl [vmem:[#allocation1 + $0x28] sm:$0xff pattern:$0x73625140]
    %v986 = vld.sshfl [vmem:[#allocation1 + $0x30] sm:$0xff pattern:$0x73625140]
    %v987 = vld.sshfl [vmem:[#allocation1 + $0x38] sm:$0xff pattern:$0x73625140]
    %988 = vst [vmem:[#allocation1] ss:$4 sm:$0xff] %v37
    %989 = vst [vmem:[%s908] ss:$4 sm:$0xff] %v38
    %v990 = vld.sshfl [vmem:[#allocation1] sm:$0xff pattern:$0x73625140]
    %v991 = vld.sshfl [vmem:[#allocation1 + $0x8] sm:$0xff pattern:$0x73625140]
    %v992 = vld.sshfl [vmem:[#allocation1 + $0x10] sm:$0xff pattern:$0x73625140]
    %v993 = vld.sshfl [vmem:[#allocation1 + $0x18] sm:$0xff pattern:$0x73625140]
    %v994 = vld.sshfl [vmem:[#allocation1 + $0x20] sm:$0xff pattern:$0x73625140]
    %v995 = vld.sshfl [vmem:[#allocation1 + $0x28] sm:$0xff pattern:$0x73625140]
    %v996 = vld.sshfl [vmem:[#allocation1 + $0x30] sm:$0xff pattern:$0x73625140]
    %v997 = vld.sshfl [vmem:[#allocation1 + $0x38] sm:$0xff pattern:$0x73625140]
    %998 = vst [vmem:[#allocation1] ss:$4 sm:$0xff] %v39
    %999 = vst [vmem:[%s908] ss:$4 sm:$0xff] %v40
    %v1000 = vld.sshfl [vmem:[#allocation1] sm:$0xff pattern:$0x73625140]
    %v1001 = vld.sshfl [vmem:[#allocation1 + $0x8] sm:$0xff pattern:$0x73625140]
    %v1002 = vld.sshfl [vmem:[#allocation1 + $0x10] sm:$0xff pattern:$0x73625140]
    %v1003 = vld.sshfl [vmem:[#allocation1 + $0x18] sm:$0xff pattern:$0x73625140]
    %v1004 = vld.sshfl [vmem:[#allocation1 + $0x20] sm:$0xff pattern:$0x73625140]
    %v1005 = vld.sshfl [vmem:[#allocation1 + $0x28] sm:$0xff pattern:$0x73625140]
    %v1006 = vld.sshfl [vmem:[#allocation1 + $0x30] sm:$0xff pattern:$0x73625140]
    %v1007 = vld.sshfl [vmem:[#allocation1 + $0x38] sm:$0xff pattern:$0x73625140]
    %1008 = vst [vmem:[#allocation1] ss:$4 sm:$0xff] %v41
    %1009 = vst [vmem:[%s908] ss:$4 sm:$0xff] %v42
    %v1010 = vld.sshfl [vmem:[#allocation1] sm:$0xff pattern:$0x73625140]
    %v1011 = vld.sshfl [vmem:[#allocation1 + $0x8] sm:$0xff pattern:$0x73625140]
    %v1012 = vld.sshfl [vmem:[#allocation1 + $0x10] sm:$0xff pattern:$0x73625140]
    %v1013 = vld.sshfl [vmem:[#allocation1 + $0x18] sm:$0xff pattern:$0x73625140]
    %v1014 = vld.sshfl [vmem:[#allocation1 + $0x20] sm:$0xff pattern:$0x73625140]
    %v1015 = vld.sshfl [vmem:[#allocation1 + $0x28] sm:$0xff pattern:$0x73625140]
    %v1016 = vld.sshfl [vmem:[#allocation1 + $0x30] sm:$0xff pattern:$0x73625140]
    %v1017 = vld.sshfl [vmem:[#allocation1 + $0x38] sm:$0xff pattern:$0x73625140]
    %1018 = vst [vmem:[#allocation1] ss:$4 sm:$0xff] %v43
    %1019 = vst [vmem:[%s908] ss:$4 sm:$0xff] %v44
    %v1020 = vld.sshfl [vmem:[#allocation1] sm:$0xff pattern:$0x73625140]
    %v1021 = vld.sshfl [vmem:[#allocation1 + $0x8] sm:$0xff pattern:$0x73625140]
    %v1022 = vld.sshfl [vmem:[#allocation1 + $0x10] sm:$0xff pattern:$0x73625140]
    %v1023 = vld.sshfl [vmem:[#allocation1 + $0x18] sm:$0xff pattern:$0x73625140]
    %v1024 = vld.sshfl [vmem:[#allocation1 + $0x20] sm:$0xff pattern:$0x73625140]
    %v1025 = vld.sshfl [vmem:[#allocation1 + $0x28] sm:$0xff pattern:$0x73625140]
    %v1026 = vld.sshfl [vmem:[#allocation1 + $0x30] sm:$0xff pattern:$0x73625140]
    %v1027 = vld.sshfl [vmem:[#allocation1 + $0x38] sm:$0xff pattern:$0x73625140]
    %1028 = vst [vmem:[#allocation1] ss:$4 sm:$0xff] %v45
    %1029 = vst [vmem:[%s908] ss:$4 sm:$0xff] %v46
    %v1030 = vld.sshfl [vmem:[#allocation1] sm:$0xff pattern:$0x73625140]
    %v1031 = vld.sshfl [vmem:[#allocation1 + $0x8] sm:$0xff pattern:$0x73625140]
    %v1032 = vld.sshfl [vmem:[#allocation1 + $0x10] sm:$0xff pattern:$0x73625140]
    %v1033 = vld.sshfl [vmem:[#allocation1 + $0x18] sm:$0xff pattern:$0x73625140]
    %v1034 = vld.sshfl [vmem:[#allocation1 + $0x20] sm:$0xff pattern:$0x73625140]
    %v1035 = vld.sshfl [vmem:[#allocation1 + $0x28] sm:$0xff pattern:$0x73625140]
    %v1036 = vld.sshfl [vmem:[#allocation1 + $0x30] sm:$0xff pattern:$0x73625140]
    %v1037 = vld.sshfl [vmem:[#allocation1 + $0x38] sm:$0xff pattern:$0x73625140]
    %1038 = vst [vmem:[#allocation1] ss:$4 sm:$0xff] %v47
    %1039 = vst [vmem:[%s908] ss:$4 sm:$0xff] %v48
    %v1040 = vld.sshfl [vmem:[#allocation1] sm:$0xff pattern:$0x73625140]
    %v1041 = vld.sshfl [vmem:[#allocation1 + $0x8] sm:$0xff pattern:$0x73625140]
    %v1042 = vld.sshfl [vmem:[#allocation1 + $0x10] sm:$0xff pattern:$0x73625140]
    %v1043 = vld.sshfl [vmem:[#allocation1 + $0x18] sm:$0xff pattern:$0x73625140]
    %v1044 = vld.sshfl [vmem:[#allocation1 + $0x20] sm:$0xff pattern:$0x73625140]
    %v1045 = vld.sshfl [vmem:[#allocation1 + $0x28] sm:$0xff pattern:$0x73625140]
    %v1046 = vld.sshfl [vmem:[#allocation1 + $0x30] sm:$0xff pattern:$0x73625140]
    %v1047 = vld.sshfl [vmem:[#allocation1 + $0x38] sm:$0xff pattern:$0x73625140]
    %1048 = vst [vmem:[#allocation1] ss:$4 sm:$0xff] %v49
    %1049 = vst [vmem:[%s908] ss:$4 sm:$0xff] %v50
    %v1050 = vld.sshfl [vmem:[#allocation1] sm:$0xff pattern:$0x73625140]
    %v1051 = vld.sshfl [vmem:[#allocation1 + $0x8] sm:$0xff pattern:$0x73625140]
    %v1052 = vld.sshfl [vmem:[#allocation1 + $0x10] sm:$0xff pattern:$0x73625140]
    %v1053 = vld.sshfl [vmem:[#allocation1 + $0x18] sm:$0xff pattern:$0x73625140]
    %v1054 = vld.sshfl [vmem:[#allocation1 + $0x20] sm:$0xff pattern:$0x73625140]
    %v1055 = vld.sshfl [vmem:[#allocation1 + $0x28] sm:$0xff pattern:$0x73625140]
    %v1056 = vld.sshfl [vmem:[#allocation1 + $0x30] sm:$0xff pattern:$0x73625140]
    %v1057 = vld.sshfl [vmem:[#allocation1 + $0x38] sm:$0xff pattern:$0x73625140]
    %1058 = vst [vmem:[#allocation1] ss:$4 sm:$0xff] %v51
    %1059 = vst [vmem:[%s908] ss:$4 sm:$0xff] %v52
    %v1060 = vld.sshfl [vmem:[#allocation1] sm:$0xff pattern:$0x73625140]
    %v1061 = vld.sshfl [vmem:[#allocation1 + $0x8] sm:$0xff pattern:$0x73625140]
    %v1062 = vld.sshfl [vmem:[#allocation1 + $0x10] sm:$0xff pattern:$0x73625140]
    %v1063 = vld.sshfl [vmem:[#allocation1 + $0x18] sm:$0xff pattern:$0x73625140]
    %v1064 = vld.sshfl [vmem:[#allocation1 + $0x20] sm:$0xff pattern:$0x73625140]
    %v1065 = vld.sshfl [vmem:[#allocation1 + $0x28] sm:$0xff pattern:$0x73625140]
    %v1066 = vld.sshfl [vmem:[#allocation1 + $0x30] sm:$0xff pattern:$0x73625140]
    %v1067 = vld.sshfl [vmem:[#allocation1 + $0x38] sm:$0xff pattern:$0x73625140]
    %1068 = vst [vmem:[#allocation1] ss:$4 sm:$0xff] %v53
    %1069 = vst [vmem:[%s908] ss:$4 sm:$0xff] %v54
    %v1070 = vld.sshfl [vmem:[#allocation1] sm:$0xff pattern:$0x73625140]
    %v1071 = vld.sshfl [vmem:[#allocation1 + $0x8] sm:$0xff pattern:$0x73625140]
    %v1072 = vld.sshfl [vmem:[#allocation1 + $0x10] sm:$0xff pattern:$0x73625140]
    %v1073 = vld.sshfl [vmem:[#allocation1 + $0x18] sm:$0xff pattern:$0x73625140]
    %v1074 = vld.sshfl [vmem:[#allocation1 + $0x20] sm:$0xff pattern:$0x73625140]
    %v1075 = vld.sshfl [vmem:[#allocation1 + $0x28] sm:$0xff pattern:$0x73625140]
    %v1076 = vld.sshfl [vmem:[#allocation1 + $0x30] sm:$0xff pattern:$0x73625140]
    %v1077 = vld.sshfl [vmem:[#allocation1 + $0x38] sm:$0xff pattern:$0x73625140]
    %1078 = vst [vmem:[#allocation1] ss:$4 sm:$0xff] %v55
    %1079 = vst [vmem:[%s908] ss:$4 sm:$0xff] %v56
    %v1080 = vld.sshfl [vmem:[#allocation1] sm:$0xff pattern:$0x73625140]
    %v1081 = vld.sshfl [vmem:[#allocation1 + $0x8] sm:$0xff pattern:$0x73625140]
    %v1082 = vld.sshfl [vmem:[#allocation1 + $0x10] sm:$0xff pattern:$0x73625140]
    %v1083 = vld.sshfl [vmem:[#allocation1 + $0x18] sm:$0xff pattern:$0x73625140]
    %v1084 = vld.sshfl [vmem:[#allocation1 + $0x20] sm:$0xff pattern:$0x73625140]
    %v1085 = vld.sshfl [vmem:[#allocation1 + $0x28] sm:$0xff pattern:$0x73625140]
    %v1086 = vld.sshfl [vmem:[#allocation1 + $0x30] sm:$0xff pattern:$0x73625140]
    %v1087 = vld.sshfl [vmem:[#allocation1 + $0x38] sm:$0xff pattern:$0x73625140]
    %1088 = vst [vmem:[#allocation1] ss:$4 sm:$0xff] %v57
    %1089 = vst [vmem:[%s908] ss:$4 sm:$0xff] %v58
    %v1090 = vld.sshfl [vmem:[#allocation1] sm:$0xff pattern:$0x73625140]
    %v1091 = vld.sshfl [vmem:[#allocation1 + $0x8] sm:$0xff pattern:$0x73625140]
    %v1092 = vld.sshfl [vmem:[#allocation1 + $0x10] sm:$0xff pattern:$0x73625140]
    %v1093 = vld.sshfl [vmem:[#allocation1 + $0x18] sm:$0xff pattern:$0x73625140]
    %v1094 = vld.sshfl [vmem:[#allocation1 + $0x20] sm:$0xff pattern:$0x73625140]
    %v1095 = vld.sshfl [vmem:[#allocation1 + $0x28] sm:$0xff pattern:$0x73625140]
    %v1096 = vld.sshfl [vmem:[#allocation1 + $0x30] sm:$0xff pattern:$0x73625140]
    %v1097 = vld.sshfl [vmem:[#allocation1 + $0x38] sm:$0xff pattern:$0x73625140]
    %1098 = vst [vmem:[#allocation1] ss:$4 sm:$0xff] %v59
    %1099 = vst [vmem:[%s908] ss:$4 sm:$0xff] %v60
    %v1100 = vld.sshfl [vmem:[#allocation1] sm:$0xff pattern:$0x73625140]
    %v1101 = vld.sshfl [vmem:[#allocation1 + $0x8] sm:$0xff pattern:$0x73625140]
    %v1102 = vld.sshfl [vmem:[#allocation1 + $0x10] sm:$0xff pattern:$0x73625140]
    %v1103 = vld.sshfl [vmem:[#allocation1 + $0x18] sm:$0xff pattern:$0x73625140]
    %v1104 = vld.sshfl [vmem:[#allocation1 + $0x20] sm:$0xff pattern:$0x73625140]
    %v1105 = vld.sshfl [vmem:[#allocation1 + $0x28] sm:$0xff pattern:$0x73625140]
    %v1106 = vld.sshfl [vmem:[#allocation1 + $0x30] sm:$0xff pattern:$0x73625140]
    %v1107 = vld.sshfl [vmem:[#allocation1 + $0x38] sm:$0xff pattern:$0x73625140]
    %1108 = vst [vmem:[#allocation1] ss:$4 sm:$0xff] %v61
    %1109 = vst [vmem:[%s908] ss:$4 sm:$0xff] %v62
    %v1110 = vld.sshfl [vmem:[#allocation1] sm:$0xff pattern:$0x73625140]
    %v1111 = vld.sshfl [vmem:[#allocation1 + $0x8] sm:$0xff pattern:$0x73625140]
    %v1112 = vld.sshfl [vmem:[#allocation1 + $0x10] sm:$0xff pattern:$0x73625140]
    %v1113 = vld.sshfl [vmem:[#allocation1 + $0x18] sm:$0xff pattern:$0x73625140]
    %v1114 = vld.sshfl [vmem:[#allocation1 + $0x20] sm:$0xff pattern:$0x73625140]
    %v1115 = vld.sshfl [vmem:[#allocation1 + $0x28] sm:$0xff pattern:$0x73625140]
    %v1116 = vld.sshfl [vmem:[#allocation1 + $0x30] sm:$0xff pattern:$0x73625140]
    %v1117 = vld.sshfl [vmem:[#allocation1 + $0x38] sm:$0xff pattern:$0x73625140]
    %1118 = vst [vmem:[#allocation1] ss:$4 sm:$0xff] %v63
    %1119 = vst [vmem:[%s908] ss:$4 sm:$0xff] %v64
    %v1120 = vld.sshfl [vmem:[#allocation1] sm:$0xff pattern:$0x73625140]
    %v1121 = vld.sshfl [vmem:[#allocation1 + $0x8] sm:$0xff pattern:$0x73625140]
    %v1122 = vld.sshfl [vmem:[#allocation1 + $0x10] sm:$0xff pattern:$0x73625140]
    %v1123 = vld.sshfl [vmem:[#allocation1 + $0x18] sm:$0xff pattern:$0x73625140]
    %v1124 = vld.sshfl [vmem:[#allocation1 + $0x20] sm:$0xff pattern:$0x73625140]
    %v1125 = vld.sshfl [vmem:[#allocation1 + $0x28] sm:$0xff pattern:$0x73625140]
    %v1126 = vld.sshfl [vmem:[#allocation1 + $0x30] sm:$0xff pattern:$0x73625140]
    %v1127 = vld.sshfl [vmem:[#allocation1 + $0x38] sm:$0xff pattern:$0x73625140]
    %1128 = vst [vmem:[#allocation1] ss:$4 sm:$0xff] %v65
    %1129 = vst [vmem:[%s908] ss:$4 sm:$0xff] %v66
    %v1130 = vld.sshfl [vmem:[#allocation1] sm:$0xff pattern:$0x73625140]
    %v1131 = vld.sshfl [vmem:[#allocation1 + $0x8] sm:$0xff pattern:$0x73625140]
    %v1132 = vld.sshfl [vmem:[#allocation1 + $0x10] sm:$0xff pattern:$0x73625140]
    %v1133 = vld.sshfl [vmem:[#allocation1 + $0x18] sm:$0xff pattern:$0x73625140]
    %v1134 = vld.sshfl [vmem:[#allocation1 + $0x20] sm:$0xff pattern:$0x73625140]
    %v1135 = vld.sshfl [vmem:[#allocation1 + $0x28] sm:$0xff pattern:$0x73625140]
    %v1136 = vld.sshfl [vmem:[#allocation1 + $0x30] sm:$0xff pattern:$0x73625140]
    %v1137 = vld.sshfl [vmem:[#allocation1 + $0x38] sm:$0xff pattern:$0x73625140]
    %1138 = vst [vmem:[#allocation1] ss:$4 sm:$0xff] %v67
    %1139 = vst [vmem:[%s908] ss:$4 sm:$0xff] %v68
    %v1140 = vld.sshfl [vmem:[#allocation1] sm:$0xff pattern:$0x73625140]
    %v1141 = vld.sshfl [vmem:[#allocation1 + $0x8] sm:$0xff pattern:$0x73625140]
    %v1142 = vld.sshfl [vmem:[#allocation1 + $0x10] sm:$0xff pattern:$0x73625140]
    %v1143 = vld.sshfl [vmem:[#allocation1 + $0x18] sm:$0xff pattern:$0x73625140]
    %v1144 = vld.sshfl [vmem:[#allocation1 + $0x20] sm:$0xff pattern:$0x73625140]
    %v1145 = vld.sshfl [vmem:[#allocation1 + $0x28] sm:$0xff pattern:$0x73625140]
    %v1146 = vld.sshfl [vmem:[#allocation1 + $0x30] sm:$0xff pattern:$0x73625140]
    %v1147 = vld.sshfl [vmem:[#allocation1 + $0x38] sm:$0xff pattern:$0x73625140]
    %1148 = vst [vmem:[#allocation1] ss:$4 sm:$0xff] %v69
    %v1149 = vld.sshfl [vmem:[#allocation1] sm:$0xff pattern:$0x73625140]
    %v1150 = vld.sshfl [vmem:[#allocation1 + $0x8] sm:$0xff pattern:$0x73625140]
    %v1151 = vld.sshfl [vmem:[#allocation1 + $0x10] sm:$0xff pattern:$0x73625140]
    %v1152 = vld.sshfl [vmem:[#allocation1 + $0x18] sm:$0xff pattern:$0x73625140]
    %1349 = vmatpush.xpose.msra.mxu0 0.0
    %1350 = vmatpush.xpose.msra.mxu0 0.0
    %1351 = vmatpush.xpose.msra.mxu0 0.0
    %1352 = vmatpush.xpose.msra.mxu0 0.0
    %1353 = vmatpush.xpose.msra.mxu0 0.0
    %1354 = vmatpush.xpose.msra.mxu0 0.0
    %1355 = vmatpush.xpose.msra.mxu0 0.0
    %1356 = vmatpush.xpose.msra.mxu0 0.0
    %1357 = vmatpush.xpose.msra.mxu0 0.0
    %1358 = vmatpush.xpose.msra.mxu0 0.0
    %1359 = vmatpush.xpose.msra.mxu0 0.0
    %1360 = vmatpush.xpose.msra.mxu0 0.0
    %1361 = vmatpush.xpose.msra.mxu0 %v658
    %1362 = vmatpush.xpose.msra.mxu0 %v462
    %1363 = vmatpush.xpose.msra.mxu0 %v266
    %1364 = vmatpush.xpose.msra.mxu0 %v70
    %1365 = vmatmul.f32.gmra.mxu0 %v910
    %v1366 = vpop.f32.mrf.mxu0
    %v1367 = vadd.f32 %v856, %v1366
    %1368 = vdwg.mxu0
    %1369 = vmatpush.xpose.msra.mxu0 0.0
    %1370 = vmatpush.xpose.msra.mxu0 0.0
    %1371 = vmatpush.xpose.msra.mxu0 0.0
    %1372 = vmatpush.xpose.msra.mxu0 0.0
    %1373 = vmatpush.xpose.msra.mxu0 0.0
    %1374 = vmatpush.xpose.msra.mxu0 0.0
    %1375 = vmatpush.xpose.msra.mxu0 0.0
    %1376 = vmatpush.xpose.msra.mxu0 0.0
    %1377 = vmatpush.xpose.msra.mxu0 0.0
    %1378 = vmatpush.xpose.msra.mxu0 0.0
    %1379 = vmatpush.xpose.msra.mxu0 0.0
    %1380 = vmatpush.xpose.msra.mxu0 0.0
    %1381 = vmatpush.xpose.msra.mxu0 %v659
    %1382 = vmatpush.xpose.msra.mxu0 %v463
    %1383 = vmatpush.xpose.msra.mxu0 %v267
    %1384 = vmatpush.xpose.msra.mxu0 %v71
    %1385 = vmatmul.f32.gmra.mxu0 %v911
    %v1386 = vpop.f32.mrf.mxu0
    %v1387 = vadd.f32 %v1367, %v1386
    %1388 = vdwg.mxu0
    %1389 = vmatpush.xpose.msra.mxu0 0.0
    %1390 = vmatpush.xpose.msra.mxu0 0.0
    %1391 = vmatpush.xpose.msra.mxu0 0.0
    %1392 = vmatpush.xpose.msra.mxu0 0.0
    %1393 = vmatpush.xpose.msra.mxu0 0.0
    %1394 = vmatpush.xpose.msra.mxu0 0.0
    %1395 = vmatpush.xpose.msra.mxu0 0.0
    %1396 = vmatpush.xpose.msra.mxu0 0.0
    %1397 = vmatpush.xpose.msra.mxu0 0.0
    %1398 = vmatpush.xpose.msra.mxu0 0.0
    %1399 = vmatpush.xpose.msra.mxu0 0.0
    %1400 = vmatpush.xpose.msra.mxu0 0.0
    %1401 = vmatpush.xpose.msra.mxu0 %v660
    %1402 = vmatpush.xpose.msra.mxu0 %v464
    %1403 = vmatpush.xpose.msra.mxu0 %v268
    %1404 = vmatpush.xpose.msra.mxu0 %v72
    %1405 = vmatmul.f32.gmra.mxu0 %v912
    %v1406 = vpop.f32.mrf.mxu0
    %v1407 = vadd.f32 %v1387, %v1406
    %1408 = vdwg.mxu0
    %1409 = vmatpush.xpose.msra.mxu0 0.0
    %1410 = vmatpush.xpose.msra.mxu0 0.0
    %1411 = vmatpush.xpose.msra.mxu0 0.0
    %1412 = vmatpush.xpose.msra.mxu0 0.0
    %1413 = vmatpush.xpose.msra.mxu0 0.0
    %1414 = vmatpush.xpose.msra.mxu0 0.0
    %1415 = vmatpush.xpose.msra.mxu0 0.0
    %1416 = vmatpush.xpose.msra.mxu0 0.0
    %1417 = vmatpush.xpose.msra.mxu0 0.0
    %1418 = vmatpush.xpose.msra.mxu0 0.0
    %1419 = vmatpush.xpose.msra.mxu0 0.0
    %1420 = vmatpush.xpose.msra.mxu0 0.0
    %1421 = vmatpush.xpose.msra.mxu0 %v661
    %1422 = vmatpush.xpose.msra.mxu0 %v465
    %1423 = vmatpush.xpose.msra.mxu0 %v269
    %1424 = vmatpush.xpose.msra.mxu0 %v73
    %1425 = vmatmul.f32.gmra.mxu0 %v913
    %v1426 = vpop.f32.mrf.mxu0
    %v1427 = vadd.f32 %v1407, %v1426
    %1428 = vdwg.mxu0
    %1429 = vmatpush.xpose.msra.mxu0 0.0
    %1430 = vmatpush.xpose.msra.mxu0 0.0
    %1431 = vmatpush.xpose.msra.mxu0 0.0
    %1432 = vmatpush.xpose.msra.mxu0 0.0
    %1433 = vmatpush.xpose.msra.mxu0 0.0
    %1434 = vmatpush.xpose.msra.mxu0 0.0
    %1435 = vmatpush.xpose.msra.mxu0 0.0
    %1436 = vmatpush.xpose.msra.mxu0 0.0
    %1437 = vmatpush.xpose.msra.mxu0 0.0
    %1438 = vmatpush.xpose.msra.mxu0 0.0
    %1439 = vmatpush.xpose.msra.mxu0 0.0
    %1440 = vmatpush.xpose.msra.mxu0 0.0
    %1441 = vmatpush.xpose.msra.mxu0 %v662
    %1442 = vmatpush.xpose.msra.mxu0 %v466
    %1443 = vmatpush.xpose.msra.mxu0 %v270
    %1444 = vmatpush.xpose.msra.mxu0 %v74
    %1445 = vmatmul.f32.gmra.mxu0 %v914
    %v1446 = vpop.f32.mrf.mxu0
    %v1447 = vadd.f32 %v1427, %v1446
    %1448 = vdwg.mxu0
    %1449 = vmatpush.xpose.msra.mxu0 0.0
    %1450 = vmatpush.xpose.msra.mxu0 0.0
    %1451 = vmatpush.xpose.msra.mxu0 0.0
    %1452 = vmatpush.xpose.msra.mxu0 0.0
    %1453 = vmatpush.xpose.msra.mxu0 0.0
    %1454 = vmatpush.xpose.msra.mxu0 0.0
    %1455 = vmatpush.xpose.msra.mxu0 0.0
    %1456 = vmatpush.xpose.msra.mxu0 0.0
    %1457 = vmatpush.xpose.msra.mxu0 0.0
    %1458 = vmatpush.xpose.msra.mxu0 0.0
    %1459 = vmatpush.xpose.msra.mxu0 0.0
    %1460 = vmatpush.xpose.msra.mxu0 0.0
    %1461 = vmatpush.xpose.msra.mxu0 %v663
    %1462 = vmatpush.xpose.msra.mxu0 %v467
    %1463 = vmatpush.xpose.msra.mxu0 %v271
    %1464 = vmatpush.xpose.msra.mxu0 %v75
    %1465 = vmatmul.f32.gmra.mxu0 %v915
    %v1466 = vpop.f32.mrf.mxu0
    %v1467 = vadd.f32 %v1447, %v1466
    %1468 = vdwg.mxu0
    %1469 = vmatpush.xpose.msra.mxu0 0.0
    %1470 = vmatpush.xpose.msra.mxu0 0.0
    %1471 = vmatpush.xpose.msra.mxu0 0.0
    %1472 = vmatpush.xpose.msra.mxu0 0.0
    %1473 = vmatpush.xpose.msra.mxu0 0.0
    %1474 = vmatpush.xpose.msra.mxu0 0.0
    %1475 = vmatpush.xpose.msra.mxu0 0.0
    %1476 = vmatpush.xpose.msra.mxu0 0.0
    %1477 = vmatpush.xpose.msra.mxu0 0.0
    %1478 = vmatpush.xpose.msra.mxu0 0.0
    %1479 = vmatpush.xpose.msra.mxu0 0.0
    %1480 = vmatpush.xpose.msra.mxu0 0.0
    %1481 = vmatpush.xpose.msra.mxu0 %v664
    %1482 = vmatpush.xpose.msra.mxu0 %v468
    %1483 = vmatpush.xpose.msra.mxu0 %v272
    %1484 = vmatpush.xpose.msra.mxu0 %v76
    %1485 = vmatmul.f32.gmra.mxu0 %v916
    %v1486 = vpop.f32.mrf.mxu0
    %v1487 = vadd.f32 %v1467, %v1486
    %1488 = vdwg.mxu0
    %1489 = vmatpush.xpose.msra.mxu0 0.0
    %1490 = vmatpush.xpose.msra.mxu0 0.0
    %1491 = vmatpush.xpose.msra.mxu0 0.0
    %1492 = vmatpush.xpose.msra.mxu0 0.0
    %1493 = vmatpush.xpose.msra.mxu0 0.0
    %1494 = vmatpush.xpose.msra.mxu0 0.0
    %1495 = vmatpush.xpose.msra.mxu0 0.0
    %1496 = vmatpush.xpose.msra.mxu0 0.0
    %1497 = vmatpush.xpose.msra.mxu0 0.0
    %1498 = vmatpush.xpose.msra.mxu0 0.0
    %1499 = vmatpush.xpose.msra.mxu0 0.0
    %1500 = vmatpush.xpose.msra.mxu0 0.0
    %1501 = vmatpush.xpose.msra.mxu0 %v665
    %1502 = vmatpush.xpose.msra.mxu0 %v469
    %1503 = vmatpush.xpose.msra.mxu0 %v273
    %1504 = vmatpush.xpose.msra.mxu0 %v77
    %1505 = vmatmul.f32.gmra.mxu0 %v917
    %v1506 = vpop.f32.mrf.mxu0
    %v1507 = vadd.f32 %v1487, %v1506
    %1508 = vdwg.mxu0
    %1509 = vmatpush.xpose.msra.mxu0 0.0
    %1510 = vmatpush.xpose.msra.mxu0 0.0
    %1511 = vmatpush.xpose.msra.mxu0 0.0
    %1512 = vmatpush.xpose.msra.mxu0 0.0
    %1513 = vmatpush.xpose.msra.mxu0 0.0
    %1514 = vmatpush.xpose.msra.mxu0 0.0
    %1515 = vmatpush.xpose.msra.mxu0 0.0
    %1516 = vmatpush.xpose.msra.mxu0 0.0
    %1517 = vmatpush.xpose.msra.mxu0 0.0
    %1518 = vmatpush.xpose.msra.mxu0 0.0
    %1519 = vmatpush.xpose.msra.mxu0 0.0
    %1520 = vmatpush.xpose.msra.mxu0 0.0
    %1521 = vmatpush.xpose.msra.mxu0 %v666
    %1522 = vmatpush.xpose.msra.mxu0 %v470
    %1523 = vmatpush.xpose.msra.mxu0 %v274
    %1524 = vmatpush.xpose.msra.mxu0 %v78
    %1525 = vmatmul.f32.gmra.mxu0 %v920
    %v1526 = vpop.f32.mrf.mxu0
    %v1527 = vadd.f32 %v1507, %v1526
    %1528 = vdwg.mxu0
    %1529 = vmatpush.xpose.msra.mxu0 0.0
    %1530 = vmatpush.xpose.msra.mxu0 0.0
    %1531 = vmatpush.xpose.msra.mxu0 0.0
    %1532 = vmatpush.xpose.msra.mxu0 0.0
    %1533 = vmatpush.xpose.msra.mxu0 0.0
    %1534 = vmatpush.xpose.msra.mxu0 0.0
    %1535 = vmatpush.xpose.msra.mxu0 0.0
    %1536 = vmatpush.xpose.msra.mxu0 0.0
    %1537 = vmatpush.xpose.msra.mxu0 0.0
    %1538 = vmatpush.xpose.msra.mxu0 0.0
    %1539 = vmatpush.xpose.msra.mxu0 0.0
    %1540 = vmatpush.xpose.msra.mxu0 0.0
    %1541 = vmatpush.xpose.msra.mxu0 %v667
    %1542 = vmatpush.xpose.msra.mxu0 %v471
    %1543 = vmatpush.xpose.msra.mxu0 %v275
    %1544 = vmatpush.xpose.msra.mxu0 %v79
    %1545 = vmatmul.f32.gmra.mxu0 %v921
    %v1546 = vpop.f32.mrf.mxu0
    %v1547 = vadd.f32 %v1527, %v1546
    %1548 = vdwg.mxu0
    %1549 = vmatpush.xpose.msra.mxu0 0.0
    %1550 = vmatpush.xpose.msra.mxu0 0.0
    %1551 = vmatpush.xpose.msra.mxu0 0.0
    %1552 = vmatpush.xpose.msra.mxu0 0.0
    %1553 = vmatpush.xpose.msra.mxu0 0.0
    %1554 = vmatpush.xpose.msra.mxu0 0.0
    %1555 = vmatpush.xpose.msra.mxu0 0.0
    %1556 = vmatpush.xpose.msra.mxu0 0.0
    %1557 = vmatpush.xpose.msra.mxu0 0.0
    %1558 = vmatpush.xpose.msra.mxu0 0.0
    %1559 = vmatpush.xpose.msra.mxu0 0.0
    %1560 = vmatpush.xpose.msra.mxu0 0.0
    %1561 = vmatpush.xpose.msra.mxu0 %v668
    %1562 = vmatpush.xpose.msra.mxu0 %v472
    %1563 = vmatpush.xpose.msra.mxu0 %v276
    %1564 = vmatpush.xpose.msra.mxu0 %v80
    %1565 = vmatmul.f32.gmra.mxu0 %v922
    %v1566 = vpop.f32.mrf.mxu0
    %v1567 = vadd.f32 %v1547, %v1566
    %1568 = vdwg.mxu0
    %1569 = vmatpush.xpose.msra.mxu0 0.0
    %1570 = vmatpush.xpose.msra.mxu0 0.0
    %1571 = vmatpush.xpose.msra.mxu0 0.0
    %1572 = vmatpush.xpose.msra.mxu0 0.0
    %1573 = vmatpush.xpose.msra.mxu0 0.0
    %1574 = vmatpush.xpose.msra.mxu0 0.0
    %1575 = vmatpush.xpose.msra.mxu0 0.0
    %1576 = vmatpush.xpose.msra.mxu0 0.0
    %1577 = vmatpush.xpose.msra.mxu0 0.0
    %1578 = vmatpush.xpose.msra.mxu0 0.0
    %1579 = vmatpush.xpose.msra.mxu0 0.0
    %1580 = vmatpush.xpose.msra.mxu0 0.0
    %1581 = vmatpush.xpose.msra.mxu0 %v669
    %1582 = vmatpush.xpose.msra.mxu0 %v473
    %1583 = vmatpush.xpose.msra.mxu0 %v277
    %1584 = vmatpush.xpose.msra.mxu0 %v81
    %1585 = vmatmul.f32.gmra.mxu0 %v923
    %v1586 = vpop.f32.mrf.mxu0
    %v1587 = vadd.f32 %v1567, %v1586
    %1588 = vdwg.mxu0
    %1589 = vmatpush.xpose.msra.mxu0 0.0
    %1590 = vmatpush.xpose.msra.mxu0 0.0
    %1591 = vmatpush.xpose.msra.mxu0 0.0
    %1592 = vmatpush.xpose.msra.mxu0 0.0
    %1593 = vmatpush.xpose.msra.mxu0 0.0
    %1594 = vmatpush.xpose.msra.mxu0 0.0
    %1595 = vmatpush.xpose.msra.mxu0 0.0
    %1596 = vmatpush.xpose.msra.mxu0 0.0
    %1597 = vmatpush.xpose.msra.mxu0 0.0
    %1598 = vmatpush.xpose.msra.mxu0 0.0
    %1599 = vmatpush.xpose.msra.mxu0 0.0
    %1600 = vmatpush.xpose.msra.mxu0 0.0
    %1601 = vmatpush.xpose.msra.mxu0 %v670
    %1602 = vmatpush.xpose.msra.mxu0 %v474
    %1603 = vmatpush.xpose.msra.mxu0 %v278
    %1604 = vmatpush.xpose.msra.mxu0 %v82
    %1605 = vmatmul.f32.gmra.mxu0 %v924
    %v1606 = vpop.f32.mrf.mxu0
    %v1607 = vadd.f32 %v1587, %v1606
    %1608 = vdwg.mxu0
    %1609 = vmatpush.xpose.msra.mxu0 0.0
    %1610 = vmatpush.xpose.msra.mxu0 0.0
    %1611 = vmatpush.xpose.msra.mxu0 0.0
    %1612 = vmatpush.xpose.msra.mxu0 0.0
    %1613 = vmatpush.xpose.msra.mxu0 0.0
    %1614 = vmatpush.xpose.msra.mxu0 0.0
    %1615 = vmatpush.xpose.msra.mxu0 0.0
    %1616 = vmatpush.xpose.msra.mxu0 0.0
    %1617 = vmatpush.xpose.msra.mxu0 0.0
    %1618 = vmatpush.xpose.msra.mxu0 0.0
    %1619 = vmatpush.xpose.msra.mxu0 0.0
    %1620 = vmatpush.xpose.msra.mxu0 0.0
    %1621 = vmatpush.xpose.msra.mxu0 %v671
    %1622 = vmatpush.xpose.msra.mxu0 %v475
    %1623 = vmatpush.xpose.msra.mxu0 %v279
    %1624 = vmatpush.xpose.msra.mxu0 %v83
    %1625 = vmatmul.f32.gmra.mxu0 %v925
    %v1626 = vpop.f32.mrf.mxu0
    %v1627 = vadd.f32 %v1607, %v1626
    %1628 = vdwg.mxu0
    %1629 = vmatpush.xpose.msra.mxu0 0.0
    %1630 = vmatpush.xpose.msra.mxu0 0.0
    %1631 = vmatpush.xpose.msra.mxu0 0.0
    %1632 = vmatpush.xpose.msra.mxu0 0.0
    %1633 = vmatpush.xpose.msra.mxu0 0.0
    %1634 = vmatpush.xpose.msra.mxu0 0.0
    %1635 = vmatpush.xpose.msra.mxu0 0.0
    %1636 = vmatpush.xpose.msra.mxu0 0.0
    %1637 = vmatpush.xpose.msra.mxu0 0.0
    %1638 = vmatpush.xpose.msra.mxu0 0.0
    %1639 = vmatpush.xpose.msra.mxu0 0.0
    %1640 = vmatpush.xpose.msra.mxu0 0.0
    %1641 = vmatpush.xpose.msra.mxu0 %v672
    %1642 = vmatpush.xpose.msra.mxu0 %v476
    %1643 = vmatpush.xpose.msra.mxu0 %v280
    %1644 = vmatpush.xpose.msra.mxu0 %v84
    %1645 = vmatmul.f32.gmra.mxu0 %v926
    %v1646 = vpop.f32.mrf.mxu0
    %v1647 = vadd.f32 %v1627, %v1646
    %1648 = vdwg.mxu0
    %1649 = vmatpush.xpose.msra.mxu0 0.0
    %1650 = vmatpush.xpose.msra.mxu0 0.0
    %1651 = vmatpush.xpose.msra.mxu0 0.0
    %1652 = vmatpush.xpose.msra.mxu0 0.0
    %1653 = vmatpush.xpose.msra.mxu0 0.0
    %1654 = vmatpush.xpose.msra.mxu0 0.0
    %1655 = vmatpush.xpose.msra.mxu0 0.0
    %1656 = vmatpush.xpose.msra.mxu0 0.0
    %1657 = vmatpush.xpose.msra.mxu0 0.0
    %1658 = vmatpush.xpose.msra.mxu0 0.0
    %1659 = vmatpush.xpose.msra.mxu0 0.0
    %1660 = vmatpush.xpose.msra.mxu0 0.0
    %1661 = vmatpush.xpose.msra.mxu0 %v673
    %1662 = vmatpush.xpose.msra.mxu0 %v477
    %1663 = vmatpush.xpose.msra.mxu0 %v281
    %1664 = vmatpush.xpose.msra.mxu0 %v85
    %1665 = vmatmul.f32.gmra.mxu0 %v927
    %v1666 = vpop.f32.mrf.mxu0
    %v1667 = vadd.f32 %v1647, %v1666
    %1668 = vdwg.mxu0
    %1669 = vmatpush.xpose.msra.mxu0 0.0
    %1670 = vmatpush.xpose.msra.mxu0 0.0
    %1671 = vmatpush.xpose.msra.mxu0 0.0
    %1672 = vmatpush.xpose.msra.mxu0 0.0
    %1673 = vmatpush.xpose.msra.mxu0 0.0
    %1674 = vmatpush.xpose.msra.mxu0 0.0
    %1675 = vmatpush.xpose.msra.mxu0 0.0
    %1676 = vmatpush.xpose.msra.mxu0 0.0
    %1677 = vmatpush.xpose.msra.mxu0 0.0
    %1678 = vmatpush.xpose.msra.mxu0 0.0
    %1679 = vmatpush.xpose.msra.mxu0 0.0
    %1680 = vmatpush.xpose.msra.mxu0 0.0
    %1681 = vmatpush.xpose.msra.mxu0 %v674
    %1682 = vmatpush.xpose.msra.mxu0 %v478
    %1683 = vmatpush.xpose.msra.mxu0 %v282
    %1684 = vmatpush.xpose.msra.mxu0 %v86
    %1685 = vmatmul.f32.gmra.mxu0 %v930
    %v1686 = vpop.f32.mrf.mxu0
    %v1687 = vadd.f32 %v1667, %v1686
    %1688 = vdwg.mxu0
    %1689 = vmatpush.xpose.msra.mxu0 0.0
    %1690 = vmatpush.xpose.msra.mxu0 0.0
    %1691 = vmatpush.xpose.msra.mxu0 0.0
    %1692 = vmatpush.xpose.msra.mxu0 0.0
    %1693 = vmatpush.xpose.msra.mxu0 0.0
    %1694 = vmatpush.xpose.msra.mxu0 0.0
    %1695 = vmatpush.xpose.msra.mxu0 0.0
    %1696 = vmatpush.xpose.msra.mxu0 0.0
    %1697 = vmatpush.xpose.msra.mxu0 0.0
    %1698 = vmatpush.xpose.msra.mxu0 0.0
    %1699 = vmatpush.xpose.msra.mxu0 0.0
    %1700 = vmatpush.xpose.msra.mxu0 0.0
    %1701 = vmatpush.xpose.msra.mxu0 %v675
    %1702 = vmatpush.xpose.msra.mxu0 %v479
    %1703 = vmatpush.xpose.msra.mxu0 %v283
    %1704 = vmatpush.xpose.msra.mxu0 %v87
    %1705 = vmatmul.f32.gmra.mxu0 %v931
    %v1706 = vpop.f32.mrf.mxu0
    %v1707 = vadd.f32 %v1687, %v1706
    %1708 = vdwg.mxu0
    %1709 = vmatpush.xpose.msra.mxu0 0.0
    %1710 = vmatpush.xpose.msra.mxu0 0.0
    %1711 = vmatpush.xpose.msra.mxu0 0.0
    %1712 = vmatpush.xpose.msra.mxu0 0.0
    %1713 = vmatpush.xpose.msra.mxu0 0.0
    %1714 = vmatpush.xpose.msra.mxu0 0.0
    %1715 = vmatpush.xpose.msra.mxu0 0.0
    %1716 = vmatpush.xpose.msra.mxu0 0.0
    %1717 = vmatpush.xpose.msra.mxu0 0.0
    %1718 = vmatpush.xpose.msra.mxu0 0.0
    %1719 = vmatpush.xpose.msra.mxu0 0.0
    %1720 = vmatpush.xpose.msra.mxu0 0.0
    %1721 = vmatpush.xpose.msra.mxu0 %v676
    %1722 = vmatpush.xpose.msra.mxu0 %v480
    %1723 = vmatpush.xpose.msra.mxu0 %v284
    %1724 = vmatpush.xpose.msra.mxu0 %v88
    %1725 = vmatmul.f32.gmra.mxu0 %v932
    %v1726 = vpop.f32.mrf.mxu0
    %v1727 = vadd.f32 %v1707, %v1726
    %1728 = vdwg.mxu0
    %1729 = vmatpush.xpose.msra.mxu0 0.0
    %1730 = vmatpush.xpose.msra.mxu0 0.0
    %1731 = vmatpush.xpose.msra.mxu0 0.0
    %1732 = vmatpush.xpose.msra.mxu0 0.0
    %1733 = vmatpush.xpose.msra.mxu0 0.0
    %1734 = vmatpush.xpose.msra.mxu0 0.0
    %1735 = vmatpush.xpose.msra.mxu0 0.0
    %1736 = vmatpush.xpose.msra.mxu0 0.0
    %1737 = vmatpush.xpose.msra.mxu0 0.0
    %1738 = vmatpush.xpose.msra.mxu0 0.0
    %1739 = vmatpush.xpose.msra.mxu0 0.0
    %1740 = vmatpush.xpose.msra.mxu0 0.0
    %1741 = vmatpush.xpose.msra.mxu0 %v677
    %1742 = vmatpush.xpose.msra.mxu0 %v481
    %1743 = vmatpush.xpose.msra.mxu0 %v285
    %1744 = vmatpush.xpose.msra.mxu0 %v89
    %1745 = vmatmul.f32.gmra.mxu0 %v933
    %v1746 = vpop.f32.mrf.mxu0
    %v1747 = vadd.f32 %v1727, %v1746
    %1748 = vdwg.mxu0
    %1749 = vmatpush.xpose.msra.mxu0 0.0
    %1750 = vmatpush.xpose.msra.mxu0 0.0
    %1751 = vmatpush.xpose.msra.mxu0 0.0
    %1752 = vmatpush.xpose.msra.mxu0 0.0
    %1753 = vmatpush.xpose.msra.mxu0 0.0
    %1754 = vmatpush.xpose.msra.mxu0 0.0
    %1755 = vmatpush.xpose.msra.mxu0 0.0
    %1756 = vmatpush.xpose.msra.mxu0 0.0
    %1757 = vmatpush.xpose.msra.mxu0 0.0
    %1758 = vmatpush.xpose.msra.mxu0 0.0
    %1759 = vmatpush.xpose.msra.mxu0 0.0
    %1760 = vmatpush.xpose.msra.mxu0 0.0
    %1761 = vmatpush.xpose.msra.mxu0 %v678
    %1762 = vmatpush.xpose.msra.mxu0 %v482
    %1763 = vmatpush.xpose.msra.mxu0 %v286
    %1764 = vmatpush.xpose.msra.mxu0 %v90
    %1765 = vmatmul.f32.gmra.mxu0 %v934
    %v1766 = vpop.f32.mrf.mxu0
    %v1767 = vadd.f32 %v1747, %v1766
    %1768 = vdwg.mxu0
    %1769 = vmatpush.xpose.msra.mxu0 0.0
    %1770 = vmatpush.xpose.msra.mxu0 0.0
    %1771 = vmatpush.xpose.msra.mxu0 0.0
    %1772 = vmatpush.xpose.msra.mxu0 0.0
    %1773 = vmatpush.xpose.msra.mxu0 0.0
    %1774 = vmatpush.xpose.msra.mxu0 0.0
    %1775 = vmatpush.xpose.msra.mxu0 0.0
    %1776 = vmatpush.xpose.msra.mxu0 0.0
    %1777 = vmatpush.xpose.msra.mxu0 0.0
    %1778 = vmatpush.xpose.msra.mxu0 0.0
    %1779 = vmatpush.xpose.msra.mxu0 0.0
    %1780 = vmatpush.xpose.msra.mxu0 0.0
    %1781 = vmatpush.xpose.msra.mxu0 %v679
    %1782 = vmatpush.xpose.msra.mxu0 %v483
    %1783 = vmatpush.xpose.msra.mxu0 %v287
    %1784 = vmatpush.xpose.msra.mxu0 %v91
    %1785 = vmatmul.f32.gmra.mxu0 %v935
    %v1786 = vpop.f32.mrf.mxu0
    %v1787 = vadd.f32 %v1767, %v1786
    %1788 = vdwg.mxu0
    %1789 = vmatpush.xpose.msra.mxu0 0.0
    %1790 = vmatpush.xpose.msra.mxu0 0.0
    %1791 = vmatpush.xpose.msra.mxu0 0.0
    %1792 = vmatpush.xpose.msra.mxu0 0.0
    %1793 = vmatpush.xpose.msra.mxu0 0.0
    %1794 = vmatpush.xpose.msra.mxu0 0.0
    %1795 = vmatpush.xpose.msra.mxu0 0.0
    %1796 = vmatpush.xpose.msra.mxu0 0.0
    %1797 = vmatpush.xpose.msra.mxu0 0.0
    %1798 = vmatpush.xpose.msra.mxu0 0.0
    %1799 = vmatpush.xpose.msra.mxu0 0.0
    %1800 = vmatpush.xpose.msra.mxu0 0.0
    %1801 = vmatpush.xpose.msra.mxu0 %v680
    %1802 = vmatpush.xpose.msra.mxu0 %v484
    %1803 = vmatpush.xpose.msra.mxu0 %v288
    %1804 = vmatpush.xpose.msra.mxu0 %v92
    %1805 = vmatmul.f32.gmra.mxu0 %v936
    %v1806 = vpop.f32.mrf.mxu0
    %v1807 = vadd.f32 %v1787, %v1806
    %1808 = vdwg.mxu0
    %1809 = vmatpush.xpose.msra.mxu0 0.0
    %1810 = vmatpush.xpose.msra.mxu0 0.0
    %1811 = vmatpush.xpose.msra.mxu0 0.0
    %1812 = vmatpush.xpose.msra.mxu0 0.0
    %1813 = vmatpush.xpose.msra.mxu0 0.0
    %1814 = vmatpush.xpose.msra.mxu0 0.0
    %1815 = vmatpush.xpose.msra.mxu0 0.0
    %1816 = vmatpush.xpose.msra.mxu0 0.0
    %1817 = vmatpush.xpose.msra.mxu0 0.0
    %1818 = vmatpush.xpose.msra.mxu0 0.0
    %1819 = vmatpush.xpose.msra.mxu0 0.0
    %1820 = vmatpush.xpose.msra.mxu0 0.0
    %1821 = vmatpush.xpose.msra.mxu0 %v681
    %1822 = vmatpush.xpose.msra.mxu0 %v485
    %1823 = vmatpush.xpose.msra.mxu0 %v289
    %1824 = vmatpush.xpose.msra.mxu0 %v93
    %1825 = vmatmul.f32.gmra.mxu0 %v937
    %v1826 = vpop.f32.mrf.mxu0
    %v1827 = vadd.f32 %v1807, %v1826
    %1828 = vdwg.mxu0
    %1829 = vmatpush.xpose.msra.mxu0 0.0
    %1830 = vmatpush.xpose.msra.mxu0 0.0
    %1831 = vmatpush.xpose.msra.mxu0 0.0
    %1832 = vmatpush.xpose.msra.mxu0 0.0
    %1833 = vmatpush.xpose.msra.mxu0 0.0
    %1834 = vmatpush.xpose.msra.mxu0 0.0
    %1835 = vmatpush.xpose.msra.mxu0 0.0
    %1836 = vmatpush.xpose.msra.mxu0 0.0
    %1837 = vmatpush.xpose.msra.mxu0 0.0
    %1838 = vmatpush.xpose.msra.mxu0 0.0
    %1839 = vmatpush.xpose.msra.mxu0 0.0
    %1840 = vmatpush.xpose.msra.mxu0 0.0
    %1841 = vmatpush.xpose.msra.mxu0 %v682
    %1842 = vmatpush.xpose.msra.mxu0 %v486
    %1843 = vmatpush.xpose.msra.mxu0 %v290
    %1844 = vmatpush.xpose.msra.mxu0 %v94
    %1845 = vmatmul.f32.gmra.mxu0 %v940
    %v1846 = vpop.f32.mrf.mxu0
    %v1847 = vadd.f32 %v1827, %v1846
    %1848 = vdwg.mxu0
    %1849 = vmatpush.xpose.msra.mxu0 0.0
    %1850 = vmatpush.xpose.msra.mxu0 0.0
    %1851 = vmatpush.xpose.msra.mxu0 0.0
    %1852 = vmatpush.xpose.msra.mxu0 0.0
    %1853 = vmatpush.xpose.msra.mxu0 0.0
    %1854 = vmatpush.xpose.msra.mxu0 0.0
    %1855 = vmatpush.xpose.msra.mxu0 0.0
    %1856 = vmatpush.xpose.msra.mxu0 0.0
    %1857 = vmatpush.xpose.msra.mxu0 0.0
    %1858 = vmatpush.xpose.msra.mxu0 0.0
    %1859 = vmatpush.xpose.msra.mxu0 0.0
    %1860 = vmatpush.xpose.msra.mxu0 0.0
    %1861 = vmatpush.xpose.msra.mxu0 %v683
    %1862 = vmatpush.xpose.msra.mxu0 %v487
    %1863 = vmatpush.xpose.msra.mxu0 %v291
    %1864 = vmatpush.xpose.msra.mxu0 %v95
    %1865 = vmatmul.f32.gmra.mxu0 %v941
    %v1866 = vpop.f32.mrf.mxu0
    %v1867 = vadd.f32 %v1847, %v1866
    %1868 = vdwg.mxu0
    %1869 = vmatpush.xpose.msra.mxu0 0.0
    %1870 = vmatpush.xpose.msra.mxu0 0.0
    %1871 = vmatpush.xpose.msra.mxu0 0.0
    %1872 = vmatpush.xpose.msra.mxu0 0.0
    %1873 = vmatpush.xpose.msra.mxu0 0.0
    %1874 = vmatpush.xpose.msra.mxu0 0.0
    %1875 = vmatpush.xpose.msra.mxu0 0.0
    %1876 = vmatpush.xpose.msra.mxu0 0.0
    %1877 = vmatpush.xpose.msra.mxu0 0.0
    %1878 = vmatpush.xpose.msra.mxu0 0.0
    %1879 = vmatpush.xpose.msra.mxu0 0.0
    %1880 = vmatpush.xpose.msra.mxu0 0.0
    %1881 = vmatpush.xpose.msra.mxu0 %v684
    %1882 = vmatpush.xpose.msra.mxu0 %v488
    %1883 = vmatpush.xpose.msra.mxu0 %v292
    %1884 = vmatpush.xpose.msra.mxu0 %v96
    %1885 = vmatmul.f32.gmra.mxu0 %v942
    %v1886 = vpop.f32.mrf.mxu0
    %v1887 = vadd.f32 %v1867, %v1886
    %1888 = vdwg.mxu0
    %1889 = vmatpush.xpose.msra.mxu0 0.0
    %1890 = vmatpush.xpose.msra.mxu0 0.0
    %1891 = vmatpush.xpose.msra.mxu0 0.0
    %1892 = vmatpush.xpose.msra.mxu0 0.0
    %1893 = vmatpush.xpose.msra.mxu0 0.0
    %1894 = vmatpush.xpose.msra.mxu0 0.0
    %1895 = vmatpush.xpose.msra.mxu0 0.0
    %1896 = vmatpush.xpose.msra.mxu0 0.0
    %1897 = vmatpush.xpose.msra.mxu0 0.0
    %1898 = vmatpush.xpose.msra.mxu0 0.0
    %1899 = vmatpush.xpose.msra.mxu0 0.0
    %1900 = vmatpush.xpose.msra.mxu0 0.0
    %1901 = vmatpush.xpose.msra.mxu0 %v685
    %1902 = vmatpush.xpose.msra.mxu0 %v489
    %1903 = vmatpush.xpose.msra.mxu0 %v293
    %1904 = vmatpush.xpose.msra.mxu0 %v97
    %1905 = vmatmul.f32.gmra.mxu0 %v943
    %v1906 = vpop.f32.mrf.mxu0
    %v1907 = vadd.f32 %v1887, %v1906
    %1908 = vdwg.mxu0
    %1909 = vmatpush.xpose.msra.mxu0 0.0
    %1910 = vmatpush.xpose.msra.mxu0 0.0
    %1911 = vmatpush.xpose.msra.mxu0 0.0
    %1912 = vmatpush.xpose.msra.mxu0 0.0
    %1913 = vmatpush.xpose.msra.mxu0 0.0
    %1914 = vmatpush.xpose.msra.mxu0 0.0
    %1915 = vmatpush.xpose.msra.mxu0 0.0
    %1916 = vmatpush.xpose.msra.mxu0 0.0
    %1917 = vmatpush.xpose.msra.mxu0 0.0
    %1918 = vmatpush.xpose.msra.mxu0 0.0
    %1919 = vmatpush.xpose.msra.mxu0 0.0
    %1920 = vmatpush.xpose.msra.mxu0 0.0
    %1921 = vmatpush.xpose.msra.mxu0 %v686
    %1922 = vmatpush.xpose.msra.mxu0 %v490
    %1923 = vmatpush.xpose.msra.mxu0 %v294
    %1924 = vmatpush.xpose.msra.mxu0 %v98
    %1925 = vmatmul.f32.gmra.mxu0 %v944
    %v1926 = vpop.f32.mrf.mxu0
    %v1927 = vadd.f32 %v1907, %v1926
    %1928 = vdwg.mxu0
    %1929 = vmatpush.xpose.msra.mxu0 0.0
    %1930 = vmatpush.xpose.msra.mxu0 0.0
    %1931 = vmatpush.xpose.msra.mxu0 0.0
    %1932 = vmatpush.xpose.msra.mxu0 0.0
    %1933 = vmatpush.xpose.msra.mxu0 0.0
    %1934 = vmatpush.xpose.msra.mxu0 0.0
    %1935 = vmatpush.xpose.msra.mxu0 0.0
    %1936 = vmatpush.xpose.msra.mxu0 0.0
    %1937 = vmatpush.xpose.msra.mxu0 0.0
    %1938 = vmatpush.xpose.msra.mxu0 0.0
    %1939 = vmatpush.xpose.msra.mxu0 0.0
    %1940 = vmatpush.xpose.msra.mxu0 0.0
    %1941 = vmatpush.xpose.msra.mxu0 %v687
    %1942 = vmatpush.xpose.msra.mxu0 %v491
    %1943 = vmatpush.xpose.msra.mxu0 %v295
    %1944 = vmatpush.xpose.msra.mxu0 %v99
    %1945 = vmatmul.f32.gmra.mxu0 %v945
    %v1946 = vpop.f32.mrf.mxu0
    %v1947 = vadd.f32 %v1927, %v1946
    %1948 = vdwg.mxu0
    %1949 = vmatpush.xpose.msra.mxu0 0.0
    %1950 = vmatpush.xpose.msra.mxu0 0.0
    %1951 = vmatpush.xpose.msra.mxu0 0.0
    %1952 = vmatpush.xpose.msra.mxu0 0.0
    %1953 = vmatpush.xpose.msra.mxu0 0.0
    %1954 = vmatpush.xpose.msra.mxu0 0.0
    %1955 = vmatpush.xpose.msra.mxu0 0.0
    %1956 = vmatpush.xpose.msra.mxu0 0.0
    %1957 = vmatpush.xpose.msra.mxu0 0.0
    %1958 = vmatpush.xpose.msra.mxu0 0.0
    %1959 = vmatpush.xpose.msra.mxu0 0.0
    %1960 = vmatpush.xpose.msra.mxu0 0.0
    %1961 = vmatpush.xpose.msra.mxu0 %v688
    %1962 = vmatpush.xpose.msra.mxu0 %v492
    %1963 = vmatpush.xpose.msra.mxu0 %v296
    %1964 = vmatpush.xpose.msra.mxu0 %v100
    %1965 = vmatmul.f32.gmra.mxu0 %v946
    %v1966 = vpop.f32.mrf.mxu0
    %v1967 = vadd.f32 %v1947, %v1966
    %1968 = vdwg.mxu0
    %1969 = vmatpush.xpose.msra.mxu0 0.0
    %1970 = vmatpush.xpose.msra.mxu0 0.0
    %1971 = vmatpush.xpose.msra.mxu0 0.0
    %1972 = vmatpush.xpose.msra.mxu0 0.0
    %1973 = vmatpush.xpose.msra.mxu0 0.0
    %1974 = vmatpush.xpose.msra.mxu0 0.0
    %1975 = vmatpush.xpose.msra.mxu0 0.0
    %1976 = vmatpush.xpose.msra.mxu0 0.0
    %1977 = vmatpush.xpose.msra.mxu0 0.0
    %1978 = vmatpush.xpose.msra.mxu0 0.0
    %1979 = vmatpush.xpose.msra.mxu0 0.0
    %1980 = vmatpush.xpose.msra.mxu0 0.0
    %1981 = vmatpush.xpose.msra.mxu0 %v689
    %1982 = vmatpush.xpose.msra.mxu0 %v493
    %1983 = vmatpush.xpose.msra.mxu0 %v297
    %1984 = vmatpush.xpose.msra.mxu0 %v101
    %1985 = vmatmul.f32.gmra.mxu0 %v947
    %v1986 = vpop.f32.mrf.mxu0
    %v1987 = vadd.f32 %v1967, %v1986
    %1988 = vdwg.mxu0
    %1989 = vmatpush.xpose.msra.mxu0 0.0
    %1990 = vmatpush.xpose.msra.mxu0 0.0
    %1991 = vmatpush.xpose.msra.mxu0 0.0
    %1992 = vmatpush.xpose.msra.mxu0 0.0
    %1993 = vmatpush.xpose.msra.mxu0 0.0
    %1994 = vmatpush.xpose.msra.mxu0 0.0
    %1995 = vmatpush.xpose.msra.mxu0 0.0
    %1996 = vmatpush.xpose.msra.mxu0 0.0
    %1997 = vmatpush.xpose.msra.mxu0 0.0
    %1998 = vmatpush.xpose.msra.mxu0 0.0
    %1999 = vmatpush.xpose.msra.mxu0 0.0
    %2000 = vmatpush.xpose.msra.mxu0 0.0
    %2001 = vmatpush.xpose.msra.mxu0 %v690
    %2002 = vmatpush.xpose.msra.mxu0 %v494
    %2003 = vmatpush.xpose.msra.mxu0 %v298
    %2004 = vmatpush.xpose.msra.mxu0 %v102
    %2005 = vmatmul.f32.gmra.mxu0 %v950
    %v2006 = vpop.f32.mrf.mxu0
    %v2007 = vadd.f32 %v1987, %v2006
    %2008 = vdwg.mxu0
    %2009 = vmatpush.xpose.msra.mxu0 0.0
    %2010 = vmatpush.xpose.msra.mxu0 0.0
    %2011 = vmatpush.xpose.msra.mxu0 0.0
    %2012 = vmatpush.xpose.msra.mxu0 0.0
    %2013 = vmatpush.xpose.msra.mxu0 0.0
    %2014 = vmatpush.xpose.msra.mxu0 0.0
    %2015 = vmatpush.xpose.msra.mxu0 0.0
    %2016 = vmatpush.xpose.msra.mxu0 0.0
    %2017 = vmatpush.xpose.msra.mxu0 0.0
    %2018 = vmatpush.xpose.msra.mxu0 0.0
    %2019 = vmatpush.xpose.msra.mxu0 0.0
    %2020 = vmatpush.xpose.msra.mxu0 0.0
    %2021 = vmatpush.xpose.msra.mxu0 %v691
    %2022 = vmatpush.xpose.msra.mxu0 %v495
    %2023 = vmatpush.xpose.msra.mxu0 %v299
    %2024 = vmatpush.xpose.msra.mxu0 %v103
    %2025 = vmatmul.f32.gmra.mxu0 %v951
    %v2026 = vpop.f32.mrf.mxu0
    %v2027 = vadd.f32 %v2007, %v2026
    %2028 = vdwg.mxu0
    %2029 = vmatpush.xpose.msra.mxu0 0.0
    %2030 = vmatpush.xpose.msra.mxu0 0.0
    %2031 = vmatpush.xpose.msra.mxu0 0.0
    %2032 = vmatpush.xpose.msra.mxu0 0.0
    %2033 = vmatpush.xpose.msra.mxu0 0.0
    %2034 = vmatpush.xpose.msra.mxu0 0.0
    %2035 = vmatpush.xpose.msra.mxu0 0.0
    %2036 = vmatpush.xpose.msra.mxu0 0.0
    %2037 = vmatpush.xpose.msra.mxu0 0.0
    %2038 = vmatpush.xpose.msra.mxu0 0.0
    %2039 = vmatpush.xpose.msra.mxu0 0.0
    %2040 = vmatpush.xpose.msra.mxu0 0.0
    %2041 = vmatpush.xpose.msra.mxu0 %v692
    %2042 = vmatpush.xpose.msra.mxu0 %v496
    %2043 = vmatpush.xpose.msra.mxu0 %v300
    %2044 = vmatpush.xpose.msra.mxu0 %v104
    %2045 = vmatmul.f32.gmra.mxu0 %v952
    %v2046 = vpop.f32.mrf.mxu0
    %v2047 = vadd.f32 %v2027, %v2046
    %2048 = vdwg.mxu0
    %2049 = vmatpush.xpose.msra.mxu0 0.0
    %2050 = vmatpush.xpose.msra.mxu0 0.0
    %2051 = vmatpush.xpose.msra.mxu0 0.0
    %2052 = vmatpush.xpose.msra.mxu0 0.0
    %2053 = vmatpush.xpose.msra.mxu0 0.0
    %2054 = vmatpush.xpose.msra.mxu0 0.0
    %2055 = vmatpush.xpose.msra.mxu0 0.0
    %2056 = vmatpush.xpose.msra.mxu0 0.0
    %2057 = vmatpush.xpose.msra.mxu0 0.0
    %2058 = vmatpush.xpose.msra.mxu0 0.0
    %2059 = vmatpush.xpose.msra.mxu0 0.0
    %2060 = vmatpush.xpose.msra.mxu0 0.0
    %2061 = vmatpush.xpose.msra.mxu0 %v693
    %2062 = vmatpush.xpose.msra.mxu0 %v497
    %2063 = vmatpush.xpose.msra.mxu0 %v301
    %2064 = vmatpush.xpose.msra.mxu0 %v105
    %2065 = vmatmul.f32.gmra.mxu0 %v953
    %v2066 = vpop.f32.mrf.mxu0
    %v2067 = vadd.f32 %v2047, %v2066
    %2068 = vdwg.mxu0
    %2069 = vmatpush.xpose.msra.mxu0 0.0
    %2070 = vmatpush.xpose.msra.mxu0 0.0
    %2071 = vmatpush.xpose.msra.mxu0 0.0
    %2072 = vmatpush.xpose.msra.mxu0 0.0
    %2073 = vmatpush.xpose.msra.mxu0 0.0
    %2074 = vmatpush.xpose.msra.mxu0 0.0
    %2075 = vmatpush.xpose.msra.mxu0 0.0
    %2076 = vmatpush.xpose.msra.mxu0 0.0
    %2077 = vmatpush.xpose.msra.mxu0 0.0
    %2078 = vmatpush.xpose.msra.mxu0 0.0
    %2079 = vmatpush.xpose.msra.mxu0 0.0
    %2080 = vmatpush.xpose.msra.mxu0 0.0
    %2081 = vmatpush.xpose.msra.mxu0 %v694
    %2082 = vmatpush.xpose.msra.mxu0 %v498
    %2083 = vmatpush.xpose.msra.mxu0 %v302
    %2084 = vmatpush.xpose.msra.mxu0 %v106
    %2085 = vmatmul.f32.gmra.mxu0 %v954
    %v2086 = vpop.f32.mrf.mxu0
    %v2087 = vadd.f32 %v2067, %v2086
    %2088 = vdwg.mxu0
    %2089 = vmatpush.xpose.msra.mxu0 0.0
    %2090 = vmatpush.xpose.msra.mxu0 0.0
    %2091 = vmatpush.xpose.msra.mxu0 0.0
    %2092 = vmatpush.xpose.msra.mxu0 0.0
    %2093 = vmatpush.xpose.msra.mxu0 0.0
    %2094 = vmatpush.xpose.msra.mxu0 0.0
    %2095 = vmatpush.xpose.msra.mxu0 0.0
    %2096 = vmatpush.xpose.msra.mxu0 0.0
    %2097 = vmatpush.xpose.msra.mxu0 0.0
    %2098 = vmatpush.xpose.msra.mxu0 0.0
    %2099 = vmatpush.xpose.msra.mxu0 0.0
    %2100 = vmatpush.xpose.msra.mxu0 0.0
    %2101 = vmatpush.xpose.msra.mxu0 %v695
    %2102 = vmatpush.xpose.msra.mxu0 %v499
    %2103 = vmatpush.xpose.msra.mxu0 %v303
    %2104 = vmatpush.xpose.msra.mxu0 %v107
    %2105 = vmatmul.f32.gmra.mxu0 %v955
    %v2106 = vpop.f32.mrf.mxu0
    %v2107 = vadd.f32 %v2087, %v2106
    %2108 = vdwg.mxu0
    %2109 = vmatpush.xpose.msra.mxu0 0.0
    %2110 = vmatpush.xpose.msra.mxu0 0.0
    %2111 = vmatpush.xpose.msra.mxu0 0.0
    %2112 = vmatpush.xpose.msra.mxu0 0.0
    %2113 = vmatpush.xpose.msra.mxu0 0.0
    %2114 = vmatpush.xpose.msra.mxu0 0.0
    %2115 = vmatpush.xpose.msra.mxu0 0.0
    %2116 = vmatpush.xpose.msra.mxu0 0.0
    %2117 = vmatpush.xpose.msra.mxu0 0.0
    %2118 = vmatpush.xpose.msra.mxu0 0.0
    %2119 = vmatpush.xpose.msra.mxu0 0.0
    %2120 = vmatpush.xpose.msra.mxu0 0.0
    %2121 = vmatpush.xpose.msra.mxu0 %v696
    %2122 = vmatpush.xpose.msra.mxu0 %v500
    %2123 = vmatpush.xpose.msra.mxu0 %v304
    %2124 = vmatpush.xpose.msra.mxu0 %v108
    %2125 = vmatmul.f32.gmra.mxu0 %v956
    %v2126 = vpop.f32.mrf.mxu0
    %v2127 = vadd.f32 %v2107, %v2126
    %2128 = vdwg.mxu0
    %2129 = vmatpush.xpose.msra.mxu0 0.0
    %2130 = vmatpush.xpose.msra.mxu0 0.0
    %2131 = vmatpush.xpose.msra.mxu0 0.0
    %2132 = vmatpush.xpose.msra.mxu0 0.0
    %2133 = vmatpush.xpose.msra.mxu0 0.0
    %2134 = vmatpush.xpose.msra.mxu0 0.0
    %2135 = vmatpush.xpose.msra.mxu0 0.0
    %2136 = vmatpush.xpose.msra.mxu0 0.0
    %2137 = vmatpush.xpose.msra.mxu0 0.0
    %2138 = vmatpush.xpose.msra.mxu0 0.0
    %2139 = vmatpush.xpose.msra.mxu0 0.0
    %2140 = vmatpush.xpose.msra.mxu0 0.0
    %2141 = vmatpush.xpose.msra.mxu0 %v697
    %2142 = vmatpush.xpose.msra.mxu0 %v501
    %2143 = vmatpush.xpose.msra.mxu0 %v305
    %2144 = vmatpush.xpose.msra.mxu0 %v109
    %2145 = vmatmul.f32.gmra.mxu0 %v957
    %v2146 = vpop.f32.mrf.mxu0
    %v2147 = vadd.f32 %v2127, %v2146
    %2148 = vdwg.mxu0
    %2149 = vmatpush.xpose.msra.mxu0 0.0
    %2150 = vmatpush.xpose.msra.mxu0 0.0
    %2151 = vmatpush.xpose.msra.mxu0 0.0
    %2152 = vmatpush.xpose.msra.mxu0 0.0
    %2153 = vmatpush.xpose.msra.mxu0 0.0
    %2154 = vmatpush.xpose.msra.mxu0 0.0
    %2155 = vmatpush.xpose.msra.mxu0 0.0
    %2156 = vmatpush.xpose.msra.mxu0 0.0
    %2157 = vmatpush.xpose.msra.mxu0 0.0
    %2158 = vmatpush.xpose.msra.mxu0 0.0
    %2159 = vmatpush.xpose.msra.mxu0 0.0
    %2160 = vmatpush.xpose.msra.mxu0 0.0
    %2161 = vmatpush.xpose.msra.mxu0 %v698
    %2162 = vmatpush.xpose.msra.mxu0 %v502
    %2163 = vmatpush.xpose.msra.mxu0 %v306
    %2164 = vmatpush.xpose.msra.mxu0 %v110
    %2165 = vmatmul.f32.gmra.mxu0 %v960
    %v2166 = vpop.f32.mrf.mxu0
    %v2167 = vadd.f32 %v2147, %v2166
    %2168 = vdwg.mxu0
    %2169 = vmatpush.xpose.msra.mxu0 0.0
    %2170 = vmatpush.xpose.msra.mxu0 0.0
    %2171 = vmatpush.xpose.msra.mxu0 0.0
    %2172 = vmatpush.xpose.msra.mxu0 0.0
    %2173 = vmatpush.xpose.msra.mxu0 0.0
    %2174 = vmatpush.xpose.msra.mxu0 0.0
    %2175 = vmatpush.xpose.msra.mxu0 0.0
    %2176 = vmatpush.xpose.msra.mxu0 0.0
    %2177 = vmatpush.xpose.msra.mxu0 0.0
    %2178 = vmatpush.xpose.msra.mxu0 0.0
    %2179 = vmatpush.xpose.msra.mxu0 0.0
    %2180 = vmatpush.xpose.msra.mxu0 0.0
    %2181 = vmatpush.xpose.msra.mxu0 %v699
    %2182 = vmatpush.xpose.msra.mxu0 %v503
    %2183 = vmatpush.xpose.msra.mxu0 %v307
    %2184 = vmatpush.xpose.msra.mxu0 %v111
    %2185 = vmatmul.f32.gmra.mxu0 %v961
    %v2186 = vpop.f32.mrf.mxu0
    %v2187 = vadd.f32 %v2167, %v2186
    %2188 = vdwg.mxu0
    %2189 = vmatpush.xpose.msra.mxu0 0.0
    %2190 = vmatpush.xpose.msra.mxu0 0.0
    %2191 = vmatpush.xpose.msra.mxu0 0.0
    %2192 = vmatpush.xpose.msra.mxu0 0.0
    %2193 = vmatpush.xpose.msra.mxu0 0.0
    %2194 = vmatpush.xpose.msra.mxu0 0.0
    %2195 = vmatpush.xpose.msra.mxu0 0.0
    %2196 = vmatpush.xpose.msra.mxu0 0.0
    %2197 = vmatpush.xpose.msra.mxu0 0.0
    %2198 = vmatpush.xpose.msra.mxu0 0.0
    %2199 = vmatpush.xpose.msra.mxu0 0.0
    %2200 = vmatpush.xpose.msra.mxu0 0.0
    %2201 = vmatpush.xpose.msra.mxu0 %v700
    %2202 = vmatpush.xpose.msra.mxu0 %v504
    %2203 = vmatpush.xpose.msra.mxu0 %v308
    %2204 = vmatpush.xpose.msra.mxu0 %v112
    %2205 = vmatmul.f32.gmra.mxu0 %v962
    %v2206 = vpop.f32.mrf.mxu0
    %v2207 = vadd.f32 %v2187, %v2206
    %2208 = vdwg.mxu0
    %2209 = vmatpush.xpose.msra.mxu0 0.0
    %2210 = vmatpush.xpose.msra.mxu0 0.0
    %2211 = vmatpush.xpose.msra.mxu0 0.0
    %2212 = vmatpush.xpose.msra.mxu0 0.0
    %2213 = vmatpush.xpose.msra.mxu0 0.0
    %2214 = vmatpush.xpose.msra.mxu0 0.0
    %2215 = vmatpush.xpose.msra.mxu0 0.0
    %2216 = vmatpush.xpose.msra.mxu0 0.0
    %2217 = vmatpush.xpose.msra.mxu0 0.0
    %2218 = vmatpush.xpose.msra.mxu0 0.0
    %2219 = vmatpush.xpose.msra.mxu0 0.0
    %2220 = vmatpush.xpose.msra.mxu0 0.0
    %2221 = vmatpush.xpose.msra.mxu0 %v701
    %2222 = vmatpush.xpose.msra.mxu0 %v505
    %2223 = vmatpush.xpose.msra.mxu0 %v309
    %2224 = vmatpush.xpose.msra.mxu0 %v113
    %2225 = vmatmul.f32.gmra.mxu0 %v963
    %v2226 = vpop.f32.mrf.mxu0
    %v2227 = vadd.f32 %v2207, %v2226
    %2228 = vdwg.mxu0
    %2229 = vmatpush.xpose.msra.mxu0 0.0
    %2230 = vmatpush.xpose.msra.mxu0 0.0
    %2231 = vmatpush.xpose.msra.mxu0 0.0
    %2232 = vmatpush.xpose.msra.mxu0 0.0
    %2233 = vmatpush.xpose.msra.mxu0 0.0
    %2234 = vmatpush.xpose.msra.mxu0 0.0
    %2235 = vmatpush.xpose.msra.mxu0 0.0
    %2236 = vmatpush.xpose.msra.mxu0 0.0
    %2237 = vmatpush.xpose.msra.mxu0 0.0
    %2238 = vmatpush.xpose.msra.mxu0 0.0
    %2239 = vmatpush.xpose.msra.mxu0 0.0
    %2240 = vmatpush.xpose.msra.mxu0 0.0
    %2241 = vmatpush.xpose.msra.mxu0 %v702
    %2242 = vmatpush.xpose.msra.mxu0 %v506
    %2243 = vmatpush.xpose.msra.mxu0 %v310
    %2244 = vmatpush.xpose.msra.mxu0 %v114
    %2245 = vmatmul.f32.gmra.mxu0 %v964
    %v2246 = vpop.f32.mrf.mxu0
    %v2247 = vadd.f32 %v2227, %v2246
    %2248 = vdwg.mxu0
    %2249 = vmatpush.xpose.msra.mxu0 0.0
    %2250 = vmatpush.xpose.msra.mxu0 0.0
    %2251 = vmatpush.xpose.msra.mxu0 0.0
    %2252 = vmatpush.xpose.msra.mxu0 0.0
    %2253 = vmatpush.xpose.msra.mxu0 0.0
    %2254 = vmatpush.xpose.msra.mxu0 0.0
    %2255 = vmatpush.xpose.msra.mxu0 0.0
    %2256 = vmatpush.xpose.msra.mxu0 0.0
    %2257 = vmatpush.xpose.msra.mxu0 0.0
    %2258 = vmatpush.xpose.msra.mxu0 0.0
    %2259 = vmatpush.xpose.msra.mxu0 0.0
    %2260 = vmatpush.xpose.msra.mxu0 0.0
    %2261 = vmatpush.xpose.msra.mxu0 %v703
    %2262 = vmatpush.xpose.msra.mxu0 %v507
    %2263 = vmatpush.xpose.msra.mxu0 %v311
    %2264 = vmatpush.xpose.msra.mxu0 %v115
    %2265 = vmatmul.f32.gmra.mxu0 %v965
    %v2266 = vpop.f32.mrf.mxu0
    %v2267 = vadd.f32 %v2247, %v2266
    %2268 = vdwg.mxu0
    %2269 = vmatpush.xpose.msra.mxu0 0.0
    %2270 = vmatpush.xpose.msra.mxu0 0.0
    %2271 = vmatpush.xpose.msra.mxu0 0.0
    %2272 = vmatpush.xpose.msra.mxu0 0.0
    %2273 = vmatpush.xpose.msra.mxu0 0.0
    %2274 = vmatpush.xpose.msra.mxu0 0.0
    %2275 = vmatpush.xpose.msra.mxu0 0.0
    %2276 = vmatpush.xpose.msra.mxu0 0.0
    %2277 = vmatpush.xpose.msra.mxu0 0.0
    %2278 = vmatpush.xpose.msra.mxu0 0.0
    %2279 = vmatpush.xpose.msra.mxu0 0.0
    %2280 = vmatpush.xpose.msra.mxu0 0.0
    %2281 = vmatpush.xpose.msra.mxu0 %v704
    %2282 = vmatpush.xpose.msra.mxu0 %v508
    %2283 = vmatpush.xpose.msra.mxu0 %v312
    %2284 = vmatpush.xpose.msra.mxu0 %v116
    %2285 = vmatmul.f32.gmra.mxu0 %v966
    %v2286 = vpop.f32.mrf.mxu0
    %v2287 = vadd.f32 %v2267, %v2286
    %2288 = vdwg.mxu0
    %2289 = vmatpush.xpose.msra.mxu0 0.0
    %2290 = vmatpush.xpose.msra.mxu0 0.0
    %2291 = vmatpush.xpose.msra.mxu0 0.0
    %2292 = vmatpush.xpose.msra.mxu0 0.0
    %2293 = vmatpush.xpose.msra.mxu0 0.0
    %2294 = vmatpush.xpose.msra.mxu0 0.0
    %2295 = vmatpush.xpose.msra.mxu0 0.0
    %2296 = vmatpush.xpose.msra.mxu0 0.0
    %2297 = vmatpush.xpose.msra.mxu0 0.0
    %2298 = vmatpush.xpose.msra.mxu0 0.0
    %2299 = vmatpush.xpose.msra.mxu0 0.0
    %2300 = vmatpush.xpose.msra.mxu0 0.0
    %2301 = vmatpush.xpose.msra.mxu0 %v705
    %2302 = vmatpush.xpose.msra.mxu0 %v509
    %2303 = vmatpush.xpose.msra.mxu0 %v313
    %2304 = vmatpush.xpose.msra.mxu0 %v117
    %2305 = vmatmul.f32.gmra.mxu0 %v967
    %v2306 = vpop.f32.mrf.mxu0
    %v2307 = vadd.f32 %v2287, %v2306
    %2308 = vdwg.mxu0
    %2309 = vmatpush.xpose.msra.mxu0 0.0
    %2310 = vmatpush.xpose.msra.mxu0 0.0
    %2311 = vmatpush.xpose.msra.mxu0 0.0
    %2312 = vmatpush.xpose.msra.mxu0 0.0
    %2313 = vmatpush.xpose.msra.mxu0 0.0
    %2314 = vmatpush.xpose.msra.mxu0 0.0
    %2315 = vmatpush.xpose.msra.mxu0 0.0
    %2316 = vmatpush.xpose.msra.mxu0 0.0
    %2317 = vmatpush.xpose.msra.mxu0 0.0
    %2318 = vmatpush.xpose.msra.mxu0 0.0
    %2319 = vmatpush.xpose.msra.mxu0 0.0
    %2320 = vmatpush.xpose.msra.mxu0 0.0
    %2321 = vmatpush.xpose.msra.mxu0 %v706
    %2322 = vmatpush.xpose.msra.mxu0 %v510
    %2323 = vmatpush.xpose.msra.mxu0 %v314
    %2324 = vmatpush.xpose.msra.mxu0 %v118
    %2325 = vmatmul.f32.gmra.mxu0 %v970
    %v2326 = vpop.f32.mrf.mxu0
    %v2327 = vadd.f32 %v2307, %v2326
    %2328 = vdwg.mxu0
    %2329 = vmatpush.xpose.msra.mxu0 0.0
    %2330 = vmatpush.xpose.msra.mxu0 0.0
    %2331 = vmatpush.xpose.msra.mxu0 0.0
    %2332 = vmatpush.xpose.msra.mxu0 0.0
    %2333 = vmatpush.xpose.msra.mxu0 0.0
    %2334 = vmatpush.xpose.msra.mxu0 0.0
    %2335 = vmatpush.xpose.msra.mxu0 0.0
    %2336 = vmatpush.xpose.msra.mxu0 0.0
    %2337 = vmatpush.xpose.msra.mxu0 0.0
    %2338 = vmatpush.xpose.msra.mxu0 0.0
    %2339 = vmatpush.xpose.msra.mxu0 0.0
    %2340 = vmatpush.xpose.msra.mxu0 0.0
    %2341 = vmatpush.xpose.msra.mxu0 %v707
    %2342 = vmatpush.xpose.msra.mxu0 %v511
    %2343 = vmatpush.xpose.msra.mxu0 %v315
    %2344 = vmatpush.xpose.msra.mxu0 %v119
    %2345 = vmatmul.f32.gmra.mxu0 %v971
    %v2346 = vpop.f32.mrf.mxu0
    %v2347 = vadd.f32 %v2327, %v2346
    %2348 = vdwg.mxu0
    %2349 = vmatpush.xpose.msra.mxu0 0.0
    %2350 = vmatpush.xpose.msra.mxu0 0.0
    %2351 = vmatpush.xpose.msra.mxu0 0.0
    %2352 = vmatpush.xpose.msra.mxu0 0.0
    %2353 = vmatpush.xpose.msra.mxu0 0.0
    %2354 = vmatpush.xpose.msra.mxu0 0.0
    %2355 = vmatpush.xpose.msra.mxu0 0.0
    %2356 = vmatpush.xpose.msra.mxu0 0.0
    %2357 = vmatpush.xpose.msra.mxu0 0.0
    %2358 = vmatpush.xpose.msra.mxu0 0.0
    %2359 = vmatpush.xpose.msra.mxu0 0.0
    %2360 = vmatpush.xpose.msra.mxu0 0.0
    %2361 = vmatpush.xpose.msra.mxu0 %v708
    %2362 = vmatpush.xpose.msra.mxu0 %v512
    %2363 = vmatpush.xpose.msra.mxu0 %v316
    %2364 = vmatpush.xpose.msra.mxu0 %v120
    %2365 = vmatmul.f32.gmra.mxu0 %v972
    %v2366 = vpop.f32.mrf.mxu0
    %v2367 = vadd.f32 %v2347, %v2366
    %2368 = vdwg.mxu0
    %2369 = vmatpush.xpose.msra.mxu0 0.0
    %2370 = vmatpush.xpose.msra.mxu0 0.0
    %2371 = vmatpush.xpose.msra.mxu0 0.0
    %2372 = vmatpush.xpose.msra.mxu0 0.0
    %2373 = vmatpush.xpose.msra.mxu0 0.0
    %2374 = vmatpush.xpose.msra.mxu0 0.0
    %2375 = vmatpush.xpose.msra.mxu0 0.0
    %2376 = vmatpush.xpose.msra.mxu0 0.0
    %2377 = vmatpush.xpose.msra.mxu0 0.0
    %2378 = vmatpush.xpose.msra.mxu0 0.0
    %2379 = vmatpush.xpose.msra.mxu0 0.0
    %2380 = vmatpush.xpose.msra.mxu0 0.0
    %2381 = vmatpush.xpose.msra.mxu0 %v709
    %2382 = vmatpush.xpose.msra.mxu0 %v513
    %2383 = vmatpush.xpose.msra.mxu0 %v317
    %2384 = vmatpush.xpose.msra.mxu0 %v121
    %2385 = vmatmul.f32.gmra.mxu0 %v973
    %v2386 = vpop.f32.mrf.mxu0
    %v2387 = vadd.f32 %v2367, %v2386
    %2388 = vdwg.mxu0
    %2389 = vmatpush.xpose.msra.mxu0 0.0
    %2390 = vmatpush.xpose.msra.mxu0 0.0
    %2391 = vmatpush.xpose.msra.mxu0 0.0
    %2392 = vmatpush.xpose.msra.mxu0 0.0
    %2393 = vmatpush.xpose.msra.mxu0 0.0
    %2394 = vmatpush.xpose.msra.mxu0 0.0
    %2395 = vmatpush.xpose.msra.mxu0 0.0
    %2396 = vmatpush.xpose.msra.mxu0 0.0
    %2397 = vmatpush.xpose.msra.mxu0 0.0
    %2398 = vmatpush.xpose.msra.mxu0 0.0
    %2399 = vmatpush.xpose.msra.mxu0 0.0
    %2400 = vmatpush.xpose.msra.mxu0 0.0
    %2401 = vmatpush.xpose.msra.mxu0 %v710
    %2402 = vmatpush.xpose.msra.mxu0 %v514
    %2403 = vmatpush.xpose.msra.mxu0 %v318
    %2404 = vmatpush.xpose.msra.mxu0 %v122
    %2405 = vmatmul.f32.gmra.mxu0 %v974
    %v2406 = vpop.f32.mrf.mxu0
    %v2407 = vadd.f32 %v2387, %v2406
    %2408 = vdwg.mxu0
    %2409 = vmatpush.xpose.msra.mxu0 0.0
    %2410 = vmatpush.xpose.msra.mxu0 0.0
    %2411 = vmatpush.xpose.msra.mxu0 0.0
    %2412 = vmatpush.xpose.msra.mxu0 0.0
    %2413 = vmatpush.xpose.msra.mxu0 0.0
    %2414 = vmatpush.xpose.msra.mxu0 0.0
    %2415 = vmatpush.xpose.msra.mxu0 0.0
    %2416 = vmatpush.xpose.msra.mxu0 0.0
    %2417 = vmatpush.xpose.msra.mxu0 0.0
    %2418 = vmatpush.xpose.msra.mxu0 0.0
    %2419 = vmatpush.xpose.msra.mxu0 0.0
    %2420 = vmatpush.xpose.msra.mxu0 0.0
    %2421 = vmatpush.xpose.msra.mxu0 %v711
    %2422 = vmatpush.xpose.msra.mxu0 %v515
    %2423 = vmatpush.xpose.msra.mxu0 %v319
    %2424 = vmatpush.xpose.msra.mxu0 %v123
    %2425 = vmatmul.f32.gmra.mxu0 %v975
    %v2426 = vpop.f32.mrf.mxu0
    %v2427 = vadd.f32 %v2407, %v2426
    %2428 = vdwg.mxu0
    %2429 = vmatpush.xpose.msra.mxu0 0.0
    %2430 = vmatpush.xpose.msra.mxu0 0.0
    %2431 = vmatpush.xpose.msra.mxu0 0.0
    %2432 = vmatpush.xpose.msra.mxu0 0.0
    %2433 = vmatpush.xpose.msra.mxu0 0.0
    %2434 = vmatpush.xpose.msra.mxu0 0.0
    %2435 = vmatpush.xpose.msra.mxu0 0.0
    %2436 = vmatpush.xpose.msra.mxu0 0.0
    %2437 = vmatpush.xpose.msra.mxu0 0.0
    %2438 = vmatpush.xpose.msra.mxu0 0.0
    %2439 = vmatpush.xpose.msra.mxu0 0.0
    %2440 = vmatpush.xpose.msra.mxu0 0.0
    %2441 = vmatpush.xpose.msra.mxu0 %v712
    %2442 = vmatpush.xpose.msra.mxu0 %v516
    %2443 = vmatpush.xpose.msra.mxu0 %v320
    %2444 = vmatpush.xpose.msra.mxu0 %v124
    %2445 = vmatmul.f32.gmra.mxu0 %v976
    %v2446 = vpop.f32.mrf.mxu0
    %v2447 = vadd.f32 %v2427, %v2446
    %2448 = vdwg.mxu0
    %2449 = vmatpush.xpose.msra.mxu0 0.0
    %2450 = vmatpush.xpose.msra.mxu0 0.0
    %2451 = vmatpush.xpose.msra.mxu0 0.0
    %2452 = vmatpush.xpose.msra.mxu0 0.0
    %2453 = vmatpush.xpose.msra.mxu0 0.0
    %2454 = vmatpush.xpose.msra.mxu0 0.0
    %2455 = vmatpush.xpose.msra.mxu0 0.0
    %2456 = vmatpush.xpose.msra.mxu0 0.0
    %2457 = vmatpush.xpose.msra.mxu0 0.0
    %2458 = vmatpush.xpose.msra.mxu0 0.0
    %2459 = vmatpush.xpose.msra.mxu0 0.0
    %2460 = vmatpush.xpose.msra.mxu0 0.0
    %2461 = vmatpush.xpose.msra.mxu0 %v713
    %2462 = vmatpush.xpose.msra.mxu0 %v517
    %2463 = vmatpush.xpose.msra.mxu0 %v321
    %2464 = vmatpush.xpose.msra.mxu0 %v125
    %2465 = vmatmul.f32.gmra.mxu0 %v977
    %v2466 = vpop.f32.mrf.mxu0
    %v2467 = vadd.f32 %v2447, %v2466
    %2468 = vdwg.mxu0
    %2469 = vmatpush.xpose.msra.mxu0 0.0
    %2470 = vmatpush.xpose.msra.mxu0 0.0
    %2471 = vmatpush.xpose.msra.mxu0 0.0
    %2472 = vmatpush.xpose.msra.mxu0 0.0
    %2473 = vmatpush.xpose.msra.mxu0 0.0
    %2474 = vmatpush.xpose.msra.mxu0 0.0
    %2475 = vmatpush.xpose.msra.mxu0 0.0
    %2476 = vmatpush.xpose.msra.mxu0 0.0
    %2477 = vmatpush.xpose.msra.mxu0 0.0
    %2478 = vmatpush.xpose.msra.mxu0 0.0
    %2479 = vmatpush.xpose.msra.mxu0 0.0
    %2480 = vmatpush.xpose.msra.mxu0 0.0
    %2481 = vmatpush.xpose.msra.mxu0 %v714
    %2482 = vmatpush.xpose.msra.mxu0 %v518
    %2483 = vmatpush.xpose.msra.mxu0 %v322
    %2484 = vmatpush.xpose.msra.mxu0 %v126
    %2485 = vmatmul.f32.gmra.mxu0 %v980
    %v2486 = vpop.f32.mrf.mxu0
    %v2487 = vadd.f32 %v2467, %v2486
    %2488 = vdwg.mxu0
    %2489 = vmatpush.xpose.msra.mxu0 0.0
    %2490 = vmatpush.xpose.msra.mxu0 0.0
    %2491 = vmatpush.xpose.msra.mxu0 0.0
    %2492 = vmatpush.xpose.msra.mxu0 0.0
    %2493 = vmatpush.xpose.msra.mxu0 0.0
    %2494 = vmatpush.xpose.msra.mxu0 0.0
    %2495 = vmatpush.xpose.msra.mxu0 0.0
    %2496 = vmatpush.xpose.msra.mxu0 0.0
    %2497 = vmatpush.xpose.msra.mxu0 0.0
    %2498 = vmatpush.xpose.msra.mxu0 0.0
    %2499 = vmatpush.xpose.msra.mxu0 0.0
    %2500 = vmatpush.xpose.msra.mxu0 0.0
    %2501 = vmatpush.xpose.msra.mxu0 %v715
    %2502 = vmatpush.xpose.msra.mxu0 %v519
    %2503 = vmatpush.xpose.msra.mxu0 %v323
    %2504 = vmatpush.xpose.msra.mxu0 %v127
    %2505 = vmatmul.f32.gmra.mxu0 %v981
    %v2506 = vpop.f32.mrf.mxu0
    %v2507 = vadd.f32 %v2487, %v2506
    %2508 = vdwg.mxu0
    %2509 = vmatpush.xpose.msra.mxu0 0.0
    %2510 = vmatpush.xpose.msra.mxu0 0.0
    %2511 = vmatpush.xpose.msra.mxu0 0.0
    %2512 = vmatpush.xpose.msra.mxu0 0.0
    %2513 = vmatpush.xpose.msra.mxu0 0.0
    %2514 = vmatpush.xpose.msra.mxu0 0.0
    %2515 = vmatpush.xpose.msra.mxu0 0.0
    %2516 = vmatpush.xpose.msra.mxu0 0.0
    %2517 = vmatpush.xpose.msra.mxu0 0.0
    %2518 = vmatpush.xpose.msra.mxu0 0.0
    %2519 = vmatpush.xpose.msra.mxu0 0.0
    %2520 = vmatpush.xpose.msra.mxu0 0.0
    %2521 = vmatpush.xpose.msra.mxu0 %v716
    %2522 = vmatpush.xpose.msra.mxu0 %v520
    %2523 = vmatpush.xpose.msra.mxu0 %v324
    %2524 = vmatpush.xpose.msra.mxu0 %v128
    %2525 = vmatmul.f32.gmra.mxu0 %v982
    %v2526 = vpop.f32.mrf.mxu0
    %v2527 = vadd.f32 %v2507, %v2526
    %2528 = vdwg.mxu0
    %2529 = vmatpush.xpose.msra.mxu0 0.0
    %2530 = vmatpush.xpose.msra.mxu0 0.0
    %2531 = vmatpush.xpose.msra.mxu0 0.0
    %2532 = vmatpush.xpose.msra.mxu0 0.0
    %2533 = vmatpush.xpose.msra.mxu0 0.0
    %2534 = vmatpush.xpose.msra.mxu0 0.0
    %2535 = vmatpush.xpose.msra.mxu0 0.0
    %2536 = vmatpush.xpose.msra.mxu0 0.0
    %2537 = vmatpush.xpose.msra.mxu0 0.0
    %2538 = vmatpush.xpose.msra.mxu0 0.0
    %2539 = vmatpush.xpose.msra.mxu0 0.0
    %2540 = vmatpush.xpose.msra.mxu0 0.0
    %2541 = vmatpush.xpose.msra.mxu0 %v717
    %2542 = vmatpush.xpose.msra.mxu0 %v521
    %2543 = vmatpush.xpose.msra.mxu0 %v325
    %2544 = vmatpush.xpose.msra.mxu0 %v129
    %2545 = vmatmul.f32.gmra.mxu0 %v983
    %v2546 = vpop.f32.mrf.mxu0
    %v2547 = vadd.f32 %v2527, %v2546
    %2548 = vdwg.mxu0
    %2549 = vmatpush.xpose.msra.mxu0 0.0
    %2550 = vmatpush.xpose.msra.mxu0 0.0
    %2551 = vmatpush.xpose.msra.mxu0 0.0
    %2552 = vmatpush.xpose.msra.mxu0 0.0
    %2553 = vmatpush.xpose.msra.mxu0 0.0
    %2554 = vmatpush.xpose.msra.mxu0 0.0
    %2555 = vmatpush.xpose.msra.mxu0 0.0
    %2556 = vmatpush.xpose.msra.mxu0 0.0
    %2557 = vmatpush.xpose.msra.mxu0 0.0
    %2558 = vmatpush.xpose.msra.mxu0 0.0
    %2559 = vmatpush.xpose.msra.mxu0 0.0
    %2560 = vmatpush.xpose.msra.mxu0 0.0
    %2561 = vmatpush.xpose.msra.mxu0 %v718
    %2562 = vmatpush.xpose.msra.mxu0 %v522
    %2563 = vmatpush.xpose.msra.mxu0 %v326
    %2564 = vmatpush.xpose.msra.mxu0 %v130
    %2565 = vmatmul.f32.gmra.mxu0 %v984
    %v2566 = vpop.f32.mrf.mxu0
    %v2567 = vadd.f32 %v2547, %v2566
    %2568 = vdwg.mxu0
    %2569 = vmatpush.xpose.msra.mxu0 0.0
    %2570 = vmatpush.xpose.msra.mxu0 0.0
    %2571 = vmatpush.xpose.msra.mxu0 0.0
    %2572 = vmatpush.xpose.msra.mxu0 0.0
    %2573 = vmatpush.xpose.msra.mxu0 0.0
    %2574 = vmatpush.xpose.msra.mxu0 0.0
    %2575 = vmatpush.xpose.msra.mxu0 0.0
    %2576 = vmatpush.xpose.msra.mxu0 0.0
    %2577 = vmatpush.xpose.msra.mxu0 0.0
    %2578 = vmatpush.xpose.msra.mxu0 0.0
    %2579 = vmatpush.xpose.msra.mxu0 0.0
    %2580 = vmatpush.xpose.msra.mxu0 0.0
    %2581 = vmatpush.xpose.msra.mxu0 %v719
    %2582 = vmatpush.xpose.msra.mxu0 %v523
    %2583 = vmatpush.xpose.msra.mxu0 %v327
    %2584 = vmatpush.xpose.msra.mxu0 %v131
    %2585 = vmatmul.f32.gmra.mxu0 %v985
    %v2586 = vpop.f32.mrf.mxu0
    %v2587 = vadd.f32 %v2567, %v2586
    %2588 = vdwg.mxu0
    %2589 = vmatpush.xpose.msra.mxu0 0.0
    %2590 = vmatpush.xpose.msra.mxu0 0.0
    %2591 = vmatpush.xpose.msra.mxu0 0.0
    %2592 = vmatpush.xpose.msra.mxu0 0.0
    %2593 = vmatpush.xpose.msra.mxu0 0.0
    %2594 = vmatpush.xpose.msra.mxu0 0.0
    %2595 = vmatpush.xpose.msra.mxu0 0.0
    %2596 = vmatpush.xpose.msra.mxu0 0.0
    %2597 = vmatpush.xpose.msra.mxu0 0.0
    %2598 = vmatpush.xpose.msra.mxu0 0.0
    %2599 = vmatpush.xpose.msra.mxu0 0.0
    %2600 = vmatpush.xpose.msra.mxu0 0.0
    %2601 = vmatpush.xpose.msra.mxu0 %v720
    %2602 = vmatpush.xpose.msra.mxu0 %v524
    %2603 = vmatpush.xpose.msra.mxu0 %v328
    %2604 = vmatpush.xpose.msra.mxu0 %v132
    %2605 = vmatmul.f32.gmra.mxu0 %v986
    %v2606 = vpop.f32.mrf.mxu0
    %v2607 = vadd.f32 %v2587, %v2606
    %2608 = vdwg.mxu0
    %2609 = vmatpush.xpose.msra.mxu0 0.0
    %2610 = vmatpush.xpose.msra.mxu0 0.0
    %2611 = vmatpush.xpose.msra.mxu0 0.0
    %2612 = vmatpush.xpose.msra.mxu0 0.0
    %2613 = vmatpush.xpose.msra.mxu0 0.0
    %2614 = vmatpush.xpose.msra.mxu0 0.0
    %2615 = vmatpush.xpose.msra.mxu0 0.0
    %2616 = vmatpush.xpose.msra.mxu0 0.0
    %2617 = vmatpush.xpose.msra.mxu0 0.0
    %2618 = vmatpush.xpose.msra.mxu0 0.0
    %2619 = vmatpush.xpose.msra.mxu0 0.0
    %2620 = vmatpush.xpose.msra.mxu0 0.0
    %2621 = vmatpush.xpose.msra.mxu0 %v721
    %2622 = vmatpush.xpose.msra.mxu0 %v525
    %2623 = vmatpush.xpose.msra.mxu0 %v329
    %2624 = vmatpush.xpose.msra.mxu0 %v133
    %2625 = vmatmul.f32.gmra.mxu0 %v987
    %v2626 = vpop.f32.mrf.mxu0
    %v2627 = vadd.f32 %v2607, %v2626
    %2628 = vdwg.mxu0
    %2629 = vmatpush.xpose.msra.mxu0 0.0
    %2630 = vmatpush.xpose.msra.mxu0 0.0
    %2631 = vmatpush.xpose.msra.mxu0 0.0
    %2632 = vmatpush.xpose.msra.mxu0 0.0
    %2633 = vmatpush.xpose.msra.mxu0 0.0
    %2634 = vmatpush.xpose.msra.mxu0 0.0
    %2635 = vmatpush.xpose.msra.mxu0 0.0
    %2636 = vmatpush.xpose.msra.mxu0 0.0
    %2637 = vmatpush.xpose.msra.mxu0 0.0
    %2638 = vmatpush.xpose.msra.mxu0 0.0
    %2639 = vmatpush.xpose.msra.mxu0 0.0
    %2640 = vmatpush.xpose.msra.mxu0 0.0
    %2641 = vmatpush.xpose.msra.mxu0 %v722
    %2642 = vmatpush.xpose.msra.mxu0 %v526
    %2643 = vmatpush.xpose.msra.mxu0 %v330
    %2644 = vmatpush.xpose.msra.mxu0 %v134
    %2645 = vmatmul.f32.gmra.mxu0 %v990
    %v2646 = vpop.f32.mrf.mxu0
    %v2647 = vadd.f32 %v2627, %v2646
    %2648 = vdwg.mxu0
    %2649 = vmatpush.xpose.msra.mxu0 0.0
    %2650 = vmatpush.xpose.msra.mxu0 0.0
    %2651 = vmatpush.xpose.msra.mxu0 0.0
    %2652 = vmatpush.xpose.msra.mxu0 0.0
    %2653 = vmatpush.xpose.msra.mxu0 0.0
    %2654 = vmatpush.xpose.msra.mxu0 0.0
    %2655 = vmatpush.xpose.msra.mxu0 0.0
    %2656 = vmatpush.xpose.msra.mxu0 0.0
    %2657 = vmatpush.xpose.msra.mxu0 0.0
    %2658 = vmatpush.xpose.msra.mxu0 0.0
    %2659 = vmatpush.xpose.msra.mxu0 0.0
    %2660 = vmatpush.xpose.msra.mxu0 0.0
    %2661 = vmatpush.xpose.msra.mxu0 %v723
    %2662 = vmatpush.xpose.msra.mxu0 %v527
    %2663 = vmatpush.xpose.msra.mxu0 %v331
    %2664 = vmatpush.xpose.msra.mxu0 %v135
    %2665 = vmatmul.f32.gmra.mxu0 %v991
    %v2666 = vpop.f32.mrf.mxu0
    %v2667 = vadd.f32 %v2647, %v2666
    %2668 = vdwg.mxu0
    %2669 = vmatpush.xpose.msra.mxu0 0.0
    %2670 = vmatpush.xpose.msra.mxu0 0.0
    %2671 = vmatpush.xpose.msra.mxu0 0.0
    %2672 = vmatpush.xpose.msra.mxu0 0.0
    %2673 = vmatpush.xpose.msra.mxu0 0.0
    %2674 = vmatpush.xpose.msra.mxu0 0.0
    %2675 = vmatpush.xpose.msra.mxu0 0.0
    %2676 = vmatpush.xpose.msra.mxu0 0.0
    %2677 = vmatpush.xpose.msra.mxu0 0.0
    %2678 = vmatpush.xpose.msra.mxu0 0.0
    %2679 = vmatpush.xpose.msra.mxu0 0.0
    %2680 = vmatpush.xpose.msra.mxu0 0.0
    %2681 = vmatpush.xpose.msra.mxu0 %v724
    %2682 = vmatpush.xpose.msra.mxu0 %v528
    %2683 = vmatpush.xpose.msra.mxu0 %v332
    %2684 = vmatpush.xpose.msra.mxu0 %v136
    %2685 = vmatmul.f32.gmra.mxu0 %v992
    %v2686 = vpop.f32.mrf.mxu0
    %v2687 = vadd.f32 %v2667, %v2686
    %2688 = vdwg.mxu0
    %2689 = vmatpush.xpose.msra.mxu0 0.0
    %2690 = vmatpush.xpose.msra.mxu0 0.0
    %2691 = vmatpush.xpose.msra.mxu0 0.0
    %2692 = vmatpush.xpose.msra.mxu0 0.0
    %2693 = vmatpush.xpose.msra.mxu0 0.0
    %2694 = vmatpush.xpose.msra.mxu0 0.0
    %2695 = vmatpush.xpose.msra.mxu0 0.0
    %2696 = vmatpush.xpose.msra.mxu0 0.0
    %2697 = vmatpush.xpose.msra.mxu0 0.0
    %2698 = vmatpush.xpose.msra.mxu0 0.0
    %2699 = vmatpush.xpose.msra.mxu0 0.0
    %2700 = vmatpush.xpose.msra.mxu0 0.0
    %2701 = vmatpush.xpose.msra.mxu0 %v725
    %2702 = vmatpush.xpose.msra.mxu0 %v529
    %2703 = vmatpush.xpose.msra.mxu0 %v333
    %2704 = vmatpush.xpose.msra.mxu0 %v137
    %2705 = vmatmul.f32.gmra.mxu0 %v993
    %v2706 = vpop.f32.mrf.mxu0
    %v2707 = vadd.f32 %v2687, %v2706
    %2708 = vdwg.mxu0
    %2709 = vmatpush.xpose.msra.mxu0 0.0
    %2710 = vmatpush.xpose.msra.mxu0 0.0
    %2711 = vmatpush.xpose.msra.mxu0 0.0
    %2712 = vmatpush.xpose.msra.mxu0 0.0
    %2713 = vmatpush.xpose.msra.mxu0 0.0
    %2714 = vmatpush.xpose.msra.mxu0 0.0
    %2715 = vmatpush.xpose.msra.mxu0 0.0
    %2716 = vmatpush.xpose.msra.mxu0 0.0
    %2717 = vmatpush.xpose.msra.mxu0 0.0
    %2718 = vmatpush.xpose.msra.mxu0 0.0
    %2719 = vmatpush.xpose.msra.mxu0 0.0
    %2720 = vmatpush.xpose.msra.mxu0 0.0
    %2721 = vmatpush.xpose.msra.mxu0 %v726
    %2722 = vmatpush.xpose.msra.mxu0 %v530
    %2723 = vmatpush.xpose.msra.mxu0 %v334
    %2724 = vmatpush.xpose.msra.mxu0 %v138
    %2725 = vmatmul.f32.gmra.mxu0 %v994
    %v2726 = vpop.f32.mrf.mxu0
    %v2727 = vadd.f32 %v2707, %v2726
    %2728 = vdwg.mxu0
    %2729 = vmatpush.xpose.msra.mxu0 0.0
    %2730 = vmatpush.xpose.msra.mxu0 0.0
    %2731 = vmatpush.xpose.msra.mxu0 0.0
    %2732 = vmatpush.xpose.msra.mxu0 0.0
    %2733 = vmatpush.xpose.msra.mxu0 0.0
    %2734 = vmatpush.xpose.msra.mxu0 0.0
    %2735 = vmatpush.xpose.msra.mxu0 0.0
    %2736 = vmatpush.xpose.msra.mxu0 0.0
    %2737 = vmatpush.xpose.msra.mxu0 0.0
    %2738 = vmatpush.xpose.msra.mxu0 0.0
    %2739 = vmatpush.xpose.msra.mxu0 0.0
    %2740 = vmatpush.xpose.msra.mxu0 0.0
    %2741 = vmatpush.xpose.msra.mxu0 %v727
    %2742 = vmatpush.xpose.msra.mxu0 %v531
    %2743 = vmatpush.xpose.msra.mxu0 %v335
    %2744 = vmatpush.xpose.msra.mxu0 %v139
    %2745 = vmatmul.f32.gmra.mxu0 %v995
    %v2746 = vpop.f32.mrf.mxu0
    %v2747 = vadd.f32 %v2727, %v2746
    %2748 = vdwg.mxu0
    %2749 = vmatpush.xpose.msra.mxu0 0.0
    %2750 = vmatpush.xpose.msra.mxu0 0.0
    %2751 = vmatpush.xpose.msra.mxu0 0.0
    %2752 = vmatpush.xpose.msra.mxu0 0.0
    %2753 = vmatpush.xpose.msra.mxu0 0.0
    %2754 = vmatpush.xpose.msra.mxu0 0.0
    %2755 = vmatpush.xpose.msra.mxu0 0.0
    %2756 = vmatpush.xpose.msra.mxu0 0.0
    %2757 = vmatpush.xpose.msra.mxu0 0.0
    %2758 = vmatpush.xpose.msra.mxu0 0.0
    %2759 = vmatpush.xpose.msra.mxu0 0.0
    %2760 = vmatpush.xpose.msra.mxu0 0.0
    %2761 = vmatpush.xpose.msra.mxu0 %v728
    %2762 = vmatpush.xpose.msra.mxu0 %v532
    %2763 = vmatpush.xpose.msra.mxu0 %v336
    %2764 = vmatpush.xpose.msra.mxu0 %v140
    %2765 = vmatmul.f32.gmra.mxu0 %v996
    %v2766 = vpop.f32.mrf.mxu0
    %v2767 = vadd.f32 %v2747, %v2766
    %2768 = vdwg.mxu0
    %2769 = vmatpush.xpose.msra.mxu0 0.0
    %2770 = vmatpush.xpose.msra.mxu0 0.0
    %2771 = vmatpush.xpose.msra.mxu0 0.0
    %2772 = vmatpush.xpose.msra.mxu0 0.0
    %2773 = vmatpush.xpose.msra.mxu0 0.0
    %2774 = vmatpush.xpose.msra.mxu0 0.0
    %2775 = vmatpush.xpose.msra.mxu0 0.0
    %2776 = vmatpush.xpose.msra.mxu0 0.0
    %2777 = vmatpush.xpose.msra.mxu0 0.0
    %2778 = vmatpush.xpose.msra.mxu0 0.0
    %2779 = vmatpush.xpose.msra.mxu0 0.0
    %2780 = vmatpush.xpose.msra.mxu0 0.0
    %2781 = vmatpush.xpose.msra.mxu0 %v729
    %2782 = vmatpush.xpose.msra.mxu0 %v533
    %2783 = vmatpush.xpose.msra.mxu0 %v337
    %2784 = vmatpush.xpose.msra.mxu0 %v141
    %2785 = vmatmul.f32.gmra.mxu0 %v997
    %v2786 = vpop.f32.mrf.mxu0
    %v2787 = vadd.f32 %v2767, %v2786
    %2788 = vdwg.mxu0
    %2789 = vmatpush.xpose.msra.mxu0 0.0
    %2790 = vmatpush.xpose.msra.mxu0 0.0
    %2791 = vmatpush.xpose.msra.mxu0 0.0
    %2792 = vmatpush.xpose.msra.mxu0 0.0
    %2793 = vmatpush.xpose.msra.mxu0 0.0
    %2794 = vmatpush.xpose.msra.mxu0 0.0
    %2795 = vmatpush.xpose.msra.mxu0 0.0
    %2796 = vmatpush.xpose.msra.mxu0 0.0
    %2797 = vmatpush.xpose.msra.mxu0 0.0
    %2798 = vmatpush.xpose.msra.mxu0 0.0
    %2799 = vmatpush.xpose.msra.mxu0 0.0
    %2800 = vmatpush.xpose.msra.mxu0 0.0
    %2801 = vmatpush.xpose.msra.mxu0 %v730
    %2802 = vmatpush.xpose.msra.mxu0 %v534
    %2803 = vmatpush.xpose.msra.mxu0 %v338
    %2804 = vmatpush.xpose.msra.mxu0 %v142
    %2805 = vmatmul.f32.gmra.mxu0 %v1000
    %v2806 = vpop.f32.mrf.mxu0
    %v2807 = vadd.f32 %v2787, %v2806
    %2808 = vdwg.mxu0
    %2809 = vmatpush.xpose.msra.mxu0 0.0
    %2810 = vmatpush.xpose.msra.mxu0 0.0
    %2811 = vmatpush.xpose.msra.mxu0 0.0
    %2812 = vmatpush.xpose.msra.mxu0 0.0
    %2813 = vmatpush.xpose.msra.mxu0 0.0
    %2814 = vmatpush.xpose.msra.mxu0 0.0
    %2815 = vmatpush.xpose.msra.mxu0 0.0
    %2816 = vmatpush.xpose.msra.mxu0 0.0
    %2817 = vmatpush.xpose.msra.mxu0 0.0
    %2818 = vmatpush.xpose.msra.mxu0 0.0
    %2819 = vmatpush.xpose.msra.mxu0 0.0
    %2820 = vmatpush.xpose.msra.mxu0 0.0
    %2821 = vmatpush.xpose.msra.mxu0 %v731
    %2822 = vmatpush.xpose.msra.mxu0 %v535
    %2823 = vmatpush.xpose.msra.mxu0 %v339
    %2824 = vmatpush.xpose.msra.mxu0 %v143
    %2825 = vmatmul.f32.gmra.mxu0 %v1001
    %v2826 = vpop.f32.mrf.mxu0
    %v2827 = vadd.f32 %v2807, %v2826
    %2828 = vdwg.mxu0
    %2829 = vmatpush.xpose.msra.mxu0 0.0
    %2830 = vmatpush.xpose.msra.mxu0 0.0
    %2831 = vmatpush.xpose.msra.mxu0 0.0
    %2832 = vmatpush.xpose.msra.mxu0 0.0
    %2833 = vmatpush.xpose.msra.mxu0 0.0
    %2834 = vmatpush.xpose.msra.mxu0 0.0
    %2835 = vmatpush.xpose.msra.mxu0 0.0
    %2836 = vmatpush.xpose.msra.mxu0 0.0
    %2837 = vmatpush.xpose.msra.mxu0 0.0
    %2838 = vmatpush.xpose.msra.mxu0 0.0
    %2839 = vmatpush.xpose.msra.mxu0 0.0
    %2840 = vmatpush.xpose.msra.mxu0 0.0
    %2841 = vmatpush.xpose.msra.mxu0 %v732
    %2842 = vmatpush.xpose.msra.mxu0 %v536
    %2843 = vmatpush.xpose.msra.mxu0 %v340
    %2844 = vmatpush.xpose.msra.mxu0 %v144
    %2845 = vmatmul.f32.gmra.mxu0 %v1002
    %v2846 = vpop.f32.mrf.mxu0
    %v2847 = vadd.f32 %v2827, %v2846
    %2848 = vdwg.mxu0
    %2849 = vmatpush.xpose.msra.mxu0 0.0
    %2850 = vmatpush.xpose.msra.mxu0 0.0
    %2851 = vmatpush.xpose.msra.mxu0 0.0
    %2852 = vmatpush.xpose.msra.mxu0 0.0
    %2853 = vmatpush.xpose.msra.mxu0 0.0
    %2854 = vmatpush.xpose.msra.mxu0 0.0
    %2855 = vmatpush.xpose.msra.mxu0 0.0
    %2856 = vmatpush.xpose.msra.mxu0 0.0
    %2857 = vmatpush.xpose.msra.mxu0 0.0
    %2858 = vmatpush.xpose.msra.mxu0 0.0
    %2859 = vmatpush.xpose.msra.mxu0 0.0
    %2860 = vmatpush.xpose.msra.mxu0 0.0
    %2861 = vmatpush.xpose.msra.mxu0 %v733
    %2862 = vmatpush.xpose.msra.mxu0 %v537
    %2863 = vmatpush.xpose.msra.mxu0 %v341
    %2864 = vmatpush.xpose.msra.mxu0 %v145
    %2865 = vmatmul.f32.gmra.mxu0 %v1003
    %v2866 = vpop.f32.mrf.mxu0
    %v2867 = vadd.f32 %v2847, %v2866
    %2868 = vdwg.mxu0
    %2869 = vmatpush.xpose.msra.mxu0 0.0
    %2870 = vmatpush.xpose.msra.mxu0 0.0
    %2871 = vmatpush.xpose.msra.mxu0 0.0
    %2872 = vmatpush.xpose.msra.mxu0 0.0
    %2873 = vmatpush.xpose.msra.mxu0 0.0
    %2874 = vmatpush.xpose.msra.mxu0 0.0
    %2875 = vmatpush.xpose.msra.mxu0 0.0
    %2876 = vmatpush.xpose.msra.mxu0 0.0
    %2877 = vmatpush.xpose.msra.mxu0 0.0
    %2878 = vmatpush.xpose.msra.mxu0 0.0
    %2879 = vmatpush.xpose.msra.mxu0 0.0
    %2880 = vmatpush.xpose.msra.mxu0 0.0
    %2881 = vmatpush.xpose.msra.mxu0 %v734
    %2882 = vmatpush.xpose.msra.mxu0 %v538
    %2883 = vmatpush.xpose.msra.mxu0 %v342
    %2884 = vmatpush.xpose.msra.mxu0 %v146
    %2885 = vmatmul.f32.gmra.mxu0 %v1004
    %v2886 = vpop.f32.mrf.mxu0
    %v2887 = vadd.f32 %v2867, %v2886
    %2888 = vdwg.mxu0
    %2889 = vmatpush.xpose.msra.mxu0 0.0
    %2890 = vmatpush.xpose.msra.mxu0 0.0
    %2891 = vmatpush.xpose.msra.mxu0 0.0
    %2892 = vmatpush.xpose.msra.mxu0 0.0
    %2893 = vmatpush.xpose.msra.mxu0 0.0
    %2894 = vmatpush.xpose.msra.mxu0 0.0
    %2895 = vmatpush.xpose.msra.mxu0 0.0
    %2896 = vmatpush.xpose.msra.mxu0 0.0
    %2897 = vmatpush.xpose.msra.mxu0 0.0
    %2898 = vmatpush.xpose.msra.mxu0 0.0
    %2899 = vmatpush.xpose.msra.mxu0 0.0
    %2900 = vmatpush.xpose.msra.mxu0 0.0
    %2901 = vmatpush.xpose.msra.mxu0 %v735
    %2902 = vmatpush.xpose.msra.mxu0 %v539
    %2903 = vmatpush.xpose.msra.mxu0 %v343
    %2904 = vmatpush.xpose.msra.mxu0 %v147
    %2905 = vmatmul.f32.gmra.mxu0 %v1005
    %v2906 = vpop.f32.mrf.mxu0
    %v2907 = vadd.f32 %v2887, %v2906
    %2908 = vdwg.mxu0
    %2909 = vmatpush.xpose.msra.mxu0 0.0
    %2910 = vmatpush.xpose.msra.mxu0 0.0
    %2911 = vmatpush.xpose.msra.mxu0 0.0
    %2912 = vmatpush.xpose.msra.mxu0 0.0
    %2913 = vmatpush.xpose.msra.mxu0 0.0
    %2914 = vmatpush.xpose.msra.mxu0 0.0
    %2915 = vmatpush.xpose.msra.mxu0 0.0
    %2916 = vmatpush.xpose.msra.mxu0 0.0
    %2917 = vmatpush.xpose.msra.mxu0 0.0
    %2918 = vmatpush.xpose.msra.mxu0 0.0
    %2919 = vmatpush.xpose.msra.mxu0 0.0
    %2920 = vmatpush.xpose.msra.mxu0 0.0
    %2921 = vmatpush.xpose.msra.mxu0 %v736
    %2922 = vmatpush.xpose.msra.mxu0 %v540
    %2923 = vmatpush.xpose.msra.mxu0 %v344
    %2924 = vmatpush.xpose.msra.mxu0 %v148
    %2925 = vmatmul.f32.gmra.mxu0 %v1006
    %v2926 = vpop.f32.mrf.mxu0
    %v2927 = vadd.f32 %v2907, %v2926
    %2928 = vdwg.mxu0
    %2929 = vmatpush.xpose.msra.mxu0 0.0
    %2930 = vmatpush.xpose.msra.mxu0 0.0
    %2931 = vmatpush.xpose.msra.mxu0 0.0
    %2932 = vmatpush.xpose.msra.mxu0 0.0
    %2933 = vmatpush.xpose.msra.mxu0 0.0
    %2934 = vmatpush.xpose.msra.mxu0 0.0
    %2935 = vmatpush.xpose.msra.mxu0 0.0
    %2936 = vmatpush.xpose.msra.mxu0 0.0
    %2937 = vmatpush.xpose.msra.mxu0 0.0
    %2938 = vmatpush.xpose.msra.mxu0 0.0
    %2939 = vmatpush.xpose.msra.mxu0 0.0
    %2940 = vmatpush.xpose.msra.mxu0 0.0
    %2941 = vmatpush.xpose.msra.mxu0 %v737
    %2942 = vmatpush.xpose.msra.mxu0 %v541
    %2943 = vmatpush.xpose.msra.mxu0 %v345
    %2944 = vmatpush.xpose.msra.mxu0 %v149
    %2945 = vmatmul.f32.gmra.mxu0 %v1007
    %v2946 = vpop.f32.mrf.mxu0
    %v2947 = vadd.f32 %v2927, %v2946
    %2948 = vdwg.mxu0
    %2949 = vmatpush.xpose.msra.mxu0 0.0
    %2950 = vmatpush.xpose.msra.mxu0 0.0
    %2951 = vmatpush.xpose.msra.mxu0 0.0
    %2952 = vmatpush.xpose.msra.mxu0 0.0
    %2953 = vmatpush.xpose.msra.mxu0 0.0
    %2954 = vmatpush.xpose.msra.mxu0 0.0
    %2955 = vmatpush.xpose.msra.mxu0 0.0
    %2956 = vmatpush.xpose.msra.mxu0 0.0
    %2957 = vmatpush.xpose.msra.mxu0 0.0
    %2958 = vmatpush.xpose.msra.mxu0 0.0
    %2959 = vmatpush.xpose.msra.mxu0 0.0
    %2960 = vmatpush.xpose.msra.mxu0 0.0
    %2961 = vmatpush.xpose.msra.mxu0 %v738
    %2962 = vmatpush.xpose.msra.mxu0 %v542
    %2963 = vmatpush.xpose.msra.mxu0 %v346
    %2964 = vmatpush.xpose.msra.mxu0 %v150
    %2965 = vmatmul.f32.gmra.mxu0 %v1010
    %v2966 = vpop.f32.mrf.mxu0
    %v2967 = vadd.f32 %v2947, %v2966
    %2968 = vdwg.mxu0
    %2969 = vmatpush.xpose.msra.mxu0 0.0
    %2970 = vmatpush.xpose.msra.mxu0 0.0
    %2971 = vmatpush.xpose.msra.mxu0 0.0
    %2972 = vmatpush.xpose.msra.mxu0 0.0
    %2973 = vmatpush.xpose.msra.mxu0 0.0
    %2974 = vmatpush.xpose.msra.mxu0 0.0
    %2975 = vmatpush.xpose.msra.mxu0 0.0
    %2976 = vmatpush.xpose.msra.mxu0 0.0
    %2977 = vmatpush.xpose.msra.mxu0 0.0
    %2978 = vmatpush.xpose.msra.mxu0 0.0
    %2979 = vmatpush.xpose.msra.mxu0 0.0
    %2980 = vmatpush.xpose.msra.mxu0 0.0
    %2981 = vmatpush.xpose.msra.mxu0 %v739
    %2982 = vmatpush.xpose.msra.mxu0 %v543
    %2983 = vmatpush.xpose.msra.mxu0 %v347
    %2984 = vmatpush.xpose.msra.mxu0 %v151
    %2985 = vmatmul.f32.gmra.mxu0 %v1011
    %v2986 = vpop.f32.mrf.mxu0
    %v2987 = vadd.f32 %v2967, %v2986
    %2988 = vdwg.mxu0
    %2989 = vmatpush.xpose.msra.mxu0 0.0
    %2990 = vmatpush.xpose.msra.mxu0 0.0
    %2991 = vmatpush.xpose.msra.mxu0 0.0
    %2992 = vmatpush.xpose.msra.mxu0 0.0
    %2993 = vmatpush.xpose.msra.mxu0 0.0
    %2994 = vmatpush.xpose.msra.mxu0 0.0
    %2995 = vmatpush.xpose.msra.mxu0 0.0
    %2996 = vmatpush.xpose.msra.mxu0 0.0
    %2997 = vmatpush.xpose.msra.mxu0 0.0
    %2998 = vmatpush.xpose.msra.mxu0 0.0
    %2999 = vmatpush.xpose.msra.mxu0 0.0
    %3000 = vmatpush.xpose.msra.mxu0 0.0
    %3001 = vmatpush.xpose.msra.mxu0 %v740
    %3002 = vmatpush.xpose.msra.mxu0 %v544
    %3003 = vmatpush.xpose.msra.mxu0 %v348
    %3004 = vmatpush.xpose.msra.mxu0 %v152
    %3005 = vmatmul.f32.gmra.mxu0 %v1012
    %v3006 = vpop.f32.mrf.mxu0
    %v3007 = vadd.f32 %v2987, %v3006
    %3008 = vdwg.mxu0
    %3009 = vmatpush.xpose.msra.mxu0 0.0
    %3010 = vmatpush.xpose.msra.mxu0 0.0
    %3011 = vmatpush.xpose.msra.mxu0 0.0
    %3012 = vmatpush.xpose.msra.mxu0 0.0
    %3013 = vmatpush.xpose.msra.mxu0 0.0
    %3014 = vmatpush.xpose.msra.mxu0 0.0
    %3015 = vmatpush.xpose.msra.mxu0 0.0
    %3016 = vmatpush.xpose.msra.mxu0 0.0
    %3017 = vmatpush.xpose.msra.mxu0 0.0
    %3018 = vmatpush.xpose.msra.mxu0 0.0
    %3019 = vmatpush.xpose.msra.mxu0 0.0
    %3020 = vmatpush.xpose.msra.mxu0 0.0
    %3021 = vmatpush.xpose.msra.mxu0 %v741
    %3022 = vmatpush.xpose.msra.mxu0 %v545
    %3023 = vmatpush.xpose.msra.mxu0 %v349
    %3024 = vmatpush.xpose.msra.mxu0 %v153
    %3025 = vmatmul.f32.gmra.mxu0 %v1013
    %v3026 = vpop.f32.mrf.mxu0
    %v3027 = vadd.f32 %v3007, %v3026
    %3028 = vdwg.mxu0
    %3029 = vmatpush.xpose.msra.mxu0 0.0
    %3030 = vmatpush.xpose.msra.mxu0 0.0
    %3031 = vmatpush.xpose.msra.mxu0 0.0
    %3032 = vmatpush.xpose.msra.mxu0 0.0
    %3033 = vmatpush.xpose.msra.mxu0 0.0
    %3034 = vmatpush.xpose.msra.mxu0 0.0
    %3035 = vmatpush.xpose.msra.mxu0 0.0
    %3036 = vmatpush.xpose.msra.mxu0 0.0
    %3037 = vmatpush.xpose.msra.mxu0 0.0
    %3038 = vmatpush.xpose.msra.mxu0 0.0
    %3039 = vmatpush.xpose.msra.mxu0 0.0
    %3040 = vmatpush.xpose.msra.mxu0 0.0
    %3041 = vmatpush.xpose.msra.mxu0 %v742
    %3042 = vmatpush.xpose.msra.mxu0 %v546
    %3043 = vmatpush.xpose.msra.mxu0 %v350
    %3044 = vmatpush.xpose.msra.mxu0 %v154
    %3045 = vmatmul.f32.gmra.mxu0 %v1014
    %v3046 = vpop.f32.mrf.mxu0
    %v3047 = vadd.f32 %v3027, %v3046
    %3048 = vdwg.mxu0
    %3049 = vmatpush.xpose.msra.mxu0 0.0
    %3050 = vmatpush.xpose.msra.mxu0 0.0
    %3051 = vmatpush.xpose.msra.mxu0 0.0
    %3052 = vmatpush.xpose.msra.mxu0 0.0
    %3053 = vmatpush.xpose.msra.mxu0 0.0
    %3054 = vmatpush.xpose.msra.mxu0 0.0
    %3055 = vmatpush.xpose.msra.mxu0 0.0
    %3056 = vmatpush.xpose.msra.mxu0 0.0
    %3057 = vmatpush.xpose.msra.mxu0 0.0
    %3058 = vmatpush.xpose.msra.mxu0 0.0
    %3059 = vmatpush.xpose.msra.mxu0 0.0
    %3060 = vmatpush.xpose.msra.mxu0 0.0
    %3061 = vmatpush.xpose.msra.mxu0 %v743
    %3062 = vmatpush.xpose.msra.mxu0 %v547
    %3063 = vmatpush.xpose.msra.mxu0 %v351
    %3064 = vmatpush.xpose.msra.mxu0 %v155
    %3065 = vmatmul.f32.gmra.mxu0 %v1015
    %v3066 = vpop.f32.mrf.mxu0
    %v3067 = vadd.f32 %v3047, %v3066
    %3068 = vdwg.mxu0
    %3069 = vmatpush.xpose.msra.mxu0 0.0
    %3070 = vmatpush.xpose.msra.mxu0 0.0
    %3071 = vmatpush.xpose.msra.mxu0 0.0
    %3072 = vmatpush.xpose.msra.mxu0 0.0
    %3073 = vmatpush.xpose.msra.mxu0 0.0
    %3074 = vmatpush.xpose.msra.mxu0 0.0
    %3075 = vmatpush.xpose.msra.mxu0 0.0
    %3076 = vmatpush.xpose.msra.mxu0 0.0
    %3077 = vmatpush.xpose.msra.mxu0 0.0
    %3078 = vmatpush.xpose.msra.mxu0 0.0
    %3079 = vmatpush.xpose.msra.mxu0 0.0
    %3080 = vmatpush.xpose.msra.mxu0 0.0
    %3081 = vmatpush.xpose.msra.mxu0 %v744
    %3082 = vmatpush.xpose.msra.mxu0 %v548
    %3083 = vmatpush.xpose.msra.mxu0 %v352
    %3084 = vmatpush.xpose.msra.mxu0 %v156
    %3085 = vmatmul.f32.gmra.mxu0 %v1016
    %v3086 = vpop.f32.mrf.mxu0
    %v3087 = vadd.f32 %v3067, %v3086
    %3088 = vdwg.mxu0
    %3089 = vmatpush.xpose.msra.mxu0 0.0
    %3090 = vmatpush.xpose.msra.mxu0 0.0
    %3091 = vmatpush.xpose.msra.mxu0 0.0
    %3092 = vmatpush.xpose.msra.mxu0 0.0
    %3093 = vmatpush.xpose.msra.mxu0 0.0
    %3094 = vmatpush.xpose.msra.mxu0 0.0
    %3095 = vmatpush.xpose.msra.mxu0 0.0
    %3096 = vmatpush.xpose.msra.mxu0 0.0
    %3097 = vmatpush.xpose.msra.mxu0 0.0
    %3098 = vmatpush.xpose.msra.mxu0 0.0
    %3099 = vmatpush.xpose.msra.mxu0 0.0
    %3100 = vmatpush.xpose.msra.mxu0 0.0
    %3101 = vmatpush.xpose.msra.mxu0 %v745
    %3102 = vmatpush.xpose.msra.mxu0 %v549
    %3103 = vmatpush.xpose.msra.mxu0 %v353
    %3104 = vmatpush.xpose.msra.mxu0 %v157
    %3105 = vmatmul.f32.gmra.mxu0 %v1017
    %v3106 = vpop.f32.mrf.mxu0
    %v3107 = vadd.f32 %v3087, %v3106
    %3108 = vdwg.mxu0
    %3109 = vmatpush.xpose.msra.mxu0 0.0
    %3110 = vmatpush.xpose.msra.mxu0 0.0
    %3111 = vmatpush.xpose.msra.mxu0 0.0
    %3112 = vmatpush.xpose.msra.mxu0 0.0
    %3113 = vmatpush.xpose.msra.mxu0 0.0
    %3114 = vmatpush.xpose.msra.mxu0 0.0
    %3115 = vmatpush.xpose.msra.mxu0 0.0
    %3116 = vmatpush.xpose.msra.mxu0 0.0
    %3117 = vmatpush.xpose.msra.mxu0 0.0
    %3118 = vmatpush.xpose.msra.mxu0 0.0
    %3119 = vmatpush.xpose.msra.mxu0 0.0
    %3120 = vmatpush.xpose.msra.mxu0 0.0
    %3121 = vmatpush.xpose.msra.mxu0 %v746
    %3122 = vmatpush.xpose.msra.mxu0 %v550
    %3123 = vmatpush.xpose.msra.mxu0 %v354
    %3124 = vmatpush.xpose.msra.mxu0 %v158
    %3125 = vmatmul.f32.gmra.mxu0 %v1020
    %v3126 = vpop.f32.mrf.mxu0
    %v3127 = vadd.f32 %v3107, %v3126
    %3128 = vdwg.mxu0
    %3129 = vmatpush.xpose.msra.mxu0 0.0
    %3130 = vmatpush.xpose.msra.mxu0 0.0
    %3131 = vmatpush.xpose.msra.mxu0 0.0
    %3132 = vmatpush.xpose.msra.mxu0 0.0
    %3133 = vmatpush.xpose.msra.mxu0 0.0
    %3134 = vmatpush.xpose.msra.mxu0 0.0
    %3135 = vmatpush.xpose.msra.mxu0 0.0
    %3136 = vmatpush.xpose.msra.mxu0 0.0
    %3137 = vmatpush.xpose.msra.mxu0 0.0
    %3138 = vmatpush.xpose.msra.mxu0 0.0
    %3139 = vmatpush.xpose.msra.mxu0 0.0
    %3140 = vmatpush.xpose.msra.mxu0 0.0
    %3141 = vmatpush.xpose.msra.mxu0 %v747
    %3142 = vmatpush.xpose.msra.mxu0 %v551
    %3143 = vmatpush.xpose.msra.mxu0 %v355
    %3144 = vmatpush.xpose.msra.mxu0 %v159
    %3145 = vmatmul.f32.gmra.mxu0 %v1021
    %v3146 = vpop.f32.mrf.mxu0
    %v3147 = vadd.f32 %v3127, %v3146
    %3148 = vdwg.mxu0
    %3149 = vmatpush.xpose.msra.mxu0 0.0
    %3150 = vmatpush.xpose.msra.mxu0 0.0
    %3151 = vmatpush.xpose.msra.mxu0 0.0
    %3152 = vmatpush.xpose.msra.mxu0 0.0
    %3153 = vmatpush.xpose.msra.mxu0 0.0
    %3154 = vmatpush.xpose.msra.mxu0 0.0
    %3155 = vmatpush.xpose.msra.mxu0 0.0
    %3156 = vmatpush.xpose.msra.mxu0 0.0
    %3157 = vmatpush.xpose.msra.mxu0 0.0
    %3158 = vmatpush.xpose.msra.mxu0 0.0
    %3159 = vmatpush.xpose.msra.mxu0 0.0
    %3160 = vmatpush.xpose.msra.mxu0 0.0
    %3161 = vmatpush.xpose.msra.mxu0 %v748
    %3162 = vmatpush.xpose.msra.mxu0 %v552
    %3163 = vmatpush.xpose.msra.mxu0 %v356
    %3164 = vmatpush.xpose.msra.mxu0 %v160
    %3165 = vmatmul.f32.gmra.mxu0 %v1022
    %v3166 = vpop.f32.mrf.mxu0
    %v3167 = vadd.f32 %v3147, %v3166
    %3168 = vdwg.mxu0
    %3169 = vmatpush.xpose.msra.mxu0 0.0
    %3170 = vmatpush.xpose.msra.mxu0 0.0
    %3171 = vmatpush.xpose.msra.mxu0 0.0
    %3172 = vmatpush.xpose.msra.mxu0 0.0
    %3173 = vmatpush.xpose.msra.mxu0 0.0
    %3174 = vmatpush.xpose.msra.mxu0 0.0
    %3175 = vmatpush.xpose.msra.mxu0 0.0
    %3176 = vmatpush.xpose.msra.mxu0 0.0
    %3177 = vmatpush.xpose.msra.mxu0 0.0
    %3178 = vmatpush.xpose.msra.mxu0 0.0
    %3179 = vmatpush.xpose.msra.mxu0 0.0
    %3180 = vmatpush.xpose.msra.mxu0 0.0
    %3181 = vmatpush.xpose.msra.mxu0 %v749
    %3182 = vmatpush.xpose.msra.mxu0 %v553
    %3183 = vmatpush.xpose.msra.mxu0 %v357
    %3184 = vmatpush.xpose.msra.mxu0 %v161
    %3185 = vmatmul.f32.gmra.mxu0 %v1023
    %v3186 = vpop.f32.mrf.mxu0
    %v3187 = vadd.f32 %v3167, %v3186
    %3188 = vdwg.mxu0
    %3189 = vmatpush.xpose.msra.mxu0 0.0
    %3190 = vmatpush.xpose.msra.mxu0 0.0
    %3191 = vmatpush.xpose.msra.mxu0 0.0
    %3192 = vmatpush.xpose.msra.mxu0 0.0
    %3193 = vmatpush.xpose.msra.mxu0 0.0
    %3194 = vmatpush.xpose.msra.mxu0 0.0
    %3195 = vmatpush.xpose.msra.mxu0 0.0
    %3196 = vmatpush.xpose.msra.mxu0 0.0
    %3197 = vmatpush.xpose.msra.mxu0 0.0
    %3198 = vmatpush.xpose.msra.mxu0 0.0
    %3199 = vmatpush.xpose.msra.mxu0 0.0
    %3200 = vmatpush.xpose.msra.mxu0 0.0
    %3201 = vmatpush.xpose.msra.mxu0 %v750
    %3202 = vmatpush.xpose.msra.mxu0 %v554
    %3203 = vmatpush.xpose.msra.mxu0 %v358
    %3204 = vmatpush.xpose.msra.mxu0 %v162
    %3205 = vmatmul.f32.gmra.mxu0 %v1024
    %v3206 = vpop.f32.mrf.mxu0
    %v3207 = vadd.f32 %v3187, %v3206
    %3208 = vdwg.mxu0
    %3209 = vmatpush.xpose.msra.mxu0 0.0
    %3210 = vmatpush.xpose.msra.mxu0 0.0
    %3211 = vmatpush.xpose.msra.mxu0 0.0
    %3212 = vmatpush.xpose.msra.mxu0 0.0
    %3213 = vmatpush.xpose.msra.mxu0 0.0
    %3214 = vmatpush.xpose.msra.mxu0 0.0
    %3215 = vmatpush.xpose.msra.mxu0 0.0
    %3216 = vmatpush.xpose.msra.mxu0 0.0
    %3217 = vmatpush.xpose.msra.mxu0 0.0
    %3218 = vmatpush.xpose.msra.mxu0 0.0
    %3219 = vmatpush.xpose.msra.mxu0 0.0
    %3220 = vmatpush.xpose.msra.mxu0 0.0
    %3221 = vmatpush.xpose.msra.mxu0 %v751
    %3222 = vmatpush.xpose.msra.mxu0 %v555
    %3223 = vmatpush.xpose.msra.mxu0 %v359
    %3224 = vmatpush.xpose.msra.mxu0 %v163
    %3225 = vmatmul.f32.gmra.mxu0 %v1025
    %v3226 = vpop.f32.mrf.mxu0
    %v3227 = vadd.f32 %v3207, %v3226
    %3228 = vdwg.mxu0
    %3229 = vmatpush.xpose.msra.mxu0 0.0
    %3230 = vmatpush.xpose.msra.mxu0 0.0
    %3231 = vmatpush.xpose.msra.mxu0 0.0
    %3232 = vmatpush.xpose.msra.mxu0 0.0
    %3233 = vmatpush.xpose.msra.mxu0 0.0
    %3234 = vmatpush.xpose.msra.mxu0 0.0
    %3235 = vmatpush.xpose.msra.mxu0 0.0
    %3236 = vmatpush.xpose.msra.mxu0 0.0
    %3237 = vmatpush.xpose.msra.mxu0 0.0
    %3238 = vmatpush.xpose.msra.mxu0 0.0
    %3239 = vmatpush.xpose.msra.mxu0 0.0
    %3240 = vmatpush.xpose.msra.mxu0 0.0
    %3241 = vmatpush.xpose.msra.mxu0 %v752
    %3242 = vmatpush.xpose.msra.mxu0 %v556
    %3243 = vmatpush.xpose.msra.mxu0 %v360
    %3244 = vmatpush.xpose.msra.mxu0 %v164
    %3245 = vmatmul.f32.gmra.mxu0 %v1026
    %v3246 = vpop.f32.mrf.mxu0
    %v3247 = vadd.f32 %v3227, %v3246
    %3248 = vdwg.mxu0
    %3249 = vmatpush.xpose.msra.mxu0 0.0
    %3250 = vmatpush.xpose.msra.mxu0 0.0
    %3251 = vmatpush.xpose.msra.mxu0 0.0
    %3252 = vmatpush.xpose.msra.mxu0 0.0
    %3253 = vmatpush.xpose.msra.mxu0 0.0
    %3254 = vmatpush.xpose.msra.mxu0 0.0
    %3255 = vmatpush.xpose.msra.mxu0 0.0
    %3256 = vmatpush.xpose.msra.mxu0 0.0
    %3257 = vmatpush.xpose.msra.mxu0 0.0
    %3258 = vmatpush.xpose.msra.mxu0 0.0
    %3259 = vmatpush.xpose.msra.mxu0 0.0
    %3260 = vmatpush.xpose.msra.mxu0 0.0
    %3261 = vmatpush.xpose.msra.mxu0 %v753
    %3262 = vmatpush.xpose.msra.mxu0 %v557
    %3263 = vmatpush.xpose.msra.mxu0 %v361
    %3264 = vmatpush.xpose.msra.mxu0 %v165
    %3265 = vmatmul.f32.gmra.mxu0 %v1027
    %v3266 = vpop.f32.mrf.mxu0
    %v3267 = vadd.f32 %v3247, %v3266
    %3268 = vdwg.mxu0
    %3269 = vmatpush.xpose.msra.mxu0 0.0
    %3270 = vmatpush.xpose.msra.mxu0 0.0
    %3271 = vmatpush.xpose.msra.mxu0 0.0
    %3272 = vmatpush.xpose.msra.mxu0 0.0
    %3273 = vmatpush.xpose.msra.mxu0 0.0
    %3274 = vmatpush.xpose.msra.mxu0 0.0
    %3275 = vmatpush.xpose.msra.mxu0 0.0
    %3276 = vmatpush.xpose.msra.mxu0 0.0
    %3277 = vmatpush.xpose.msra.mxu0 0.0
    %3278 = vmatpush.xpose.msra.mxu0 0.0
    %3279 = vmatpush.xpose.msra.mxu0 0.0
    %3280 = vmatpush.xpose.msra.mxu0 0.0
    %3281 = vmatpush.xpose.msra.mxu0 %v754
    %3282 = vmatpush.xpose.msra.mxu0 %v558
    %3283 = vmatpush.xpose.msra.mxu0 %v362
    %3284 = vmatpush.xpose.msra.mxu0 %v166
    %3285 = vmatmul.f32.gmra.mxu0 %v1030
    %v3286 = vpop.f32.mrf.mxu0
    %v3287 = vadd.f32 %v3267, %v3286
    %3288 = vdwg.mxu0
    %3289 = vmatpush.xpose.msra.mxu0 0.0
    %3290 = vmatpush.xpose.msra.mxu0 0.0
    %3291 = vmatpush.xpose.msra.mxu0 0.0
    %3292 = vmatpush.xpose.msra.mxu0 0.0
    %3293 = vmatpush.xpose.msra.mxu0 0.0
    %3294 = vmatpush.xpose.msra.mxu0 0.0
    %3295 = vmatpush.xpose.msra.mxu0 0.0
    %3296 = vmatpush.xpose.msra.mxu0 0.0
    %3297 = vmatpush.xpose.msra.mxu0 0.0
    %3298 = vmatpush.xpose.msra.mxu0 0.0
    %3299 = vmatpush.xpose.msra.mxu0 0.0
    %3300 = vmatpush.xpose.msra.mxu0 0.0
    %3301 = vmatpush.xpose.msra.mxu0 %v755
    %3302 = vmatpush.xpose.msra.mxu0 %v559
    %3303 = vmatpush.xpose.msra.mxu0 %v363
    %3304 = vmatpush.xpose.msra.mxu0 %v167
    %3305 = vmatmul.f32.gmra.mxu0 %v1031
    %v3306 = vpop.f32.mrf.mxu0
    %v3307 = vadd.f32 %v3287, %v3306
    %3308 = vdwg.mxu0
    %3309 = vmatpush.xpose.msra.mxu0 0.0
    %3310 = vmatpush.xpose.msra.mxu0 0.0
    %3311 = vmatpush.xpose.msra.mxu0 0.0
    %3312 = vmatpush.xpose.msra.mxu0 0.0
    %3313 = vmatpush.xpose.msra.mxu0 0.0
    %3314 = vmatpush.xpose.msra.mxu0 0.0
    %3315 = vmatpush.xpose.msra.mxu0 0.0
    %3316 = vmatpush.xpose.msra.mxu0 0.0
    %3317 = vmatpush.xpose.msra.mxu0 0.0
    %3318 = vmatpush.xpose.msra.mxu0 0.0
    %3319 = vmatpush.xpose.msra.mxu0 0.0
    %3320 = vmatpush.xpose.msra.mxu0 0.0
    %3321 = vmatpush.xpose.msra.mxu0 %v756
    %3322 = vmatpush.xpose.msra.mxu0 %v560
    %3323 = vmatpush.xpose.msra.mxu0 %v364
    %3324 = vmatpush.xpose.msra.mxu0 %v168
    %3325 = vmatmul.f32.gmra.mxu0 %v1032
    %v3326 = vpop.f32.mrf.mxu0
    %v3327 = vadd.f32 %v3307, %v3326
    %3328 = vdwg.mxu0
    %3329 = vmatpush.xpose.msra.mxu0 0.0
    %3330 = vmatpush.xpose.msra.mxu0 0.0
    %3331 = vmatpush.xpose.msra.mxu0 0.0
    %3332 = vmatpush.xpose.msra.mxu0 0.0
    %3333 = vmatpush.xpose.msra.mxu0 0.0
    %3334 = vmatpush.xpose.msra.mxu0 0.0
    %3335 = vmatpush.xpose.msra.mxu0 0.0
    %3336 = vmatpush.xpose.msra.mxu0 0.0
    %3337 = vmatpush.xpose.msra.mxu0 0.0
    %3338 = vmatpush.xpose.msra.mxu0 0.0
    %3339 = vmatpush.xpose.msra.mxu0 0.0
    %3340 = vmatpush.xpose.msra.mxu0 0.0
    %3341 = vmatpush.xpose.msra.mxu0 %v757
    %3342 = vmatpush.xpose.msra.mxu0 %v561
    %3343 = vmatpush.xpose.msra.mxu0 %v365
    %3344 = vmatpush.xpose.msra.mxu0 %v169
    %3345 = vmatmul.f32.gmra.mxu0 %v1033
    %v3346 = vpop.f32.mrf.mxu0
    %v3347 = vadd.f32 %v3327, %v3346
    %3348 = vdwg.mxu0
    %3349 = vmatpush.xpose.msra.mxu0 0.0
    %3350 = vmatpush.xpose.msra.mxu0 0.0
    %3351 = vmatpush.xpose.msra.mxu0 0.0
    %3352 = vmatpush.xpose.msra.mxu0 0.0
    %3353 = vmatpush.xpose.msra.mxu0 0.0
    %3354 = vmatpush.xpose.msra.mxu0 0.0
    %3355 = vmatpush.xpose.msra.mxu0 0.0
    %3356 = vmatpush.xpose.msra.mxu0 0.0
    %3357 = vmatpush.xpose.msra.mxu0 0.0
    %3358 = vmatpush.xpose.msra.mxu0 0.0
    %3359 = vmatpush.xpose.msra.mxu0 0.0
    %3360 = vmatpush.xpose.msra.mxu0 0.0
    %3361 = vmatpush.xpose.msra.mxu0 %v758
    %3362 = vmatpush.xpose.msra.mxu0 %v562
    %3363 = vmatpush.xpose.msra.mxu0 %v366
    %3364 = vmatpush.xpose.msra.mxu0 %v170
    %3365 = vmatmul.f32.gmra.mxu0 %v1034
    %v3366 = vpop.f32.mrf.mxu0
    %v3367 = vadd.f32 %v3347, %v3366
    %3368 = vdwg.mxu0
    %3369 = vmatpush.xpose.msra.mxu0 0.0
    %3370 = vmatpush.xpose.msra.mxu0 0.0
    %3371 = vmatpush.xpose.msra.mxu0 0.0
    %3372 = vmatpush.xpose.msra.mxu0 0.0
    %3373 = vmatpush.xpose.msra.mxu0 0.0
    %3374 = vmatpush.xpose.msra.mxu0 0.0
    %3375 = vmatpush.xpose.msra.mxu0 0.0
    %3376 = vmatpush.xpose.msra.mxu0 0.0
    %3377 = vmatpush.xpose.msra.mxu0 0.0
    %3378 = vmatpush.xpose.msra.mxu0 0.0
    %3379 = vmatpush.xpose.msra.mxu0 0.0
    %3380 = vmatpush.xpose.msra.mxu0 0.0
    %3381 = vmatpush.xpose.msra.mxu0 %v759
    %3382 = vmatpush.xpose.msra.mxu0 %v563
    %3383 = vmatpush.xpose.msra.mxu0 %v367
    %3384 = vmatpush.xpose.msra.mxu0 %v171
    %3385 = vmatmul.f32.gmra.mxu0 %v1035
    %v3386 = vpop.f32.mrf.mxu0
    %v3387 = vadd.f32 %v3367, %v3386
    %3388 = vdwg.mxu0
    %3389 = vmatpush.xpose.msra.mxu0 0.0
    %3390 = vmatpush.xpose.msra.mxu0 0.0
    %3391 = vmatpush.xpose.msra.mxu0 0.0
    %3392 = vmatpush.xpose.msra.mxu0 0.0
    %3393 = vmatpush.xpose.msra.mxu0 0.0
    %3394 = vmatpush.xpose.msra.mxu0 0.0
    %3395 = vmatpush.xpose.msra.mxu0 0.0
    %3396 = vmatpush.xpose.msra.mxu0 0.0
    %3397 = vmatpush.xpose.msra.mxu0 0.0
    %3398 = vmatpush.xpose.msra.mxu0 0.0
    %3399 = vmatpush.xpose.msra.mxu0 0.0
    %3400 = vmatpush.xpose.msra.mxu0 0.0
    %3401 = vmatpush.xpose.msra.mxu0 %v760
    %3402 = vmatpush.xpose.msra.mxu0 %v564
    %3403 = vmatpush.xpose.msra.mxu0 %v368
    %3404 = vmatpush.xpose.msra.mxu0 %v172
    %3405 = vmatmul.f32.gmra.mxu0 %v1036
    %v3406 = vpop.f32.mrf.mxu0
    %v3407 = vadd.f32 %v3387, %v3406
    %3408 = vdwg.mxu0
    %3409 = vmatpush.xpose.msra.mxu0 0.0
    %3410 = vmatpush.xpose.msra.mxu0 0.0
    %3411 = vmatpush.xpose.msra.mxu0 0.0
    %3412 = vmatpush.xpose.msra.mxu0 0.0
    %3413 = vmatpush.xpose.msra.mxu0 0.0
    %3414 = vmatpush.xpose.msra.mxu0 0.0
    %3415 = vmatpush.xpose.msra.mxu0 0.0
    %3416 = vmatpush.xpose.msra.mxu0 0.0
    %3417 = vmatpush.xpose.msra.mxu0 0.0
    %3418 = vmatpush.xpose.msra.mxu0 0.0
    %3419 = vmatpush.xpose.msra.mxu0 0.0
    %3420 = vmatpush.xpose.msra.mxu0 0.0
    %3421 = vmatpush.xpose.msra.mxu0 %v761
    %3422 = vmatpush.xpose.msra.mxu0 %v565
    %3423 = vmatpush.xpose.msra.mxu0 %v369
    %3424 = vmatpush.xpose.msra.mxu0 %v173
    %3425 = vmatmul.f32.gmra.mxu0 %v1037
    %v3426 = vpop.f32.mrf.mxu0
    %v3427 = vadd.f32 %v3407, %v3426
    %3428 = vdwg.mxu0
    %3429 = vmatpush.xpose.msra.mxu0 0.0
    %3430 = vmatpush.xpose.msra.mxu0 0.0
    %3431 = vmatpush.xpose.msra.mxu0 0.0
    %3432 = vmatpush.xpose.msra.mxu0 0.0
    %3433 = vmatpush.xpose.msra.mxu0 0.0
    %3434 = vmatpush.xpose.msra.mxu0 0.0
    %3435 = vmatpush.xpose.msra.mxu0 0.0
    %3436 = vmatpush.xpose.msra.mxu0 0.0
    %3437 = vmatpush.xpose.msra.mxu0 0.0
    %3438 = vmatpush.xpose.msra.mxu0 0.0
    %3439 = vmatpush.xpose.msra.mxu0 0.0
    %3440 = vmatpush.xpose.msra.mxu0 0.0
    %3441 = vmatpush.xpose.msra.mxu0 %v762
    %3442 = vmatpush.xpose.msra.mxu0 %v566
    %3443 = vmatpush.xpose.msra.mxu0 %v370
    %3444 = vmatpush.xpose.msra.mxu0 %v174
    %3445 = vmatmul.f32.gmra.mxu0 %v1040
    %v3446 = vpop.f32.mrf.mxu0
    %v3447 = vadd.f32 %v3427, %v3446
    %3448 = vdwg.mxu0
    %3449 = vmatpush.xpose.msra.mxu0 0.0
    %3450 = vmatpush.xpose.msra.mxu0 0.0
    %3451 = vmatpush.xpose.msra.mxu0 0.0
    %3452 = vmatpush.xpose.msra.mxu0 0.0
    %3453 = vmatpush.xpose.msra.mxu0 0.0
    %3454 = vmatpush.xpose.msra.mxu0 0.0
    %3455 = vmatpush.xpose.msra.mxu0 0.0
    %3456 = vmatpush.xpose.msra.mxu0 0.0
    %3457 = vmatpush.xpose.msra.mxu0 0.0
    %3458 = vmatpush.xpose.msra.mxu0 0.0
    %3459 = vmatpush.xpose.msra.mxu0 0.0
    %3460 = vmatpush.xpose.msra.mxu0 0.0
    %3461 = vmatpush.xpose.msra.mxu0 %v763
    %3462 = vmatpush.xpose.msra.mxu0 %v567
    %3463 = vmatpush.xpose.msra.mxu0 %v371
    %3464 = vmatpush.xpose.msra.mxu0 %v175
    %3465 = vmatmul.f32.gmra.mxu0 %v1041
    %v3466 = vpop.f32.mrf.mxu0
    %v3467 = vadd.f32 %v3447, %v3466
    %3468 = vdwg.mxu0
    %3469 = vmatpush.xpose.msra.mxu0 0.0
    %3470 = vmatpush.xpose.msra.mxu0 0.0
    %3471 = vmatpush.xpose.msra.mxu0 0.0
    %3472 = vmatpush.xpose.msra.mxu0 0.0
    %3473 = vmatpush.xpose.msra.mxu0 0.0
    %3474 = vmatpush.xpose.msra.mxu0 0.0
    %3475 = vmatpush.xpose.msra.mxu0 0.0
    %3476 = vmatpush.xpose.msra.mxu0 0.0
    %3477 = vmatpush.xpose.msra.mxu0 0.0
    %3478 = vmatpush.xpose.msra.mxu0 0.0
    %3479 = vmatpush.xpose.msra.mxu0 0.0
    %3480 = vmatpush.xpose.msra.mxu0 0.0
    %3481 = vmatpush.xpose.msra.mxu0 %v764
    %3482 = vmatpush.xpose.msra.mxu0 %v568
    %3483 = vmatpush.xpose.msra.mxu0 %v372
    %3484 = vmatpush.xpose.msra.mxu0 %v176
    %3485 = vmatmul.f32.gmra.mxu0 %v1042
    %v3486 = vpop.f32.mrf.mxu0
    %v3487 = vadd.f32 %v3467, %v3486
    %3488 = vdwg.mxu0
    %3489 = vmatpush.xpose.msra.mxu0 0.0
    %3490 = vmatpush.xpose.msra.mxu0 0.0
    %3491 = vmatpush.xpose.msra.mxu0 0.0
    %3492 = vmatpush.xpose.msra.mxu0 0.0
    %3493 = vmatpush.xpose.msra.mxu0 0.0
    %3494 = vmatpush.xpose.msra.mxu0 0.0
    %3495 = vmatpush.xpose.msra.mxu0 0.0
    %3496 = vmatpush.xpose.msra.mxu0 0.0
    %3497 = vmatpush.xpose.msra.mxu0 0.0
    %3498 = vmatpush.xpose.msra.mxu0 0.0
    %3499 = vmatpush.xpose.msra.mxu0 0.0
    %3500 = vmatpush.xpose.msra.mxu0 0.0
    %3501 = vmatpush.xpose.msra.mxu0 %v765
    %3502 = vmatpush.xpose.msra.mxu0 %v569
    %3503 = vmatpush.xpose.msra.mxu0 %v373
    %3504 = vmatpush.xpose.msra.mxu0 %v177
    %3505 = vmatmul.f32.gmra.mxu0 %v1043
    %v3506 = vpop.f32.mrf.mxu0
    %v3507 = vadd.f32 %v3487, %v3506
    %3508 = vdwg.mxu0
    %3509 = vmatpush.xpose.msra.mxu0 0.0
    %3510 = vmatpush.xpose.msra.mxu0 0.0
    %3511 = vmatpush.xpose.msra.mxu0 0.0
    %3512 = vmatpush.xpose.msra.mxu0 0.0
    %3513 = vmatpush.xpose.msra.mxu0 0.0
    %3514 = vmatpush.xpose.msra.mxu0 0.0
    %3515 = vmatpush.xpose.msra.mxu0 0.0
    %3516 = vmatpush.xpose.msra.mxu0 0.0
    %3517 = vmatpush.xpose.msra.mxu0 0.0
    %3518 = vmatpush.xpose.msra.mxu0 0.0
    %3519 = vmatpush.xpose.msra.mxu0 0.0
    %3520 = vmatpush.xpose.msra.mxu0 0.0
    %3521 = vmatpush.xpose.msra.mxu0 %v766
    %3522 = vmatpush.xpose.msra.mxu0 %v570
    %3523 = vmatpush.xpose.msra.mxu0 %v374
    %3524 = vmatpush.xpose.msra.mxu0 %v178
    %3525 = vmatmul.f32.gmra.mxu0 %v1044
    %v3526 = vpop.f32.mrf.mxu0
    %v3527 = vadd.f32 %v3507, %v3526
    %3528 = vdwg.mxu0
    %3529 = vmatpush.xpose.msra.mxu0 0.0
    %3530 = vmatpush.xpose.msra.mxu0 0.0
    %3531 = vmatpush.xpose.msra.mxu0 0.0
    %3532 = vmatpush.xpose.msra.mxu0 0.0
    %3533 = vmatpush.xpose.msra.mxu0 0.0
    %3534 = vmatpush.xpose.msra.mxu0 0.0
    %3535 = vmatpush.xpose.msra.mxu0 0.0
    %3536 = vmatpush.xpose.msra.mxu0 0.0
    %3537 = vmatpush.xpose.msra.mxu0 0.0
    %3538 = vmatpush.xpose.msra.mxu0 0.0
    %3539 = vmatpush.xpose.msra.mxu0 0.0
    %3540 = vmatpush.xpose.msra.mxu0 0.0
    %3541 = vmatpush.xpose.msra.mxu0 %v767
    %3542 = vmatpush.xpose.msra.mxu0 %v571
    %3543 = vmatpush.xpose.msra.mxu0 %v375
    %3544 = vmatpush.xpose.msra.mxu0 %v179
    %3545 = vmatmul.f32.gmra.mxu0 %v1045
    %v3546 = vpop.f32.mrf.mxu0
    %v3547 = vadd.f32 %v3527, %v3546
    %3548 = vdwg.mxu0
    %3549 = vmatpush.xpose.msra.mxu0 0.0
    %3550 = vmatpush.xpose.msra.mxu0 0.0
    %3551 = vmatpush.xpose.msra.mxu0 0.0
    %3552 = vmatpush.xpose.msra.mxu0 0.0
    %3553 = vmatpush.xpose.msra.mxu0 0.0
    %3554 = vmatpush.xpose.msra.mxu0 0.0
    %3555 = vmatpush.xpose.msra.mxu0 0.0
    %3556 = vmatpush.xpose.msra.mxu0 0.0
    %3557 = vmatpush.xpose.msra.mxu0 0.0
    %3558 = vmatpush.xpose.msra.mxu0 0.0
    %3559 = vmatpush.xpose.msra.mxu0 0.0
    %3560 = vmatpush.xpose.msra.mxu0 0.0
    %3561 = vmatpush.xpose.msra.mxu0 %v768
    %3562 = vmatpush.xpose.msra.mxu0 %v572
    %3563 = vmatpush.xpose.msra.mxu0 %v376
    %3564 = vmatpush.xpose.msra.mxu0 %v180
    %3565 = vmatmul.f32.gmra.mxu0 %v1046
    %v3566 = vpop.f32.mrf.mxu0
    %v3567 = vadd.f32 %v3547, %v3566
    %3568 = vdwg.mxu0
    %3569 = vmatpush.xpose.msra.mxu0 0.0
    %3570 = vmatpush.xpose.msra.mxu0 0.0
    %3571 = vmatpush.xpose.msra.mxu0 0.0
    %3572 = vmatpush.xpose.msra.mxu0 0.0
    %3573 = vmatpush.xpose.msra.mxu0 0.0
    %3574 = vmatpush.xpose.msra.mxu0 0.0
    %3575 = vmatpush.xpose.msra.mxu0 0.0
    %3576 = vmatpush.xpose.msra.mxu0 0.0
    %3577 = vmatpush.xpose.msra.mxu0 0.0
    %3578 = vmatpush.xpose.msra.mxu0 0.0
    %3579 = vmatpush.xpose.msra.mxu0 0.0
    %3580 = vmatpush.xpose.msra.mxu0 0.0
    %3581 = vmatpush.xpose.msra.mxu0 %v769
    %3582 = vmatpush.xpose.msra.mxu0 %v573
    %3583 = vmatpush.xpose.msra.mxu0 %v377
    %3584 = vmatpush.xpose.msra.mxu0 %v181
    %3585 = vmatmul.f32.gmra.mxu0 %v1047
    %v3586 = vpop.f32.mrf.mxu0
    %v3587 = vadd.f32 %v3567, %v3586
    %3588 = vdwg.mxu0
    %3589 = vmatpush.xpose.msra.mxu0 0.0
    %3590 = vmatpush.xpose.msra.mxu0 0.0
    %3591 = vmatpush.xpose.msra.mxu0 0.0
    %3592 = vmatpush.xpose.msra.mxu0 0.0
    %3593 = vmatpush.xpose.msra.mxu0 0.0
    %3594 = vmatpush.xpose.msra.mxu0 0.0
    %3595 = vmatpush.xpose.msra.mxu0 0.0
    %3596 = vmatpush.xpose.msra.mxu0 0.0
    %3597 = vmatpush.xpose.msra.mxu0 0.0
    %3598 = vmatpush.xpose.msra.mxu0 0.0
    %3599 = vmatpush.xpose.msra.mxu0 0.0
    %3600 = vmatpush.xpose.msra.mxu0 0.0
    %3601 = vmatpush.xpose.msra.mxu0 %v770
    %3602 = vmatpush.xpose.msra.mxu0 %v574
    %3603 = vmatpush.xpose.msra.mxu0 %v378
    %3604 = vmatpush.xpose.msra.mxu0 %v182
    %3605 = vmatmul.f32.gmra.mxu0 %v1050
    %v3606 = vpop.f32.mrf.mxu0
    %v3607 = vadd.f32 %v3587, %v3606
    %3608 = vdwg.mxu0
    %3609 = vmatpush.xpose.msra.mxu0 0.0
    %3610 = vmatpush.xpose.msra.mxu0 0.0
    %3611 = vmatpush.xpose.msra.mxu0 0.0
    %3612 = vmatpush.xpose.msra.mxu0 0.0
    %3613 = vmatpush.xpose.msra.mxu0 0.0
    %3614 = vmatpush.xpose.msra.mxu0 0.0
    %3615 = vmatpush.xpose.msra.mxu0 0.0
    %3616 = vmatpush.xpose.msra.mxu0 0.0
    %3617 = vmatpush.xpose.msra.mxu0 0.0
    %3618 = vmatpush.xpose.msra.mxu0 0.0
    %3619 = vmatpush.xpose.msra.mxu0 0.0
    %3620 = vmatpush.xpose.msra.mxu0 0.0
    %3621 = vmatpush.xpose.msra.mxu0 %v771
    %3622 = vmatpush.xpose.msra.mxu0 %v575
    %3623 = vmatpush.xpose.msra.mxu0 %v379
    %3624 = vmatpush.xpose.msra.mxu0 %v183
    %3625 = vmatmul.f32.gmra.mxu0 %v1051
    %v3626 = vpop.f32.mrf.mxu0
    %v3627 = vadd.f32 %v3607, %v3626
    %3628 = vdwg.mxu0
    %3629 = vmatpush.xpose.msra.mxu0 0.0
    %3630 = vmatpush.xpose.msra.mxu0 0.0
    %3631 = vmatpush.xpose.msra.mxu0 0.0
    %3632 = vmatpush.xpose.msra.mxu0 0.0
    %3633 = vmatpush.xpose.msra.mxu0 0.0
    %3634 = vmatpush.xpose.msra.mxu0 0.0
    %3635 = vmatpush.xpose.msra.mxu0 0.0
    %3636 = vmatpush.xpose.msra.mxu0 0.0
    %3637 = vmatpush.xpose.msra.mxu0 0.0
    %3638 = vmatpush.xpose.msra.mxu0 0.0
    %3639 = vmatpush.xpose.msra.mxu0 0.0
    %3640 = vmatpush.xpose.msra.mxu0 0.0
    %3641 = vmatpush.xpose.msra.mxu0 %v772
    %3642 = vmatpush.xpose.msra.mxu0 %v576
    %3643 = vmatpush.xpose.msra.mxu0 %v380
    %3644 = vmatpush.xpose.msra.mxu0 %v184
    %3645 = vmatmul.f32.gmra.mxu0 %v1052
    %v3646 = vpop.f32.mrf.mxu0
    %v3647 = vadd.f32 %v3627, %v3646
    %3648 = vdwg.mxu0
    %3649 = vmatpush.xpose.msra.mxu0 0.0
    %3650 = vmatpush.xpose.msra.mxu0 0.0
    %3651 = vmatpush.xpose.msra.mxu0 0.0
    %3652 = vmatpush.xpose.msra.mxu0 0.0
    %3653 = vmatpush.xpose.msra.mxu0 0.0
    %3654 = vmatpush.xpose.msra.mxu0 0.0
    %3655 = vmatpush.xpose.msra.mxu0 0.0
    %3656 = vmatpush.xpose.msra.mxu0 0.0
    %3657 = vmatpush.xpose.msra.mxu0 0.0
    %3658 = vmatpush.xpose.msra.mxu0 0.0
    %3659 = vmatpush.xpose.msra.mxu0 0.0
    %3660 = vmatpush.xpose.msra.mxu0 0.0
    %3661 = vmatpush.xpose.msra.mxu0 %v773
    %3662 = vmatpush.xpose.msra.mxu0 %v577
    %3663 = vmatpush.xpose.msra.mxu0 %v381
    %3664 = vmatpush.xpose.msra.mxu0 %v185
    %3665 = vmatmul.f32.gmra.mxu0 %v1053
    %v3666 = vpop.f32.mrf.mxu0
    %v3667 = vadd.f32 %v3647, %v3666
    %3668 = vdwg.mxu0
    %3669 = vmatpush.xpose.msra.mxu0 0.0
    %3670 = vmatpush.xpose.msra.mxu0 0.0
    %3671 = vmatpush.xpose.msra.mxu0 0.0
    %3672 = vmatpush.xpose.msra.mxu0 0.0
    %3673 = vmatpush.xpose.msra.mxu0 0.0
    %3674 = vmatpush.xpose.msra.mxu0 0.0
    %3675 = vmatpush.xpose.msra.mxu0 0.0
    %3676 = vmatpush.xpose.msra.mxu0 0.0
    %3677 = vmatpush.xpose.msra.mxu0 0.0
    %3678 = vmatpush.xpose.msra.mxu0 0.0
    %3679 = vmatpush.xpose.msra.mxu0 0.0
    %3680 = vmatpush.xpose.msra.mxu0 0.0
    %3681 = vmatpush.xpose.msra.mxu0 %v774
    %3682 = vmatpush.xpose.msra.mxu0 %v578
    %3683 = vmatpush.xpose.msra.mxu0 %v382
    %3684 = vmatpush.xpose.msra.mxu0 %v186
    %3685 = vmatmul.f32.gmra.mxu0 %v1054
    %v3686 = vpop.f32.mrf.mxu0
    %v3687 = vadd.f32 %v3667, %v3686
    %3688 = vdwg.mxu0
    %3689 = vmatpush.xpose.msra.mxu0 0.0
    %3690 = vmatpush.xpose.msra.mxu0 0.0
    %3691 = vmatpush.xpose.msra.mxu0 0.0
    %3692 = vmatpush.xpose.msra.mxu0 0.0
    %3693 = vmatpush.xpose.msra.mxu0 0.0
    %3694 = vmatpush.xpose.msra.mxu0 0.0
    %3695 = vmatpush.xpose.msra.mxu0 0.0
    %3696 = vmatpush.xpose.msra.mxu0 0.0
    %3697 = vmatpush.xpose.msra.mxu0 0.0
    %3698 = vmatpush.xpose.msra.mxu0 0.0
    %3699 = vmatpush.xpose.msra.mxu0 0.0
    %3700 = vmatpush.xpose.msra.mxu0 0.0
    %3701 = vmatpush.xpose.msra.mxu0 %v775
    %3702 = vmatpush.xpose.msra.mxu0 %v579
    %3703 = vmatpush.xpose.msra.mxu0 %v383
    %3704 = vmatpush.xpose.msra.mxu0 %v187
    %3705 = vmatmul.f32.gmra.mxu0 %v1055
    %v3706 = vpop.f32.mrf.mxu0
    %v3707 = vadd.f32 %v3687, %v3706
    %3708 = vdwg.mxu0
    %3709 = vmatpush.xpose.msra.mxu0 0.0
    %3710 = vmatpush.xpose.msra.mxu0 0.0
    %3711 = vmatpush.xpose.msra.mxu0 0.0
    %3712 = vmatpush.xpose.msra.mxu0 0.0
    %3713 = vmatpush.xpose.msra.mxu0 0.0
    %3714 = vmatpush.xpose.msra.mxu0 0.0
    %3715 = vmatpush.xpose.msra.mxu0 0.0
    %3716 = vmatpush.xpose.msra.mxu0 0.0
    %3717 = vmatpush.xpose.msra.mxu0 0.0
    %3718 = vmatpush.xpose.msra.mxu0 0.0
    %3719 = vmatpush.xpose.msra.mxu0 0.0
    %3720 = vmatpush.xpose.msra.mxu0 0.0
    %3721 = vmatpush.xpose.msra.mxu0 %v776
    %3722 = vmatpush.xpose.msra.mxu0 %v580
    %3723 = vmatpush.xpose.msra.mxu0 %v384
    %3724 = vmatpush.xpose.msra.mxu0 %v188
    %3725 = vmatmul.f32.gmra.mxu0 %v1056
    %v3726 = vpop.f32.mrf.mxu0
    %v3727 = vadd.f32 %v3707, %v3726
    %3728 = vdwg.mxu0
    %3729 = vmatpush.xpose.msra.mxu0 0.0
    %3730 = vmatpush.xpose.msra.mxu0 0.0
    %3731 = vmatpush.xpose.msra.mxu0 0.0
    %3732 = vmatpush.xpose.msra.mxu0 0.0
    %3733 = vmatpush.xpose.msra.mxu0 0.0
    %3734 = vmatpush.xpose.msra.mxu0 0.0
    %3735 = vmatpush.xpose.msra.mxu0 0.0
    %3736 = vmatpush.xpose.msra.mxu0 0.0
    %3737 = vmatpush.xpose.msra.mxu0 0.0
    %3738 = vmatpush.xpose.msra.mxu0 0.0
    %3739 = vmatpush.xpose.msra.mxu0 0.0
    %3740 = vmatpush.xpose.msra.mxu0 0.0
    %3741 = vmatpush.xpose.msra.mxu0 %v777
    %3742 = vmatpush.xpose.msra.mxu0 %v581
    %3743 = vmatpush.xpose.msra.mxu0 %v385
    %3744 = vmatpush.xpose.msra.mxu0 %v189
    %3745 = vmatmul.f32.gmra.mxu0 %v1057
    %v3746 = vpop.f32.mrf.mxu0
    %v3747 = vadd.f32 %v3727, %v3746
    %3748 = vdwg.mxu0
    %3749 = vmatpush.xpose.msra.mxu0 0.0
    %3750 = vmatpush.xpose.msra.mxu0 0.0
    %3751 = vmatpush.xpose.msra.mxu0 0.0
    %3752 = vmatpush.xpose.msra.mxu0 0.0
    %3753 = vmatpush.xpose.msra.mxu0 0.0
    %3754 = vmatpush.xpose.msra.mxu0 0.0
    %3755 = vmatpush.xpose.msra.mxu0 0.0
    %3756 = vmatpush.xpose.msra.mxu0 0.0
    %3757 = vmatpush.xpose.msra.mxu0 0.0
    %3758 = vmatpush.xpose.msra.mxu0 0.0
    %3759 = vmatpush.xpose.msra.mxu0 0.0
    %3760 = vmatpush.xpose.msra.mxu0 0.0
    %3761 = vmatpush.xpose.msra.mxu0 %v778
    %3762 = vmatpush.xpose.msra.mxu0 %v582
    %3763 = vmatpush.xpose.msra.mxu0 %v386
    %3764 = vmatpush.xpose.msra.mxu0 %v190
    %3765 = vmatmul.f32.gmra.mxu0 %v1060
    %v3766 = vpop.f32.mrf.mxu0
    %v3767 = vadd.f32 %v3747, %v3766
    %3768 = vdwg.mxu0
    %3769 = vmatpush.xpose.msra.mxu0 0.0
    %3770 = vmatpush.xpose.msra.mxu0 0.0
    %3771 = vmatpush.xpose.msra.mxu0 0.0
    %3772 = vmatpush.xpose.msra.mxu0 0.0
    %3773 = vmatpush.xpose.msra.mxu0 0.0
    %3774 = vmatpush.xpose.msra.mxu0 0.0
    %3775 = vmatpush.xpose.msra.mxu0 0.0
    %3776 = vmatpush.xpose.msra.mxu0 0.0
    %3777 = vmatpush.xpose.msra.mxu0 0.0
    %3778 = vmatpush.xpose.msra.mxu0 0.0
    %3779 = vmatpush.xpose.msra.mxu0 0.0
    %3780 = vmatpush.xpose.msra.mxu0 0.0
    %3781 = vmatpush.xpose.msra.mxu0 %v779
    %3782 = vmatpush.xpose.msra.mxu0 %v583
    %3783 = vmatpush.xpose.msra.mxu0 %v387
    %3784 = vmatpush.xpose.msra.mxu0 %v191
    %3785 = vmatmul.f32.gmra.mxu0 %v1061
    %v3786 = vpop.f32.mrf.mxu0
    %v3787 = vadd.f32 %v3767, %v3786
    %3788 = vdwg.mxu0
    %3789 = vmatpush.xpose.msra.mxu0 0.0
    %3790 = vmatpush.xpose.msra.mxu0 0.0
    %3791 = vmatpush.xpose.msra.mxu0 0.0
    %3792 = vmatpush.xpose.msra.mxu0 0.0
    %3793 = vmatpush.xpose.msra.mxu0 0.0
    %3794 = vmatpush.xpose.msra.mxu0 0.0
    %3795 = vmatpush.xpose.msra.mxu0 0.0
    %3796 = vmatpush.xpose.msra.mxu0 0.0
    %3797 = vmatpush.xpose.msra.mxu0 0.0
    %3798 = vmatpush.xpose.msra.mxu0 0.0
    %3799 = vmatpush.xpose.msra.mxu0 0.0
    %3800 = vmatpush.xpose.msra.mxu0 0.0
    %3801 = vmatpush.xpose.msra.mxu0 %v780
    %3802 = vmatpush.xpose.msra.mxu0 %v584
    %3803 = vmatpush.xpose.msra.mxu0 %v388
    %3804 = vmatpush.xpose.msra.mxu0 %v192
    %3805 = vmatmul.f32.gmra.mxu0 %v1062
    %v3806 = vpop.f32.mrf.mxu0
    %v3807 = vadd.f32 %v3787, %v3806
    %3808 = vdwg.mxu0
    %3809 = vmatpush.xpose.msra.mxu0 0.0
    %3810 = vmatpush.xpose.msra.mxu0 0.0
    %3811 = vmatpush.xpose.msra.mxu0 0.0
    %3812 = vmatpush.xpose.msra.mxu0 0.0
    %3813 = vmatpush.xpose.msra.mxu0 0.0
    %3814 = vmatpush.xpose.msra.mxu0 0.0
    %3815 = vmatpush.xpose.msra.mxu0 0.0
    %3816 = vmatpush.xpose.msra.mxu0 0.0
    %3817 = vmatpush.xpose.msra.mxu0 0.0
    %3818 = vmatpush.xpose.msra.mxu0 0.0
    %3819 = vmatpush.xpose.msra.mxu0 0.0
    %3820 = vmatpush.xpose.msra.mxu0 0.0
    %3821 = vmatpush.xpose.msra.mxu0 %v781
    %3822 = vmatpush.xpose.msra.mxu0 %v585
    %3823 = vmatpush.xpose.msra.mxu0 %v389
    %3824 = vmatpush.xpose.msra.mxu0 %v193
    %3825 = vmatmul.f32.gmra.mxu0 %v1063
    %v3826 = vpop.f32.mrf.mxu0
    %v3827 = vadd.f32 %v3807, %v3826
    %3828 = vdwg.mxu0
    %3829 = vmatpush.xpose.msra.mxu0 0.0
    %3830 = vmatpush.xpose.msra.mxu0 0.0
    %3831 = vmatpush.xpose.msra.mxu0 0.0
    %3832 = vmatpush.xpose.msra.mxu0 0.0
    %3833 = vmatpush.xpose.msra.mxu0 0.0
    %3834 = vmatpush.xpose.msra.mxu0 0.0
    %3835 = vmatpush.xpose.msra.mxu0 0.0
    %3836 = vmatpush.xpose.msra.mxu0 0.0
    %3837 = vmatpush.xpose.msra.mxu0 0.0
    %3838 = vmatpush.xpose.msra.mxu0 0.0
    %3839 = vmatpush.xpose.msra.mxu0 0.0
    %3840 = vmatpush.xpose.msra.mxu0 0.0
    %3841 = vmatpush.xpose.msra.mxu0 %v782
    %3842 = vmatpush.xpose.msra.mxu0 %v586
    %3843 = vmatpush.xpose.msra.mxu0 %v390
    %3844 = vmatpush.xpose.msra.mxu0 %v194
    %3845 = vmatmul.f32.gmra.mxu0 %v1064
    %v3846 = vpop.f32.mrf.mxu0
    %v3847 = vadd.f32 %v3827, %v3846
    %3848 = vdwg.mxu0
    %3849 = vmatpush.xpose.msra.mxu0 0.0
    %3850 = vmatpush.xpose.msra.mxu0 0.0
    %3851 = vmatpush.xpose.msra.mxu0 0.0
    %3852 = vmatpush.xpose.msra.mxu0 0.0
    %3853 = vmatpush.xpose.msra.mxu0 0.0
    %3854 = vmatpush.xpose.msra.mxu0 0.0
    %3855 = vmatpush.xpose.msra.mxu0 0.0
    %3856 = vmatpush.xpose.msra.mxu0 0.0
    %3857 = vmatpush.xpose.msra.mxu0 0.0
    %3858 = vmatpush.xpose.msra.mxu0 0.0
    %3859 = vmatpush.xpose.msra.mxu0 0.0
    %3860 = vmatpush.xpose.msra.mxu0 0.0
    %3861 = vmatpush.xpose.msra.mxu0 %v783
    %3862 = vmatpush.xpose.msra.mxu0 %v587
    %3863 = vmatpush.xpose.msra.mxu0 %v391
    %3864 = vmatpush.xpose.msra.mxu0 %v195
    %3865 = vmatmul.f32.gmra.mxu0 %v1065
    %v3866 = vpop.f32.mrf.mxu0
    %v3867 = vadd.f32 %v3847, %v3866
    %3868 = vdwg.mxu0
    %3869 = vmatpush.xpose.msra.mxu0 0.0
    %3870 = vmatpush.xpose.msra.mxu0 0.0
    %3871 = vmatpush.xpose.msra.mxu0 0.0
    %3872 = vmatpush.xpose.msra.mxu0 0.0
    %3873 = vmatpush.xpose.msra.mxu0 0.0
    %3874 = vmatpush.xpose.msra.mxu0 0.0
    %3875 = vmatpush.xpose.msra.mxu0 0.0
    %3876 = vmatpush.xpose.msra.mxu0 0.0
    %3877 = vmatpush.xpose.msra.mxu0 0.0
    %3878 = vmatpush.xpose.msra.mxu0 0.0
    %3879 = vmatpush.xpose.msra.mxu0 0.0
    %3880 = vmatpush.xpose.msra.mxu0 0.0
    %3881 = vmatpush.xpose.msra.mxu0 %v784
    %3882 = vmatpush.xpose.msra.mxu0 %v588
    %3883 = vmatpush.xpose.msra.mxu0 %v392
    %3884 = vmatpush.xpose.msra.mxu0 %v196
    %3885 = vmatmul.f32.gmra.mxu0 %v1066
    %v3886 = vpop.f32.mrf.mxu0
    %v3887 = vadd.f32 %v3867, %v3886
    %3888 = vdwg.mxu0
    %3889 = vmatpush.xpose.msra.mxu0 0.0
    %3890 = vmatpush.xpose.msra.mxu0 0.0
    %3891 = vmatpush.xpose.msra.mxu0 0.0
    %3892 = vmatpush.xpose.msra.mxu0 0.0
    %3893 = vmatpush.xpose.msra.mxu0 0.0
    %3894 = vmatpush.xpose.msra.mxu0 0.0
    %3895 = vmatpush.xpose.msra.mxu0 0.0
    %3896 = vmatpush.xpose.msra.mxu0 0.0
    %3897 = vmatpush.xpose.msra.mxu0 0.0
    %3898 = vmatpush.xpose.msra.mxu0 0.0
    %3899 = vmatpush.xpose.msra.mxu0 0.0
    %3900 = vmatpush.xpose.msra.mxu0 0.0
    %3901 = vmatpush.xpose.msra.mxu0 %v785
    %3902 = vmatpush.xpose.msra.mxu0 %v589
    %3903 = vmatpush.xpose.msra.mxu0 %v393
    %3904 = vmatpush.xpose.msra.mxu0 %v197
    %3905 = vmatmul.f32.gmra.mxu0 %v1067
    %v3906 = vpop.f32.mrf.mxu0
    %v3907 = vadd.f32 %v3887, %v3906
    %3908 = vdwg.mxu0
    %3909 = vmatpush.xpose.msra.mxu0 0.0
    %3910 = vmatpush.xpose.msra.mxu0 0.0
    %3911 = vmatpush.xpose.msra.mxu0 0.0
    %3912 = vmatpush.xpose.msra.mxu0 0.0
    %3913 = vmatpush.xpose.msra.mxu0 0.0
    %3914 = vmatpush.xpose.msra.mxu0 0.0
    %3915 = vmatpush.xpose.msra.mxu0 0.0
    %3916 = vmatpush.xpose.msra.mxu0 0.0
    %3917 = vmatpush.xpose.msra.mxu0 0.0
    %3918 = vmatpush.xpose.msra.mxu0 0.0
    %3919 = vmatpush.xpose.msra.mxu0 0.0
    %3920 = vmatpush.xpose.msra.mxu0 0.0
    %3921 = vmatpush.xpose.msra.mxu0 %v786
    %3922 = vmatpush.xpose.msra.mxu0 %v590
    %3923 = vmatpush.xpose.msra.mxu0 %v394
    %3924 = vmatpush.xpose.msra.mxu0 %v198
    %3925 = vmatmul.f32.gmra.mxu0 %v1070
    %v3926 = vpop.f32.mrf.mxu0
    %v3927 = vadd.f32 %v3907, %v3926
    %3928 = vdwg.mxu0
    %3929 = vmatpush.xpose.msra.mxu0 0.0
    %3930 = vmatpush.xpose.msra.mxu0 0.0
    %3931 = vmatpush.xpose.msra.mxu0 0.0
    %3932 = vmatpush.xpose.msra.mxu0 0.0
    %3933 = vmatpush.xpose.msra.mxu0 0.0
    %3934 = vmatpush.xpose.msra.mxu0 0.0
    %3935 = vmatpush.xpose.msra.mxu0 0.0
    %3936 = vmatpush.xpose.msra.mxu0 0.0
    %3937 = vmatpush.xpose.msra.mxu0 0.0
    %3938 = vmatpush.xpose.msra.mxu0 0.0
    %3939 = vmatpush.xpose.msra.mxu0 0.0
    %3940 = vmatpush.xpose.msra.mxu0 0.0
    %3941 = vmatpush.xpose.msra.mxu0 %v787
    %3942 = vmatpush.xpose.msra.mxu0 %v591
    %3943 = vmatpush.xpose.msra.mxu0 %v395
    %3944 = vmatpush.xpose.msra.mxu0 %v199
    %3945 = vmatmul.f32.gmra.mxu0 %v1071
    %v3946 = vpop.f32.mrf.mxu0
    %v3947 = vadd.f32 %v3927, %v3946
    %3948 = vdwg.mxu0
    %3949 = vmatpush.xpose.msra.mxu0 0.0
    %3950 = vmatpush.xpose.msra.mxu0 0.0
    %3951 = vmatpush.xpose.msra.mxu0 0.0
    %3952 = vmatpush.xpose.msra.mxu0 0.0
    %3953 = vmatpush.xpose.msra.mxu0 0.0
    %3954 = vmatpush.xpose.msra.mxu0 0.0
    %3955 = vmatpush.xpose.msra.mxu0 0.0
    %3956 = vmatpush.xpose.msra.mxu0 0.0
    %3957 = vmatpush.xpose.msra.mxu0 0.0
    %3958 = vmatpush.xpose.msra.mxu0 0.0
    %3959 = vmatpush.xpose.msra.mxu0 0.0
    %3960 = vmatpush.xpose.msra.mxu0 0.0
    %3961 = vmatpush.xpose.msra.mxu0 %v788
    %3962 = vmatpush.xpose.msra.mxu0 %v592
    %3963 = vmatpush.xpose.msra.mxu0 %v396
    %3964 = vmatpush.xpose.msra.mxu0 %v200
    %3965 = vmatmul.f32.gmra.mxu0 %v1072
    %v3966 = vpop.f32.mrf.mxu0
    %v3967 = vadd.f32 %v3947, %v3966
    %3968 = vdwg.mxu0
    %3969 = vmatpush.xpose.msra.mxu0 0.0
    %3970 = vmatpush.xpose.msra.mxu0 0.0
    %3971 = vmatpush.xpose.msra.mxu0 0.0
    %3972 = vmatpush.xpose.msra.mxu0 0.0
    %3973 = vmatpush.xpose.msra.mxu0 0.0
    %3974 = vmatpush.xpose.msra.mxu0 0.0
    %3975 = vmatpush.xpose.msra.mxu0 0.0
    %3976 = vmatpush.xpose.msra.mxu0 0.0
    %3977 = vmatpush.xpose.msra.mxu0 0.0
    %3978 = vmatpush.xpose.msra.mxu0 0.0
    %3979 = vmatpush.xpose.msra.mxu0 0.0
    %3980 = vmatpush.xpose.msra.mxu0 0.0
    %3981 = vmatpush.xpose.msra.mxu0 %v789
    %3982 = vmatpush.xpose.msra.mxu0 %v593
    %3983 = vmatpush.xpose.msra.mxu0 %v397
    %3984 = vmatpush.xpose.msra.mxu0 %v201
    %3985 = vmatmul.f32.gmra.mxu0 %v1073
    %v3986 = vpop.f32.mrf.mxu0
    %v3987 = vadd.f32 %v3967, %v3986
    %3988 = vdwg.mxu0
    %3989 = vmatpush.xpose.msra.mxu0 0.0
    %3990 = vmatpush.xpose.msra.mxu0 0.0
    %3991 = vmatpush.xpose.msra.mxu0 0.0
    %3992 = vmatpush.xpose.msra.mxu0 0.0
    %3993 = vmatpush.xpose.msra.mxu0 0.0
    %3994 = vmatpush.xpose.msra.mxu0 0.0
    %3995 = vmatpush.xpose.msra.mxu0 0.0
    %3996 = vmatpush.xpose.msra.mxu0 0.0
    %3997 = vmatpush.xpose.msra.mxu0 0.0
    %3998 = vmatpush.xpose.msra.mxu0 0.0
    %3999 = vmatpush.xpose.msra.mxu0 0.0
    %4000 = vmatpush.xpose.msra.mxu0 0.0
    %4001 = vmatpush.xpose.msra.mxu0 %v790
    %4002 = vmatpush.xpose.msra.mxu0 %v594
    %4003 = vmatpush.xpose.msra.mxu0 %v398
    %4004 = vmatpush.xpose.msra.mxu0 %v202
    %4005 = vmatmul.f32.gmra.mxu0 %v1074
    %v4006 = vpop.f32.mrf.mxu0
    %v4007 = vadd.f32 %v3987, %v4006
    %4008 = vdwg.mxu0
    %4009 = vmatpush.xpose.msra.mxu0 0.0
    %4010 = vmatpush.xpose.msra.mxu0 0.0
    %4011 = vmatpush.xpose.msra.mxu0 0.0
    %4012 = vmatpush.xpose.msra.mxu0 0.0
    %4013 = vmatpush.xpose.msra.mxu0 0.0
    %4014 = vmatpush.xpose.msra.mxu0 0.0
    %4015 = vmatpush.xpose.msra.mxu0 0.0
    %4016 = vmatpush.xpose.msra.mxu0 0.0
    %4017 = vmatpush.xpose.msra.mxu0 0.0
    %4018 = vmatpush.xpose.msra.mxu0 0.0
    %4019 = vmatpush.xpose.msra.mxu0 0.0
    %4020 = vmatpush.xpose.msra.mxu0 0.0
    %4021 = vmatpush.xpose.msra.mxu0 %v791
    %4022 = vmatpush.xpose.msra.mxu0 %v595
    %4023 = vmatpush.xpose.msra.mxu0 %v399
    %4024 = vmatpush.xpose.msra.mxu0 %v203
    %4025 = vmatmul.f32.gmra.mxu0 %v1075
    %v4026 = vpop.f32.mrf.mxu0
    %v4027 = vadd.f32 %v4007, %v4026
    %4028 = vdwg.mxu0
    %4029 = vmatpush.xpose.msra.mxu0 0.0
    %4030 = vmatpush.xpose.msra.mxu0 0.0
    %4031 = vmatpush.xpose.msra.mxu0 0.0
    %4032 = vmatpush.xpose.msra.mxu0 0.0
    %4033 = vmatpush.xpose.msra.mxu0 0.0
    %4034 = vmatpush.xpose.msra.mxu0 0.0
    %4035 = vmatpush.xpose.msra.mxu0 0.0
    %4036 = vmatpush.xpose.msra.mxu0 0.0
    %4037 = vmatpush.xpose.msra.mxu0 0.0
    %4038 = vmatpush.xpose.msra.mxu0 0.0
    %4039 = vmatpush.xpose.msra.mxu0 0.0
    %4040 = vmatpush.xpose.msra.mxu0 0.0
    %4041 = vmatpush.xpose.msra.mxu0 %v792
    %4042 = vmatpush.xpose.msra.mxu0 %v596
    %4043 = vmatpush.xpose.msra.mxu0 %v400
    %4044 = vmatpush.xpose.msra.mxu0 %v204
    %4045 = vmatmul.f32.gmra.mxu0 %v1076
    %v4046 = vpop.f32.mrf.mxu0
    %v4047 = vadd.f32 %v4027, %v4046
    %4048 = vdwg.mxu0
    %4049 = vmatpush.xpose.msra.mxu0 0.0
    %4050 = vmatpush.xpose.msra.mxu0 0.0
    %4051 = vmatpush.xpose.msra.mxu0 0.0
    %4052 = vmatpush.xpose.msra.mxu0 0.0
    %4053 = vmatpush.xpose.msra.mxu0 0.0
    %4054 = vmatpush.xpose.msra.mxu0 0.0
    %4055 = vmatpush.xpose.msra.mxu0 0.0
    %4056 = vmatpush.xpose.msra.mxu0 0.0
    %4057 = vmatpush.xpose.msra.mxu0 0.0
    %4058 = vmatpush.xpose.msra.mxu0 0.0
    %4059 = vmatpush.xpose.msra.mxu0 0.0
    %4060 = vmatpush.xpose.msra.mxu0 0.0
    %4061 = vmatpush.xpose.msra.mxu0 %v793
    %4062 = vmatpush.xpose.msra.mxu0 %v597
    %4063 = vmatpush.xpose.msra.mxu0 %v401
    %4064 = vmatpush.xpose.msra.mxu0 %v205
    %4065 = vmatmul.f32.gmra.mxu0 %v1077
    %v4066 = vpop.f32.mrf.mxu0
    %v4067 = vadd.f32 %v4047, %v4066
    %4068 = vdwg.mxu0
    %4069 = vmatpush.xpose.msra.mxu0 0.0
    %4070 = vmatpush.xpose.msra.mxu0 0.0
    %4071 = vmatpush.xpose.msra.mxu0 0.0
    %4072 = vmatpush.xpose.msra.mxu0 0.0
    %4073 = vmatpush.xpose.msra.mxu0 0.0
    %4074 = vmatpush.xpose.msra.mxu0 0.0
    %4075 = vmatpush.xpose.msra.mxu0 0.0
    %4076 = vmatpush.xpose.msra.mxu0 0.0
    %4077 = vmatpush.xpose.msra.mxu0 0.0
    %4078 = vmatpush.xpose.msra.mxu0 0.0
    %4079 = vmatpush.xpose.msra.mxu0 0.0
    %4080 = vmatpush.xpose.msra.mxu0 0.0
    %4081 = vmatpush.xpose.msra.mxu0 %v794
    %4082 = vmatpush.xpose.msra.mxu0 %v598
    %4083 = vmatpush.xpose.msra.mxu0 %v402
    %4084 = vmatpush.xpose.msra.mxu0 %v206
    %4085 = vmatmul.f32.gmra.mxu0 %v1080
    %v4086 = vpop.f32.mrf.mxu0
    %v4087 = vadd.f32 %v4067, %v4086
    %4088 = vdwg.mxu0
    %4089 = vmatpush.xpose.msra.mxu0 0.0
    %4090 = vmatpush.xpose.msra.mxu0 0.0
    %4091 = vmatpush.xpose.msra.mxu0 0.0
    %4092 = vmatpush.xpose.msra.mxu0 0.0
    %4093 = vmatpush.xpose.msra.mxu0 0.0
    %4094 = vmatpush.xpose.msra.mxu0 0.0
    %4095 = vmatpush.xpose.msra.mxu0 0.0
    %4096 = vmatpush.xpose.msra.mxu0 0.0
    %4097 = vmatpush.xpose.msra.mxu0 0.0
    %4098 = vmatpush.xpose.msra.mxu0 0.0
    %4099 = vmatpush.xpose.msra.mxu0 0.0
    %4100 = vmatpush.xpose.msra.mxu0 0.0
    %4101 = vmatpush.xpose.msra.mxu0 %v795
    %4102 = vmatpush.xpose.msra.mxu0 %v599
    %4103 = vmatpush.xpose.msra.mxu0 %v403
    %4104 = vmatpush.xpose.msra.mxu0 %v207
    %4105 = vmatmul.f32.gmra.mxu0 %v1081
    %v4106 = vpop.f32.mrf.mxu0
    %v4107 = vadd.f32 %v4087, %v4106
    %4108 = vdwg.mxu0
    %4109 = vmatpush.xpose.msra.mxu0 0.0
    %4110 = vmatpush.xpose.msra.mxu0 0.0
    %4111 = vmatpush.xpose.msra.mxu0 0.0
    %4112 = vmatpush.xpose.msra.mxu0 0.0
    %4113 = vmatpush.xpose.msra.mxu0 0.0
    %4114 = vmatpush.xpose.msra.mxu0 0.0
    %4115 = vmatpush.xpose.msra.mxu0 0.0
    %4116 = vmatpush.xpose.msra.mxu0 0.0
    %4117 = vmatpush.xpose.msra.mxu0 0.0
    %4118 = vmatpush.xpose.msra.mxu0 0.0
    %4119 = vmatpush.xpose.msra.mxu0 0.0
    %4120 = vmatpush.xpose.msra.mxu0 0.0
    %4121 = vmatpush.xpose.msra.mxu0 %v796
    %4122 = vmatpush.xpose.msra.mxu0 %v600
    %4123 = vmatpush.xpose.msra.mxu0 %v404
    %4124 = vmatpush.xpose.msra.mxu0 %v208
    %4125 = vmatmul.f32.gmra.mxu0 %v1082
    %v4126 = vpop.f32.mrf.mxu0
    %v4127 = vadd.f32 %v4107, %v4126
    %4128 = vdwg.mxu0
    %4129 = vmatpush.xpose.msra.mxu0 0.0
    %4130 = vmatpush.xpose.msra.mxu0 0.0
    %4131 = vmatpush.xpose.msra.mxu0 0.0
    %4132 = vmatpush.xpose.msra.mxu0 0.0
    %4133 = vmatpush.xpose.msra.mxu0 0.0
    %4134 = vmatpush.xpose.msra.mxu0 0.0
    %4135 = vmatpush.xpose.msra.mxu0 0.0
    %4136 = vmatpush.xpose.msra.mxu0 0.0
    %4137 = vmatpush.xpose.msra.mxu0 0.0
    %4138 = vmatpush.xpose.msra.mxu0 0.0
    %4139 = vmatpush.xpose.msra.mxu0 0.0
    %4140 = vmatpush.xpose.msra.mxu0 0.0
    %4141 = vmatpush.xpose.msra.mxu0 %v797
    %4142 = vmatpush.xpose.msra.mxu0 %v601
    %4143 = vmatpush.xpose.msra.mxu0 %v405
    %4144 = vmatpush.xpose.msra.mxu0 %v209
    %4145 = vmatmul.f32.gmra.mxu0 %v1083
    %v4146 = vpop.f32.mrf.mxu0
    %v4147 = vadd.f32 %v4127, %v4146
    %4148 = vdwg.mxu0
    %4149 = vmatpush.xpose.msra.mxu0 0.0
    %4150 = vmatpush.xpose.msra.mxu0 0.0
    %4151 = vmatpush.xpose.msra.mxu0 0.0
    %4152 = vmatpush.xpose.msra.mxu0 0.0
    %4153 = vmatpush.xpose.msra.mxu0 0.0
    %4154 = vmatpush.xpose.msra.mxu0 0.0
    %4155 = vmatpush.xpose.msra.mxu0 0.0
    %4156 = vmatpush.xpose.msra.mxu0 0.0
    %4157 = vmatpush.xpose.msra.mxu0 0.0
    %4158 = vmatpush.xpose.msra.mxu0 0.0
    %4159 = vmatpush.xpose.msra.mxu0 0.0
    %4160 = vmatpush.xpose.msra.mxu0 0.0
    %4161 = vmatpush.xpose.msra.mxu0 %v798
    %4162 = vmatpush.xpose.msra.mxu0 %v602
    %4163 = vmatpush.xpose.msra.mxu0 %v406
    %4164 = vmatpush.xpose.msra.mxu0 %v210
    %4165 = vmatmul.f32.gmra.mxu0 %v1084
    %v4166 = vpop.f32.mrf.mxu0
    %v4167 = vadd.f32 %v4147, %v4166
    %4168 = vdwg.mxu0
    %4169 = vmatpush.xpose.msra.mxu0 0.0
    %4170 = vmatpush.xpose.msra.mxu0 0.0
    %4171 = vmatpush.xpose.msra.mxu0 0.0
    %4172 = vmatpush.xpose.msra.mxu0 0.0
    %4173 = vmatpush.xpose.msra.mxu0 0.0
    %4174 = vmatpush.xpose.msra.mxu0 0.0
    %4175 = vmatpush.xpose.msra.mxu0 0.0
    %4176 = vmatpush.xpose.msra.mxu0 0.0
    %4177 = vmatpush.xpose.msra.mxu0 0.0
    %4178 = vmatpush.xpose.msra.mxu0 0.0
    %4179 = vmatpush.xpose.msra.mxu0 0.0
    %4180 = vmatpush.xpose.msra.mxu0 0.0
    %4181 = vmatpush.xpose.msra.mxu0 %v799
    %4182 = vmatpush.xpose.msra.mxu0 %v603
    %4183 = vmatpush.xpose.msra.mxu0 %v407
    %4184 = vmatpush.xpose.msra.mxu0 %v211
    %4185 = vmatmul.f32.gmra.mxu0 %v1085
    %v4186 = vpop.f32.mrf.mxu0
    %v4187 = vadd.f32 %v4167, %v4186
    %4188 = vdwg.mxu0
    %4189 = vmatpush.xpose.msra.mxu0 0.0
    %4190 = vmatpush.xpose.msra.mxu0 0.0
    %4191 = vmatpush.xpose.msra.mxu0 0.0
    %4192 = vmatpush.xpose.msra.mxu0 0.0
    %4193 = vmatpush.xpose.msra.mxu0 0.0
    %4194 = vmatpush.xpose.msra.mxu0 0.0
    %4195 = vmatpush.xpose.msra.mxu0 0.0
    %4196 = vmatpush.xpose.msra.mxu0 0.0
    %4197 = vmatpush.xpose.msra.mxu0 0.0
    %4198 = vmatpush.xpose.msra.mxu0 0.0
    %4199 = vmatpush.xpose.msra.mxu0 0.0
    %4200 = vmatpush.xpose.msra.mxu0 0.0
    %4201 = vmatpush.xpose.msra.mxu0 %v800
    %4202 = vmatpush.xpose.msra.mxu0 %v604
    %4203 = vmatpush.xpose.msra.mxu0 %v408
    %4204 = vmatpush.xpose.msra.mxu0 %v212
    %4205 = vmatmul.f32.gmra.mxu0 %v1086
    %v4206 = vpop.f32.mrf.mxu0
    %v4207 = vadd.f32 %v4187, %v4206
    %4208 = vdwg.mxu0
    %4209 = vmatpush.xpose.msra.mxu0 0.0
    %4210 = vmatpush.xpose.msra.mxu0 0.0
    %4211 = vmatpush.xpose.msra.mxu0 0.0
    %4212 = vmatpush.xpose.msra.mxu0 0.0
    %4213 = vmatpush.xpose.msra.mxu0 0.0
    %4214 = vmatpush.xpose.msra.mxu0 0.0
    %4215 = vmatpush.xpose.msra.mxu0 0.0
    %4216 = vmatpush.xpose.msra.mxu0 0.0
    %4217 = vmatpush.xpose.msra.mxu0 0.0
    %4218 = vmatpush.xpose.msra.mxu0 0.0
    %4219 = vmatpush.xpose.msra.mxu0 0.0
    %4220 = vmatpush.xpose.msra.mxu0 0.0
    %4221 = vmatpush.xpose.msra.mxu0 %v801
    %4222 = vmatpush.xpose.msra.mxu0 %v605
    %4223 = vmatpush.xpose.msra.mxu0 %v409
    %4224 = vmatpush.xpose.msra.mxu0 %v213
    %4225 = vmatmul.f32.gmra.mxu0 %v1087
    %v4226 = vpop.f32.mrf.mxu0
    %v4227 = vadd.f32 %v4207, %v4226
    %4228 = vdwg.mxu0
    %4229 = vmatpush.xpose.msra.mxu0 0.0
    %4230 = vmatpush.xpose.msra.mxu0 0.0
    %4231 = vmatpush.xpose.msra.mxu0 0.0
    %4232 = vmatpush.xpose.msra.mxu0 0.0
    %4233 = vmatpush.xpose.msra.mxu0 0.0
    %4234 = vmatpush.xpose.msra.mxu0 0.0
    %4235 = vmatpush.xpose.msra.mxu0 0.0
    %4236 = vmatpush.xpose.msra.mxu0 0.0
    %4237 = vmatpush.xpose.msra.mxu0 0.0
    %4238 = vmatpush.xpose.msra.mxu0 0.0
    %4239 = vmatpush.xpose.msra.mxu0 0.0
    %4240 = vmatpush.xpose.msra.mxu0 0.0
    %4241 = vmatpush.xpose.msra.mxu0 %v802
    %4242 = vmatpush.xpose.msra.mxu0 %v606
    %4243 = vmatpush.xpose.msra.mxu0 %v410
    %4244 = vmatpush.xpose.msra.mxu0 %v214
    %4245 = vmatmul.f32.gmra.mxu0 %v1090
    %v4246 = vpop.f32.mrf.mxu0
    %v4247 = vadd.f32 %v4227, %v4246
    %4248 = vdwg.mxu0
    %4249 = vmatpush.xpose.msra.mxu0 0.0
    %4250 = vmatpush.xpose.msra.mxu0 0.0
    %4251 = vmatpush.xpose.msra.mxu0 0.0
    %4252 = vmatpush.xpose.msra.mxu0 0.0
    %4253 = vmatpush.xpose.msra.mxu0 0.0
    %4254 = vmatpush.xpose.msra.mxu0 0.0
    %4255 = vmatpush.xpose.msra.mxu0 0.0
    %4256 = vmatpush.xpose.msra.mxu0 0.0
    %4257 = vmatpush.xpose.msra.mxu0 0.0
    %4258 = vmatpush.xpose.msra.mxu0 0.0
    %4259 = vmatpush.xpose.msra.mxu0 0.0
    %4260 = vmatpush.xpose.msra.mxu0 0.0
    %4261 = vmatpush.xpose.msra.mxu0 %v803
    %4262 = vmatpush.xpose.msra.mxu0 %v607
    %4263 = vmatpush.xpose.msra.mxu0 %v411
    %4264 = vmatpush.xpose.msra.mxu0 %v215
    %4265 = vmatmul.f32.gmra.mxu0 %v1091
    %v4266 = vpop.f32.mrf.mxu0
    %v4267 = vadd.f32 %v4247, %v4266
    %4268 = vdwg.mxu0
    %4269 = vmatpush.xpose.msra.mxu0 0.0
    %4270 = vmatpush.xpose.msra.mxu0 0.0
    %4271 = vmatpush.xpose.msra.mxu0 0.0
    %4272 = vmatpush.xpose.msra.mxu0 0.0
    %4273 = vmatpush.xpose.msra.mxu0 0.0
    %4274 = vmatpush.xpose.msra.mxu0 0.0
    %4275 = vmatpush.xpose.msra.mxu0 0.0
    %4276 = vmatpush.xpose.msra.mxu0 0.0
    %4277 = vmatpush.xpose.msra.mxu0 0.0
    %4278 = vmatpush.xpose.msra.mxu0 0.0
    %4279 = vmatpush.xpose.msra.mxu0 0.0
    %4280 = vmatpush.xpose.msra.mxu0 0.0
    %4281 = vmatpush.xpose.msra.mxu0 %v804
    %4282 = vmatpush.xpose.msra.mxu0 %v608
    %4283 = vmatpush.xpose.msra.mxu0 %v412
    %4284 = vmatpush.xpose.msra.mxu0 %v216
    %4285 = vmatmul.f32.gmra.mxu0 %v1092
    %v4286 = vpop.f32.mrf.mxu0
    %v4287 = vadd.f32 %v4267, %v4286
    %4288 = vdwg.mxu0
    %4289 = vmatpush.xpose.msra.mxu0 0.0
    %4290 = vmatpush.xpose.msra.mxu0 0.0
    %4291 = vmatpush.xpose.msra.mxu0 0.0
    %4292 = vmatpush.xpose.msra.mxu0 0.0
    %4293 = vmatpush.xpose.msra.mxu0 0.0
    %4294 = vmatpush.xpose.msra.mxu0 0.0
    %4295 = vmatpush.xpose.msra.mxu0 0.0
    %4296 = vmatpush.xpose.msra.mxu0 0.0
    %4297 = vmatpush.xpose.msra.mxu0 0.0
    %4298 = vmatpush.xpose.msra.mxu0 0.0
    %4299 = vmatpush.xpose.msra.mxu0 0.0
    %4300 = vmatpush.xpose.msra.mxu0 0.0
    %4301 = vmatpush.xpose.msra.mxu0 %v805
    %4302 = vmatpush.xpose.msra.mxu0 %v609
    %4303 = vmatpush.xpose.msra.mxu0 %v413
    %4304 = vmatpush.xpose.msra.mxu0 %v217
    %4305 = vmatmul.f32.gmra.mxu0 %v1093
    %v4306 = vpop.f32.mrf.mxu0
    %v4307 = vadd.f32 %v4287, %v4306
    %4308 = vdwg.mxu0
    %4309 = vmatpush.xpose.msra.mxu0 0.0
    %4310 = vmatpush.xpose.msra.mxu0 0.0
    %4311 = vmatpush.xpose.msra.mxu0 0.0
    %4312 = vmatpush.xpose.msra.mxu0 0.0
    %4313 = vmatpush.xpose.msra.mxu0 0.0
    %4314 = vmatpush.xpose.msra.mxu0 0.0
    %4315 = vmatpush.xpose.msra.mxu0 0.0
    %4316 = vmatpush.xpose.msra.mxu0 0.0
    %4317 = vmatpush.xpose.msra.mxu0 0.0
    %4318 = vmatpush.xpose.msra.mxu0 0.0
    %4319 = vmatpush.xpose.msra.mxu0 0.0
    %4320 = vmatpush.xpose.msra.mxu0 0.0
    %4321 = vmatpush.xpose.msra.mxu0 %v806
    %4322 = vmatpush.xpose.msra.mxu0 %v610
    %4323 = vmatpush.xpose.msra.mxu0 %v414
    %4324 = vmatpush.xpose.msra.mxu0 %v218
    %4325 = vmatmul.f32.gmra.mxu0 %v1094
    %v4326 = vpop.f32.mrf.mxu0
    %v4327 = vadd.f32 %v4307, %v4326
    %4328 = vdwg.mxu0
    %4329 = vmatpush.xpose.msra.mxu0 0.0
    %4330 = vmatpush.xpose.msra.mxu0 0.0
    %4331 = vmatpush.xpose.msra.mxu0 0.0
    %4332 = vmatpush.xpose.msra.mxu0 0.0
    %4333 = vmatpush.xpose.msra.mxu0 0.0
    %4334 = vmatpush.xpose.msra.mxu0 0.0
    %4335 = vmatpush.xpose.msra.mxu0 0.0
    %4336 = vmatpush.xpose.msra.mxu0 0.0
    %4337 = vmatpush.xpose.msra.mxu0 0.0
    %4338 = vmatpush.xpose.msra.mxu0 0.0
    %4339 = vmatpush.xpose.msra.mxu0 0.0
    %4340 = vmatpush.xpose.msra.mxu0 0.0
    %4341 = vmatpush.xpose.msra.mxu0 %v807
    %4342 = vmatpush.xpose.msra.mxu0 %v611
    %4343 = vmatpush.xpose.msra.mxu0 %v415
    %4344 = vmatpush.xpose.msra.mxu0 %v219
    %4345 = vmatmul.f32.gmra.mxu0 %v1095
    %v4346 = vpop.f32.mrf.mxu0
    %v4347 = vadd.f32 %v4327, %v4346
    %4348 = vdwg.mxu0
    %4349 = vmatpush.xpose.msra.mxu0 0.0
    %4350 = vmatpush.xpose.msra.mxu0 0.0
    %4351 = vmatpush.xpose.msra.mxu0 0.0
    %4352 = vmatpush.xpose.msra.mxu0 0.0
    %4353 = vmatpush.xpose.msra.mxu0 0.0
    %4354 = vmatpush.xpose.msra.mxu0 0.0
    %4355 = vmatpush.xpose.msra.mxu0 0.0
    %4356 = vmatpush.xpose.msra.mxu0 0.0
    %4357 = vmatpush.xpose.msra.mxu0 0.0
    %4358 = vmatpush.xpose.msra.mxu0 0.0
    %4359 = vmatpush.xpose.msra.mxu0 0.0
    %4360 = vmatpush.xpose.msra.mxu0 0.0
    %4361 = vmatpush.xpose.msra.mxu0 %v808
    %4362 = vmatpush.xpose.msra.mxu0 %v612
    %4363 = vmatpush.xpose.msra.mxu0 %v416
    %4364 = vmatpush.xpose.msra.mxu0 %v220
    %4365 = vmatmul.f32.gmra.mxu0 %v1096
    %v4366 = vpop.f32.mrf.mxu0
    %v4367 = vadd.f32 %v4347, %v4366
    %4368 = vdwg.mxu0
    %4369 = vmatpush.xpose.msra.mxu0 0.0
    %4370 = vmatpush.xpose.msra.mxu0 0.0
    %4371 = vmatpush.xpose.msra.mxu0 0.0
    %4372 = vmatpush.xpose.msra.mxu0 0.0
    %4373 = vmatpush.xpose.msra.mxu0 0.0
    %4374 = vmatpush.xpose.msra.mxu0 0.0
    %4375 = vmatpush.xpose.msra.mxu0 0.0
    %4376 = vmatpush.xpose.msra.mxu0 0.0
    %4377 = vmatpush.xpose.msra.mxu0 0.0
    %4378 = vmatpush.xpose.msra.mxu0 0.0
    %4379 = vmatpush.xpose.msra.mxu0 0.0
    %4380 = vmatpush.xpose.msra.mxu0 0.0
    %4381 = vmatpush.xpose.msra.mxu0 %v809
    %4382 = vmatpush.xpose.msra.mxu0 %v613
    %4383 = vmatpush.xpose.msra.mxu0 %v417
    %4384 = vmatpush.xpose.msra.mxu0 %v221
    %4385 = vmatmul.f32.gmra.mxu0 %v1097
    %v4386 = vpop.f32.mrf.mxu0
    %v4387 = vadd.f32 %v4367, %v4386
    %4388 = vdwg.mxu0
    %4389 = vmatpush.xpose.msra.mxu0 0.0
    %4390 = vmatpush.xpose.msra.mxu0 0.0
    %4391 = vmatpush.xpose.msra.mxu0 0.0
    %4392 = vmatpush.xpose.msra.mxu0 0.0
    %4393 = vmatpush.xpose.msra.mxu0 0.0
    %4394 = vmatpush.xpose.msra.mxu0 0.0
    %4395 = vmatpush.xpose.msra.mxu0 0.0
    %4396 = vmatpush.xpose.msra.mxu0 0.0
    %4397 = vmatpush.xpose.msra.mxu0 0.0
    %4398 = vmatpush.xpose.msra.mxu0 0.0
    %4399 = vmatpush.xpose.msra.mxu0 0.0
    %4400 = vmatpush.xpose.msra.mxu0 0.0
    %4401 = vmatpush.xpose.msra.mxu0 %v810
    %4402 = vmatpush.xpose.msra.mxu0 %v614
    %4403 = vmatpush.xpose.msra.mxu0 %v418
    %4404 = vmatpush.xpose.msra.mxu0 %v222
    %4405 = vmatmul.f32.gmra.mxu0 %v1100
    %v4406 = vpop.f32.mrf.mxu0
    %v4407 = vadd.f32 %v4387, %v4406
    %4408 = vdwg.mxu0
    %4409 = vmatpush.xpose.msra.mxu0 0.0
    %4410 = vmatpush.xpose.msra.mxu0 0.0
    %4411 = vmatpush.xpose.msra.mxu0 0.0
    %4412 = vmatpush.xpose.msra.mxu0 0.0
    %4413 = vmatpush.xpose.msra.mxu0 0.0
    %4414 = vmatpush.xpose.msra.mxu0 0.0
    %4415 = vmatpush.xpose.msra.mxu0 0.0
    %4416 = vmatpush.xpose.msra.mxu0 0.0
    %4417 = vmatpush.xpose.msra.mxu0 0.0
    %4418 = vmatpush.xpose.msra.mxu0 0.0
    %4419 = vmatpush.xpose.msra.mxu0 0.0
    %4420 = vmatpush.xpose.msra.mxu0 0.0
    %4421 = vmatpush.xpose.msra.mxu0 %v811
    %4422 = vmatpush.xpose.msra.mxu0 %v615
    %4423 = vmatpush.xpose.msra.mxu0 %v419
    %4424 = vmatpush.xpose.msra.mxu0 %v223
    %4425 = vmatmul.f32.gmra.mxu0 %v1101
    %v4426 = vpop.f32.mrf.mxu0
    %v4427 = vadd.f32 %v4407, %v4426
    %4428 = vdwg.mxu0
    %4429 = vmatpush.xpose.msra.mxu0 0.0
    %4430 = vmatpush.xpose.msra.mxu0 0.0
    %4431 = vmatpush.xpose.msra.mxu0 0.0
    %4432 = vmatpush.xpose.msra.mxu0 0.0
    %4433 = vmatpush.xpose.msra.mxu0 0.0
    %4434 = vmatpush.xpose.msra.mxu0 0.0
    %4435 = vmatpush.xpose.msra.mxu0 0.0
    %4436 = vmatpush.xpose.msra.mxu0 0.0
    %4437 = vmatpush.xpose.msra.mxu0 0.0
    %4438 = vmatpush.xpose.msra.mxu0 0.0
    %4439 = vmatpush.xpose.msra.mxu0 0.0
    %4440 = vmatpush.xpose.msra.mxu0 0.0
    %4441 = vmatpush.xpose.msra.mxu0 %v812
    %4442 = vmatpush.xpose.msra.mxu0 %v616
    %4443 = vmatpush.xpose.msra.mxu0 %v420
    %4444 = vmatpush.xpose.msra.mxu0 %v224
    %4445 = vmatmul.f32.gmra.mxu0 %v1102
    %v4446 = vpop.f32.mrf.mxu0
    %v4447 = vadd.f32 %v4427, %v4446
    %4448 = vdwg.mxu0
    %4449 = vmatpush.xpose.msra.mxu0 0.0
    %4450 = vmatpush.xpose.msra.mxu0 0.0
    %4451 = vmatpush.xpose.msra.mxu0 0.0
    %4452 = vmatpush.xpose.msra.mxu0 0.0
    %4453 = vmatpush.xpose.msra.mxu0 0.0
    %4454 = vmatpush.xpose.msra.mxu0 0.0
    %4455 = vmatpush.xpose.msra.mxu0 0.0
    %4456 = vmatpush.xpose.msra.mxu0 0.0
    %4457 = vmatpush.xpose.msra.mxu0 0.0
    %4458 = vmatpush.xpose.msra.mxu0 0.0
    %4459 = vmatpush.xpose.msra.mxu0 0.0
    %4460 = vmatpush.xpose.msra.mxu0 0.0
    %4461 = vmatpush.xpose.msra.mxu0 %v813
    %4462 = vmatpush.xpose.msra.mxu0 %v617
    %4463 = vmatpush.xpose.msra.mxu0 %v421
    %4464 = vmatpush.xpose.msra.mxu0 %v225
    %4465 = vmatmul.f32.gmra.mxu0 %v1103
    %v4466 = vpop.f32.mrf.mxu0
    %v4467 = vadd.f32 %v4447, %v4466
    %4468 = vdwg.mxu0
    %4469 = vmatpush.xpose.msra.mxu0 0.0
    %4470 = vmatpush.xpose.msra.mxu0 0.0
    %4471 = vmatpush.xpose.msra.mxu0 0.0
    %4472 = vmatpush.xpose.msra.mxu0 0.0
    %4473 = vmatpush.xpose.msra.mxu0 0.0
    %4474 = vmatpush.xpose.msra.mxu0 0.0
    %4475 = vmatpush.xpose.msra.mxu0 0.0
    %4476 = vmatpush.xpose.msra.mxu0 0.0
    %4477 = vmatpush.xpose.msra.mxu0 0.0
    %4478 = vmatpush.xpose.msra.mxu0 0.0
    %4479 = vmatpush.xpose.msra.mxu0 0.0
    %4480 = vmatpush.xpose.msra.mxu0 0.0
    %4481 = vmatpush.xpose.msra.mxu0 %v814
    %4482 = vmatpush.xpose.msra.mxu0 %v618
    %4483 = vmatpush.xpose.msra.mxu0 %v422
    %4484 = vmatpush.xpose.msra.mxu0 %v226
    %4485 = vmatmul.f32.gmra.mxu0 %v1104
    %v4486 = vpop.f32.mrf.mxu0
    %v4487 = vadd.f32 %v4467, %v4486
    %4488 = vdwg.mxu0
    %4489 = vmatpush.xpose.msra.mxu0 0.0
    %4490 = vmatpush.xpose.msra.mxu0 0.0
    %4491 = vmatpush.xpose.msra.mxu0 0.0
    %4492 = vmatpush.xpose.msra.mxu0 0.0
    %4493 = vmatpush.xpose.msra.mxu0 0.0
    %4494 = vmatpush.xpose.msra.mxu0 0.0
    %4495 = vmatpush.xpose.msra.mxu0 0.0
    %4496 = vmatpush.xpose.msra.mxu0 0.0
    %4497 = vmatpush.xpose.msra.mxu0 0.0
    %4498 = vmatpush.xpose.msra.mxu0 0.0
    %4499 = vmatpush.xpose.msra.mxu0 0.0
    %4500 = vmatpush.xpose.msra.mxu0 0.0
    %4501 = vmatpush.xpose.msra.mxu0 %v815
    %4502 = vmatpush.xpose.msra.mxu0 %v619
    %4503 = vmatpush.xpose.msra.mxu0 %v423
    %4504 = vmatpush.xpose.msra.mxu0 %v227
    %4505 = vmatmul.f32.gmra.mxu0 %v1105
    %v4506 = vpop.f32.mrf.mxu0
    %v4507 = vadd.f32 %v4487, %v4506
    %4508 = vdwg.mxu0
    %4509 = vmatpush.xpose.msra.mxu0 0.0
    %4510 = vmatpush.xpose.msra.mxu0 0.0
    %4511 = vmatpush.xpose.msra.mxu0 0.0
    %4512 = vmatpush.xpose.msra.mxu0 0.0
    %4513 = vmatpush.xpose.msra.mxu0 0.0
    %4514 = vmatpush.xpose.msra.mxu0 0.0
    %4515 = vmatpush.xpose.msra.mxu0 0.0
    %4516 = vmatpush.xpose.msra.mxu0 0.0
    %4517 = vmatpush.xpose.msra.mxu0 0.0
    %4518 = vmatpush.xpose.msra.mxu0 0.0
    %4519 = vmatpush.xpose.msra.mxu0 0.0
    %4520 = vmatpush.xpose.msra.mxu0 0.0
    %4521 = vmatpush.xpose.msra.mxu0 %v816
    %4522 = vmatpush.xpose.msra.mxu0 %v620
    %4523 = vmatpush.xpose.msra.mxu0 %v424
    %4524 = vmatpush.xpose.msra.mxu0 %v228
    %4525 = vmatmul.f32.gmra.mxu0 %v1106
    %v4526 = vpop.f32.mrf.mxu0
    %v4527 = vadd.f32 %v4507, %v4526
    %4528 = vdwg.mxu0
    %4529 = vmatpush.xpose.msra.mxu0 0.0
    %4530 = vmatpush.xpose.msra.mxu0 0.0
    %4531 = vmatpush.xpose.msra.mxu0 0.0
    %4532 = vmatpush.xpose.msra.mxu0 0.0
    %4533 = vmatpush.xpose.msra.mxu0 0.0
    %4534 = vmatpush.xpose.msra.mxu0 0.0
    %4535 = vmatpush.xpose.msra.mxu0 0.0
    %4536 = vmatpush.xpose.msra.mxu0 0.0
    %4537 = vmatpush.xpose.msra.mxu0 0.0
    %4538 = vmatpush.xpose.msra.mxu0 0.0
    %4539 = vmatpush.xpose.msra.mxu0 0.0
    %4540 = vmatpush.xpose.msra.mxu0 0.0
    %4541 = vmatpush.xpose.msra.mxu0 %v817
    %4542 = vmatpush.xpose.msra.mxu0 %v621
    %4543 = vmatpush.xpose.msra.mxu0 %v425
    %4544 = vmatpush.xpose.msra.mxu0 %v229
    %4545 = vmatmul.f32.gmra.mxu0 %v1107
    %v4546 = vpop.f32.mrf.mxu0
    %v4547 = vadd.f32 %v4527, %v4546
    %4548 = vdwg.mxu0
    %4549 = vmatpush.xpose.msra.mxu0 0.0
    %4550 = vmatpush.xpose.msra.mxu0 0.0
    %4551 = vmatpush.xpose.msra.mxu0 0.0
    %4552 = vmatpush.xpose.msra.mxu0 0.0
    %4553 = vmatpush.xpose.msra.mxu0 0.0
    %4554 = vmatpush.xpose.msra.mxu0 0.0
    %4555 = vmatpush.xpose.msra.mxu0 0.0
    %4556 = vmatpush.xpose.msra.mxu0 0.0
    %4557 = vmatpush.xpose.msra.mxu0 0.0
    %4558 = vmatpush.xpose.msra.mxu0 0.0
    %4559 = vmatpush.xpose.msra.mxu0 0.0
    %4560 = vmatpush.xpose.msra.mxu0 0.0
    %4561 = vmatpush.xpose.msra.mxu0 %v818
    %4562 = vmatpush.xpose.msra.mxu0 %v622
    %4563 = vmatpush.xpose.msra.mxu0 %v426
    %4564 = vmatpush.xpose.msra.mxu0 %v230
    %4565 = vmatmul.f32.gmra.mxu0 %v1110
    %v4566 = vpop.f32.mrf.mxu0
    %v4567 = vadd.f32 %v4547, %v4566
    %4568 = vdwg.mxu0
    %4569 = vmatpush.xpose.msra.mxu0 0.0
    %4570 = vmatpush.xpose.msra.mxu0 0.0
    %4571 = vmatpush.xpose.msra.mxu0 0.0
    %4572 = vmatpush.xpose.msra.mxu0 0.0
    %4573 = vmatpush.xpose.msra.mxu0 0.0
    %4574 = vmatpush.xpose.msra.mxu0 0.0
    %4575 = vmatpush.xpose.msra.mxu0 0.0
    %4576 = vmatpush.xpose.msra.mxu0 0.0
    %4577 = vmatpush.xpose.msra.mxu0 0.0
    %4578 = vmatpush.xpose.msra.mxu0 0.0
    %4579 = vmatpush.xpose.msra.mxu0 0.0
    %4580 = vmatpush.xpose.msra.mxu0 0.0
    %4581 = vmatpush.xpose.msra.mxu0 %v819
    %4582 = vmatpush.xpose.msra.mxu0 %v623
    %4583 = vmatpush.xpose.msra.mxu0 %v427
    %4584 = vmatpush.xpose.msra.mxu0 %v231
    %4585 = vmatmul.f32.gmra.mxu0 %v1111
    %v4586 = vpop.f32.mrf.mxu0
    %v4587 = vadd.f32 %v4567, %v4586
    %4588 = vdwg.mxu0
    %4589 = vmatpush.xpose.msra.mxu0 0.0
    %4590 = vmatpush.xpose.msra.mxu0 0.0
    %4591 = vmatpush.xpose.msra.mxu0 0.0
    %4592 = vmatpush.xpose.msra.mxu0 0.0
    %4593 = vmatpush.xpose.msra.mxu0 0.0
    %4594 = vmatpush.xpose.msra.mxu0 0.0
    %4595 = vmatpush.xpose.msra.mxu0 0.0
    %4596 = vmatpush.xpose.msra.mxu0 0.0
    %4597 = vmatpush.xpose.msra.mxu0 0.0
    %4598 = vmatpush.xpose.msra.mxu0 0.0
    %4599 = vmatpush.xpose.msra.mxu0 0.0
    %4600 = vmatpush.xpose.msra.mxu0 0.0
    %4601 = vmatpush.xpose.msra.mxu0 %v820
    %4602 = vmatpush.xpose.msra.mxu0 %v624
    %4603 = vmatpush.xpose.msra.mxu0 %v428
    %4604 = vmatpush.xpose.msra.mxu0 %v232
    %4605 = vmatmul.f32.gmra.mxu0 %v1112
    %v4606 = vpop.f32.mrf.mxu0
    %v4607 = vadd.f32 %v4587, %v4606
    %4608 = vdwg.mxu0
    %4609 = vmatpush.xpose.msra.mxu0 0.0
    %4610 = vmatpush.xpose.msra.mxu0 0.0
    %4611 = vmatpush.xpose.msra.mxu0 0.0
    %4612 = vmatpush.xpose.msra.mxu0 0.0
    %4613 = vmatpush.xpose.msra.mxu0 0.0
    %4614 = vmatpush.xpose.msra.mxu0 0.0
    %4615 = vmatpush.xpose.msra.mxu0 0.0
    %4616 = vmatpush.xpose.msra.mxu0 0.0
    %4617 = vmatpush.xpose.msra.mxu0 0.0
    %4618 = vmatpush.xpose.msra.mxu0 0.0
    %4619 = vmatpush.xpose.msra.mxu0 0.0
    %4620 = vmatpush.xpose.msra.mxu0 0.0
    %4621 = vmatpush.xpose.msra.mxu0 %v821
    %4622 = vmatpush.xpose.msra.mxu0 %v625
    %4623 = vmatpush.xpose.msra.mxu0 %v429
    %4624 = vmatpush.xpose.msra.mxu0 %v233
    %4625 = vmatmul.f32.gmra.mxu0 %v1113
    %v4626 = vpop.f32.mrf.mxu0
    %v4627 = vadd.f32 %v4607, %v4626
    %4628 = vdwg.mxu0
    %4629 = vmatpush.xpose.msra.mxu0 0.0
    %4630 = vmatpush.xpose.msra.mxu0 0.0
    %4631 = vmatpush.xpose.msra.mxu0 0.0
    %4632 = vmatpush.xpose.msra.mxu0 0.0
    %4633 = vmatpush.xpose.msra.mxu0 0.0
    %4634 = vmatpush.xpose.msra.mxu0 0.0
    %4635 = vmatpush.xpose.msra.mxu0 0.0
    %4636 = vmatpush.xpose.msra.mxu0 0.0
    %4637 = vmatpush.xpose.msra.mxu0 0.0
    %4638 = vmatpush.xpose.msra.mxu0 0.0
    %4639 = vmatpush.xpose.msra.mxu0 0.0
    %4640 = vmatpush.xpose.msra.mxu0 0.0
    %4641 = vmatpush.xpose.msra.mxu0 %v822
    %4642 = vmatpush.xpose.msra.mxu0 %v626
    %4643 = vmatpush.xpose.msra.mxu0 %v430
    %4644 = vmatpush.xpose.msra.mxu0 %v234
    %4645 = vmatmul.f32.gmra.mxu0 %v1114
    %v4646 = vpop.f32.mrf.mxu0
    %v4647 = vadd.f32 %v4627, %v4646
    %4648 = vdwg.mxu0
    %4649 = vmatpush.xpose.msra.mxu0 0.0
    %4650 = vmatpush.xpose.msra.mxu0 0.0
    %4651 = vmatpush.xpose.msra.mxu0 0.0
    %4652 = vmatpush.xpose.msra.mxu0 0.0
    %4653 = vmatpush.xpose.msra.mxu0 0.0
    %4654 = vmatpush.xpose.msra.mxu0 0.0
    %4655 = vmatpush.xpose.msra.mxu0 0.0
    %4656 = vmatpush.xpose.msra.mxu0 0.0
    %4657 = vmatpush.xpose.msra.mxu0 0.0
    %4658 = vmatpush.xpose.msra.mxu0 0.0
    %4659 = vmatpush.xpose.msra.mxu0 0.0
    %4660 = vmatpush.xpose.msra.mxu0 0.0
    %4661 = vmatpush.xpose.msra.mxu0 %v823
    %4662 = vmatpush.xpose.msra.mxu0 %v627
    %4663 = vmatpush.xpose.msra.mxu0 %v431
    %4664 = vmatpush.xpose.msra.mxu0 %v235
    %4665 = vmatmul.f32.gmra.mxu0 %v1115
    %v4666 = vpop.f32.mrf.mxu0
    %v4667 = vadd.f32 %v4647, %v4666
    %4668 = vdwg.mxu0
    %4669 = vmatpush.xpose.msra.mxu0 0.0
    %4670 = vmatpush.xpose.msra.mxu0 0.0
    %4671 = vmatpush.xpose.msra.mxu0 0.0
    %4672 = vmatpush.xpose.msra.mxu0 0.0
    %4673 = vmatpush.xpose.msra.mxu0 0.0
    %4674 = vmatpush.xpose.msra.mxu0 0.0
    %4675 = vmatpush.xpose.msra.mxu0 0.0
    %4676 = vmatpush.xpose.msra.mxu0 0.0
    %4677 = vmatpush.xpose.msra.mxu0 0.0
    %4678 = vmatpush.xpose.msra.mxu0 0.0
    %4679 = vmatpush.xpose.msra.mxu0 0.0
    %4680 = vmatpush.xpose.msra.mxu0 0.0
    %4681 = vmatpush.xpose.msra.mxu0 %v824
    %4682 = vmatpush.xpose.msra.mxu0 %v628
    %4683 = vmatpush.xpose.msra.mxu0 %v432
    %4684 = vmatpush.xpose.msra.mxu0 %v236
    %4685 = vmatmul.f32.gmra.mxu0 %v1116
    %v4686 = vpop.f32.mrf.mxu0
    %v4687 = vadd.f32 %v4667, %v4686
    %4688 = vdwg.mxu0
    %4689 = vmatpush.xpose.msra.mxu0 0.0
    %4690 = vmatpush.xpose.msra.mxu0 0.0
    %4691 = vmatpush.xpose.msra.mxu0 0.0
    %4692 = vmatpush.xpose.msra.mxu0 0.0
    %4693 = vmatpush.xpose.msra.mxu0 0.0
    %4694 = vmatpush.xpose.msra.mxu0 0.0
    %4695 = vmatpush.xpose.msra.mxu0 0.0
    %4696 = vmatpush.xpose.msra.mxu0 0.0
    %4697 = vmatpush.xpose.msra.mxu0 0.0
    %4698 = vmatpush.xpose.msra.mxu0 0.0
    %4699 = vmatpush.xpose.msra.mxu0 0.0
    %4700 = vmatpush.xpose.msra.mxu0 0.0
    %4701 = vmatpush.xpose.msra.mxu0 %v825
    %4702 = vmatpush.xpose.msra.mxu0 %v629
    %4703 = vmatpush.xpose.msra.mxu0 %v433
    %4704 = vmatpush.xpose.msra.mxu0 %v237
    %4705 = vmatmul.f32.gmra.mxu0 %v1117
    %v4706 = vpop.f32.mrf.mxu0
    %v4707 = vadd.f32 %v4687, %v4706
    %4708 = vdwg.mxu0
    %4709 = vmatpush.xpose.msra.mxu0 0.0
    %4710 = vmatpush.xpose.msra.mxu0 0.0
    %4711 = vmatpush.xpose.msra.mxu0 0.0
    %4712 = vmatpush.xpose.msra.mxu0 0.0
    %4713 = vmatpush.xpose.msra.mxu0 0.0
    %4714 = vmatpush.xpose.msra.mxu0 0.0
    %4715 = vmatpush.xpose.msra.mxu0 0.0
    %4716 = vmatpush.xpose.msra.mxu0 0.0
    %4717 = vmatpush.xpose.msra.mxu0 0.0
    %4718 = vmatpush.xpose.msra.mxu0 0.0
    %4719 = vmatpush.xpose.msra.mxu0 0.0
    %4720 = vmatpush.xpose.msra.mxu0 0.0
    %4721 = vmatpush.xpose.msra.mxu0 %v826
    %4722 = vmatpush.xpose.msra.mxu0 %v630
    %4723 = vmatpush.xpose.msra.mxu0 %v434
    %4724 = vmatpush.xpose.msra.mxu0 %v238
    %4725 = vmatmul.f32.gmra.mxu0 %v1120
    %v4726 = vpop.f32.mrf.mxu0
    %v4727 = vadd.f32 %v4707, %v4726
    %4728 = vdwg.mxu0
    %4729 = vmatpush.xpose.msra.mxu0 0.0
    %4730 = vmatpush.xpose.msra.mxu0 0.0
    %4731 = vmatpush.xpose.msra.mxu0 0.0
    %4732 = vmatpush.xpose.msra.mxu0 0.0
    %4733 = vmatpush.xpose.msra.mxu0 0.0
    %4734 = vmatpush.xpose.msra.mxu0 0.0
    %4735 = vmatpush.xpose.msra.mxu0 0.0
    %4736 = vmatpush.xpose.msra.mxu0 0.0
    %4737 = vmatpush.xpose.msra.mxu0 0.0
    %4738 = vmatpush.xpose.msra.mxu0 0.0
    %4739 = vmatpush.xpose.msra.mxu0 0.0
    %4740 = vmatpush.xpose.msra.mxu0 0.0
    %4741 = vmatpush.xpose.msra.mxu0 %v827
    %4742 = vmatpush.xpose.msra.mxu0 %v631
    %4743 = vmatpush.xpose.msra.mxu0 %v435
    %4744 = vmatpush.xpose.msra.mxu0 %v239
    %4745 = vmatmul.f32.gmra.mxu0 %v1121
    %v4746 = vpop.f32.mrf.mxu0
    %v4747 = vadd.f32 %v4727, %v4746
    %4748 = vdwg.mxu0
    %4749 = vmatpush.xpose.msra.mxu0 0.0
    %4750 = vmatpush.xpose.msra.mxu0 0.0
    %4751 = vmatpush.xpose.msra.mxu0 0.0
    %4752 = vmatpush.xpose.msra.mxu0 0.0
    %4753 = vmatpush.xpose.msra.mxu0 0.0
    %4754 = vmatpush.xpose.msra.mxu0 0.0
    %4755 = vmatpush.xpose.msra.mxu0 0.0
    %4756 = vmatpush.xpose.msra.mxu0 0.0
    %4757 = vmatpush.xpose.msra.mxu0 0.0
    %4758 = vmatpush.xpose.msra.mxu0 0.0
    %4759 = vmatpush.xpose.msra.mxu0 0.0
    %4760 = vmatpush.xpose.msra.mxu0 0.0
    %4761 = vmatpush.xpose.msra.mxu0 %v828
    %4762 = vmatpush.xpose.msra.mxu0 %v632
    %4763 = vmatpush.xpose.msra.mxu0 %v436
    %4764 = vmatpush.xpose.msra.mxu0 %v240
    %4765 = vmatmul.f32.gmra.mxu0 %v1122
    %v4766 = vpop.f32.mrf.mxu0
    %v4767 = vadd.f32 %v4747, %v4766
    %4768 = vdwg.mxu0
    %4769 = vmatpush.xpose.msra.mxu0 0.0
    %4770 = vmatpush.xpose.msra.mxu0 0.0
    %4771 = vmatpush.xpose.msra.mxu0 0.0
    %4772 = vmatpush.xpose.msra.mxu0 0.0
    %4773 = vmatpush.xpose.msra.mxu0 0.0
    %4774 = vmatpush.xpose.msra.mxu0 0.0
    %4775 = vmatpush.xpose.msra.mxu0 0.0
    %4776 = vmatpush.xpose.msra.mxu0 0.0
    %4777 = vmatpush.xpose.msra.mxu0 0.0
    %4778 = vmatpush.xpose.msra.mxu0 0.0
    %4779 = vmatpush.xpose.msra.mxu0 0.0
    %4780 = vmatpush.xpose.msra.mxu0 0.0
    %4781 = vmatpush.xpose.msra.mxu0 %v829
    %4782 = vmatpush.xpose.msra.mxu0 %v633
    %4783 = vmatpush.xpose.msra.mxu0 %v437
    %4784 = vmatpush.xpose.msra.mxu0 %v241
    %4785 = vmatmul.f32.gmra.mxu0 %v1123
    %v4786 = vpop.f32.mrf.mxu0
    %v4787 = vadd.f32 %v4767, %v4786
    %4788 = vdwg.mxu0
    %4789 = vmatpush.xpose.msra.mxu0 0.0
    %4790 = vmatpush.xpose.msra.mxu0 0.0
    %4791 = vmatpush.xpose.msra.mxu0 0.0
    %4792 = vmatpush.xpose.msra.mxu0 0.0
    %4793 = vmatpush.xpose.msra.mxu0 0.0
    %4794 = vmatpush.xpose.msra.mxu0 0.0
    %4795 = vmatpush.xpose.msra.mxu0 0.0
    %4796 = vmatpush.xpose.msra.mxu0 0.0
    %4797 = vmatpush.xpose.msra.mxu0 0.0
    %4798 = vmatpush.xpose.msra.mxu0 0.0
    %4799 = vmatpush.xpose.msra.mxu0 0.0
    %4800 = vmatpush.xpose.msra.mxu0 0.0
    %4801 = vmatpush.xpose.msra.mxu0 %v830
    %4802 = vmatpush.xpose.msra.mxu0 %v634
    %4803 = vmatpush.xpose.msra.mxu0 %v438
    %4804 = vmatpush.xpose.msra.mxu0 %v242
    %4805 = vmatmul.f32.gmra.mxu0 %v1124
    %v4806 = vpop.f32.mrf.mxu0
    %v4807 = vadd.f32 %v4787, %v4806
    %4808 = vdwg.mxu0
    %4809 = vmatpush.xpose.msra.mxu0 0.0
    %4810 = vmatpush.xpose.msra.mxu0 0.0
    %4811 = vmatpush.xpose.msra.mxu0 0.0
    %4812 = vmatpush.xpose.msra.mxu0 0.0
    %4813 = vmatpush.xpose.msra.mxu0 0.0
    %4814 = vmatpush.xpose.msra.mxu0 0.0
    %4815 = vmatpush.xpose.msra.mxu0 0.0
    %4816 = vmatpush.xpose.msra.mxu0 0.0
    %4817 = vmatpush.xpose.msra.mxu0 0.0
    %4818 = vmatpush.xpose.msra.mxu0 0.0
    %4819 = vmatpush.xpose.msra.mxu0 0.0
    %4820 = vmatpush.xpose.msra.mxu0 0.0
    %4821 = vmatpush.xpose.msra.mxu0 %v831
    %4822 = vmatpush.xpose.msra.mxu0 %v635
    %4823 = vmatpush.xpose.msra.mxu0 %v439
    %4824 = vmatpush.xpose.msra.mxu0 %v243
    %4825 = vmatmul.f32.gmra.mxu0 %v1125
    %v4826 = vpop.f32.mrf.mxu0
    %v4827 = vadd.f32 %v4807, %v4826
    %4828 = vdwg.mxu0
    %4829 = vmatpush.xpose.msra.mxu0 0.0
    %4830 = vmatpush.xpose.msra.mxu0 0.0
    %4831 = vmatpush.xpose.msra.mxu0 0.0
    %4832 = vmatpush.xpose.msra.mxu0 0.0
    %4833 = vmatpush.xpose.msra.mxu0 0.0
    %4834 = vmatpush.xpose.msra.mxu0 0.0
    %4835 = vmatpush.xpose.msra.mxu0 0.0
    %4836 = vmatpush.xpose.msra.mxu0 0.0
    %4837 = vmatpush.xpose.msra.mxu0 0.0
    %4838 = vmatpush.xpose.msra.mxu0 0.0
    %4839 = vmatpush.xpose.msra.mxu0 0.0
    %4840 = vmatpush.xpose.msra.mxu0 0.0
    %4841 = vmatpush.xpose.msra.mxu0 %v832
    %4842 = vmatpush.xpose.msra.mxu0 %v636
    %4843 = vmatpush.xpose.msra.mxu0 %v440
    %4844 = vmatpush.xpose.msra.mxu0 %v244
    %4845 = vmatmul.f32.gmra.mxu0 %v1126
    %v4846 = vpop.f32.mrf.mxu0
    %v4847 = vadd.f32 %v4827, %v4846
    %4848 = vdwg.mxu0
    %4849 = vmatpush.xpose.msra.mxu0 0.0
    %4850 = vmatpush.xpose.msra.mxu0 0.0
    %4851 = vmatpush.xpose.msra.mxu0 0.0
    %4852 = vmatpush.xpose.msra.mxu0 0.0
    %4853 = vmatpush.xpose.msra.mxu0 0.0
    %4854 = vmatpush.xpose.msra.mxu0 0.0
    %4855 = vmatpush.xpose.msra.mxu0 0.0
    %4856 = vmatpush.xpose.msra.mxu0 0.0
    %4857 = vmatpush.xpose.msra.mxu0 0.0
    %4858 = vmatpush.xpose.msra.mxu0 0.0
    %4859 = vmatpush.xpose.msra.mxu0 0.0
    %4860 = vmatpush.xpose.msra.mxu0 0.0
    %4861 = vmatpush.xpose.msra.mxu0 %v833
    %4862 = vmatpush.xpose.msra.mxu0 %v637
    %4863 = vmatpush.xpose.msra.mxu0 %v441
    %4864 = vmatpush.xpose.msra.mxu0 %v245
    %4865 = vmatmul.f32.gmra.mxu0 %v1127
    %v4866 = vpop.f32.mrf.mxu0
    %v4867 = vadd.f32 %v4847, %v4866
    %4868 = vdwg.mxu0
    %4869 = vmatpush.xpose.msra.mxu0 0.0
    %4870 = vmatpush.xpose.msra.mxu0 0.0
    %4871 = vmatpush.xpose.msra.mxu0 0.0
    %4872 = vmatpush.xpose.msra.mxu0 0.0
    %4873 = vmatpush.xpose.msra.mxu0 0.0
    %4874 = vmatpush.xpose.msra.mxu0 0.0
    %4875 = vmatpush.xpose.msra.mxu0 0.0
    %4876 = vmatpush.xpose.msra.mxu0 0.0
    %4877 = vmatpush.xpose.msra.mxu0 0.0
    %4878 = vmatpush.xpose.msra.mxu0 0.0
    %4879 = vmatpush.xpose.msra.mxu0 0.0
    %4880 = vmatpush.xpose.msra.mxu0 0.0
    %4881 = vmatpush.xpose.msra.mxu0 %v834
    %4882 = vmatpush.xpose.msra.mxu0 %v638
    %4883 = vmatpush.xpose.msra.mxu0 %v442
    %4884 = vmatpush.xpose.msra.mxu0 %v246
    %4885 = vmatmul.f32.gmra.mxu0 %v1130
    %v4886 = vpop.f32.mrf.mxu0
    %v4887 = vadd.f32 %v4867, %v4886
    %4888 = vdwg.mxu0
    %4889 = vmatpush.xpose.msra.mxu0 0.0
    %4890 = vmatpush.xpose.msra.mxu0 0.0
    %4891 = vmatpush.xpose.msra.mxu0 0.0
    %4892 = vmatpush.xpose.msra.mxu0 0.0
    %4893 = vmatpush.xpose.msra.mxu0 0.0
    %4894 = vmatpush.xpose.msra.mxu0 0.0
    %4895 = vmatpush.xpose.msra.mxu0 0.0
    %4896 = vmatpush.xpose.msra.mxu0 0.0
    %4897 = vmatpush.xpose.msra.mxu0 0.0
    %4898 = vmatpush.xpose.msra.mxu0 0.0
    %4899 = vmatpush.xpose.msra.mxu0 0.0
    %4900 = vmatpush.xpose.msra.mxu0 0.0
    %4901 = vmatpush.xpose.msra.mxu0 %v835
    %4902 = vmatpush.xpose.msra.mxu0 %v639
    %4903 = vmatpush.xpose.msra.mxu0 %v443
    %4904 = vmatpush.xpose.msra.mxu0 %v247
    %4905 = vmatmul.f32.gmra.mxu0 %v1131
    %v4906 = vpop.f32.mrf.mxu0
    %v4907 = vadd.f32 %v4887, %v4906
    %4908 = vdwg.mxu0
    %4909 = vmatpush.xpose.msra.mxu0 0.0
    %4910 = vmatpush.xpose.msra.mxu0 0.0
    %4911 = vmatpush.xpose.msra.mxu0 0.0
    %4912 = vmatpush.xpose.msra.mxu0 0.0
    %4913 = vmatpush.xpose.msra.mxu0 0.0
    %4914 = vmatpush.xpose.msra.mxu0 0.0
    %4915 = vmatpush.xpose.msra.mxu0 0.0
    %4916 = vmatpush.xpose.msra.mxu0 0.0
    %4917 = vmatpush.xpose.msra.mxu0 0.0
    %4918 = vmatpush.xpose.msra.mxu0 0.0
    %4919 = vmatpush.xpose.msra.mxu0 0.0
    %4920 = vmatpush.xpose.msra.mxu0 0.0
    %4921 = vmatpush.xpose.msra.mxu0 %v836
    %4922 = vmatpush.xpose.msra.mxu0 %v640
    %4923 = vmatpush.xpose.msra.mxu0 %v444
    %4924 = vmatpush.xpose.msra.mxu0 %v248
    %4925 = vmatmul.f32.gmra.mxu0 %v1132
    %v4926 = vpop.f32.mrf.mxu0
    %v4927 = vadd.f32 %v4907, %v4926
    %4928 = vdwg.mxu0
    %4929 = vmatpush.xpose.msra.mxu0 0.0
    %4930 = vmatpush.xpose.msra.mxu0 0.0
    %4931 = vmatpush.xpose.msra.mxu0 0.0
    %4932 = vmatpush.xpose.msra.mxu0 0.0
    %4933 = vmatpush.xpose.msra.mxu0 0.0
    %4934 = vmatpush.xpose.msra.mxu0 0.0
    %4935 = vmatpush.xpose.msra.mxu0 0.0
    %4936 = vmatpush.xpose.msra.mxu0 0.0
    %4937 = vmatpush.xpose.msra.mxu0 0.0
    %4938 = vmatpush.xpose.msra.mxu0 0.0
    %4939 = vmatpush.xpose.msra.mxu0 0.0
    %4940 = vmatpush.xpose.msra.mxu0 0.0
    %4941 = vmatpush.xpose.msra.mxu0 %v837
    %4942 = vmatpush.xpose.msra.mxu0 %v641
    %4943 = vmatpush.xpose.msra.mxu0 %v445
    %4944 = vmatpush.xpose.msra.mxu0 %v249
    %4945 = vmatmul.f32.gmra.mxu0 %v1133
    %v4946 = vpop.f32.mrf.mxu0
    %v4947 = vadd.f32 %v4927, %v4946
    %4948 = vdwg.mxu0
    %4949 = vmatpush.xpose.msra.mxu0 0.0
    %4950 = vmatpush.xpose.msra.mxu0 0.0
    %4951 = vmatpush.xpose.msra.mxu0 0.0
    %4952 = vmatpush.xpose.msra.mxu0 0.0
    %4953 = vmatpush.xpose.msra.mxu0 0.0
    %4954 = vmatpush.xpose.msra.mxu0 0.0
    %4955 = vmatpush.xpose.msra.mxu0 0.0
    %4956 = vmatpush.xpose.msra.mxu0 0.0
    %4957 = vmatpush.xpose.msra.mxu0 0.0
    %4958 = vmatpush.xpose.msra.mxu0 0.0
    %4959 = vmatpush.xpose.msra.mxu0 0.0
    %4960 = vmatpush.xpose.msra.mxu0 0.0
    %4961 = vmatpush.xpose.msra.mxu0 %v838
    %4962 = vmatpush.xpose.msra.mxu0 %v642
    %4963 = vmatpush.xpose.msra.mxu0 %v446
    %4964 = vmatpush.xpose.msra.mxu0 %v250
    %4965 = vmatmul.f32.gmra.mxu0 %v1134
    %v4966 = vpop.f32.mrf.mxu0
    %v4967 = vadd.f32 %v4947, %v4966
    %4968 = vdwg.mxu0
    %4969 = vmatpush.xpose.msra.mxu0 0.0
    %4970 = vmatpush.xpose.msra.mxu0 0.0
    %4971 = vmatpush.xpose.msra.mxu0 0.0
    %4972 = vmatpush.xpose.msra.mxu0 0.0
    %4973 = vmatpush.xpose.msra.mxu0 0.0
    %4974 = vmatpush.xpose.msra.mxu0 0.0
    %4975 = vmatpush.xpose.msra.mxu0 0.0
    %4976 = vmatpush.xpose.msra.mxu0 0.0
    %4977 = vmatpush.xpose.msra.mxu0 0.0
    %4978 = vmatpush.xpose.msra.mxu0 0.0
    %4979 = vmatpush.xpose.msra.mxu0 0.0
    %4980 = vmatpush.xpose.msra.mxu0 0.0
    %4981 = vmatpush.xpose.msra.mxu0 %v839
    %4982 = vmatpush.xpose.msra.mxu0 %v643
    %4983 = vmatpush.xpose.msra.mxu0 %v447
    %4984 = vmatpush.xpose.msra.mxu0 %v251
    %4985 = vmatmul.f32.gmra.mxu0 %v1135
    %v4986 = vpop.f32.mrf.mxu0
    %v4987 = vadd.f32 %v4967, %v4986
    %4988 = vdwg.mxu0
    %4989 = vmatpush.xpose.msra.mxu0 0.0
    %4990 = vmatpush.xpose.msra.mxu0 0.0
    %4991 = vmatpush.xpose.msra.mxu0 0.0
    %4992 = vmatpush.xpose.msra.mxu0 0.0
    %4993 = vmatpush.xpose.msra.mxu0 0.0
    %4994 = vmatpush.xpose.msra.mxu0 0.0
    %4995 = vmatpush.xpose.msra.mxu0 0.0
    %4996 = vmatpush.xpose.msra.mxu0 0.0
    %4997 = vmatpush.xpose.msra.mxu0 0.0
    %4998 = vmatpush.xpose.msra.mxu0 0.0
    %4999 = vmatpush.xpose.msra.mxu0 0.0
    %5000 = vmatpush.xpose.msra.mxu0 0.0
    %5001 = vmatpush.xpose.msra.mxu0 %v840
    %5002 = vmatpush.xpose.msra.mxu0 %v644
    %5003 = vmatpush.xpose.msra.mxu0 %v448
    %5004 = vmatpush.xpose.msra.mxu0 %v252
    %5005 = vmatmul.f32.gmra.mxu0 %v1136
    %v5006 = vpop.f32.mrf.mxu0
    %v5007 = vadd.f32 %v4987, %v5006
    %5008 = vdwg.mxu0
    %5009 = vmatpush.xpose.msra.mxu0 0.0
    %5010 = vmatpush.xpose.msra.mxu0 0.0
    %5011 = vmatpush.xpose.msra.mxu0 0.0
    %5012 = vmatpush.xpose.msra.mxu0 0.0
    %5013 = vmatpush.xpose.msra.mxu0 0.0
    %5014 = vmatpush.xpose.msra.mxu0 0.0
    %5015 = vmatpush.xpose.msra.mxu0 0.0
    %5016 = vmatpush.xpose.msra.mxu0 0.0
    %5017 = vmatpush.xpose.msra.mxu0 0.0
    %5018 = vmatpush.xpose.msra.mxu0 0.0
    %5019 = vmatpush.xpose.msra.mxu0 0.0
    %5020 = vmatpush.xpose.msra.mxu0 0.0
    %5021 = vmatpush.xpose.msra.mxu0 %v841
    %5022 = vmatpush.xpose.msra.mxu0 %v645
    %5023 = vmatpush.xpose.msra.mxu0 %v449
    %5024 = vmatpush.xpose.msra.mxu0 %v253
    %5025 = vmatmul.f32.gmra.mxu0 %v1137
    %v5026 = vpop.f32.mrf.mxu0
    %v5027 = vadd.f32 %v5007, %v5026
    %5028 = vdwg.mxu0
    %5029 = vmatpush.xpose.msra.mxu0 0.0
    %5030 = vmatpush.xpose.msra.mxu0 0.0
    %5031 = vmatpush.xpose.msra.mxu0 0.0
    %5032 = vmatpush.xpose.msra.mxu0 0.0
    %5033 = vmatpush.xpose.msra.mxu0 0.0
    %5034 = vmatpush.xpose.msra.mxu0 0.0
    %5035 = vmatpush.xpose.msra.mxu0 0.0
    %5036 = vmatpush.xpose.msra.mxu0 0.0
    %5037 = vmatpush.xpose.msra.mxu0 0.0
    %5038 = vmatpush.xpose.msra.mxu0 0.0
    %5039 = vmatpush.xpose.msra.mxu0 0.0
    %5040 = vmatpush.xpose.msra.mxu0 0.0
    %5041 = vmatpush.xpose.msra.mxu0 %v842
    %5042 = vmatpush.xpose.msra.mxu0 %v646
    %5043 = vmatpush.xpose.msra.mxu0 %v450
    %5044 = vmatpush.xpose.msra.mxu0 %v254
    %5045 = vmatmul.f32.gmra.mxu0 %v1140
    %v5046 = vpop.f32.mrf.mxu0
    %v5047 = vadd.f32 %v5027, %v5046
    %5048 = vdwg.mxu0
    %5049 = vmatpush.xpose.msra.mxu0 0.0
    %5050 = vmatpush.xpose.msra.mxu0 0.0
    %5051 = vmatpush.xpose.msra.mxu0 0.0
    %5052 = vmatpush.xpose.msra.mxu0 0.0
    %5053 = vmatpush.xpose.msra.mxu0 0.0
    %5054 = vmatpush.xpose.msra.mxu0 0.0
    %5055 = vmatpush.xpose.msra.mxu0 0.0
    %5056 = vmatpush.xpose.msra.mxu0 0.0
    %5057 = vmatpush.xpose.msra.mxu0 0.0
    %5058 = vmatpush.xpose.msra.mxu0 0.0
    %5059 = vmatpush.xpose.msra.mxu0 0.0
    %5060 = vmatpush.xpose.msra.mxu0 0.0
    %5061 = vmatpush.xpose.msra.mxu0 %v843
    %5062 = vmatpush.xpose.msra.mxu0 %v647
    %5063 = vmatpush.xpose.msra.mxu0 %v451
    %5064 = vmatpush.xpose.msra.mxu0 %v255
    %5065 = vmatmul.f32.gmra.mxu0 %v1141
    %v5066 = vpop.f32.mrf.mxu0
    %v5067 = vadd.f32 %v5047, %v5066
    %5068 = vdwg.mxu0
    %5069 = vmatpush.xpose.msra.mxu0 0.0
    %5070 = vmatpush.xpose.msra.mxu0 0.0
    %5071 = vmatpush.xpose.msra.mxu0 0.0
    %5072 = vmatpush.xpose.msra.mxu0 0.0
    %5073 = vmatpush.xpose.msra.mxu0 0.0
    %5074 = vmatpush.xpose.msra.mxu0 0.0
    %5075 = vmatpush.xpose.msra.mxu0 0.0
    %5076 = vmatpush.xpose.msra.mxu0 0.0
    %5077 = vmatpush.xpose.msra.mxu0 0.0
    %5078 = vmatpush.xpose.msra.mxu0 0.0
    %5079 = vmatpush.xpose.msra.mxu0 0.0
    %5080 = vmatpush.xpose.msra.mxu0 0.0
    %5081 = vmatpush.xpose.msra.mxu0 %v844
    %5082 = vmatpush.xpose.msra.mxu0 %v648
    %5083 = vmatpush.xpose.msra.mxu0 %v452
    %5084 = vmatpush.xpose.msra.mxu0 %v256
    %5085 = vmatmul.f32.gmra.mxu0 %v1142
    %v5086 = vpop.f32.mrf.mxu0
    %v5087 = vadd.f32 %v5067, %v5086
    %5088 = vdwg.mxu0
    %5089 = vmatpush.xpose.msra.mxu0 0.0
    %5090 = vmatpush.xpose.msra.mxu0 0.0
    %5091 = vmatpush.xpose.msra.mxu0 0.0
    %5092 = vmatpush.xpose.msra.mxu0 0.0
    %5093 = vmatpush.xpose.msra.mxu0 0.0
    %5094 = vmatpush.xpose.msra.mxu0 0.0
    %5095 = vmatpush.xpose.msra.mxu0 0.0
    %5096 = vmatpush.xpose.msra.mxu0 0.0
    %5097 = vmatpush.xpose.msra.mxu0 0.0
    %5098 = vmatpush.xpose.msra.mxu0 0.0
    %5099 = vmatpush.xpose.msra.mxu0 0.0
    %5100 = vmatpush.xpose.msra.mxu0 0.0
    %5101 = vmatpush.xpose.msra.mxu0 %v845
    %5102 = vmatpush.xpose.msra.mxu0 %v649
    %5103 = vmatpush.xpose.msra.mxu0 %v453
    %5104 = vmatpush.xpose.msra.mxu0 %v257
    %5105 = vmatmul.f32.gmra.mxu0 %v1143
    %v5106 = vpop.f32.mrf.mxu0
    %v5107 = vadd.f32 %v5087, %v5106
    %5108 = vdwg.mxu0
    %5109 = vmatpush.xpose.msra.mxu0 0.0
    %5110 = vmatpush.xpose.msra.mxu0 0.0
    %5111 = vmatpush.xpose.msra.mxu0 0.0
    %5112 = vmatpush.xpose.msra.mxu0 0.0
    %5113 = vmatpush.xpose.msra.mxu0 0.0
    %5114 = vmatpush.xpose.msra.mxu0 0.0
    %5115 = vmatpush.xpose.msra.mxu0 0.0
    %5116 = vmatpush.xpose.msra.mxu0 0.0
    %5117 = vmatpush.xpose.msra.mxu0 0.0
    %5118 = vmatpush.xpose.msra.mxu0 0.0
    %5119 = vmatpush.xpose.msra.mxu0 0.0
    %5120 = vmatpush.xpose.msra.mxu0 0.0
    %5121 = vmatpush.xpose.msra.mxu0 %v846
    %5122 = vmatpush.xpose.msra.mxu0 %v650
    %5123 = vmatpush.xpose.msra.mxu0 %v454
    %5124 = vmatpush.xpose.msra.mxu0 %v258
    %5125 = vmatmul.f32.gmra.mxu0 %v1144
    %v5126 = vpop.f32.mrf.mxu0
    %v5127 = vadd.f32 %v5107, %v5126
    %5128 = vdwg.mxu0
    %5129 = vmatpush.xpose.msra.mxu0 0.0
    %5130 = vmatpush.xpose.msra.mxu0 0.0
    %5131 = vmatpush.xpose.msra.mxu0 0.0
    %5132 = vmatpush.xpose.msra.mxu0 0.0
    %5133 = vmatpush.xpose.msra.mxu0 0.0
    %5134 = vmatpush.xpose.msra.mxu0 0.0
    %5135 = vmatpush.xpose.msra.mxu0 0.0
    %5136 = vmatpush.xpose.msra.mxu0 0.0
    %5137 = vmatpush.xpose.msra.mxu0 0.0
    %5138 = vmatpush.xpose.msra.mxu0 0.0
    %5139 = vmatpush.xpose.msra.mxu0 0.0
    %5140 = vmatpush.xpose.msra.mxu0 0.0
    %5141 = vmatpush.xpose.msra.mxu0 %v847
    %5142 = vmatpush.xpose.msra.mxu0 %v651
    %5143 = vmatpush.xpose.msra.mxu0 %v455
    %5144 = vmatpush.xpose.msra.mxu0 %v259
    %5145 = vmatmul.f32.gmra.mxu0 %v1145
    %v5146 = vpop.f32.mrf.mxu0
    %v5147 = vadd.f32 %v5127, %v5146
    %5148 = vdwg.mxu0
    %5149 = vmatpush.xpose.msra.mxu0 0.0
    %5150 = vmatpush.xpose.msra.mxu0 0.0
    %5151 = vmatpush.xpose.msra.mxu0 0.0
    %5152 = vmatpush.xpose.msra.mxu0 0.0
    %5153 = vmatpush.xpose.msra.mxu0 0.0
    %5154 = vmatpush.xpose.msra.mxu0 0.0
    %5155 = vmatpush.xpose.msra.mxu0 0.0
    %5156 = vmatpush.xpose.msra.mxu0 0.0
    %5157 = vmatpush.xpose.msra.mxu0 0.0
    %5158 = vmatpush.xpose.msra.mxu0 0.0
    %5159 = vmatpush.xpose.msra.mxu0 0.0
    %5160 = vmatpush.xpose.msra.mxu0 0.0
    %5161 = vmatpush.xpose.msra.mxu0 %v848
    %5162 = vmatpush.xpose.msra.mxu0 %v652
    %5163 = vmatpush.xpose.msra.mxu0 %v456
    %5164 = vmatpush.xpose.msra.mxu0 %v260
    %5165 = vmatmul.f32.gmra.mxu0 %v1146
    %v5166 = vpop.f32.mrf.mxu0
    %v5167 = vadd.f32 %v5147, %v5166
    %5168 = vdwg.mxu0
    %5169 = vmatpush.xpose.msra.mxu0 0.0
    %5170 = vmatpush.xpose.msra.mxu0 0.0
    %5171 = vmatpush.xpose.msra.mxu0 0.0
    %5172 = vmatpush.xpose.msra.mxu0 0.0
    %5173 = vmatpush.xpose.msra.mxu0 0.0
    %5174 = vmatpush.xpose.msra.mxu0 0.0
    %5175 = vmatpush.xpose.msra.mxu0 0.0
    %5176 = vmatpush.xpose.msra.mxu0 0.0
    %5177 = vmatpush.xpose.msra.mxu0 0.0
    %5178 = vmatpush.xpose.msra.mxu0 0.0
    %5179 = vmatpush.xpose.msra.mxu0 0.0
    %5180 = vmatpush.xpose.msra.mxu0 0.0
    %5181 = vmatpush.xpose.msra.mxu0 %v849
    %5182 = vmatpush.xpose.msra.mxu0 %v653
    %5183 = vmatpush.xpose.msra.mxu0 %v457
    %5184 = vmatpush.xpose.msra.mxu0 %v261
    %5185 = vmatmul.f32.gmra.mxu0 %v1147
    %v5186 = vpop.f32.mrf.mxu0
    %v5187 = vadd.f32 %v5167, %v5186
    %5188 = vdwg.mxu0
    %5189 = vmatpush.xpose.msra.mxu0 0.0
    %5190 = vmatpush.xpose.msra.mxu0 0.0
    %5191 = vmatpush.xpose.msra.mxu0 0.0
    %5192 = vmatpush.xpose.msra.mxu0 0.0
    %5193 = vmatpush.xpose.msra.mxu0 0.0
    %5194 = vmatpush.xpose.msra.mxu0 0.0
    %5195 = vmatpush.xpose.msra.mxu0 0.0
    %5196 = vmatpush.xpose.msra.mxu0 0.0
    %5197 = vmatpush.xpose.msra.mxu0 0.0
    %5198 = vmatpush.xpose.msra.mxu0 0.0
    %5199 = vmatpush.xpose.msra.mxu0 0.0
    %5200 = vmatpush.xpose.msra.mxu0 0.0
    %5201 = vmatpush.xpose.msra.mxu0 %v850
    %5202 = vmatpush.xpose.msra.mxu0 %v654
    %5203 = vmatpush.xpose.msra.mxu0 %v458
    %5204 = vmatpush.xpose.msra.mxu0 %v262
    %5205 = vmatmul.f32.gmra.mxu0 %v1149
    %v5206 = vpop.f32.mrf.mxu0
    %v5207 = vadd.f32 %v5187, %v5206
    %5208 = vdwg.mxu0
    %5209 = vmatpush.xpose.msra.mxu0 0.0
    %5210 = vmatpush.xpose.msra.mxu0 0.0
    %5211 = vmatpush.xpose.msra.mxu0 0.0
    %5212 = vmatpush.xpose.msra.mxu0 0.0
    %5213 = vmatpush.xpose.msra.mxu0 0.0
    %5214 = vmatpush.xpose.msra.mxu0 0.0
    %5215 = vmatpush.xpose.msra.mxu0 0.0
    %5216 = vmatpush.xpose.msra.mxu0 0.0
    %5217 = vmatpush.xpose.msra.mxu0 0.0
    %5218 = vmatpush.xpose.msra.mxu0 0.0
    %5219 = vmatpush.xpose.msra.mxu0 0.0
    %5220 = vmatpush.xpose.msra.mxu0 0.0
    %5221 = vmatpush.xpose.msra.mxu0 %v851
    %5222 = vmatpush.xpose.msra.mxu0 %v655
    %5223 = vmatpush.xpose.msra.mxu0 %v459
    %5224 = vmatpush.xpose.msra.mxu0 %v263
    %5225 = vmatmul.f32.gmra.mxu0 %v1150
    %v5226 = vpop.f32.mrf.mxu0
    %v5227 = vadd.f32 %v5207, %v5226
    %5228 = vdwg.mxu0
    %5229 = vmatpush.xpose.msra.mxu0 0.0
    %5230 = vmatpush.xpose.msra.mxu0 0.0
    %5231 = vmatpush.xpose.msra.mxu0 0.0
    %5232 = vmatpush.xpose.msra.mxu0 0.0
    %5233 = vmatpush.xpose.msra.mxu0 0.0
    %5234 = vmatpush.xpose.msra.mxu0 0.0
    %5235 = vmatpush.xpose.msra.mxu0 0.0
    %5236 = vmatpush.xpose.msra.mxu0 0.0
    %5237 = vmatpush.xpose.msra.mxu0 0.0
    %5238 = vmatpush.xpose.msra.mxu0 0.0
    %5239 = vmatpush.xpose.msra.mxu0 0.0
    %5240 = vmatpush.xpose.msra.mxu0 0.0
    %5241 = vmatpush.xpose.msra.mxu0 %v852
    %5242 = vmatpush.xpose.msra.mxu0 %v656
    %5243 = vmatpush.xpose.msra.mxu0 %v460
    %5244 = vmatpush.xpose.msra.mxu0 %v264
    %5245 = vmatmul.f32.gmra.mxu0 %v1151
    %v5246 = vpop.f32.mrf.mxu0
    %v5247 = vadd.f32 %v5227, %v5246
    %5248 = vdwg.mxu0
    %5249 = vmatpush.xpose.msra.mxu0 0.0
    %5250 = vmatpush.xpose.msra.mxu0 0.0
    %5251 = vmatpush.xpose.msra.mxu0 0.0
    %5252 = vmatpush.xpose.msra.mxu0 0.0
    %5253 = vmatpush.xpose.msra.mxu0 0.0
    %5254 = vmatpush.xpose.msra.mxu0 0.0
    %5255 = vmatpush.xpose.msra.mxu0 0.0
    %5256 = vmatpush.xpose.msra.mxu0 0.0
    %5257 = vmatpush.xpose.msra.mxu0 0.0
    %5258 = vmatpush.xpose.msra.mxu0 0.0
    %5259 = vmatpush.xpose.msra.mxu0 0.0
    %5260 = vmatpush.xpose.msra.mxu0 0.0
    %5261 = vmatpush.xpose.msra.mxu0 %v853
    %5262 = vmatpush.xpose.msra.mxu0 %v657
    %5263 = vmatpush.xpose.msra.mxu0 %v461
    %5264 = vmatpush.xpose.msra.mxu0 %v265
    %5265 = vmatmul.f32.gmra.mxu0 %v1152
    %v5266 = vpop.f32.mrf.mxu0
    %v5267 = vadd.f32 %v5247, %v5266
    %5268 = vdwg.mxu0
    %v5269 = vld [vmem:[%s2] sm:$0xff]
    %v5270 = vld [vmem:[%s2 + $0x8] sm:$0xff]
    %v5271 = vld [vmem:[%s2 + $0x10] sm:$0xff]
    %v5272 = vld [vmem:[%s2 + $0x18] sm:$0xff]
    %v5273 = vld [vmem:[%s4] sm:$0x3]
    %vm5274 = vcmask 261120
    %v5276 = vsel %vm5274, %v5267, 0
    %5278 = vmatpush.msra.mxu0 0.0
    %5279 = vmatpush.msra.mxu0 0.0
    %5280 = vmatpush.msra.mxu0 0.0
    %5281 = vmatpush.msra.mxu0 0.0
    %5282 = vmatpush.msra.mxu0 0.0
    %5283 = vmatpush.msra.mxu0 0.0
    %5284 = vmatpush.msra.mxu0 0.0
    %5285 = vmatpush.msra.mxu0 0.0
    %5286 = vmatpush.msra.mxu0 0.0
    %5287 = vmatpush.msra.mxu0 0.0
    %5288 = vmatpush.msra.mxu0 0.0
    %5289 = vmatpush.msra.mxu0 0.0
    %5290 = vmatpush.msra.mxu0 %v5272
    %5291 = vmatpush.msra.mxu0 %v5271
    %5292 = vmatpush.msra.mxu0 %v5270
    %5293 = vmatpush.msra.mxu0 %v5269
    %5294 = vmatmul.f32.gmra.mxu0 %v5276
    %v5295 = vpop.f32.mrf.mxu0
    %v5296 = vadd.f32 %v5273, %v5295
    %5297 = vdwg.mxu0
    %vm5298 = vcmask 25600
    %5299 = vst.msk [vmem:[#allocation2] sm:$0x3] %vm5298, %v5296
    // Predicated region
    $region22: #{multimodal_concat_forward.3} parent=1 // pred_check
      _
    $region23: #{multimodal_concat_forward.3} parent=1 // pred_check_branch
      %5301 = sbr.rel (0) target = $region25
    $region24: #{multimodal_concat_forward.3} parent=1 // pred_region
      %5303 = vsyncadd [#allocation3], 0
      %s5305 = sshll.u32 [#allocation2], 4
      %s5306 = int_to_ptr.vmem [resolvable:$true] %s5305
      %s5307 = sshll.u32 %s5, 4
      %s5308 = int_to_ptr.hbm [resolvable:$true] %s5307
      %5310 = dma.vmem_to_hbm [thread:$0]  %s5306, 32, %s5308, [#allocation3]
    $region25: #{multimodal_concat_forward.3} parent=1 // pred_fallthru
      _
    // Predicated region
    $region26: #{multimodal_concat_forward.3} parent=1 // pred_check
      _
    $region27: #{multimodal_concat_forward.3} parent=1 // pred_check_branch
      %5312 = sbr.rel (0) target = $region29
    $region28: #{multimodal_concat_forward.3} parent=1 // pred_region
      %5314 = dma.done [#allocation3], 32
    $region29: #{multimodal_concat_forward.3} parent=1 // pred_fallthru
      _
    %5315 = vsyncpa [#allocation3], 1

</llo_original>
